<compile_context>
chip_gen: v7x
topology: tpu7x:2x2x1
jax: 0.10.0
libtpu: 0.0.40
codegen_flags: <defaults>
</compile_context>

<pallas_src>
import jax
import jax.numpy as jnp
from jax.experimental import pallas as pl
from jax.experimental.pallas import tpu as pltpu

LANE = 128


def _round_up(v, m):
    return ((v + m - 1) // m) * m


# ----------------------------------------------------------------------------
# Fused Pallas kernel: the full fftKAN stack on one tile of rows.
#   refs = (x_ref, w0_ref, b0_ref, w1_ref, b1_ref, ..., o_ref)
#     x_ref  : (TILE_N, D0)          f32 input rows (true input width, no pad)
#     wL_ref : (2*G, DL, OL_pad)     bf16 weights; [2g+0]=cos_g, [2g+1]=sin_g
#     bL_ref : (1, OL_pad)           f32 bias (zero in padded columns)
#     o_ref  : (TILE_N, O_last_pad)  f32 output rows
#   Per layer: y = sum_g cos((g+1)x) @ Wc_g + sin((g+1)x) @ Ws_g + b
#   with tanh between layers (but not after the last one).
# ----------------------------------------------------------------------------
def fused_fftkan_kernel(*refs):
    x_ref, o_ref = refs[0], refs[-1]
    layer_refs = refs[1:-1]
    n_layers = len(layer_refs) // 2

    h = x_ref[...].astype(jnp.float32)                  # (TN, D) real cols only

    for li in range(n_layers):
        w_ref = layer_refs[2 * li]                      # (2*G, D, O_pad) bf16
        b_ref = layer_refs[2 * li + 1]                  # (1, O_pad) f32
        gridsize = w_ref.shape[0] // 2

        # One cos/sin per layer (EUP); higher harmonics via the angle-addition
        # recurrence (VPU).  f32 recurrence limits drift over harmonics; only
        # the MXU operands are cast to bf16, accumulation stays f32.
        c1 = jnp.cos(h)
        s1 = jnp.sin(h)
        acc = jnp.dot(c1.astype(jnp.bfloat16), w_ref[0],
                      preferred_element_type=jnp.float32)
        acc = acc + jnp.dot(s1.astype(jnp.bfloat16), w_ref[1],
                            preferred_element_type=jnp.float32)
        c, s = c1, s1
        for g in range(1, gridsize):
            # cos((g+1)x), sin((g+1)x) from cos(gx), sin(gx)
            c, s = c * c1 - s * s1, s * c1 + c * s1
            acc = acc + jnp.dot(c.astype(jnp.bfloat16), w_ref[2 * g],
                                preferred_element_type=jnp.float32)
            acc = acc + jnp.dot(s.astype(jnp.bfloat16), w_ref[2 * g + 1],
                                preferred_element_type=jnp.float32)

        y = acc + b_ref[...]                            # (TN, O_pad)

        if li < n_layers - 1:
            # Slice back to the REAL output width before tanh so the next
            # layer's trig/recurrence only touches real columns.
            next_d = layer_refs[2 * (li + 1)].shape[1]
            h = jnp.tanh(y[:, :next_d])
        else:
            h = y

    o_ref[...] = h.astype(o_ref.dtype)


# ----------------------------------------------------------------------------
# Parameter construction (torch layout) and one-time kernel-layout conversion.
# ----------------------------------------------------------------------------
def init_fkan_params(key, inputdim, outdim, gridsize, smooth_initialization=True):
    if smooth_initialization:
        grid_norm = (jnp.arange(gridsize, dtype=jnp.float32) + 1.0) ** 2   # (G,)
    else:
        grid_norm = jnp.full((gridsize,), jnp.sqrt(float(gridsize)), jnp.float32)
    coeffs = jax.random.normal(key, (2, outdim, inputdim, gridsize), jnp.float32)
    coeffs = coeffs / (jnp.sqrt(float(inputdim)) * grid_norm)              # bcast on G
    bias = jnp.zeros((1, outdim), jnp.float32)
    return coeffs, bias


def init_fftkan_params(key, inputdim, outdim, hidden_dim, gridsize, hidden_layers):
    keys = jax.random.split(key, hidden_layers + 2)
    params = [init_fkan_params(keys[0], inputdim, hidden_dim, gridsize)]
    for h in range(hidden_layers):
        params.append(init_fkan_params(keys[1 + h], hidden_dim, hidden_dim, gridsize))
    params.append(init_fkan_params(keys[-1], hidden_dim, outdim, gridsize))
    return params


def prepare_kernel_params(params):
    """(2, O, D, G) torch layout -> ((2*G, D, O_pad) bf16, (1, O_pad) f32).

    w[2g + t, d, o] = coeffs[t, o, d, g], so the kernel's per-harmonic
    accumulation  sum_g cos_g @ w[2g] + sin_g @ w[2g+1]  matches the torch sum.
    Only the OUTPUT dim is padded to a lane multiple (zero columns); the
    contraction dim D is NOT padded (K packing).  Runs once, outside the
    forward hot path.
    """
    prepared = []
    for coeffs, bias in params:
        _, O, D, G = coeffs.shape
        o_pad = _round_up(O, LANE)
        w = jnp.transpose(coeffs, (3, 0, 2, 1)).reshape(2 * G, D, O)   # (2G, D, O)
        w = jnp.pad(w, ((0, 0), (0, 0), (0, o_pad - O))).astype(jnp.bfloat16)
        b = jnp.pad(bias, ((0, 0), (0, o_pad - O))).astype(jnp.float32)
        prepared.append((w, b))
    return prepared


# ----------------------------------------------------------------------------
# Full fftKAN forward (Pallas) and a pure-JAX reference for verification.
# ----------------------------------------------------------------------------
def fftkan_forward_pallas(x, kparams, outdim, *, tile_n=256):
    lead = x.shape[:-1]
    d_in = x.shape[-1]
    x2d = x.reshape(-1, d_in).astype(jnp.float32)
    n_rows = x2d.shape[0]

    # Row tiling: guarantee >= 2 grid tiles when possible (v7x has 2 TCs and
    # the row axis is "parallel").  Sweep tile_n in {256, 512} on v6e.
    if n_rows < 2 * tile_n:
        tile_n = max(8, _round_up((n_rows + 1) // 2, 8))
    n_pad = _round_up(max(n_rows, 1), tile_n)
    x2d = jnp.pad(x2d, ((0, n_pad - n_rows), (0, 0)))   # pad rows only; D unpadded

    o_pad_final = kparams[-1][0].shape[-1]
    n_layers = len(kparams)

    flat_inputs = [x2d]
    for w, b in kparams:
        flat_inputs.append(w)
        flat_inputs.append(b)

    # Advisory cost estimate for the XLA scheduler around the fused call.
    flops = 0
    transcendentals = 0
    bytes_accessed = n_pad * d_in * 4 + n_pad * o_pad_final * 4
    for li, (w, b) in enumerate(kparams):
        two_g, d_l, o_pad_l = w.shape
        flops += 2 * n_pad * two_g * d_l * o_pad_l              # MXU matmuls
        flops += 6 * n_pad * d_l * (two_g // 2 - 1)             # VPU recurrence
        transcendentals += 2 * n_pad * d_l                      # cos + sin
        if li < n_layers - 1:
            transcendentals += n_pad * kparams[li + 1][0].shape[1]   # tanh
        bytes_accessed += int(w.size) * 2 + int(b.size) * 4
    cost = pl.CostEstimate(flops=int(flops),
                           transcendentals=int(transcendentals),
                           bytes_accessed=int(bytes_accessed))

    # Explicit VMEM budget: single-buffered resident weight/bias slabs +
    # double-buffered x/out row tiles + margin for intermediates/spills.
    resident = sum(int(w.size) * 2 + int(b.size) * 4 for w, b in kparams)
    io = 2 * tile_n * (d_in + o_pad_final) * 4
    vmem_limit = int(min(64 << 20, resident + io + (16 << 20)))

    out_spec = pl.BlockSpec((tile_n, o_pad_final), lambda i: (i, 0))

    def _call(single_buffer_consts):
        # Grid-invariant weights/biases: request single buffering so resident
        # slabs are not double-buffered (key on v7x's 64 MiB VMEM).
        const_kwargs = ({"pipeline_mode": pl.Buffered(1)}
                        if single_buffer_consts else {})
        in_specs = [pl.BlockSpec((tile_n, d_in), lambda i: (i, 0))]
        for w, b in kparams:
            in_specs.append(
                pl.BlockSpec(w.shape, lambda i: (0, 0, 0), **const_kwargs))
            in_specs.append(
                pl.BlockSpec(b.shape, lambda i: (0, 0), **const_kwargs))
        return pl.pallas_call(
            fused_fftkan_kernel,
            out_shape=jax.ShapeDtypeStruct((n_pad, o_pad_final), jnp.float32),
            grid_spec=pltpu.PrefetchScalarGridSpec(
                num_scalar_prefetch=0,
                grid=(n_pad // tile_n,),
                in_specs=in_specs,
                out_specs=out_spec,
            ),
            compiler_params=pltpu.CompilerParams(
                dimension_semantics=("parallel",),
                vmem_limit_bytes=vmem_limit),
            cost_estimate=cost,
        )(*flat_inputs)

    try:
        out = _call(True)
    except Exception:
        # Portability fallback: some jax versions reject pipeline_mode /
        # Buffered(1) on pallas_call BlockSpecs; rerun with default buffering.
        out = _call(False)

    out = out[:n_rows, :outdim]
    return out.reshape(lead + (outdim,))


def _fkan_layer_ref(x2d, coeffs, bias):
    G = coeffs.shape[-1]
    k = jnp.arange(1, G + 1, dtype=jnp.float32).reshape(1, 1, 1, G)
    xr = x2d[:, None, :, None]                               # (N,1,D,1)
    c = jnp.cos(k * xr)                                      # (N,1,D,G)
    s = jnp.sin(k * xr)
    y = jnp.sum(c * coeffs[0:1], axis=(-2, -1))              # (N,O)
    y = y + jnp.sum(s * coeffs[1:2], axis=(-2, -1))
    return y + bias


def fftkan_forward_ref(x, params):
    lead = x.shape[:-1]
    x2d = x.reshape(-1, x.shape[-1]).astype(jnp.float32)
    n_layers = len(params)
    for li, (coeffs, bias) in enumerate(params):
        x2d = _fkan_layer_ref(x2d, coeffs, bias)
        if li < n_layers - 1:
            x2d = jnp.tanh(x2d)
    outdim = params[-1][0].shape[1]
    return x2d.reshape(lead + (outdim,))


if __name__ == "__main__":
    # Small deterministic config: inputdim=16, hidden=32, outdim=8, grid=5.
    batch, seq = 2, 8
    inputdim, hidden_dim, outdim = 16, 32, 8
    gridsize, hidden_layers = 5, 1

    root = jax.random.PRNGKey(0)
    kx, kp = jax.random.split(root)
    x = jax.random.normal(kx, (batch, seq, inputdim), jnp.float32)
    params = init_fftkan_params(kp, inputdim, outdim, hidden_dim,
                                gridsize, hidden_layers)

    # One-time slab preparation, hoisted out of the forward (perf review #9).
    kparams = prepare_kernel_params(params)
    kparams = jax.block_until_ready(kparams)

    out = fftkan_forward_pallas(x, kparams, outdim)
    out = jax.block_until_ready(out)

    ref = jax.block_until_ready(fftkan_forward_ref(x, params))
    assert out.shape == (batch, seq, outdim)
    # bf16 MXU operands with f32 accumulation -> tolerance loosened vs f32.
    assert jnp.allclose(out, ref, atol=5e-2, rtol=5e-2), "mismatch vs reference"

    print("KERNEL_OK")
</pallas_src>

<mosaic_0001>
module attributes {stable_mosaic.version = 11 : i64} {
  func.func @fused_fftkan_kernel(%arg0: i32, %arg1: memref<8x16xf32, #tpu.memory_space<vmem>>, %arg2: memref<10x16x128xbf16, #tpu.memory_space<vmem>>, %arg3: memref<1x128xf32, #tpu.memory_space<vmem>>, %arg4: memref<10x32x128xbf16, #tpu.memory_space<vmem>>, %arg5: memref<1x128xf32, #tpu.memory_space<vmem>>, %arg6: memref<10x32x128xbf16, #tpu.memory_space<vmem>>, %arg7: memref<1x128xf32, #tpu.memory_space<vmem>>, %arg8: memref<8x128xf32, #tpu.memory_space<vmem>>) attributes {dimension_semantics = [#tpu.dimension_semantics<parallel>], iteration_bounds = array<i64: 2>, scalar_prefetch = 0 : i64, scratch_operands = 0 : i64, tpu.core_type = #tpu.core_type<tc>, window_params = [{transform_indices = @transform_0, window_bounds = array<i64: 8, 16>}, {pipeline_mode = #tpu.pipeline_mode<synchronous>, transform_indices = @transform_1, window_bounds = array<i64: 10, 16, 128>}, {pipeline_mode = #tpu.pipeline_mode<synchronous>, transform_indices = @transform_2, window_bounds = array<i64: 1, 128>}, {pipeline_mode = #tpu.pipeline_mode<synchronous>, transform_indices = @transform_3, window_bounds = array<i64: 10, 32, 128>}, {pipeline_mode = #tpu.pipeline_mode<synchronous>, transform_indices = @transform_4, window_bounds = array<i64: 1, 128>}, {pipeline_mode = #tpu.pipeline_mode<synchronous>, transform_indices = @transform_5, window_bounds = array<i64: 10, 32, 128>}, {pipeline_mode = #tpu.pipeline_mode<synchronous>, transform_indices = @transform_6, window_bounds = array<i64: 1, 128>}, {transform_indices = @transform_7, window_bounds = array<i64: 8, 128>}]} {
    %c0 = arith.constant 0 : index
    %c0_0 = arith.constant 0 : index
    %0 = vector.load %arg1[%c0, %c0_0] : memref<8x16xf32, #tpu.memory_space<vmem>>, vector<8x16xf32>
    %1 = math.cos %0 : vector<8x16xf32>
    %2 = math.sin %0 : vector<8x16xf32>
    %3 = arith.truncf %1 : vector<8x16xf32> to vector<8x16xbf16>
    %c0_1 = arith.constant 0 : index
    %c0_2 = arith.constant 0 : index
    %c0_3 = arith.constant 0 : index
    %4 = vector.load %arg2[%c0_1, %c0_2, %c0_3] : memref<10x16x128xbf16, #tpu.memory_space<vmem>>, vector<1x16x128xbf16>
    %5 = vector.shape_cast %4 : vector<1x16x128xbf16> to vector<16x128xbf16>
    %cst = arith.constant dense<0.000000e+00> : vector<8x128xf32>
    %6 = tpu.matmul %3, %5, %cst {dimension_numbers = #tpu.dot_dimension_numbers<[1], [0], [0], [1], [0, 0, 1, 1], [], []>} : vector<8x16xbf16>, vector<16x128xbf16>, vector<8x128xf32> -> vector<8x128xf32>
    %7 = arith.truncf %2 : vector<8x16xf32> to vector<8x16xbf16>
    %c1 = arith.constant 1 : index
    %c0_4 = arith.constant 0 : index
    %c0_5 = arith.constant 0 : index
    %8 = vector.load %arg2[%c1, %c0_4, %c0_5] : memref<10x16x128xbf16, #tpu.memory_space<vmem>>, vector<1x16x128xbf16>
    %9 = vector.shape_cast %8 : vector<1x16x128xbf16> to vector<16x128xbf16>
    %cst_6 = arith.constant dense<0.000000e+00> : vector<8x128xf32>
    %10 = tpu.matmul %7, %9, %cst_6 {dimension_numbers = #tpu.dot_dimension_numbers<[1], [0], [0], [1], [0, 0, 1, 1], [], []>} : vector<8x16xbf16>, vector<16x128xbf16>, vector<8x128xf32> -> vector<8x128xf32>
    %11 = arith.addf %6, %10 : vector<8x128xf32>
    %12 = arith.mulf %1, %1 : vector<8x16xf32>
    %13 = arith.mulf %2, %2 : vector<8x16xf32>
    %14 = arith.subf %12, %13 : vector<8x16xf32>
    %15 = arith.mulf %2, %1 : vector<8x16xf32>
    %16 = arith.mulf %1, %2 : vector<8x16xf32>
    %17 = arith.addf %15, %16 : vector<8x16xf32>
    %18 = arith.truncf %14 : vector<8x16xf32> to vector<8x16xbf16>
    %c2 = arith.constant 2 : index
    %c0_7 = arith.constant 0 : index
    %c0_8 = arith.constant 0 : index
    %19 = vector.load %arg2[%c2, %c0_7, %c0_8] : memref<10x16x128xbf16, #tpu.memory_space<vmem>>, vector<1x16x128xbf16>
    %20 = vector.shape_cast %19 : vector<1x16x128xbf16> to vector<16x128xbf16>
    %cst_9 = arith.constant dense<0.000000e+00> : vector<8x128xf32>
    %21 = tpu.matmul %18, %20, %cst_9 {dimension_numbers = #tpu.dot_dimension_numbers<[1], [0], [0], [1], [0, 0, 1, 1], [], []>} : vector<8x16xbf16>, vector<16x128xbf16>, vector<8x128xf32> -> vector<8x128xf32>
    %22 = arith.addf %11, %21 : vector<8x128xf32>
    %23 = arith.truncf %17 : vector<8x16xf32> to vector<8x16xbf16>
    %c3 = arith.constant 3 : index
    %c0_10 = arith.constant 0 : index
    %c0_11 = arith.constant 0 : index
    %24 = vector.load %arg2[%c3, %c0_10, %c0_11] : memref<10x16x128xbf16, #tpu.memory_space<vmem>>, vector<1x16x128xbf16>
    %25 = vector.shape_cast %24 : vector<1x16x128xbf16> to vector<16x128xbf16>
    %cst_12 = arith.constant dense<0.000000e+00> : vector<8x128xf32>
    %26 = tpu.matmul %23, %25, %cst_12 {dimension_numbers = #tpu.dot_dimension_numbers<[1], [0], [0], [1], [0, 0, 1, 1], [], []>} : vector<8x16xbf16>, vector<16x128xbf16>, vector<8x128xf32> -> vector<8x128xf32>
    %27 = arith.addf %22, %26 : vector<8x128xf32>
    %28 = arith.mulf %14, %1 : vector<8x16xf32>
    %29 = arith.mulf %17, %2 : vector<8x16xf32>
    %30 = arith.subf %28, %29 : vector<8x16xf32>
    %31 = arith.mulf %17, %1 : vector<8x16xf32>
    %32 = arith.mulf %14, %2 : vector<8x16xf32>
    %33 = arith.addf %31, %32 : vector<8x16xf32>
    %34 = arith.truncf %30 : vector<8x16xf32> to vector<8x16xbf16>
    %c4 = arith.constant 4 : index
    %c0_13 = arith.constant 0 : index
    %c0_14 = arith.constant 0 : index
    %35 = vector.load %arg2[%c4, %c0_13, %c0_14] : memref<10x16x128xbf16, #tpu.memory_space<vmem>>, vector<1x16x128xbf16>
    %36 = vector.shape_cast %35 : vector<1x16x128xbf16> to vector<16x128xbf16>
    %cst_15 = arith.constant dense<0.000000e+00> : vector<8x128xf32>
    %37 = tpu.matmul %34, %36, %cst_15 {dimension_numbers = #tpu.dot_dimension_numbers<[1], [0], [0], [1], [0, 0, 1, 1], [], []>} : vector<8x16xbf16>, vector<16x128xbf16>, vector<8x128xf32> -> vector<8x128xf32>
    %38 = arith.addf %27, %37 : vector<8x128xf32>
    %39 = arith.truncf %33 : vector<8x16xf32> to vector<8x16xbf16>
    %c5 = arith.constant 5 : index
    %c0_16 = arith.constant 0 : index
    %c0_17 = arith.constant 0 : index
    %40 = vector.load %arg2[%c5, %c0_16, %c0_17] : memref<10x16x128xbf16, #tpu.memory_space<vmem>>, vector<1x16x128xbf16>
    %41 = vector.shape_cast %40 : vector<1x16x128xbf16> to vector<16x128xbf16>
    %cst_18 = arith.constant dense<0.000000e+00> : vector<8x128xf32>
    %42 = tpu.matmul %39, %41, %cst_18 {dimension_numbers = #tpu.dot_dimension_numbers<[1], [0], [0], [1], [0, 0, 1, 1], [], []>} : vector<8x16xbf16>, vector<16x128xbf16>, vector<8x128xf32> -> vector<8x128xf32>
    %43 = arith.addf %38, %42 : vector<8x128xf32>
    %44 = arith.mulf %30, %1 : vector<8x16xf32>
    %45 = arith.mulf %33, %2 : vector<8x16xf32>
    %46 = arith.subf %44, %45 : vector<8x16xf32>
    %47 = arith.mulf %33, %1 : vector<8x16xf32>
    %48 = arith.mulf %30, %2 : vector<8x16xf32>
    %49 = arith.addf %47, %48 : vector<8x16xf32>
    %50 = arith.truncf %46 : vector<8x16xf32> to vector<8x16xbf16>
    %c6 = arith.constant 6 : index
    %c0_19 = arith.constant 0 : index
    %c0_20 = arith.constant 0 : index
    %51 = vector.load %arg2[%c6, %c0_19, %c0_20] : memref<10x16x128xbf16, #tpu.memory_space<vmem>>, vector<1x16x128xbf16>
    %52 = vector.shape_cast %51 : vector<1x16x128xbf16> to vector<16x128xbf16>
    %cst_21 = arith.constant dense<0.000000e+00> : vector<8x128xf32>
    %53 = tpu.matmul %50, %52, %cst_21 {dimension_numbers = #tpu.dot_dimension_numbers<[1], [0], [0], [1], [0, 0, 1, 1], [], []>} : vector<8x16xbf16>, vector<16x128xbf16>, vector<8x128xf32> -> vector<8x128xf32>
    %54 = arith.addf %43, %53 : vector<8x128xf32>
    %55 = arith.truncf %49 : vector<8x16xf32> to vector<8x16xbf16>
    %c7 = arith.constant 7 : index
    %c0_22 = arith.constant 0 : index
    %c0_23 = arith.constant 0 : index
    %56 = vector.load %arg2[%c7, %c0_22, %c0_23] : memref<10x16x128xbf16, #tpu.memory_space<vmem>>, vector<1x16x128xbf16>
    %57 = vector.shape_cast %56 : vector<1x16x128xbf16> to vector<16x128xbf16>
    %cst_24 = arith.constant dense<0.000000e+00> : vector<8x128xf32>
    %58 = tpu.matmul %55, %57, %cst_24 {dimension_numbers = #tpu.dot_dimension_numbers<[1], [0], [0], [1], [0, 0, 1, 1], [], []>} : vector<8x16xbf16>, vector<16x128xbf16>, vector<8x128xf32> -> vector<8x128xf32>
    %59 = arith.addf %54, %58 : vector<8x128xf32>
    %60 = arith.mulf %46, %1 : vector<8x16xf32>
    %61 = arith.mulf %49, %2 : vector<8x16xf32>
    %62 = arith.subf %60, %61 : vector<8x16xf32>
    %63 = arith.mulf %49, %1 : vector<8x16xf32>
    %64 = arith.mulf %46, %2 : vector<8x16xf32>
    %65 = arith.addf %63, %64 : vector<8x16xf32>
    %66 = arith.truncf %62 : vector<8x16xf32> to vector<8x16xbf16>
    %c8 = arith.constant 8 : index
    %c0_25 = arith.constant 0 : index
    %c0_26 = arith.constant 0 : index
    %67 = vector.load %arg2[%c8, %c0_25, %c0_26] : memref<10x16x128xbf16, #tpu.memory_space<vmem>>, vector<1x16x128xbf16>
    %68 = vector.shape_cast %67 : vector<1x16x128xbf16> to vector<16x128xbf16>
    %cst_27 = arith.constant dense<0.000000e+00> : vector<8x128xf32>
    %69 = tpu.matmul %66, %68, %cst_27 {dimension_numbers = #tpu.dot_dimension_numbers<[1], [0], [0], [1], [0, 0, 1, 1], [], []>} : vector<8x16xbf16>, vector<16x128xbf16>, vector<8x128xf32> -> vector<8x128xf32>
    %70 = arith.addf %59, %69 : vector<8x128xf32>
    %71 = arith.truncf %65 : vector<8x16xf32> to vector<8x16xbf16>
    %c9 = arith.constant 9 : index
    %c0_28 = arith.constant 0 : index
    %c0_29 = arith.constant 0 : index
    %72 = vector.load %arg2[%c9, %c0_28, %c0_29] : memref<10x16x128xbf16, #tpu.memory_space<vmem>>, vector<1x16x128xbf16>
    %73 = vector.shape_cast %72 : vector<1x16x128xbf16> to vector<16x128xbf16>
    %cst_30 = arith.constant dense<0.000000e+00> : vector<8x128xf32>
    %74 = tpu.matmul %71, %73, %cst_30 {dimension_numbers = #tpu.dot_dimension_numbers<[1], [0], [0], [1], [0, 0, 1, 1], [], []>} : vector<8x16xbf16>, vector<16x128xbf16>, vector<8x128xf32> -> vector<8x128xf32>
    %75 = arith.addf %70, %74 : vector<8x128xf32>
    %c0_31 = arith.constant 0 : index
    %c0_32 = arith.constant 0 : index
    %76 = vector.load %arg3[%c0_31, %c0_32] : memref<1x128xf32, #tpu.memory_space<vmem>>, vector<1x128xf32>
    %77 = vector.broadcast %76 : vector<1x128xf32> to vector<8x128xf32>
    %78 = arith.addf %75, %77 : vector<8x128xf32>
    %79 = vector.extract_strided_slice %78 {offsets = [0, 0], sizes = [8, 32], strides = [1, 1]} : vector<8x128xf32> to vector<8x32xf32>
    %80 = math.tanh %79 : vector<8x32xf32>
    %81 = math.cos %80 : vector<8x32xf32>
    %82 = math.sin %80 : vector<8x32xf32>
    %83 = arith.truncf %81 : vector<8x32xf32> to vector<8x32xbf16>
    %c0_33 = arith.constant 0 : index
    %c0_34 = arith.constant 0 : index
    %c0_35 = arith.constant 0 : index
    %84 = vector.load %arg4[%c0_33, %c0_34, %c0_35] : memref<10x32x128xbf16, #tpu.memory_space<vmem>>, vector<1x32x128xbf16>
    %85 = vector.shape_cast %84 : vector<1x32x128xbf16> to vector<32x128xbf16>
    %cst_36 = arith.constant dense<0.000000e+00> : vector<8x128xf32>
    %86 = tpu.matmul %83, %85, %cst_36 {dimension_numbers = #tpu.dot_dimension_numbers<[1], [0], [0], [1], [0, 0, 1, 1], [], []>} : vector<8x32xbf16>, vector<32x128xbf16>, vector<8x128xf32> -> vector<8x128xf32>
    %87 = arith.truncf %82 : vector<8x32xf32> to vector<8x32xbf16>
    %c1_37 = arith.constant 1 : index
    %c0_38 = arith.constant 0 : index
    %c0_39 = arith.constant 0 : index
    %88 = vector.load %arg4[%c1_37, %c0_38, %c0_39] : memref<10x32x128xbf16, #tpu.memory_space<vmem>>, vector<1x32x128xbf16>
    %89 = vector.shape_cast %88 : vector<1x32x128xbf16> to vector<32x128xbf16>
    %cst_40 = arith.constant dense<0.000000e+00> : vector<8x128xf32>
    %90 = tpu.matmul %87, %89, %cst_40 {dimension_numbers = #tpu.dot_dimension_numbers<[1], [0], [0], [1], [0, 0, 1, 1], [], []>} : vector<8x32xbf16>, vector<32x128xbf16>, vector<8x128xf32> -> vector<8x128xf32>
    %91 = arith.addf %86, %90 : vector<8x128xf32>
    %92 = arith.mulf %81, %81 : vector<8x32xf32>
    %93 = arith.mulf %82, %82 : vector<8x32xf32>
    %94 = arith.subf %92, %93 : vector<8x32xf32>
    %95 = arith.mulf %82, %81 : vector<8x32xf32>
    %96 = arith.mulf %81, %82 : vector<8x32xf32>
    %97 = arith.addf %95, %96 : vector<8x32xf32>
    %98 = arith.truncf %94 : vector<8x32xf32> to vector<8x32xbf16>
    %c2_41 = arith.constant 2 : index
    %c0_42 = arith.constant 0 : index
    %c0_43 = arith.constant 0 : index
    %99 = vector.load %arg4[%c2_41, %c0_42, %c0_43] : memref<10x32x128xbf16, #tpu.memory_space<vmem>>, vector<1x32x128xbf16>
    %100 = vector.shape_cast %99 : vector<1x32x128xbf16> to vector<32x128xbf16>
    %cst_44 = arith.constant dense<0.000000e+00> : vector<8x128xf32>
    %101 = tpu.matmul %98, %100, %cst_44 {dimension_numbers = #tpu.dot_dimension_numbers<[1], [0], [0], [1], [0, 0, 1, 1], [], []>} : vector<8x32xbf16>, vector<32x128xbf16>, vector<8x128xf32> -> vector<8x128xf32>
    %102 = arith.addf %91, %101 : vector<8x128xf32>
    %103 = arith.truncf %97 : vector<8x32xf32> to vector<8x32xbf16>
    %c3_45 = arith.constant 3 : index
    %c0_46 = arith.constant 0 : index
    %c0_47 = arith.constant 0 : index
    %104 = vector.load %arg4[%c3_45, %c0_46, %c0_47] : memref<10x32x128xbf16, #tpu.memory_space<vmem>>, vector<1x32x128xbf16>
    %105 = vector.shape_cast %104 : vector<1x32x128xbf16> to vector<32x128xbf16>
    %cst_48 = arith.constant dense<0.000000e+00> : vector<8x128xf32>
    %106 = tpu.matmul %103, %105, %cst_48 {dimension_numbers = #tpu.dot_dimension_numbers<[1], [0], [0], [1], [0, 0, 1, 1], [], []>} : vector<8x32xbf16>, vector<32x128xbf16>, vector<8x128xf32> -> vector<8x128xf32>
    %107 = arith.addf %102, %106 : vector<8x128xf32>
    %108 = arith.mulf %94, %81 : vector<8x32xf32>
    %109 = arith.mulf %97, %82 : vector<8x32xf32>
    %110 = arith.subf %108, %109 : vector<8x32xf32>
    %111 = arith.mulf %97, %81 : vector<8x32xf32>
    %112 = arith.mulf %94, %82 : vector<8x32xf32>
    %113 = arith.addf %111, %112 : vector<8x32xf32>
    %114 = arith.truncf %110 : vector<8x32xf32> to vector<8x32xbf16>
    %c4_49 = arith.constant 4 : index
    %c0_50 = arith.constant 0 : index
    %c0_51 = arith.constant 0 : index
    %115 = vector.load %arg4[%c4_49, %c0_50, %c0_51] : memref<10x32x128xbf16, #tpu.memory_space<vmem>>, vector<1x32x128xbf16>
    %116 = vector.shape_cast %115 : vector<1x32x128xbf16> to vector<32x128xbf16>
    %cst_52 = arith.constant dense<0.000000e+00> : vector<8x128xf32>
    %117 = tpu.matmul %114, %116, %cst_52 {dimension_numbers = #tpu.dot_dimension_numbers<[1], [0], [0], [1], [0, 0, 1, 1], [], []>} : vector<8x32xbf16>, vector<32x128xbf16>, vector<8x128xf32> -> vector<8x128xf32>
    %118 = arith.addf %107, %117 : vector<8x128xf32>
    %119 = arith.truncf %113 : vector<8x32xf32> to vector<8x32xbf16>
    %c5_53 = arith.constant 5 : index
    %c0_54 = arith.constant 0 : index
    %c0_55 = arith.constant 0 : index
    %120 = vector.load %arg4[%c5_53, %c0_54, %c0_55] : memref<10x32x128xbf16, #tpu.memory_space<vmem>>, vector<1x32x128xbf16>
    %121 = vector.shape_cast %120 : vector<1x32x128xbf16> to vector<32x128xbf16>
    %cst_56 = arith.constant dense<0.000000e+00> : vector<8x128xf32>
    %122 = tpu.matmul %119, %121, %cst_56 {dimension_numbers = #tpu.dot_dimension_numbers<[1], [0], [0], [1], [0, 0, 1, 1], [], []>} : vector<8x32xbf16>, vector<32x128xbf16>, vector<8x128xf32> -> vector<8x128xf32>
    %123 = arith.addf %118, %122 : vector<8x128xf32>
    %124 = arith.mulf %110, %81 : vector<8x32xf32>
    %125 = arith.mulf %113, %82 : vector<8x32xf32>
    %126 = arith.subf %124, %125 : vector<8x32xf32>
    %127 = arith.mulf %113, %81 : vector<8x32xf32>
    %128 = arith.mulf %110, %82 : vector<8x32xf32>
    %129 = arith.addf %127, %128 : vector<8x32xf32>
    %130 = arith.truncf %126 : vector<8x32xf32> to vector<8x32xbf16>
    %c6_57 = arith.constant 6 : index
    %c0_58 = arith.constant 0 : index
    %c0_59 = arith.constant 0 : index
    %131 = vector.load %arg4[%c6_57, %c0_58, %c0_59] : memref<10x32x128xbf16, #tpu.memory_space<vmem>>, vector<1x32x128xbf16>
    %132 = vector.shape_cast %131 : vector<1x32x128xbf16> to vector<32x128xbf16>
    %cst_60 = arith.constant dense<0.000000e+00> : vector<8x128xf32>
    %133 = tpu.matmul %130, %132, %cst_60 {dimension_numbers = #tpu.dot_dimension_numbers<[1], [0], [0], [1], [0, 0, 1, 1], [], []>} : vector<8x32xbf16>, vector<32x128xbf16>, vector<8x128xf32> -> vector<8x128xf32>
    %134 = arith.addf %123, %133 : vector<8x128xf32>
    %135 = arith.truncf %129 : vector<8x32xf32> to vector<8x32xbf16>
    %c7_61 = arith.constant 7 : index
    %c0_62 = arith.constant 0 : index
    %c0_63 = arith.constant 0 : index
    %136 = vector.load %arg4[%c7_61, %c0_62, %c0_63] : memref<10x32x128xbf16, #tpu.memory_space<vmem>>, vector<1x32x128xbf16>
    %137 = vector.shape_cast %136 : vector<1x32x128xbf16> to vector<32x128xbf16>
    %cst_64 = arith.constant dense<0.000000e+00> : vector<8x128xf32>
    %138 = tpu.matmul %135, %137, %cst_64 {dimension_numbers = #tpu.dot_dimension_numbers<[1], [0], [0], [1], [0, 0, 1, 1], [], []>} : vector<8x32xbf16>, vector<32x128xbf16>, vector<8x128xf32> -> vector<8x128xf32>
    %139 = arith.addf %134, %138 : vector<8x128xf32>
    %140 = arith.mulf %126, %81 : vector<8x32xf32>
    %141 = arith.mulf %129, %82 : vector<8x32xf32>
    %142 = arith.subf %140, %141 : vector<8x32xf32>
    %143 = arith.mulf %129, %81 : vector<8x32xf32>
    %144 = arith.mulf %126, %82 : vector<8x32xf32>
    %145 = arith.addf %143, %144 : vector<8x32xf32>
    %146 = arith.truncf %142 : vector<8x32xf32> to vector<8x32xbf16>
    %c8_65 = arith.constant 8 : index
    %c0_66 = arith.constant 0 : index
    %c0_67 = arith.constant 0 : index
    %147 = vector.load %arg4[%c8_65, %c0_66, %c0_67] : memref<10x32x128xbf16, #tpu.memory_space<vmem>>, vector<1x32x128xbf16>
    %148 = vector.shape_cast %147 : vector<1x32x128xbf16> to vector<32x128xbf16>
    %cst_68 = arith.constant dense<0.000000e+00> : vector<8x128xf32>
    %149 = tpu.matmul %146, %148, %cst_68 {dimension_numbers = #tpu.dot_dimension_numbers<[1], [0], [0], [1], [0, 0, 1, 1], [], []>} : vector<8x32xbf16>, vector<32x128xbf16>, vector<8x128xf32> -> vector<8x128xf32>
    %150 = arith.addf %139, %149 : vector<8x128xf32>
    %151 = arith.truncf %145 : vector<8x32xf32> to vector<8x32xbf16>
    %c9_69 = arith.constant 9 : index
    %c0_70 = arith.constant 0 : index
    %c0_71 = arith.constant 0 : index
    %152 = vector.load %arg4[%c9_69, %c0_70, %c0_71] : memref<10x32x128xbf16, #tpu.memory_space<vmem>>, vector<1x32x128xbf16>
    %153 = vector.shape_cast %152 : vector<1x32x128xbf16> to vector<32x128xbf16>
    %cst_72 = arith.constant dense<0.000000e+00> : vector<8x128xf32>
    %154 = tpu.matmul %151, %153, %cst_72 {dimension_numbers = #tpu.dot_dimension_numbers<[1], [0], [0], [1], [0, 0, 1, 1], [], []>} : vector<8x32xbf16>, vector<32x128xbf16>, vector<8x128xf32> -> vector<8x128xf32>
    %155 = arith.addf %150, %154 : vector<8x128xf32>
    %c0_73 = arith.constant 0 : index
    %c0_74 = arith.constant 0 : index
    %156 = vector.load %arg5[%c0_73, %c0_74] : memref<1x128xf32, #tpu.memory_space<vmem>>, vector<1x128xf32>
    %157 = vector.broadcast %156 : vector<1x128xf32> to vector<8x128xf32>
    %158 = arith.addf %155, %157 : vector<8x128xf32>
    %159 = vector.extract_strided_slice %158 {offsets = [0, 0], sizes = [8, 32], strides = [1, 1]} : vector<8x128xf32> to vector<8x32xf32>
    %160 = math.tanh %159 : vector<8x32xf32>
    %161 = math.cos %160 : vector<8x32xf32>
    %162 = math.sin %160 : vector<8x32xf32>
    %163 = arith.truncf %161 : vector<8x32xf32> to vector<8x32xbf16>
    %c0_75 = arith.constant 0 : index
    %c0_76 = arith.constant 0 : index
    %c0_77 = arith.constant 0 : index
    %164 = vector.load %arg6[%c0_75, %c0_76, %c0_77] : memref<10x32x128xbf16, #tpu.memory_space<vmem>>, vector<1x32x128xbf16>
    %165 = vector.shape_cast %164 : vector<1x32x128xbf16> to vector<32x128xbf16>
    %cst_78 = arith.constant dense<0.000000e+00> : vector<8x128xf32>
    %166 = tpu.matmul %163, %165, %cst_78 {dimension_numbers = #tpu.dot_dimension_numbers<[1], [0], [0], [1], [0, 0, 1, 1], [], []>} : vector<8x32xbf16>, vector<32x128xbf16>, vector<8x128xf32> -> vector<8x128xf32>
    %167 = arith.truncf %162 : vector<8x32xf32> to vector<8x32xbf16>
    %c1_79 = arith.constant 1 : index
    %c0_80 = arith.constant 0 : index
    %c0_81 = arith.constant 0 : index
    %168 = vector.load %arg6[%c1_79, %c0_80, %c0_81] : memref<10x32x128xbf16, #tpu.memory_space<vmem>>, vector<1x32x128xbf16>
    %169 = vector.shape_cast %168 : vector<1x32x128xbf16> to vector<32x128xbf16>
    %cst_82 = arith.constant dense<0.000000e+00> : vector<8x128xf32>
    %170 = tpu.matmul %167, %169, %cst_82 {dimension_numbers = #tpu.dot_dimension_numbers<[1], [0], [0], [1], [0, 0, 1, 1], [], []>} : vector<8x32xbf16>, vector<32x128xbf16>, vector<8x128xf32> -> vector<8x128xf32>
    %171 = arith.addf %166, %170 : vector<8x128xf32>
    %172 = arith.mulf %161, %161 : vector<8x32xf32>
    %173 = arith.mulf %162, %162 : vector<8x32xf32>
    %174 = arith.subf %172, %173 : vector<8x32xf32>
    %175 = arith.mulf %162, %161 : vector<8x32xf32>
    %176 = arith.mulf %161, %162 : vector<8x32xf32>
    %177 = arith.addf %175, %176 : vector<8x32xf32>
    %178 = arith.truncf %174 : vector<8x32xf32> to vector<8x32xbf16>
    %c2_83 = arith.constant 2 : index
    %c0_84 = arith.constant 0 : index
    %c0_85 = arith.constant 0 : index
    %179 = vector.load %arg6[%c2_83, %c0_84, %c0_85] : memref<10x32x128xbf16, #tpu.memory_space<vmem>>, vector<1x32x128xbf16>
    %180 = vector.shape_cast %179 : vector<1x32x128xbf16> to vector<32x128xbf16>
    %cst_86 = arith.constant dense<0.000000e+00> : vector<8x128xf32>
    %181 = tpu.matmul %178, %180, %cst_86 {dimension_numbers = #tpu.dot_dimension_numbers<[1], [0], [0], [1], [0, 0, 1, 1], [], []>} : vector<8x32xbf16>, vector<32x128xbf16>, vector<8x128xf32> -> vector<8x128xf32>
    %182 = arith.addf %171, %181 : vector<8x128xf32>
    %183 = arith.truncf %177 : vector<8x32xf32> to vector<8x32xbf16>
    %c3_87 = arith.constant 3 : index
    %c0_88 = arith.constant 0 : index
    %c0_89 = arith.constant 0 : index
    %184 = vector.load %arg6[%c3_87, %c0_88, %c0_89] : memref<10x32x128xbf16, #tpu.memory_space<vmem>>, vector<1x32x128xbf16>
    %185 = vector.shape_cast %184 : vector<1x32x128xbf16> to vector<32x128xbf16>
    %cst_90 = arith.constant dense<0.000000e+00> : vector<8x128xf32>
    %186 = tpu.matmul %183, %185, %cst_90 {dimension_numbers = #tpu.dot_dimension_numbers<[1], [0], [0], [1], [0, 0, 1, 1], [], []>} : vector<8x32xbf16>, vector<32x128xbf16>, vector<8x128xf32> -> vector<8x128xf32>
    %187 = arith.addf %182, %186 : vector<8x128xf32>
    %188 = arith.mulf %174, %161 : vector<8x32xf32>
    %189 = arith.mulf %177, %162 : vector<8x32xf32>
    %190 = arith.subf %188, %189 : vector<8x32xf32>
    %191 = arith.mulf %177, %161 : vector<8x32xf32>
    %192 = arith.mulf %174, %162 : vector<8x32xf32>
    %193 = arith.addf %191, %192 : vector<8x32xf32>
    %194 = arith.truncf %190 : vector<8x32xf32> to vector<8x32xbf16>
    %c4_91 = arith.constant 4 : index
    %c0_92 = arith.constant 0 : index
    %c0_93 = arith.constant 0 : index
    %195 = vector.load %arg6[%c4_91, %c0_92, %c0_93] : memref<10x32x128xbf16, #tpu.memory_space<vmem>>, vector<1x32x128xbf16>
    %196 = vector.shape_cast %195 : vector<1x32x128xbf16> to vector<32x128xbf16>
    %cst_94 = arith.constant dense<0.000000e+00> : vector<8x128xf32>
    %197 = tpu.matmul %194, %196, %cst_94 {dimension_numbers = #tpu.dot_dimension_numbers<[1], [0], [0], [1], [0, 0, 1, 1], [], []>} : vector<8x32xbf16>, vector<32x128xbf16>, vector<8x128xf32> -> vector<8x128xf32>
    %198 = arith.addf %187, %197 : vector<8x128xf32>
    %199 = arith.truncf %193 : vector<8x32xf32> to vector<8x32xbf16>
    %c5_95 = arith.constant 5 : index
    %c0_96 = arith.constant 0 : index
    %c0_97 = arith.constant 0 : index
    %200 = vector.load %arg6[%c5_95, %c0_96, %c0_97] : memref<10x32x128xbf16, #tpu.memory_space<vmem>>, vector<1x32x128xbf16>
    %201 = vector.shape_cast %200 : vector<1x32x128xbf16> to vector<32x128xbf16>
    %cst_98 = arith.constant dense<0.000000e+00> : vector<8x128xf32>
    %202 = tpu.matmul %199, %201, %cst_98 {dimension_numbers = #tpu.dot_dimension_numbers<[1], [0], [0], [1], [0, 0, 1, 1], [], []>} : vector<8x32xbf16>, vector<32x128xbf16>, vector<8x128xf32> -> vector<8x128xf32>
    %203 = arith.addf %198, %202 : vector<8x128xf32>
    %204 = arith.mulf %190, %161 : vector<8x32xf32>
    %205 = arith.mulf %193, %162 : vector<8x32xf32>
    %206 = arith.subf %204, %205 : vector<8x32xf32>
    %207 = arith.mulf %193, %161 : vector<8x32xf32>
    %208 = arith.mulf %190, %162 : vector<8x32xf32>
    %209 = arith.addf %207, %208 : vector<8x32xf32>
    %210 = arith.truncf %206 : vector<8x32xf32> to vector<8x32xbf16>
    %c6_99 = arith.constant 6 : index
    %c0_100 = arith.constant 0 : index
    %c0_101 = arith.constant 0 : index
    %211 = vector.load %arg6[%c6_99, %c0_100, %c0_101] : memref<10x32x128xbf16, #tpu.memory_space<vmem>>, vector<1x32x128xbf16>
    %212 = vector.shape_cast %211 : vector<1x32x128xbf16> to vector<32x128xbf16>
    %cst_102 = arith.constant dense<0.000000e+00> : vector<8x128xf32>
    %213 = tpu.matmul %210, %212, %cst_102 {dimension_numbers = #tpu.dot_dimension_numbers<[1], [0], [0], [1], [0, 0, 1, 1], [], []>} : vector<8x32xbf16>, vector<32x128xbf16>, vector<8x128xf32> -> vector<8x128xf32>
    %214 = arith.addf %203, %213 : vector<8x128xf32>
    %215 = arith.truncf %209 : vector<8x32xf32> to vector<8x32xbf16>
    %c7_103 = arith.constant 7 : index
    %c0_104 = arith.constant 0 : index
    %c0_105 = arith.constant 0 : index
    %216 = vector.load %arg6[%c7_103, %c0_104, %c0_105] : memref<10x32x128xbf16, #tpu.memory_space<vmem>>, vector<1x32x128xbf16>
    %217 = vector.shape_cast %216 : vector<1x32x128xbf16> to vector<32x128xbf16>
    %cst_106 = arith.constant dense<0.000000e+00> : vector<8x128xf32>
    %218 = tpu.matmul %215, %217, %cst_106 {dimension_numbers = #tpu.dot_dimension_numbers<[1], [0], [0], [1], [0, 0, 1, 1], [], []>} : vector<8x32xbf16>, vector<32x128xbf16>, vector<8x128xf32> -> vector<8x128xf32>
    %219 = arith.addf %214, %218 : vector<8x128xf32>
    %220 = arith.mulf %206, %161 : vector<8x32xf32>
    %221 = arith.mulf %209, %162 : vector<8x32xf32>
    %222 = arith.subf %220, %221 : vector<8x32xf32>
    %223 = arith.mulf %209, %161 : vector<8x32xf32>
    %224 = arith.mulf %206, %162 : vector<8x32xf32>
    %225 = arith.addf %223, %224 : vector<8x32xf32>
    %226 = arith.truncf %222 : vector<8x32xf32> to vector<8x32xbf16>
    %c8_107 = arith.constant 8 : index
    %c0_108 = arith.constant 0 : index
    %c0_109 = arith.constant 0 : index
    %227 = vector.load %arg6[%c8_107, %c0_108, %c0_109] : memref<10x32x128xbf16, #tpu.memory_space<vmem>>, vector<1x32x128xbf16>
    %228 = vector.shape_cast %227 : vector<1x32x128xbf16> to vector<32x128xbf16>
    %cst_110 = arith.constant dense<0.000000e+00> : vector<8x128xf32>
    %229 = tpu.matmul %226, %228, %cst_110 {dimension_numbers = #tpu.dot_dimension_numbers<[1], [0], [0], [1], [0, 0, 1, 1], [], []>} : vector<8x32xbf16>, vector<32x128xbf16>, vector<8x128xf32> -> vector<8x128xf32>
    %230 = arith.addf %219, %229 : vector<8x128xf32>
    %231 = arith.truncf %225 : vector<8x32xf32> to vector<8x32xbf16>
    %c9_111 = arith.constant 9 : index
    %c0_112 = arith.constant 0 : index
    %c0_113 = arith.constant 0 : index
    %232 = vector.load %arg6[%c9_111, %c0_112, %c0_113] : memref<10x32x128xbf16, #tpu.memory_space<vmem>>, vector<1x32x128xbf16>
    %233 = vector.shape_cast %232 : vector<1x32x128xbf16> to vector<32x128xbf16>
    %cst_114 = arith.constant dense<0.000000e+00> : vector<8x128xf32>
    %234 = tpu.matmul %231, %233, %cst_114 {dimension_numbers = #tpu.dot_dimension_numbers<[1], [0], [0], [1], [0, 0, 1, 1], [], []>} : vector<8x32xbf16>, vector<32x128xbf16>, vector<8x128xf32> -> vector<8x128xf32>
    %235 = arith.addf %230, %234 : vector<8x128xf32>
    %c0_115 = arith.constant 0 : index
    %c0_116 = arith.constant 0 : index
    %236 = vector.load %arg7[%c0_115, %c0_116] : memref<1x128xf32, #tpu.memory_space<vmem>>, vector<1x128xf32>
    %237 = vector.broadcast %236 : vector<1x128xf32> to vector<8x128xf32>
    %238 = arith.addf %235, %237 : vector<8x128xf32>
    %c0_117 = arith.constant 0 : index
    %c0_118 = arith.constant 0 : index
    %239 = vector.load %arg8[%c0_117, %c0_118] : memref<8x128xf32, #tpu.memory_space<vmem>>, vector<8x128xf32>
    tpu.vector_store %arg8[%c0_117, %c0_118], %238 {strides = array<i32>} : memref<8x128xf32, #tpu.memory_space<vmem>>, vector<8x128xf32>,
    return
  }
  func.func @transform_0(%arg0: i32) -> (i32, i32) {
    %c0_i32 = arith.constant 0 : i32
    %c0_i32_0 = arith.constant 0 : i32
    return %arg0, %c0_i32 : i32, i32
  }
  func.func @transform_1(%arg0: i32) -> (i32, i32, i32) {
    %c0_i32 = arith.constant 0 : i32
    %c0_i32_0 = arith.constant 0 : i32
    %c0_i32_1 = arith.constant 0 : i32
    %c0_i32_2 = arith.constant 0 : i32
    return %c0_i32, %c0_i32_0, %c0_i32_1 : i32, i32, i32
  }
  func.func @transform_2(%arg0: i32) -> (i32, i32) {
    %c0_i32 = arith.constant 0 : i32
    %c0_i32_0 = arith.constant 0 : i32
    %c0_i32_1 = arith.constant 0 : i32
    return %c0_i32, %c0_i32_0 : i32, i32
  }
  func.func @transform_3(%arg0: i32) -> (i32, i32, i32) {
    %c0_i32 = arith.constant 0 : i32
    %c0_i32_0 = arith.constant 0 : i32
    %c0_i32_1 = arith.constant 0 : i32
    %c0_i32_2 = arith.constant 0 : i32
    return %c0_i32, %c0_i32_0, %c0_i32_1 : i32, i32, i32
  }
  func.func @transform_4(%arg0: i32) -> (i32, i32) {
    %c0_i32 = arith.constant 0 : i32
    %c0_i32_0 = arith.constant 0 : i32
    %c0_i32_1 = arith.constant 0 : i32
    return %c0_i32, %c0_i32_0 : i32, i32
  }
  func.func @transform_5(%arg0: i32) -> (i32, i32, i32) {
    %c0_i32 = arith.constant 0 : i32
    %c0_i32_0 = arith.constant 0 : i32
    %c0_i32_1 = arith.constant 0 : i32
    %c0_i32_2 = arith.constant 0 : i32
    return %c0_i32, %c0_i32_0, %c0_i32_1 : i32, i32, i32
  }
  func.func @transform_6(%arg0: i32) -> (i32, i32) {
    %c0_i32 = arith.constant 0 : i32
    %c0_i32_0 = arith.constant 0 : i32
    %c0_i32_1 = arith.constant 0 : i32
    return %c0_i32, %c0_i32_0 : i32, i32
  }
  func.func @transform_7(%arg0: i32) -> (i32, i32) {
    %c0_i32 = arith.constant 0 : i32
    %c0_i32_0 = arith.constant 0 : i32
    return %arg0, %c0_i32 : i32, i32
  }
}

module attributes {stable_mosaic.version = 11 : i64} {
  func.func @fused_fftkan_kernel(%arg0: i32, %arg1: memref<8x16xf32, #tpu.memory_space<vmem>>, %arg2: memref<10x16x128xbf16, #tpu.memory_space<vmem>>, %arg3: memref<1x128xf32, #tpu.memory_space<vmem>>, %arg4: memref<10x32x128xbf16, #tpu.memory_space<vmem>>, %arg5: memref<1x128xf32, #tpu.memory_space<vmem>>, %arg6: memref<10x32x128xbf16, #tpu.memory_space<vmem>>, %arg7: memref<1x128xf32, #tpu.memory_space<vmem>>, %arg8: memref<8x128xf32, #tpu.memory_space<vmem>>) attributes {dimension_semantics = [#tpu.dimension_semantics<parallel>], iteration_bounds = array<i64: 2>, scalar_prefetch = 0 : i64, scratch_operands = 0 : i64, tpu.core_type = #tpu.core_type<tc>, window_params = [{transform_indices = @transform_0, window_bounds = array<i64: 8, 16>}, {pipeline_mode = #tpu.pipeline_mode<synchronous>, transform_indices = @transform_1, window_bounds = array<i64: 10, 16, 128>}, {pipeline_mode = #tpu.pipeline_mode<synchronous>, transform_indices = @transform_2, window_bounds = array<i64: 1, 128>}, {pipeline_mode = #tpu.pipeline_mode<synchronous>, transform_indices = @transform_3, window_bounds = array<i64: 10, 32, 128>}, {pipeline_mode = #tpu.pipeline_mode<synchronous>, transform_indices = @transform_4, window_bounds = array<i64: 1, 128>}, {pipeline_mode = #tpu.pipeline_mode<synchronous>, transform_indices = @transform_5, window_bounds = array<i64: 10, 32, 128>}, {pipeline_mode = #tpu.pipeline_mode<synchronous>, transform_indices = @transform_6, window_bounds = array<i64: 1, 128>}, {transform_indices = @transform_7, window_bounds = array<i64: 8, 128>}]} {
    %c0 = arith.constant 0 : index
    %c0_0 = arith.constant 0 : index
    %0 = vector.load %arg1[%c0, %c0_0] : memref<8x16xf32, #tpu.memory_space<vmem>>, vector<8x16xf32>
    %1 = math.cos %0 : vector<8x16xf32>
    %2 = math.sin %0 : vector<8x16xf32>
    %3 = arith.truncf %1 : vector<8x16xf32> to vector<8x16xbf16>
    %c0_1 = arith.constant 0 : index
    %c0_2 = arith.constant 0 : index
    %c0_3 = arith.constant 0 : index
    %4 = vector.load %arg2[%c0_1, %c0_2, %c0_3] : memref<10x16x128xbf16, #tpu.memory_space<vmem>>, vector<1x16x128xbf16>
    %5 = vector.shape_cast %4 : vector<1x16x128xbf16> to vector<16x128xbf16>
    %cst = arith.constant dense<0.000000e+00> : vector<8x128xf32>
    %6 = tpu.matmul %3, %5, %cst {dimension_numbers = #tpu.dot_dimension_numbers<[1], [0], [0], [1], [0, 0, 1, 1], [], []>} : vector<8x16xbf16>, vector<16x128xbf16>, vector<8x128xf32> -> vector<8x128xf32>
    %7 = arith.truncf %2 : vector<8x16xf32> to vector<8x16xbf16>
    %c1 = arith.constant 1 : index
    %c0_4 = arith.constant 0 : index
    %c0_5 = arith.constant 0 : index
    %8 = vector.load %arg2[%c1, %c0_4, %c0_5] : memref<10x16x128xbf16, #tpu.memory_space<vmem>>, vector<1x16x128xbf16>
    %9 = vector.shape_cast %8 : vector<1x16x128xbf16> to vector<16x128xbf16>
    %cst_6 = arith.constant dense<0.000000e+00> : vector<8x128xf32>
    %10 = tpu.matmul %7, %9, %cst_6 {dimension_numbers = #tpu.dot_dimension_numbers<[1], [0], [0], [1], [0, 0, 1, 1], [], []>} : vector<8x16xbf16>, vector<16x128xbf16>, vector<8x128xf32> -> vector<8x128xf32>
    %11 = arith.addf %6, %10 : vector<8x128xf32>
    %12 = arith.mulf %1, %1 : vector<8x16xf32>
    %13 = arith.mulf %2, %2 : vector<8x16xf32>
    %14 = arith.subf %12, %13 : vector<8x16xf32>
    %15 = arith.mulf %2, %1 : vector<8x16xf32>
    %16 = arith.mulf %1, %2 : vector<8x16xf32>
    %17 = arith.addf %15, %16 : vector<8x16xf32>
    %18 = arith.truncf %14 : vector<8x16xf32> to vector<8x16xbf16>
    %c2 = arith.constant 2 : index
    %c0_7 = arith.constant 0 : index
    %c0_8 = arith.constant 0 : index
    %19 = vector.load %arg2[%c2, %c0_7, %c0_8] : memref<10x16x128xbf16, #tpu.memory_space<vmem>>, vector<1x16x128xbf16>
    %20 = vector.shape_cast %19 : vector<1x16x128xbf16> to vector<16x128xbf16>
    %cst_9 = arith.constant dense<0.000000e+00> : vector<8x128xf32>
    %21 = tpu.matmul %18, %20, %cst_9 {dimension_numbers = #tpu.dot_dimension_numbers<[1], [0], [0], [1], [0, 0, 1, 1], [], []>} : vector<8x16xbf16>, vector<16x128xbf16>, vector<8x128xf32> -> vector<8x128xf32>
    %22 = arith.addf %11, %21 : vector<8x128xf32>
    %23 = arith.truncf %17 : vector<8x16xf32> to vector<8x16xbf16>
    %c3 = arith.constant 3 : index
    %c0_10 = arith.constant 0 : index
    %c0_11 = arith.constant 0 : index
    %24 = vector.load %arg2[%c3, %c0_10, %c0_11] : memref<10x16x128xbf16, #tpu.memory_space<vmem>>, vector<1x16x128xbf16>
    %25 = vector.shape_cast %24 : vector<1x16x128xbf16> to vector<16x128xbf16>
    %cst_12 = arith.constant dense<0.000000e+00> : vector<8x128xf32>
    %26 = tpu.matmul %23, %25, %cst_12 {dimension_numbers = #tpu.dot_dimension_numbers<[1], [0], [0], [1], [0, 0, 1, 1], [], []>} : vector<8x16xbf16>, vector<16x128xbf16>, vector<8x128xf32> -> vector<8x128xf32>
    %27 = arith.addf %22, %26 : vector<8x128xf32>
    %28 = arith.mulf %14, %1 : vector<8x16xf32>
    %29 = arith.mulf %17, %2 : vector<8x16xf32>
    %30 = arith.subf %28, %29 : vector<8x16xf32>
    %31 = arith.mulf %17, %1 : vector<8x16xf32>
    %32 = arith.mulf %14, %2 : vector<8x16xf32>
    %33 = arith.addf %31, %32 : vector<8x16xf32>
    %34 = arith.truncf %30 : vector<8x16xf32> to vector<8x16xbf16>
    %c4 = arith.constant 4 : index
    %c0_13 = arith.constant 0 : index
    %c0_14 = arith.constant 0 : index
    %35 = vector.load %arg2[%c4, %c0_13, %c0_14] : memref<10x16x128xbf16, #tpu.memory_space<vmem>>, vector<1x16x128xbf16>
    %36 = vector.shape_cast %35 : vector<1x16x128xbf16> to vector<16x128xbf16>
    %cst_15 = arith.constant dense<0.000000e+00> : vector<8x128xf32>
    %37 = tpu.matmul %34, %36, %cst_15 {dimension_numbers = #tpu.dot_dimension_numbers<[1], [0], [0], [1], [0, 0, 1, 1], [], []>} : vector<8x16xbf16>, vector<16x128xbf16>, vector<8x128xf32> -> vector<8x128xf32>
    %38 = arith.addf %27, %37 : vector<8x128xf32>
    %39 = arith.truncf %33 : vector<8x16xf32> to vector<8x16xbf16>
    %c5 = arith.constant 5 : index
    %c0_16 = arith.constant 0 : index
    %c0_17 = arith.constant 0 : index
    %40 = vector.load %arg2[%c5, %c0_16, %c0_17] : memref<10x16x128xbf16, #tpu.memory_space<vmem>>, vector<1x16x128xbf16>
    %41 = vector.shape_cast %40 : vector<1x16x128xbf16> to vector<16x128xbf16>
    %cst_18 = arith.constant dense<0.000000e+00> : vector<8x128xf32>
    %42 = tpu.matmul %39, %41, %cst_18 {dimension_numbers = #tpu.dot_dimension_numbers<[1], [0], [0], [1], [0, 0, 1, 1], [], []>} : vector<8x16xbf16>, vector<16x128xbf16>, vector<8x128xf32> -> vector<8x128xf32>
    %43 = arith.addf %38, %42 : vector<8x128xf32>
    %44 = arith.mulf %30, %1 : vector<8x16xf32>
    %45 = arith.mulf %33, %2 : vector<8x16xf32>
    %46 = arith.subf %44, %45 : vector<8x16xf32>
    %47 = arith.mulf %33, %1 : vector<8x16xf32>
    %48 = arith.mulf %30, %2 : vector<8x16xf32>
    %49 = arith.addf %47, %48 : vector<8x16xf32>
    %50 = arith.truncf %46 : vector<8x16xf32> to vector<8x16xbf16>
    %c6 = arith.constant 6 : index
    %c0_19 = arith.constant 0 : index
    %c0_20 = arith.constant 0 : index
    %51 = vector.load %arg2[%c6, %c0_19, %c0_20] : memref<10x16x128xbf16, #tpu.memory_space<vmem>>, vector<1x16x128xbf16>
    %52 = vector.shape_cast %51 : vector<1x16x128xbf16> to vector<16x128xbf16>
    %cst_21 = arith.constant dense<0.000000e+00> : vector<8x128xf32>
    %53 = tpu.matmul %50, %52, %cst_21 {dimension_numbers = #tpu.dot_dimension_numbers<[1], [0], [0], [1], [0, 0, 1, 1], [], []>} : vector<8x16xbf16>, vector<16x128xbf16>, vector<8x128xf32> -> vector<8x128xf32>
    %54 = arith.addf %43, %53 : vector<8x128xf32>
    %55 = arith.truncf %49 : vector<8x16xf32> to vector<8x16xbf16>
    %c7 = arith.constant 7 : index
    %c0_22 = arith.constant 0 : index
    %c0_23 = arith.constant 0 : index
    %56 = vector.load %arg2[%c7, %c0_22, %c0_23] : memref<10x16x128xbf16, #tpu.memory_space<vmem>>, vector<1x16x128xbf16>
    %57 = vector.shape_cast %56 : vector<1x16x128xbf16> to vector<16x128xbf16>
    %cst_24 = arith.constant dense<0.000000e+00> : vector<8x128xf32>
    %58 = tpu.matmul %55, %57, %cst_24 {dimension_numbers = #tpu.dot_dimension_numbers<[1], [0], [0], [1], [0, 0, 1, 1], [], []>} : vector<8x16xbf16>, vector<16x128xbf16>, vector<8x128xf32> -> vector<8x128xf32>
    %59 = arith.addf %54, %58 : vector<8x128xf32>
    %60 = arith.mulf %46, %1 : vector<8x16xf32>
    %61 = arith.mulf %49, %2 : vector<8x16xf32>
    %62 = arith.subf %60, %61 : vector<8x16xf32>
    %63 = arith.mulf %49, %1 : vector<8x16xf32>
    %64 = arith.mulf %46, %2 : vector<8x16xf32>
    %65 = arith.addf %63, %64 : vector<8x16xf32>
    %66 = arith.truncf %62 : vector<8x16xf32> to vector<8x16xbf16>
    %c8 = arith.constant 8 : index
    %c0_25 = arith.constant 0 : index
    %c0_26 = arith.constant 0 : index
    %67 = vector.load %arg2[%c8, %c0_25, %c0_26] : memref<10x16x128xbf16, #tpu.memory_space<vmem>>, vector<1x16x128xbf16>
    %68 = vector.shape_cast %67 : vector<1x16x128xbf16> to vector<16x128xbf16>
    %cst_27 = arith.constant dense<0.000000e+00> : vector<8x128xf32>
    %69 = tpu.matmul %66, %68, %cst_27 {dimension_numbers = #tpu.dot_dimension_numbers<[1], [0], [0], [1], [0, 0, 1, 1], [], []>} : vector<8x16xbf16>, vector<16x128xbf16>, vector<8x128xf32> -> vector<8x128xf32>
    %70 = arith.addf %59, %69 : vector<8x128xf32>
    %71 = arith.truncf %65 : vector<8x16xf32> to vector<8x16xbf16>
    %c9 = arith.constant 9 : index
    %c0_28 = arith.constant 0 : index
    %c0_29 = arith.constant 0 : index
    %72 = vector.load %arg2[%c9, %c0_28, %c0_29] : memref<10x16x128xbf16, #tpu.memory_space<vmem>>, vector<1x16x128xbf16>
    %73 = vector.shape_cast %72 : vector<1x16x128xbf16> to vector<16x128xbf16>
    %cst_30 = arith.constant dense<0.000000e+00> : vector<8x128xf32>
    %74 = tpu.matmul %71, %73, %cst_30 {dimension_numbers = #tpu.dot_dimension_numbers<[1], [0], [0], [1], [0, 0, 1, 1], [], []>} : vector<8x16xbf16>, vector<16x128xbf16>, vector<8x128xf32> -> vector<8x128xf32>
    %75 = arith.addf %70, %74 : vector<8x128xf32>
    %c0_31 = arith.constant 0 : index
    %c0_32 = arith.constant 0 : index
    %76 = vector.load %arg3[%c0_31, %c0_32] : memref<1x128xf32, #tpu.memory_space<vmem>>, vector<1x128xf32>
    %77 = vector.broadcast %76 : vector<1x128xf32> to vector<8x128xf32>
    %78 = arith.addf %75, %77 : vector<8x128xf32>
    %79 = vector.extract_strided_slice %78 {offsets = [0, 0], sizes = [8, 32], strides = [1, 1]} : vector<8x128xf32> to vector<8x32xf32>
    %80 = math.tanh %79 : vector<8x32xf32>
    %81 = math.cos %80 : vector<8x32xf32>
    %82 = math.sin %80 : vector<8x32xf32>
    %83 = arith.truncf %81 : vector<8x32xf32> to vector<8x32xbf16>
    %c0_33 = arith.constant 0 : index
    %c0_34 = arith.constant 0 : index
    %c0_35 = arith.constant 0 : index
    %84 = vector.load %arg4[%c0_33, %c0_34, %c0_35] : memref<10x32x128xbf16, #tpu.memory_space<vmem>>, vector<1x32x128xbf16>
    %85 = vector.shape_cast %84 : vector<1x32x128xbf16> to vector<32x128xbf16>
    %cst_36 = arith.constant dense<0.000000e+00> : vector<8x128xf32>
    %86 = tpu.matmul %83, %85, %cst_36 {dimension_numbers = #tpu.dot_dimension_numbers<[1], [0], [0], [1], [0, 0, 1, 1], [], []>} : vector<8x32xbf16>, vector<32x128xbf16>, vector<8x128xf32> -> vector<8x128xf32>
    %87 = arith.truncf %82 : vector<8x32xf32> to vector<8x32xbf16>
    %c1_37 = arith.constant 1 : index
    %c0_38 = arith.constant 0 : index
    %c0_39 = arith.constant 0 : index
    %88 = vector.load %arg4[%c1_37, %c0_38, %c0_39] : memref<10x32x128xbf16, #tpu.memory_space<vmem>>, vector<1x32x128xbf16>
    %89 = vector.shape_cast %88 : vector<1x32x128xbf16> to vector<32x128xbf16>
    %cst_40 = arith.constant dense<0.000000e+00> : vector<8x128xf32>
    %90 = tpu.matmul %87, %89, %cst_40 {dimension_numbers = #tpu.dot_dimension_numbers<[1], [0], [0], [1], [0, 0, 1, 1], [], []>} : vector<8x32xbf16>, vector<32x128xbf16>, vector<8x128xf32> -> vector<8x128xf32>
    %91 = arith.addf %86, %90 : vector<8x128xf32>
    %92 = arith.mulf %81, %81 : vector<8x32xf32>
    %93 = arith.mulf %82, %82 : vector<8x32xf32>
    %94 = arith.subf %92, %93 : vector<8x32xf32>
    %95 = arith.mulf %82, %81 : vector<8x32xf32>
    %96 = arith.mulf %81, %82 : vector<8x32xf32>
    %97 = arith.addf %95, %96 : vector<8x32xf32>
    %98 = arith.truncf %94 : vector<8x32xf32> to vector<8x32xbf16>
    %c2_41 = arith.constant 2 : index
    %c0_42 = arith.constant 0 : index
    %c0_43 = arith.constant 0 : index
    %99 = vector.load %arg4[%c2_41, %c0_42, %c0_43] : memref<10x32x128xbf16, #tpu.memory_space<vmem>>, vector<1x32x128xbf16>
    %100 = vector.shape_cast %99 : vector<1x32x128xbf16> to vector<32x128xbf16>
    %cst_44 = arith.constant dense<0.000000e+00> : vector<8x128xf32>
    %101 = tpu.matmul %98, %100, %cst_44 {dimension_numbers = #tpu.dot_dimension_numbers<[1], [0], [0], [1], [0, 0, 1, 1], [], []>} : vector<8x32xbf16>, vector<32x128xbf16>, vector<8x128xf32> -> vector<8x128xf32>
    %102 = arith.addf %91, %101 : vector<8x128xf32>
    %103 = arith.truncf %97 : vector<8x32xf32> to vector<8x32xbf16>
    %c3_45 = arith.constant 3 : index
    %c0_46 = arith.constant 0 : index
    %c0_47 = arith.constant 0 : index
    %104 = vector.load %arg4[%c3_45, %c0_46, %c0_47] : memref<10x32x128xbf16, #tpu.memory_space<vmem>>, vector<1x32x128xbf16>
    %105 = vector.shape_cast %104 : vector<1x32x128xbf16> to vector<32x128xbf16>
    %cst_48 = arith.constant dense<0.000000e+00> : vector<8x128xf32>
    %106 = tpu.matmul %103, %105, %cst_48 {dimension_numbers = #tpu.dot_dimension_numbers<[1], [0], [0], [1], [0, 0, 1, 1], [], []>} : vector<8x32xbf16>, vector<32x128xbf16>, vector<8x128xf32> -> vector<8x128xf32>
    %107 = arith.addf %102, %106 : vector<8x128xf32>
    %108 = arith.mulf %94, %81 : vector<8x32xf32>
    %109 = arith.mulf %97, %82 : vector<8x32xf32>
    %110 = arith.subf %108, %109 : vector<8x32xf32>
    %111 = arith.mulf %97, %81 : vector<8x32xf32>
    %112 = arith.mulf %94, %82 : vector<8x32xf32>
    %113 = arith.addf %111, %112 : vector<8x32xf32>
    %114 = arith.truncf %110 : vector<8x32xf32> to vector<8x32xbf16>
    %c4_49 = arith.constant 4 : index
    %c0_50 = arith.constant 0 : index
    %c0_51 = arith.constant 0 : index
    %115 = vector.load %arg4[%c4_49, %c0_50, %c0_51] : memref<10x32x128xbf16, #tpu.memory_space<vmem>>, vector<1x32x128xbf16>
    %116 = vector.shape_cast %115 : vector<1x32x128xbf16> to vector<32x128xbf16>
    %cst_52 = arith.constant dense<0.000000e+00> : vector<8x128xf32>
    %117 = tpu.matmul %114, %116, %cst_52 {dimension_numbers = #tpu.dot_dimension_numbers<[1], [0], [0], [1], [0, 0, 1, 1], [], []>} : vector<8x32xbf16>, vector<32x128xbf16>, vector<8x128xf32> -> vector<8x128xf32>
    %118 = arith.addf %107, %117 : vector<8x128xf32>
    %119 = arith.truncf %113 : vector<8x32xf32> to vector<8x32xbf16>
    %c5_53 = arith.constant 5 : index
    %c0_54 = arith.constant 0 : index
    %c0_55 = arith.constant 0 : index
    %120 = vector.load %arg4[%c5_53, %c0_54, %c0_55] : memref<10x32x128xbf16, #tpu.memory_space<vmem>>, vector<1x32x128xbf16>
    %121 = vector.shape_cast %120 : vector<1x32x128xbf16> to vector<32x128xbf16>
    %cst_56 = arith.constant dense<0.000000e+00> : vector<8x128xf32>
    %122 = tpu.matmul %119, %121, %cst_56 {dimension_numbers = #tpu.dot_dimension_numbers<[1], [0], [0], [1], [0, 0, 1, 1], [], []>} : vector<8x32xbf16>, vector<32x128xbf16>, vector<8x128xf32> -> vector<8x128xf32>
    %123 = arith.addf %118, %122 : vector<8x128xf32>
    %124 = arith.mulf %110, %81 : vector<8x32xf32>
    %125 = arith.mulf %113, %82 : vector<8x32xf32>
    %126 = arith.subf %124, %125 : vector<8x32xf32>
    %127 = arith.mulf %113, %81 : vector<8x32xf32>
    %128 = arith.mulf %110, %82 : vector<8x32xf32>
    %129 = arith.addf %127, %128 : vector<8x32xf32>
    %130 = arith.truncf %126 : vector<8x32xf32> to vector<8x32xbf16>
    %c6_57 = arith.constant 6 : index
    %c0_58 = arith.constant 0 : index
    %c0_59 = arith.constant 0 : index
    %131 = vector.load %arg4[%c6_57, %c0_58, %c0_59] : memref<10x32x128xbf16, #tpu.memory_space<vmem>>, vector<1x32x128xbf16>
    %132 = vector.shape_cast %131 : vector<1x32x128xbf16> to vector<32x128xbf16>
    %cst_60 = arith.constant dense<0.000000e+00> : vector<8x128xf32>
    %133 = tpu.matmul %130, %132, %cst_60 {dimension_numbers = #tpu.dot_dimension_numbers<[1], [0], [0], [1], [0, 0, 1, 1], [], []>} : vector<8x32xbf16>, vector<32x128xbf16>, vector<8x128xf32> -> vector<8x128xf32>
    %134 = arith.addf %123, %133 : vector<8x128xf32>
    %135 = arith.truncf %129 : vector<8x32xf32> to vector<8x32xbf16>
    %c7_61 = arith.constant 7 : index
    %c0_62 = arith.constant 0 : index
    %c0_63 = arith.constant 0 : index
    %136 = vector.load %arg4[%c7_61, %c0_62, %c0_63] : memref<10x32x128xbf16, #tpu.memory_space<vmem>>, vector<1x32x128xbf16>
    %137 = vector.shape_cast %136 : vector<1x32x128xbf16> to vector<32x128xbf16>
    %cst_64 = arith.constant dense<0.000000e+00> : vector<8x128xf32>
    %138 = tpu.matmul %135, %137, %cst_64 {dimension_numbers = #tpu.dot_dimension_numbers<[1], [0], [0], [1], [0, 0, 1, 1], [], []>} : vector<8x32xbf16>, vector<32x128xbf16>, vector<8x128xf32> -> vector<8x128xf32>
    %139 = arith.addf %134, %138 : vector<8x128xf32>
    %140 = arith.mulf %126, %81 : vector<8x32xf32>
    %141 = arith.mulf %129, %82 : vector<8x32xf32>
    %142 = arith.subf %140, %141 : vector<8x32xf32>
    %143 = arith.mulf %129, %81 : vector<8x32xf32>
    %144 = arith.mulf %126, %82 : vector<8x32xf32>
    %145 = arith.addf %143, %144 : vector<8x32xf32>
    %146 = arith.truncf %142 : vector<8x32xf32> to vector<8x32xbf16>
    %c8_65 = arith.constant 8 : index
    %c0_66 = arith.constant 0 : index
    %c0_67 = arith.constant 0 : index
    %147 = vector.load %arg4[%c8_65, %c0_66, %c0_67] : memref<10x32x128xbf16, #tpu.memory_space<vmem>>, vector<1x32x128xbf16>
    %148 = vector.shape_cast %147 : vector<1x32x128xbf16> to vector<32x128xbf16>
    %cst_68 = arith.constant dense<0.000000e+00> : vector<8x128xf32>
    %149 = tpu.matmul %146, %148, %cst_68 {dimension_numbers = #tpu.dot_dimension_numbers<[1], [0], [0], [1], [0, 0, 1, 1], [], []>} : vector<8x32xbf16>, vector<32x128xbf16>, vector<8x128xf32> -> vector<8x128xf32>
    %150 = arith.addf %139, %149 : vector<8x128xf32>
    %151 = arith.truncf %145 : vector<8x32xf32> to vector<8x32xbf16>
    %c9_69 = arith.constant 9 : index
    %c0_70 = arith.constant 0 : index
    %c0_71 = arith.constant 0 : index
    %152 = vector.load %arg4[%c9_69, %c0_70, %c0_71] : memref<10x32x128xbf16, #tpu.memory_space<vmem>>, vector<1x32x128xbf16>
    %153 = vector.shape_cast %152 : vector<1x32x128xbf16> to vector<32x128xbf16>
    %cst_72 = arith.constant dense<0.000000e+00> : vector<8x128xf32>
    %154 = tpu.matmul %151, %153, %cst_72 {dimension_numbers = #tpu.dot_dimension_numbers<[1], [0], [0], [1], [0, 0, 1, 1], [], []>} : vector<8x32xbf16>, vector<32x128xbf16>, vector<8x128xf32> -> vector<8x128xf32>
    %155 = arith.addf %150, %154 : vector<8x128xf32>
    %c0_73 = arith.constant 0 : index
    %c0_74 = arith.constant 0 : index
    %156 = vector.load %arg5[%c0_73, %c0_74] : memref<1x128xf32, #tpu.memory_space<vmem>>, vector<1x128xf32>
    %157 = vector.broadcast %156 : vector<1x128xf32> to vector<8x128xf32>
    %158 = arith.addf %155, %157 : vector<8x128xf32>
    %159 = vector.extract_strided_slice %158 {offsets = [0, 0], sizes = [8, 32], strides = [1, 1]} : vector<8x128xf32> to vector<8x32xf32>
    %160 = math.tanh %159 : vector<8x32xf32>
    %161 = math.cos %160 : vector<8x32xf32>
    %162 = math.sin %160 : vector<8x32xf32>
    %163 = arith.truncf %161 : vector<8x32xf32> to vector<8x32xbf16>
    %c0_75 = arith.constant 0 : index
    %c0_76 = arith.constant 0 : index
    %c0_77 = arith.constant 0 : index
    %164 = vector.load %arg6[%c0_75, %c0_76, %c0_77] : memref<10x32x128xbf16, #tpu.memory_space<vmem>>, vector<1x32x128xbf16>
    %165 = vector.shape_cast %164 : vector<1x32x128xbf16> to vector<32x128xbf16>
    %cst_78 = arith.constant dense<0.000000e+00> : vector<8x128xf32>
    %166 = tpu.matmul %163, %165, %cst_78 {dimension_numbers = #tpu.dot_dimension_numbers<[1], [0], [0], [1], [0, 0, 1, 1], [], []>} : vector<8x32xbf16>, vector<32x128xbf16>, vector<8x128xf32> -> vector<8x128xf32>
    %167 = arith.truncf %162 : vector<8x32xf32> to vector<8x32xbf16>
    %c1_79 = arith.constant 1 : index
    %c0_80 = arith.constant 0 : index
    %c0_81 = arith.constant 0 : index
    %168 = vector.load %arg6[%c1_79, %c0_80, %c0_81] : memref<10x32x128xbf16, #tpu.memory_space<vmem>>, vector<1x32x128xbf16>
    %169 = vector.shape_cast %168 : vector<1x32x128xbf16> to vector<32x128xbf16>
    %cst_82 = arith.constant dense<0.000000e+00> : vector<8x128xf32>
    %170 = tpu.matmul %167, %169, %cst_82 {dimension_numbers = #tpu.dot_dimension_numbers<[1], [0], [0], [1], [0, 0, 1, 1], [], []>} : vector<8x32xbf16>, vector<32x128xbf16>, vector<8x128xf32> -> vector<8x128xf32>
    %171 = arith.addf %166, %170 : vector<8x128xf32>
    %172 = arith.mulf %161, %161 : vector<8x32xf32>
    %173 = arith.mulf %162, %162 : vector<8x32xf32>
    %174 = arith.subf %172, %173 : vector<8x32xf32>
    %175 = arith.mulf %162, %161 : vector<8x32xf32>
    %176 = arith.mulf %161, %162 : vector<8x32xf32>
    %177 = arith.addf %175, %176 : vector<8x32xf32>
    %178 = arith.truncf %174 : vector<8x32xf32> to vector<8x32xbf16>
    %c2_83 = arith.constant 2 : index
    %c0_84 = arith.constant 0 : index
    %c0_85 = arith.constant 0 : index
    %179 = vector.load %arg6[%c2_83, %c0_84, %c0_85] : memref<10x32x128xbf16, #tpu.memory_space<vmem>>, vector<1x32x128xbf16>
    %180 = vector.shape_cast %179 : vector<1x32x128xbf16> to vector<32x128xbf16>
    %cst_86 = arith.constant dense<0.000000e+00> : vector<8x128xf32>
    %181 = tpu.matmul %178, %180, %cst_86 {dimension_numbers = #tpu.dot_dimension_numbers<[1], [0], [0], [1], [0, 0, 1, 1], [], []>} : vector<8x32xbf16>, vector<32x128xbf16>, vector<8x128xf32> -> vector<8x128xf32>
    %182 = arith.addf %171, %181 : vector<8x128xf32>
    %183 = arith.truncf %177 : vector<8x32xf32> to vector<8x32xbf16>
    %c3_87 = arith.constant 3 : index
    %c0_88 = arith.constant 0 : index
    %c0_89 = arith.constant 0 : index
    %184 = vector.load %arg6[%c3_87, %c0_88, %c0_89] : memref<10x32x128xbf16, #tpu.memory_space<vmem>>, vector<1x32x128xbf16>
    %185 = vector.shape_cast %184 : vector<1x32x128xbf16> to vector<32x128xbf16>
    %cst_90 = arith.constant dense<0.000000e+00> : vector<8x128xf32>
    %186 = tpu.matmul %183, %185, %cst_90 {dimension_numbers = #tpu.dot_dimension_numbers<[1], [0], [0], [1], [0, 0, 1, 1], [], []>} : vector<8x32xbf16>, vector<32x128xbf16>, vector<8x128xf32> -> vector<8x128xf32>
    %187 = arith.addf %182, %186 : vector<8x128xf32>
    %188 = arith.mulf %174, %161 : vector<8x32xf32>
    %189 = arith.mulf %177, %162 : vector<8x32xf32>
    %190 = arith.subf %188, %189 : vector<8x32xf32>
    %191 = arith.mulf %177, %161 : vector<8x32xf32>
    %192 = arith.mulf %174, %162 : vector<8x32xf32>
    %193 = arith.addf %191, %192 : vector<8x32xf32>
    %194 = arith.truncf %190 : vector<8x32xf32> to vector<8x32xbf16>
    %c4_91 = arith.constant 4 : index
    %c0_92 = arith.constant 0 : index
    %c0_93 = arith.constant 0 : index
    %195 = vector.load %arg6[%c4_91, %c0_92, %c0_93] : memref<10x32x128xbf16, #tpu.memory_space<vmem>>, vector<1x32x128xbf16>
    %196 = vector.shape_cast %195 : vector<1x32x128xbf16> to vector<32x128xbf16>
    %cst_94 = arith.constant dense<0.000000e+00> : vector<8x128xf32>
    %197 = tpu.matmul %194, %196, %cst_94 {dimension_numbers = #tpu.dot_dimension_numbers<[1], [0], [0], [1], [0, 0, 1, 1], [], []>} : vector<8x32xbf16>, vector<32x128xbf16>, vector<8x128xf32> -> vector<8x128xf32>
    %198 = arith.addf %187, %197 : vector<8x128xf32>
    %199 = arith.truncf %193 : vector<8x32xf32> to vector<8x32xbf16>
    %c5_95 = arith.constant 5 : index
    %c0_96 = arith.constant 0 : index
    %c0_97 = arith.constant 0 : index
    %200 = vector.load %arg6[%c5_95, %c0_96, %c0_97] : memref<10x32x128xbf16, #tpu.memory_space<vmem>>, vector<1x32x128xbf16>
    %201 = vector.shape_cast %200 : vector<1x32x128xbf16> to vector<32x128xbf16>
    %cst_98 = arith.constant dense<0.000000e+00> : vector<8x128xf32>
    %202 = tpu.matmul %199, %201, %cst_98 {dimension_numbers = #tpu.dot_dimension_numbers<[1], [0], [0], [1], [0, 0, 1, 1], [], []>} : vector<8x32xbf16>, vector<32x128xbf16>, vector<8x128xf32> -> vector<8x128xf32>
    %203 = arith.addf %198, %202 : vector<8x128xf32>
    %204 = arith.mulf %190, %161 : vector<8x32xf32>
    %205 = arith.mulf %193, %162 : vector<8x32xf32>
    %206 = arith.subf %204, %205 : vector<8x32xf32>
    %207 = arith.mulf %193, %161 : vector<8x32xf32>
    %208 = arith.mulf %190, %162 : vector<8x32xf32>
    %209 = arith.addf %207, %208 : vector<8x32xf32>
    %210 = arith.truncf %206 : vector<8x32xf32> to vector<8x32xbf16>
    %c6_99 = arith.constant 6 : index
    %c0_100 = arith.constant 0 : index
    %c0_101 = arith.constant 0 : index
    %211 = vector.load %arg6[%c6_99, %c0_100, %c0_101] : memref<10x32x128xbf16, #tpu.memory_space<vmem>>, vector<1x32x128xbf16>
    %212 = vector.shape_cast %211 : vector<1x32x128xbf16> to vector<32x128xbf16>
    %cst_102 = arith.constant dense<0.000000e+00> : vector<8x128xf32>
    %213 = tpu.matmul %210, %212, %cst_102 {dimension_numbers = #tpu.dot_dimension_numbers<[1], [0], [0], [1], [0, 0, 1, 1], [], []>} : vector<8x32xbf16>, vector<32x128xbf16>, vector<8x128xf32> -> vector<8x128xf32>
    %214 = arith.addf %203, %213 : vector<8x128xf32>
    %215 = arith.truncf %209 : vector<8x32xf32> to vector<8x32xbf16>
    %c7_103 = arith.constant 7 : index
    %c0_104 = arith.constant 0 : index
    %c0_105 = arith.constant 0 : index
    %216 = vector.load %arg6[%c7_103, %c0_104, %c0_105] : memref<10x32x128xbf16, #tpu.memory_space<vmem>>, vector<1x32x128xbf16>
    %217 = vector.shape_cast %216 : vector<1x32x128xbf16> to vector<32x128xbf16>
    %cst_106 = arith.constant dense<0.000000e+00> : vector<8x128xf32>
    %218 = tpu.matmul %215, %217, %cst_106 {dimension_numbers = #tpu.dot_dimension_numbers<[1], [0], [0], [1], [0, 0, 1, 1], [], []>} : vector<8x32xbf16>, vector<32x128xbf16>, vector<8x128xf32> -> vector<8x128xf32>
    %219 = arith.addf %214, %218 : vector<8x128xf32>
    %220 = arith.mulf %206, %161 : vector<8x32xf32>
    %221 = arith.mulf %209, %162 : vector<8x32xf32>
    %222 = arith.subf %220, %221 : vector<8x32xf32>
    %223 = arith.mulf %209, %161 : vector<8x32xf32>
    %224 = arith.mulf %206, %162 : vector<8x32xf32>
    %225 = arith.addf %223, %224 : vector<8x32xf32>
    %226 = arith.truncf %222 : vector<8x32xf32> to vector<8x32xbf16>
    %c8_107 = arith.constant 8 : index
    %c0_108 = arith.constant 0 : index
    %c0_109 = arith.constant 0 : index
    %227 = vector.load %arg6[%c8_107, %c0_108, %c0_109] : memref<10x32x128xbf16, #tpu.memory_space<vmem>>, vector<1x32x128xbf16>
    %228 = vector.shape_cast %227 : vector<1x32x128xbf16> to vector<32x128xbf16>
    %cst_110 = arith.constant dense<0.000000e+00> : vector<8x128xf32>
    %229 = tpu.matmul %226, %228, %cst_110 {dimension_numbers = #tpu.dot_dimension_numbers<[1], [0], [0], [1], [0, 0, 1, 1], [], []>} : vector<8x32xbf16>, vector<32x128xbf16>, vector<8x128xf32> -> vector<8x128xf32>
    %230 = arith.addf %219, %229 : vector<8x128xf32>
    %231 = arith.truncf %225 : vector<8x32xf32> to vector<8x32xbf16>
    %c9_111 = arith.constant 9 : index
    %c0_112 = arith.constant 0 : index
    %c0_113 = arith.constant 0 : index
    %232 = vector.load %arg6[%c9_111, %c0_112, %c0_113] : memref<10x32x128xbf16, #tpu.memory_space<vmem>>, vector<1x32x128xbf16>
    %233 = vector.shape_cast %232 : vector<1x32x128xbf16> to vector<32x128xbf16>
    %cst_114 = arith.constant dense<0.000000e+00> : vector<8x128xf32>
    %234 = tpu.matmul %231, %233, %cst_114 {dimension_numbers = #tpu.dot_dimension_numbers<[1], [0], [0], [1], [0, 0, 1, 1], [], []>} : vector<8x32xbf16>, vector<32x128xbf16>, vector<8x128xf32> -> vector<8x128xf32>
    %235 = arith.addf %230, %234 : vector<8x128xf32>
    %c0_115 = arith.constant 0 : index
    %c0_116 = arith.constant 0 : index
    %236 = vector.load %arg7[%c0_115, %c0_116] : memref<1x128xf32, #tpu.memory_space<vmem>>, vector<1x128xf32>
    %237 = vector.broadcast %236 : vector<1x128xf32> to vector<8x128xf32>
    %238 = arith.addf %235, %237 : vector<8x128xf32>
    %c0_117 = arith.constant 0 : index
    %c0_118 = arith.constant 0 : index
    %239 = vector.load %arg8[%c0_117, %c0_118] : memref<8x128xf32, #tpu.memory_space<vmem>>, vector<8x128xf32>
    tpu.vector_store %arg8[%c0_117, %c0_118], %238 {strides = array<i32>} : memref<8x128xf32, #tpu.memory_space<vmem>>, vector<8x128xf32>,
    return
  }
  func.func @transform_0(%arg0: i32) -> (i32, i32) {
    %c0_i32 = arith.constant 0 : i32
    %c0_i32_0 = arith.constant 0 : i32
    return %arg0, %c0_i32 : i32, i32
  }
  func.func @transform_1(%arg0: i32) -> (i32, i32, i32) {
    %c0_i32 = arith.constant 0 : i32
    %c0_i32_0 = arith.constant 0 : i32
    %c0_i32_1 = arith.constant 0 : i32
    %c0_i32_2 = arith.constant 0 : i32
    return %c0_i32, %c0_i32_0, %c0_i32_1 : i32, i32, i32
  }
  func.func @transform_2(%arg0: i32) -> (i32, i32) {
    %c0_i32 = arith.constant 0 : i32
    %c0_i32_0 = arith.constant 0 : i32
    %c0_i32_1 = arith.constant 0 : i32
    return %c0_i32, %c0_i32_0 : i32, i32
  }
  func.func @transform_3(%arg0: i32) -> (i32, i32, i32) {
    %c0_i32 = arith.constant 0 : i32
    %c0_i32_0 = arith.constant 0 : i32
    %c0_i32_1 = arith.constant 0 : i32
    %c0_i32_2 = arith.constant 0 : i32
    return %c0_i32, %c0_i32_0, %c0_i32_1 : i32, i32, i32
  }
  func.func @transform_4(%arg0: i32) -> (i32, i32) {
    %c0_i32 = arith.constant 0 : i32
    %c0_i32_0 = arith.constant 0 : i32
    %c0_i32_1 = arith.constant 0 : i32
    return %c0_i32, %c0_i32_0 : i32, i32
  }
  func.func @transform_5(%arg0: i32) -> (i32, i32, i32) {
    %c0_i32 = arith.constant 0 : i32
    %c0_i32_0 = arith.constant 0 : i32
    %c0_i32_1 = arith.constant 0 : i32
    %c0_i32_2 = arith.constant 0 : i32
    return %c0_i32, %c0_i32_0, %c0_i32_1 : i32, i32, i32
  }
  func.func @transform_6(%arg0: i32) -> (i32, i32) {
    %c0_i32 = arith.constant 0 : i32
    %c0_i32_0 = arith.constant 0 : i32
    %c0_i32_1 = arith.constant 0 : i32
    return %c0_i32, %c0_i32_0 : i32, i32
  }
  func.func @transform_7(%arg0: i32) -> (i32, i32) {
    %c0_i32 = arith.constant 0 : i32
    %c0_i32_0 = arith.constant 0 : i32
    return %arg0, %c0_i32 : i32, i32
  }
}

</mosaic_0001>

<llo_original>
// kernel: tpu_custom_call.1
$region0: #{tpu_custom_call.1}
  #allocation0 [shape = 'u32[]', space=smem, size = 0x4, offset = 0x4, fixed_abs, tag = 'smem constant byte address 0x4 - core index']
  #allocation1 [shape = 'u32[144,128]{1,0:T(1,128)}', space=vmem, size = 0x12000, scoped, tag = 'internal scratch']
  %s0 = inlined_call_operand.hbm [shape: f32[16,16], index: 0, kind: input, shape index: {}]
  %s1 = inlined_call_operand.hbm [shape: bf16[10,16,128], index: 1, kind: input, shape index: {}]
  %s2 = inlined_call_operand.vmem [shape: f32[1,128], index: 2, kind: input, shape index: {}]
  %s3 = inlined_call_operand.hbm [shape: bf16[10,32,128], index: 3, kind: input, shape index: {}]
  %s4 = inlined_call_operand.vmem [shape: f32[1,128], index: 4, kind: input, shape index: {}]
  %s5 = inlined_call_operand.hbm [shape: bf16[10,32,128], index: 5, kind: input, shape index: {}]
  %s6 = inlined_call_operand.vmem [shape: f32[1,128], index: 6, kind: input, shape index: {}]
  %s7 = inlined_call_operand.hbm [shape: f32[16,128], index: 7, kind: output, shape index: {}]
  %s8 = sld [smem:[#allocation0]]
  $region77: #{tpu_custom_call.1} parent=0
    _
  %s10 = ssub.s32 1, %s8
  %s11 = scalar_select 0, %s10, %s8
  $region1: #{tpu_custom_call.1} parent=0
    #allocation2 [shape = 'u8[8192]{0}', space=vmem, size = 0x2000, scoped, tag = 'input window, operand 0']
    #allocation3 [shape = 's32[2]{0}', space=sflag, size = 0x8, scoped, tag = 'scoped memory for tpu_custom_call.1']
    #allocation4 [shape = 's32[2]{0}', space=sflag, size = 0x8, scoped, tag = 'scoped memory for tpu_custom_call.1']
    #allocation5 [shape = 'u8[40960]{0}', space=vmem, size = 0xa000, scoped, tag = 'input window, operand 1, single buffered']
    #allocation6 [shape = 's32[1]{0}', space=sflag, size = 0x4, scoped, tag = 'scoped memory for tpu_custom_call.1']
    #allocation7 [shape = 'u8[81920]{0}', space=vmem, size = 0x14000, scoped, tag = 'input window, operand 3, single buffered']
    #allocation8 [shape = 'u8[81920]{0}', space=vmem, size = 0x14000, scoped, tag = 'input window, operand 5, single buffered']
    #allocation9 [shape = 's32[1]{0}', space=sflag, size = 0x4, scoped, tag = 'scoped memory for tpu_custom_call.1']
    #allocation10 [shape = 'u8[8192]{0}', space=vmem, size = 0x2000, scoped, tag = 'output window, operand 0']
    %12 = vsyncpa [#allocation3], 0
    %s13 = scalar_lea.sflag [#allocation3], 1
    %14 = vsyncpa %s13, 0
    %15 = vsyncpa [#allocation6], 0
    %16 = vsyncpa [#allocation9], 0
    %17 = vsyncpa [#allocation4], 0
    %s18 = scalar_lea.sflag [#allocation4], 1
    %19 = vsyncpa %s18, 0
    loop: start=0, step=1, limit=4
    $region2: #{tpu_custom_call.1} parent=1 // loop_pre_header
      _
    $region3: #{tpu_custom_call.1} parent=1 // loop_header
      %s21 = sphi 0, %s25
      %p22 = scmp.ge.s32.totalorder %s21, 4
      %s31 = sphi 0, %s33
      %s34 = sphi 0, %s31
      %s35 = sphi 0, %s34
      %s51 = sphi 0, %s35
      %s55 = sphi 0, %s55
      %s57 = sphi 0, %s55
      %s58 = sphi 0, %s57
      %s72 = sphi 0, %s58
      %s76 = sphi 0, %s76
      %s78 = sphi 0, %s76
      %s79 = sphi 0, %s78
      %s93 = sphi 0, %s79
      %s97 = sphi 0, %s97
      %s99 = sphi 0, %s97
      %s100 = sphi 0, %s99
      %s114 = sphi 0, %s100
      %s118 = sphi 0, %s118
      %s120 = sphi 0, %s118
      %s121 = sphi 0, %s120
      %s135 = sphi 0, %s121
      %s139 = sphi 0, %s139
      %s141 = sphi 0, %s139
      %s142 = sphi 0, %s141
      %s156 = sphi 0, %s142
      %s160 = sphi 0, %s160
      %s162 = sphi 0, %s160
      %s163 = sphi 0, %s162
      %s177 = sphi 0, %s163
      %s183 = sphi 0, %s185
      %s186 = sphi 0, %s183
      %s187 = sphi 0, %s186
      %s203 = sphi 0, %s187
    $region4: #{tpu_custom_call.1} parent=1 // loop_header_branch
      %24 = sbr.rel (%p22) target = $region8
    $region5: #{tpu_custom_call.1} parent=1 // loop_body
      %s26 = ssub.s32 %s21, 1
      %s27 = ssub.s32 %s21, 2
      %s28 = sadd.s32 %s21, 1
      %s29 = ssub.s32 %s21, %s28
      %p30 = scmp.eq.s32.totalorder %s29, 0
      %s32 = sadd.s32 %s31, 1
      %s33 = scalar_select %p30, %s31, %s32
      %p36 = pneg %p30
      %p37 = scmp.eq.s32.totalorder %s21, 1
      %p38 = por %p36, %p37
      %p39 = scmp.ne.s32.totalorder %s31, %s34
      %p40 = scmp.eq.s32.totalorder %s21, 0
      %p41 = por %p39, %p40
      %p42 = scmp.ne.s32.totalorder %s31, %s34
      %p43 = scmp.eq.s32.totalorder %s26, 1
      %p44 = por %p42, %p43
      %p45 = scmp.ne.s32.totalorder %s34, %s35
      %p46 = scmp.eq.s32.totalorder %s26, 0
      %p47 = por %p45, %p46
      %p48 = scmp.ne.s32.totalorder %s34, %s35
      %p49 = scmp.eq.s32.totalorder %s27, 1
      %p50 = por %p48, %p49
      %p52 = scmp.ne.s32.totalorder %s35, %s51
      %p53 = scmp.eq.s32.totalorder %s27, 0
      %p54 = por %p52, %p53
      %s56 = sadd.s32 %s55, 1
      %p59 = scmp.eq.s32.totalorder %s21, 1
      %p60 = scmp.ne.s32.totalorder %s55, %s57
      %p61 = scmp.eq.s32.totalorder %s21, 0
      %p62 = por %p60, %p61
      %p63 = scmp.ne.s32.totalorder %s55, %s57
      %p64 = scmp.eq.s32.totalorder %s26, 1
      %p65 = por %p63, %p64
      %p66 = scmp.ne.s32.totalorder %s57, %s58
      %p67 = scmp.eq.s32.totalorder %s26, 0
      %p68 = por %p66, %p67
      %p69 = scmp.ne.s32.totalorder %s57, %s58
      %p70 = scmp.eq.s32.totalorder %s27, 1
      %p71 = por %p69, %p70
      %p73 = scmp.ne.s32.totalorder %s58, %s72
      %p74 = scmp.eq.s32.totalorder %s27, 0
      %p75 = por %p73, %p74
      %s77 = sadd.s32 %s76, 1
      %p80 = scmp.eq.s32.totalorder %s21, 1
      %p81 = scmp.ne.s32.totalorder %s76, %s78
      %p82 = scmp.eq.s32.totalorder %s21, 0
      %p83 = por %p81, %p82
      %p84 = scmp.ne.s32.totalorder %s76, %s78
      %p85 = scmp.eq.s32.totalorder %s26, 1
      %p86 = por %p84, %p85
      %p87 = scmp.ne.s32.totalorder %s78, %s79
      %p88 = scmp.eq.s32.totalorder %s26, 0
      %p89 = por %p87, %p88
      %p90 = scmp.ne.s32.totalorder %s78, %s79
      %p91 = scmp.eq.s32.totalorder %s27, 1
      %p92 = por %p90, %p91
      %p94 = scmp.ne.s32.totalorder %s79, %s93
      %p95 = scmp.eq.s32.totalorder %s27, 0
      %p96 = por %p94, %p95
      %s98 = sadd.s32 %s97, 1
      %p101 = scmp.eq.s32.totalorder %s21, 1
      %p102 = scmp.ne.s32.totalorder %s97, %s99
      %p103 = scmp.eq.s32.totalorder %s21, 0
      %p104 = por %p102, %p103
      %p105 = scmp.ne.s32.totalorder %s97, %s99
      %p106 = scmp.eq.s32.totalorder %s26, 1
      %p107 = por %p105, %p106
      %p108 = scmp.ne.s32.totalorder %s99, %s100
      %p109 = scmp.eq.s32.totalorder %s26, 0
      %p110 = por %p108, %p109
      %p111 = scmp.ne.s32.totalorder %s99, %s100
      %p112 = scmp.eq.s32.totalorder %s27, 1
      %p113 = por %p111, %p112
      %p115 = scmp.ne.s32.totalorder %s100, %s114
      %p116 = scmp.eq.s32.totalorder %s27, 0
      %p117 = por %p115, %p116
      %s119 = sadd.s32 %s118, 1
      %p122 = scmp.eq.s32.totalorder %s21, 1
      %p123 = scmp.ne.s32.totalorder %s118, %s120
      %p124 = scmp.eq.s32.totalorder %s21, 0
      %p125 = por %p123, %p124
      %p126 = scmp.ne.s32.totalorder %s118, %s120
      %p127 = scmp.eq.s32.totalorder %s26, 1
      %p128 = por %p126, %p127
      %p129 = scmp.ne.s32.totalorder %s120, %s121
      %p130 = scmp.eq.s32.totalorder %s26, 0
      %p131 = por %p129, %p130
      %p132 = scmp.ne.s32.totalorder %s120, %s121
      %p133 = scmp.eq.s32.totalorder %s27, 1
      %p134 = por %p132, %p133
      %p136 = scmp.ne.s32.totalorder %s121, %s135
      %p137 = scmp.eq.s32.totalorder %s27, 0
      %p138 = por %p136, %p137
      %s140 = sadd.s32 %s139, 1
      %p143 = scmp.eq.s32.totalorder %s21, 1
      %p144 = scmp.ne.s32.totalorder %s139, %s141
      %p145 = scmp.eq.s32.totalorder %s21, 0
      %p146 = por %p144, %p145
      %p147 = scmp.ne.s32.totalorder %s139, %s141
      %p148 = scmp.eq.s32.totalorder %s26, 1
      %p149 = por %p147, %p148
      %p150 = scmp.ne.s32.totalorder %s141, %s142
      %p151 = scmp.eq.s32.totalorder %s26, 0
      %p152 = por %p150, %p151
      %p153 = scmp.ne.s32.totalorder %s141, %s142
      %p154 = scmp.eq.s32.totalorder %s27, 1
      %p155 = por %p153, %p154
      %p157 = scmp.ne.s32.totalorder %s142, %s156
      %p158 = scmp.eq.s32.totalorder %s27, 0
      %p159 = por %p157, %p158
      %s161 = sadd.s32 %s160, 1
      %p164 = scmp.eq.s32.totalorder %s21, 1
      %p165 = scmp.ne.s32.totalorder %s160, %s162
      %p166 = scmp.eq.s32.totalorder %s21, 0
      %p167 = por %p165, %p166
      %p168 = scmp.ne.s32.totalorder %s160, %s162
      %p169 = scmp.eq.s32.totalorder %s26, 1
      %p170 = por %p168, %p169
      %p171 = scmp.ne.s32.totalorder %s162, %s163
      %p172 = scmp.eq.s32.totalorder %s26, 0
      %p173 = por %p171, %p172
      %p174 = scmp.ne.s32.totalorder %s162, %s163
      %p175 = scmp.eq.s32.totalorder %s27, 1
      %p176 = por %p174, %p175
      %p178 = scmp.ne.s32.totalorder %s163, %s177
      %p179 = scmp.eq.s32.totalorder %s27, 0
      %p180 = por %p178, %p179
      %s181 = ssub.s32 %s21, %s28
      %p182 = scmp.eq.s32.totalorder %s181, 0
      %s184 = sadd.s32 %s183, 1
      %s185 = scalar_select %p182, %s183, %s184
      %p188 = pneg %p182
      %p189 = scmp.eq.s32.totalorder %s21, 1
      %p190 = por %p188, %p189
      %p191 = scmp.ne.s32.totalorder %s183, %s186
      %p192 = scmp.eq.s32.totalorder %s21, 0
      %p193 = por %p191, %p192
      %p194 = scmp.ne.s32.totalorder %s183, %s186
      %p195 = scmp.eq.s32.totalorder %s26, 1
      %p196 = por %p194, %p195
      %p197 = scmp.ne.s32.totalorder %s186, %s187
      %p198 = scmp.eq.s32.totalorder %s26, 0
      %p199 = por %p197, %p198
      %p200 = scmp.ne.s32.totalorder %s186, %s187
      %p201 = scmp.eq.s32.totalorder %s27, 1
      %p202 = por %p200, %p201
      %p204 = scmp.ne.s32.totalorder %s187, %s203
      %p205 = scmp.eq.s32.totalorder %s27, 0
      %p206 = por %p204, %p205
      %p207 = scmp.le.s32.totalorder 1, %s21
      %p208 = scmp.lt.s32.totalorder %s21, 3
      %p209 = pnand %p207, %p208
      %p210 = pneg %p209
      // Predicated region
      $region9: #{tpu_custom_call.1} parent=5 // pred_check
        _
      $region10: #{tpu_custom_call.1} parent=5 // pred_check_branch
        %212 = sbr.rel (%p209) target = $region12
      $region11: #{tpu_custom_call.1} parent=5 // pred_region
        %s213 = ssub.s32 %s21, 1
        // Predicated region
        $region13: #{tpu_custom_call.1} parent=11 // pred_check
          %p214 = pneg %p68
        $region14: #{tpu_custom_call.1} parent=11 // pred_check_branch
          %216 = sbr.rel (%p214) target = $region16
        $region15: #{tpu_custom_call.1} parent=11 // pred_region
          %s218 = ssub.s32 1280, 1280
          %219 = vsyncadd [#allocation6], %s218
          %s220 = sshll.u32 [#allocation5], 4
          %s221 = int_to_ptr.vmem [resolvable:$true] %s220
          %226 = dma.hbm_to_vmem [thread:$0]  %s1, 1280, %s221, [#allocation6], 64, 64, 4
        $region16: #{tpu_custom_call.1} parent=11 // pred_fallthru
          _
        // Predicated region
        $region17: #{tpu_custom_call.1} parent=11 // pred_check
          %p227 = pneg %p89
        $region18: #{tpu_custom_call.1} parent=11 // pred_check_branch
          %229 = sbr.rel (%p227) target = $region20
        $region19: #{tpu_custom_call.1} parent=11 // pred_region
          _
        $region20: #{tpu_custom_call.1} parent=11 // pred_fallthru
          _
        // Predicated region
        $region21: #{tpu_custom_call.1} parent=11 // pred_check
          %p230 = pneg %p110
        $region22: #{tpu_custom_call.1} parent=11 // pred_check_branch
          %232 = sbr.rel (%p230) target = $region24
        $region23: #{tpu_custom_call.1} parent=11 // pred_region
          %s234 = ssub.s32 2560, 2560
          %235 = vsyncadd [#allocation6], %s234
          %s236 = sshll.u32 [#allocation7], 4
          %s237 = int_to_ptr.vmem [resolvable:$true] %s236
          %242 = dma.hbm_to_vmem [thread:$0]  %s3, 2560, %s237, [#allocation6], 64, 64, 4
        $region24: #{tpu_custom_call.1} parent=11 // pred_fallthru
          _
        // Predicated region
        $region25: #{tpu_custom_call.1} parent=11 // pred_check
          %p243 = pneg %p131
        $region26: #{tpu_custom_call.1} parent=11 // pred_check_branch
          %245 = sbr.rel (%p243) target = $region28
        $region27: #{tpu_custom_call.1} parent=11 // pred_region
          _
        $region28: #{tpu_custom_call.1} parent=11 // pred_fallthru
          _
        // Predicated region
        $region29: #{tpu_custom_call.1} parent=11 // pred_check
          %p246 = pneg %p152
        $region30: #{tpu_custom_call.1} parent=11 // pred_check_branch
          %248 = sbr.rel (%p246) target = $region32
        $region31: #{tpu_custom_call.1} parent=11 // pred_region
          %s250 = ssub.s32 2560, 2560
          %251 = vsyncadd [#allocation9], %s250
          %s252 = sshll.u32 [#allocation8], 4
          %s253 = int_to_ptr.vmem [resolvable:$true] %s252
          %258 = dma.hbm_to_vmem [thread:$0]  %s5, 2560, %s253, [#allocation9], 64, 64, 4
        $region32: #{tpu_custom_call.1} parent=11 // pred_fallthru
          _
        // Predicated region
        $region33: #{tpu_custom_call.1} parent=11 // pred_check
          %p259 = pneg %p173
        $region34: #{tpu_custom_call.1} parent=11 // pred_check_branch
          %261 = sbr.rel (%p259) target = $region36
        $region35: #{tpu_custom_call.1} parent=11 // pred_region
          _
        $region36: #{tpu_custom_call.1} parent=11 // pred_fallthru
          _
      $region12: #{tpu_custom_call.1} parent=5 // pred_fallthru
        _
      %p262 = scmp.lt.s32.totalorder %s21, 2
      // Predicated region
      $region37: #{tpu_custom_call.1} parent=5 // pred_check
        %p263 = pneg %p262
      $region38: #{tpu_custom_call.1} parent=5 // pred_check_branch
        %265 = sbr.rel (%p263) target = $region40
      $region39: #{tpu_custom_call.1} parent=5 // pred_region
        // Predicated region
        $region41: #{tpu_custom_call.1} parent=39 // pred_check
          %p266 = pneg %p41
        $region42: #{tpu_custom_call.1} parent=39 // pred_check_branch
          %268 = sbr.rel (%p266) target = $region44
        $region43: #{tpu_custom_call.1} parent=39 // pred_region
          %s269 = sand.u32 %s31, 1
          %s270 = scalar_lea.sflag [#allocation3], %s269
          %s271 = sand.u32 %s31, 1
          %s272 = smul.addr %s271, 8
          %s273 = scalar_lea.vmem [#allocation2], %s272
          %s275 = ssub.s32 128, 128
          %276 = vsyncadd %s270, %s275
          %s277 = smul.addr %s21, 128
          %s278 = scalar_lea.hbm %s0, %s277
          %s280 = sshll.u32 %s273, 4
          %s281 = int_to_ptr.vmem [resolvable:$true] %s280
          %283 = dma.hbm_to_vmem [thread:$0]  %s278, 128, %s281, %s270
        $region44: #{tpu_custom_call.1} parent=39 // pred_fallthru
          _
      $region40: #{tpu_custom_call.1} parent=5 // pred_fallthru
        _
      %p284 = scmp.le.s32.totalorder 1, %s21
      %p285 = scmp.lt.s32.totalorder %s21, 3
      %p286 = pnand %p284, %p285
      %p287 = pneg %p286
      // Predicated region
      $region45: #{tpu_custom_call.1} parent=5 // pred_check
        _
      $region46: #{tpu_custom_call.1} parent=5 // pred_check_branch
        %289 = sbr.rel (%p286) target = $region48
      $region47: #{tpu_custom_call.1} parent=5 // pred_region
        %s290 = ssub.s32 %s21, 1
        %s291 = sand.u32 %s34, 1
        %s292 = scalar_lea.sflag [#allocation3], %s291
        %s293 = sand.u32 %s34, 1
        %s294 = smul.addr %s293, 8
        %s295 = scalar_lea.vmem [#allocation2], %s294
        // Predicated region
        $region49: #{tpu_custom_call.1} parent=47 // pred_check
          %p296 = pneg %p47
        $region50: #{tpu_custom_call.1} parent=47 // pred_check_branch
          %298 = sbr.rel (%p296) target = $region52
        $region51: #{tpu_custom_call.1} parent=47 // pred_region
          %299 = dma.done %s292, 128
        $region52: #{tpu_custom_call.1} parent=47 // pred_fallthru
          _
        // Predicated region
        $region53: #{tpu_custom_call.1} parent=47 // pred_check
          %p300 = pneg %p68
        $region54: #{tpu_custom_call.1} parent=47 // pred_check_branch
          %302 = sbr.rel (%p300) target = $region56
        $region55: #{tpu_custom_call.1} parent=47 // pred_region
          %303 = dma.done [#allocation6], 1280
        $region56: #{tpu_custom_call.1} parent=47 // pred_fallthru
          _
        // Predicated region
        $region57: #{tpu_custom_call.1} parent=47 // pred_check
          %p304 = pneg %p110
        $region58: #{tpu_custom_call.1} parent=47 // pred_check_branch
          %306 = sbr.rel (%p304) target = $region60
        $region59: #{tpu_custom_call.1} parent=47 // pred_region
          %307 = dma.done [#allocation6], 2560
        $region60: #{tpu_custom_call.1} parent=47 // pred_fallthru
          _
        // Predicated region
        $region61: #{tpu_custom_call.1} parent=47 // pred_check
          %p308 = pneg %p152
        $region62: #{tpu_custom_call.1} parent=47 // pred_check_branch
          %310 = sbr.rel (%p308) target = $region64
        $region63: #{tpu_custom_call.1} parent=47 // pred_region
          %311 = dma.done [#allocation9], 2560
        $region64: #{tpu_custom_call.1} parent=47 // pred_fallthru
          _
        %s312 = sand.u32 %s34, 1
        %s313 = scalar_lea.sflag [#allocation3], %s312
        %s314 = sand.u32 %s34, 1
        %s315 = smul.addr %s314, 8
        %s316 = scalar_lea.vmem [#allocation2], %s315
        %p317 = pneg %p47
        %p318 = pneg %p44
        %p319 = pneg %p68
        %p320 = pneg %p65
        %p321 = pneg %p89
        %p322 = pneg %p86
        %p323 = pneg %p110
        %p324 = pneg %p107
        %p325 = pneg %p131
        %p326 = pneg %p128
        %p327 = pneg %p152
        %p328 = pneg %p149
        %p329 = pneg %p173
        %p330 = pneg %p170
        %p331 = pneg %p199
        %p332 = pneg %p196
        %s333 = sand.u32 %s186, 1
        %s334 = scalar_lea.sflag [#allocation4], %s333
        %s335 = sand.u32 %s186, 1
        %s336 = smul.addr %s335, 8
        %s337 = scalar_lea.vmem [#allocation10], %s336
        %v339 = vld [vmem:[%s295] sm:$0xff]
        %v340 = vand.u32 2147483647, %v339
        %vm341 = vcmp.le.f32.partialorder %v340, 0.7853982
        %vm342 = vcmp.lt.s32.totalorder %v339, 0
        %v343 = vand.u32 %v339, 2139095040
        %v344 = vshrl.u32 %v343, 23
        %v345 = vsub.s32 %v344, 127
        %v346 = vand.u32 2147483647, %v339
        %v347 = vand.u32 %v346, 8388607
        %v348 = vor.u32 %v347, 8388608
        %v349 = vsub.s32 0, %v348
        %v350 = vadd.s32 %v345, 1
        %vm351 = vcmp.gt.s32.totalorder %v350, 0
        %v352 = vsel %vm351, %v350, 0
        %v353 = vshrl.u32 %v352, 5
        %v354 = vand.u32 %v352, 31
        %v355 = vsub.s32 32, %v354
        %v356 = vshrl.u32 683565275, %v355
        %v357 = vshll.u32 683565275, %v354
        %v358 = vshrl.u32 2475754826, %v355
        %v359 = vor.u32 %v357, %v358
        %v360 = vshll.u32 2475754826, %v354
        %v361 = vshrl.u32 2131351028, %v355
        %v362 = vor.u32 %v360, %v361
        %v363 = vshll.u32 2131351028, %v354
        %v364 = vshrl.u32 2102212464, %v355
        %v365 = vor.u32 %v363, %v364
        %v366 = vshll.u32 2102212464, %v354
        %v367 = vshrl.u32 920167782, %v355
        %v368 = vor.u32 %v366, %v367
        %v369 = vshll.u32 920167782, %v354
        %v370 = vshrl.u32 1326507024, %v355
        %v371 = vor.u32 %v369, %v370
        %vm372 = vcmp.lt.s32.totalorder %v353, 1
        %vm373 = vcmp.lt.s32.totalorder %v353, 2
        %vm374 = vcmp.lt.s32.totalorder %v353, 3
        %vm375 = vcmp.lt.s32.totalorder %v353, 4
        %v376 = vsel %vm372, %v356, %v359
        %v377 = vsel %vm375, %v365, 2102212464
        %v378 = vsel %vm374, %v362, %v377
        %v379 = vsel %vm373, %v376, %v378
        %v380 = vsel %vm372, %v359, %v362
        %v381 = vsel %vm375, %v368, 920167782
        %v382 = vsel %vm374, %v365, %v381
        %v383 = vsel %vm373, %v380, %v382
        %v384 = vsel %vm372, %v362, %v365
        %v385 = vsel %vm375, %v371, 1326507024
        %v386 = vsel %vm374, %v368, %v385
        %v387 = vsel %vm373, %v384, %v386
        %v388 = vshll.u32 %v348, 8
        %v389 = vmul.u32.u64.compose %v388, %v387
        %v390 = vextract.low.u32 %v389
        %v391 = vextract.high.u32 %v389
        %v392 = vmul.u32.u64.compose %v388, %v383
        %v393 = vextract.low.u32 %v392
        %v394 = vextract.high.u32 %v392
        %v395 = vmul.u32 %v388, %v379
        %v396 = vadd.s32 %v391, %v393
        %vm397 = vc.u32 %v391, %v393
        %v398 = vadd.s32 %v394, 1
        %v399 = vsel %vm397, %v398, %v394
        %v400 = vadd.s32 %v395, %v399
        %v401 = vadd.s32 %v400, 536870912
        %v402 = vshrl.u32 %v401, 30
        %v403 = vshll.u32 %v402, 30
        %v404 = vsub.s32 %v400, %v403
        %vm405 = vcmp.lt.s32.totalorder %v404, 0
        %v406 = vsub.s32 0, %v404
        %v407 = vsel %vm405, %v406, %v404
        %v408 = vclz %v407
        %v409 = vsub.s32 %v408, 2
        %vm410 = vcmp.gt.s32.totalorder 0, %v409
        %v411 = vsel %vm410, 0, %v409
        %v412 = vsub.s32 32, %v411
        %v413 = vshll.u32 %v404, %v411
        %v414 = vshrl.u32 %v396, %v412
        %v415 = vor.u32 %v413, %v414
        %v416 = vsub.s32 4294967266, %v411
        %v417 = vadd.s32 %v416, 127
        %v418 = vshll.u32 %v417, 23
        %v419 = vor.u32 4788187, %v418
        %v420 = vand.u32 2147483647, %v419
        %v422 = vcvt.s32.f32 %v415
        %v423 = vmul.f32 %v422, %v420
        %v424 = vxor.u32 %v423, 2147483648
        %v425 = vsel %vm342, %v424, %v423
        %v426 = vsub.s32 4, %v402
        %v427 = vsel %vm342, %v426, %v402
        %v428 = vsel %vm341, %v339, %v425
        %v429 = vsel %vm341, 0, %v427
        %v430 = vcosq.f32.pop %v428
        %v431 = vsinq.f32.pop %v428
        %vm432 = vweird.f32 %v339
        %v433 = vand.u32 %v429, 3
        %vm434 = vcmp.lt.s32.totalorder %v433, 2
        %vm435 = vcmp.eq.s32.totalorder %v433, 0
        %v436 = vxor.u32 %v431, 2147483648
        %v437 = vsel %vm435, %v430, %v436
        %vm438 = vcmp.eq.s32.totalorder %v433, 2
        %v439 = vxor.u32 %v430, 2147483648
        %v440 = vsel %vm438, %v439, %v431
        %v441 = vsel %vm434, %v437, %v440
        %v442 = vsel %vm432, nan, %v441
        %v443 = vand.u32 2147483647, %v339
        %vm444 = vcmp.le.f32.partialorder %v443, 0.7853982
        %vm445 = vcmp.lt.s32.totalorder %v339, 0
        %v446 = vand.u32 %v339, 2139095040
        %v447 = vshrl.u32 %v446, 23
        %v448 = vsub.s32 %v447, 127
        %v449 = vand.u32 2147483647, %v339
        %v450 = vand.u32 %v449, 8388607
        %v451 = vor.u32 %v450, 8388608
        %v452 = vsub.s32 0, %v451
        %v453 = vadd.s32 %v448, 1
        %vm454 = vcmp.gt.s32.totalorder %v453, 0
        %v455 = vsel %vm454, %v453, 0
        %v456 = vshrl.u32 %v455, 5
        %v457 = vand.u32 %v455, 31
        %v458 = vsub.s32 32, %v457
        %v459 = vshrl.u32 683565275, %v458
        %v460 = vshll.u32 683565275, %v457
        %v461 = vshrl.u32 2475754826, %v458
        %v462 = vor.u32 %v460, %v461
        %v463 = vshll.u32 2475754826, %v457
        %v464 = vshrl.u32 2131351028, %v458
        %v465 = vor.u32 %v463, %v464
        %v466 = vshll.u32 2131351028, %v457
        %v467 = vshrl.u32 2102212464, %v458
        %v468 = vor.u32 %v466, %v467
        %v469 = vshll.u32 2102212464, %v457
        %v470 = vshrl.u32 920167782, %v458
        %v471 = vor.u32 %v469, %v470
        %v472 = vshll.u32 920167782, %v457
        %v473 = vshrl.u32 1326507024, %v458
        %v474 = vor.u32 %v472, %v473
        %vm475 = vcmp.lt.s32.totalorder %v456, 1
        %vm476 = vcmp.lt.s32.totalorder %v456, 2
        %vm477 = vcmp.lt.s32.totalorder %v456, 3
        %vm478 = vcmp.lt.s32.totalorder %v456, 4
        %v479 = vsel %vm475, %v459, %v462
        %v480 = vsel %vm478, %v468, 2102212464
        %v481 = vsel %vm477, %v465, %v480
        %v482 = vsel %vm476, %v479, %v481
        %v483 = vsel %vm475, %v462, %v465
        %v484 = vsel %vm478, %v471, 920167782
        %v485 = vsel %vm477, %v468, %v484
        %v486 = vsel %vm476, %v483, %v485
        %v487 = vsel %vm475, %v465, %v468
        %v488 = vsel %vm478, %v474, 1326507024
        %v489 = vsel %vm477, %v471, %v488
        %v490 = vsel %vm476, %v487, %v489
        %v491 = vshll.u32 %v451, 8
        %v492 = vmul.u32.u64.compose %v491, %v490
        %v493 = vextract.low.u32 %v492
        %v494 = vextract.high.u32 %v492
        %v495 = vmul.u32.u64.compose %v491, %v486
        %v496 = vextract.low.u32 %v495
        %v497 = vextract.high.u32 %v495
        %v498 = vmul.u32 %v491, %v482
        %v499 = vadd.s32 %v494, %v496
        %vm500 = vc.u32 %v494, %v496
        %v501 = vadd.s32 %v497, 1
        %v502 = vsel %vm500, %v501, %v497
        %v503 = vadd.s32 %v498, %v502
        %v504 = vadd.s32 %v503, 536870912
        %v505 = vshrl.u32 %v504, 30
        %v506 = vshll.u32 %v505, 30
        %v507 = vsub.s32 %v503, %v506
        %vm508 = vcmp.lt.s32.totalorder %v507, 0
        %v509 = vsub.s32 0, %v507
        %v510 = vsel %vm508, %v509, %v507
        %v511 = vclz %v510
        %v512 = vsub.s32 %v511, 2
        %vm513 = vcmp.gt.s32.totalorder 0, %v512
        %v514 = vsel %vm513, 0, %v512
        %v515 = vsub.s32 32, %v514
        %v516 = vshll.u32 %v507, %v514
        %v517 = vshrl.u32 %v499, %v515
        %v518 = vor.u32 %v516, %v517
        %v519 = vsub.s32 4294967266, %v514
        %v520 = vadd.s32 %v519, 127
        %v521 = vshll.u32 %v520, 23
        %v522 = vor.u32 4788187, %v521
        %v523 = vand.u32 2147483647, %v522
        %v525 = vcvt.s32.f32 %v518
        %v526 = vmul.f32 %v525, %v523
        %v527 = vxor.u32 %v526, 2147483648
        %v528 = vsel %vm445, %v527, %v526
        %v529 = vsub.s32 4, %v505
        %v530 = vsel %vm445, %v529, %v505
        %v531 = vsel %vm444, %v339, %v528
        %v532 = vsel %vm444, 0, %v530
        %v533 = vcosq.f32.pop %v531
        %v534 = vsinq.f32.pop %v531
        %vm535 = vweird.f32 %v339
        %v536 = vadd.s32 %v532, 3
        %v537 = vand.u32 %v536, 3
        %vm538 = vcmp.lt.s32.totalorder %v537, 2
        %vm539 = vcmp.eq.s32.totalorder %v537, 0
        %v540 = vxor.u32 %v534, 2147483648
        %v541 = vsel %vm539, %v533, %v540
        %vm542 = vcmp.eq.s32.totalorder %v537, 2
        %v543 = vxor.u32 %v533, 2147483648
        %v544 = vsel %vm542, %v543, %v534
        %v545 = vsel %vm538, %v541, %v544
        %v546 = vsel %vm535, nan, %v545
        %v547 = vpack.c.bf16 %v442, %v442
        %v548 = vld [vmem:[#allocation5] sm:$0xf]
        %v549 = vld [vmem:[#allocation5 + $0x4] sm:$0xf]
        %v550 = vpack.c.bf16 %v546, %v546
        %s551 = scalar_lea.vmem [#allocation5], 8
        %v552 = vld [vmem:[%s551] sm:$0xf]
        %v553 = vld [vmem:[%s551 + $0x4] sm:$0xf]
        %v556 = vunpack.c.l.b16 %v552
        %v557 = vunpack.c.l.b16 %v553
        %v558 = vpack.c.b16 %v557, %v556
        %vm560 = vcmask 130048
        %v562 = vsel %vm560, %v550, 0
        %564 = vmatprep.subr.bf16.mxu0 0
        %565 = vmatpush1.bf16.msra.mxu0 %v558
        %566 = vmatprep.subr.bf16.mxu0 0
        %567 = vmatpush1.bf16.msra.mxu0 0
        %568 = vmatprep.subr.bf16.mxu0 0
        %569 = vmatpush1.bf16.msra.mxu0 0
        %570 = vmatprep.subr.bf16.mxu0 0
        %571 = vmatpush1.bf16.msra.mxu0 0
        %572 = vmatprep.subr.bf16.mxu0 0
        %573 = vmatpush1.bf16.msra.mxu0 0
        %574 = vmatprep.subr.bf16.mxu0 0
        %575 = vmatpush1.bf16.msra.mxu0 0
        %576 = vmatprep.subr.bf16.mxu0 0
        %577 = vmatpush1.bf16.msra.mxu0 0
        %578 = vmatprep.subr.bf16.mxu0 0
        %579 = vmatpush1.bf16.msra.mxu0 0
        %580 = vmatprep.subr.bf16.mxu0 0
        %581 = vmatpush1.bf16.msra.mxu0 0
        %582 = vmatprep.subr.bf16.mxu0 0
        %583 = vmatpush1.bf16.msra.mxu0 0
        %584 = vmatprep.subr.bf16.mxu0 0
        %585 = vmatpush1.bf16.msra.mxu0 0
        %586 = vmatprep.subr.bf16.mxu0 0
        %587 = vmatpush1.bf16.msra.mxu0 0
        %588 = vmatprep.subr.bf16.mxu0 0
        %589 = vmatpush1.bf16.msra.mxu0 0
        %590 = vmatprep.subr.bf16.mxu0 0
        %591 = vmatpush1.bf16.msra.mxu0 0
        %592 = vmatprep.subr.bf16.mxu0 0
        %593 = vmatpush1.bf16.msra.mxu0 0
        %594 = vmatprep.subr.bf16.mxu0 0
        %595 = vmatpush1.bf16.msra.mxu0 0
        %596 = vmatprep.mubr.bf16.mxu0 0
        %597 = vmatmul.mubr.bf16.gmra.mrb[0].mxu0 %v562
        %v598 = vpop.f32.mrb[0].mxu0
        %v599 = vadd.f32 0.0, %v598
        %v600 = vpop.f32.mrb[0].mxu0
        %v601 = vpop.f32.mrb[0].mxu0
        %v602 = vpop.f32.mrb[0].mxu0
        %603 = vdwg.mxu0
        %v606 = vunpack.c.l.b16 %v548
        %v607 = vunpack.c.l.b16 %v549
        %v608 = vpack.c.b16 %v607, %v606
        %v611 = vsel %vm560, %v547, 0
        %613 = vmatprep.subr.bf16.mxu0 0
        %614 = vmatpush1.bf16.msra.mxu0 %v608
        %615 = vmatprep.subr.bf16.mxu0 0
        %616 = vmatpush1.bf16.msra.mxu0 0
        %617 = vmatprep.subr.bf16.mxu0 0
        %618 = vmatpush1.bf16.msra.mxu0 0
        %619 = vmatprep.subr.bf16.mxu0 0
        %620 = vmatpush1.bf16.msra.mxu0 0
        %621 = vmatprep.subr.bf16.mxu0 0
        %622 = vmatpush1.bf16.msra.mxu0 0
        %623 = vmatprep.subr.bf16.mxu0 0
        %624 = vmatpush1.bf16.msra.mxu0 0
        %625 = vmatprep.subr.bf16.mxu0 0
        %626 = vmatpush1.bf16.msra.mxu0 0
        %627 = vmatprep.subr.bf16.mxu0 0
        %628 = vmatpush1.bf16.msra.mxu0 0
        %629 = vmatprep.subr.bf16.mxu0 0
        %630 = vmatpush1.bf16.msra.mxu0 0
        %631 = vmatprep.subr.bf16.mxu0 0
        %632 = vmatpush1.bf16.msra.mxu0 0
        %633 = vmatprep.subr.bf16.mxu0 0
        %634 = vmatpush1.bf16.msra.mxu0 0
        %635 = vmatprep.subr.bf16.mxu0 0
        %636 = vmatpush1.bf16.msra.mxu0 0
        %637 = vmatprep.subr.bf16.mxu0 0
        %638 = vmatpush1.bf16.msra.mxu0 0
        %639 = vmatprep.subr.bf16.mxu0 0
        %640 = vmatpush1.bf16.msra.mxu0 0
        %641 = vmatprep.subr.bf16.mxu0 0
        %642 = vmatpush1.bf16.msra.mxu0 0
        %643 = vmatprep.subr.bf16.mxu0 0
        %644 = vmatpush1.bf16.msra.mxu0 0
        %645 = vmatprep.mubr.bf16.mxu0 0
        %646 = vmatmul.mubr.bf16.gmra.mrb[0].mxu0 %v611
        %v647 = vpop.f32.mrb[0].mxu0
        %v648 = vadd.f32 %v599, %v647
        %v649 = vpop.f32.mrb[0].mxu0
        %v650 = vpop.f32.mrb[0].mxu0
        %v651 = vpop.f32.mrb[0].mxu0
        %652 = vdwg.mxu0
        %v653 = vmul.f32 %v442, %v442
        %v654 = vmul.f32 %v546, %v546
        %v655 = vsub.f32 %v653, %v654
        %v656 = vmul.f32 %v546, %v442
        %v657 = vadd.f32 %v656, %v656
        %v658 = vpack.c.bf16 %v655, %v655
        %s659 = scalar_lea.vmem [#allocation5], 16
        %v660 = vld [vmem:[%s659] sm:$0xf]
        %v661 = vld [vmem:[%s659 + $0x4] sm:$0xf]
        %v664 = vunpack.c.l.b16 %v660
        %v665 = vunpack.c.l.b16 %v661
        %v666 = vpack.c.b16 %v665, %v664
        %v669 = vsel %vm560, %v658, 0
        %671 = vmatprep.subr.bf16.mxu0 0
        %672 = vmatpush1.bf16.msra.mxu0 %v666
        %673 = vmatprep.subr.bf16.mxu0 0
        %674 = vmatpush1.bf16.msra.mxu0 0
        %675 = vmatprep.subr.bf16.mxu0 0
        %676 = vmatpush1.bf16.msra.mxu0 0
        %677 = vmatprep.subr.bf16.mxu0 0
        %678 = vmatpush1.bf16.msra.mxu0 0
        %679 = vmatprep.subr.bf16.mxu0 0
        %680 = vmatpush1.bf16.msra.mxu0 0
        %681 = vmatprep.subr.bf16.mxu0 0
        %682 = vmatpush1.bf16.msra.mxu0 0
        %683 = vmatprep.subr.bf16.mxu0 0
        %684 = vmatpush1.bf16.msra.mxu0 0
        %685 = vmatprep.subr.bf16.mxu0 0
        %686 = vmatpush1.bf16.msra.mxu0 0
        %687 = vmatprep.subr.bf16.mxu0 0
        %688 = vmatpush1.bf16.msra.mxu0 0
        %689 = vmatprep.subr.bf16.mxu0 0
        %690 = vmatpush1.bf16.msra.mxu0 0
        %691 = vmatprep.subr.bf16.mxu0 0
        %692 = vmatpush1.bf16.msra.mxu0 0
        %693 = vmatprep.subr.bf16.mxu0 0
        %694 = vmatpush1.bf16.msra.mxu0 0
        %695 = vmatprep.subr.bf16.mxu0 0
        %696 = vmatpush1.bf16.msra.mxu0 0
        %697 = vmatprep.subr.bf16.mxu0 0
        %698 = vmatpush1.bf16.msra.mxu0 0
        %699 = vmatprep.subr.bf16.mxu0 0
        %700 = vmatpush1.bf16.msra.mxu0 0
        %701 = vmatprep.subr.bf16.mxu0 0
        %702 = vmatpush1.bf16.msra.mxu0 0
        %703 = vmatprep.mubr.bf16.mxu0 0
        %704 = vmatmul.mubr.bf16.gmra.mrb[0].mxu0 %v669
        %v705 = vpop.f32.mrb[0].mxu0
        %v706 = vadd.f32 0.0, %v705
        %v707 = vpop.f32.mrb[0].mxu0
        %v708 = vpop.f32.mrb[0].mxu0
        %v709 = vpop.f32.mrb[0].mxu0
        %710 = vdwg.mxu0
        %v711 = vadd.f32 %v648, %v706
        %v712 = vpack.c.bf16 %v657, %v657
        %s713 = scalar_lea.vmem [#allocation5], 24
        %v714 = vld [vmem:[%s713] sm:$0xf]
        %v715 = vld [vmem:[%s713 + $0x4] sm:$0xf]
        %v718 = vunpack.c.l.b16 %v714
        %v719 = vunpack.c.l.b16 %v715
        %v720 = vpack.c.b16 %v719, %v718
        %v723 = vsel %vm560, %v712, 0
        %725 = vmatprep.subr.bf16.mxu0 0
        %726 = vmatpush1.bf16.msra.mxu0 %v720
        %727 = vmatprep.subr.bf16.mxu0 0
        %728 = vmatpush1.bf16.msra.mxu0 0
        %729 = vmatprep.subr.bf16.mxu0 0
        %730 = vmatpush1.bf16.msra.mxu0 0
        %731 = vmatprep.subr.bf16.mxu0 0
        %732 = vmatpush1.bf16.msra.mxu0 0
        %733 = vmatprep.subr.bf16.mxu0 0
        %734 = vmatpush1.bf16.msra.mxu0 0
        %735 = vmatprep.subr.bf16.mxu0 0
        %736 = vmatpush1.bf16.msra.mxu0 0
        %737 = vmatprep.subr.bf16.mxu0 0
        %738 = vmatpush1.bf16.msra.mxu0 0
        %739 = vmatprep.subr.bf16.mxu0 0
        %740 = vmatpush1.bf16.msra.mxu0 0
        %741 = vmatprep.subr.bf16.mxu0 0
        %742 = vmatpush1.bf16.msra.mxu0 0
        %743 = vmatprep.subr.bf16.mxu0 0
        %744 = vmatpush1.bf16.msra.mxu0 0
        %745 = vmatprep.subr.bf16.mxu0 0
        %746 = vmatpush1.bf16.msra.mxu0 0
        %747 = vmatprep.subr.bf16.mxu0 0
        %748 = vmatpush1.bf16.msra.mxu0 0
        %749 = vmatprep.subr.bf16.mxu0 0
        %750 = vmatpush1.bf16.msra.mxu0 0
        %751 = vmatprep.subr.bf16.mxu0 0
        %752 = vmatpush1.bf16.msra.mxu0 0
        %753 = vmatprep.subr.bf16.mxu0 0
        %754 = vmatpush1.bf16.msra.mxu0 0
        %755 = vmatprep.subr.bf16.mxu0 0
        %756 = vmatpush1.bf16.msra.mxu0 0
        %757 = vmatprep.mubr.bf16.mxu0 0
        %758 = vmatmul.mubr.bf16.gmra.mrb[0].mxu0 %v723
        %v759 = vpop.f32.mrb[0].mxu0
        %v760 = vadd.f32 0.0, %v759
        %v761 = vpop.f32.mrb[0].mxu0
        %v762 = vpop.f32.mrb[0].mxu0
        %v763 = vpop.f32.mrb[0].mxu0
        %764 = vdwg.mxu0
        %v765 = vadd.f32 %v711, %v760
        %v766 = vmul.f32 %v655, %v442
        %v767 = vmul.f32 %v657, %v546
        %v768 = vsub.f32 %v766, %v767
        %v769 = vmul.f32 %v657, %v442
        %v770 = vmul.f32 %v655, %v546
        %v771 = vadd.f32 %v769, %v770
        %v772 = vpack.c.bf16 %v768, %v768
        %s773 = scalar_lea.vmem [#allocation5], 32
        %v774 = vld [vmem:[%s773] sm:$0xf]
        %v775 = vld [vmem:[%s773 + $0x4] sm:$0xf]
        %v778 = vunpack.c.l.b16 %v774
        %v779 = vunpack.c.l.b16 %v775
        %v780 = vpack.c.b16 %v779, %v778
        %v783 = vsel %vm560, %v772, 0
        %785 = vmatprep.subr.bf16.mxu0 0
        %786 = vmatpush1.bf16.msra.mxu0 %v780
        %787 = vmatprep.subr.bf16.mxu0 0
        %788 = vmatpush1.bf16.msra.mxu0 0
        %789 = vmatprep.subr.bf16.mxu0 0
        %790 = vmatpush1.bf16.msra.mxu0 0
        %791 = vmatprep.subr.bf16.mxu0 0
        %792 = vmatpush1.bf16.msra.mxu0 0
        %793 = vmatprep.subr.bf16.mxu0 0
        %794 = vmatpush1.bf16.msra.mxu0 0
        %795 = vmatprep.subr.bf16.mxu0 0
        %796 = vmatpush1.bf16.msra.mxu0 0
        %797 = vmatprep.subr.bf16.mxu0 0
        %798 = vmatpush1.bf16.msra.mxu0 0
        %799 = vmatprep.subr.bf16.mxu0 0
        %800 = vmatpush1.bf16.msra.mxu0 0
        %801 = vmatprep.subr.bf16.mxu0 0
        %802 = vmatpush1.bf16.msra.mxu0 0
        %803 = vmatprep.subr.bf16.mxu0 0
        %804 = vmatpush1.bf16.msra.mxu0 0
        %805 = vmatprep.subr.bf16.mxu0 0
        %806 = vmatpush1.bf16.msra.mxu0 0
        %807 = vmatprep.subr.bf16.mxu0 0
        %808 = vmatpush1.bf16.msra.mxu0 0
        %809 = vmatprep.subr.bf16.mxu0 0
        %810 = vmatpush1.bf16.msra.mxu0 0
        %811 = vmatprep.subr.bf16.mxu0 0
        %812 = vmatpush1.bf16.msra.mxu0 0
        %813 = vmatprep.subr.bf16.mxu0 0
        %814 = vmatpush1.bf16.msra.mxu0 0
        %815 = vmatprep.subr.bf16.mxu0 0
        %816 = vmatpush1.bf16.msra.mxu0 0
        %817 = vmatprep.mubr.bf16.mxu0 0
        %818 = vmatmul.mubr.bf16.gmra.mrb[0].mxu0 %v783
        %v819 = vpop.f32.mrb[0].mxu0
        %v820 = vadd.f32 0.0, %v819
        %v821 = vpop.f32.mrb[0].mxu0
        %v822 = vpop.f32.mrb[0].mxu0
        %v823 = vpop.f32.mrb[0].mxu0
        %824 = vdwg.mxu0
        %v825 = vadd.f32 %v765, %v820
        %v826 = vpack.c.bf16 %v771, %v771
        %s827 = scalar_lea.vmem [#allocation5], 40
        %v828 = vld [vmem:[%s827] sm:$0xf]
        %v829 = vld [vmem:[%s827 + $0x4] sm:$0xf]
        %v832 = vunpack.c.l.b16 %v828
        %v833 = vunpack.c.l.b16 %v829
        %v834 = vpack.c.b16 %v833, %v832
        %v837 = vsel %vm560, %v826, 0
        %839 = vmatprep.subr.bf16.mxu0 0
        %840 = vmatpush1.bf16.msra.mxu0 %v834
        %841 = vmatprep.subr.bf16.mxu0 0
        %842 = vmatpush1.bf16.msra.mxu0 0
        %843 = vmatprep.subr.bf16.mxu0 0
        %844 = vmatpush1.bf16.msra.mxu0 0
        %845 = vmatprep.subr.bf16.mxu0 0
        %846 = vmatpush1.bf16.msra.mxu0 0
        %847 = vmatprep.subr.bf16.mxu0 0
        %848 = vmatpush1.bf16.msra.mxu0 0
        %849 = vmatprep.subr.bf16.mxu0 0
        %850 = vmatpush1.bf16.msra.mxu0 0
        %851 = vmatprep.subr.bf16.mxu0 0
        %852 = vmatpush1.bf16.msra.mxu0 0
        %853 = vmatprep.subr.bf16.mxu0 0
        %854 = vmatpush1.bf16.msra.mxu0 0
        %855 = vmatprep.subr.bf16.mxu0 0
        %856 = vmatpush1.bf16.msra.mxu0 0
        %857 = vmatprep.subr.bf16.mxu0 0
        %858 = vmatpush1.bf16.msra.mxu0 0
        %859 = vmatprep.subr.bf16.mxu0 0
        %860 = vmatpush1.bf16.msra.mxu0 0
        %861 = vmatprep.subr.bf16.mxu0 0
        %862 = vmatpush1.bf16.msra.mxu0 0
        %863 = vmatprep.subr.bf16.mxu0 0
        %864 = vmatpush1.bf16.msra.mxu0 0
        %865 = vmatprep.subr.bf16.mxu0 0
        %866 = vmatpush1.bf16.msra.mxu0 0
        %867 = vmatprep.subr.bf16.mxu0 0
        %868 = vmatpush1.bf16.msra.mxu0 0
        %869 = vmatprep.subr.bf16.mxu0 0
        %870 = vmatpush1.bf16.msra.mxu0 0
        %871 = vmatprep.mubr.bf16.mxu0 0
        %872 = vmatmul.mubr.bf16.gmra.mrb[0].mxu0 %v837
        %v873 = vpop.f32.mrb[0].mxu0
        %v874 = vadd.f32 0.0, %v873
        %v875 = vpop.f32.mrb[0].mxu0
        %v876 = vpop.f32.mrb[0].mxu0
        %v877 = vpop.f32.mrb[0].mxu0
        %878 = vdwg.mxu0
        %v879 = vadd.f32 %v825, %v874
        %v880 = vmul.f32 %v768, %v442
        %v881 = vmul.f32 %v771, %v546
        %v882 = vsub.f32 %v880, %v881
        %v883 = vmul.f32 %v771, %v442
        %v884 = vmul.f32 %v768, %v546
        %v885 = vadd.f32 %v883, %v884
        %v886 = vpack.c.bf16 %v882, %v882
        %s887 = scalar_lea.vmem [#allocation5], 48
        %v888 = vld [vmem:[%s887] sm:$0xf]
        %v889 = vld [vmem:[%s887 + $0x4] sm:$0xf]
        %v892 = vunpack.c.l.b16 %v888
        %v893 = vunpack.c.l.b16 %v889
        %v894 = vpack.c.b16 %v893, %v892
        %v897 = vsel %vm560, %v886, 0
        %899 = vmatprep.subr.bf16.mxu0 0
        %900 = vmatpush1.bf16.msra.mxu0 %v894
        %901 = vmatprep.subr.bf16.mxu0 0
        %902 = vmatpush1.bf16.msra.mxu0 0
        %903 = vmatprep.subr.bf16.mxu0 0
        %904 = vmatpush1.bf16.msra.mxu0 0
        %905 = vmatprep.subr.bf16.mxu0 0
        %906 = vmatpush1.bf16.msra.mxu0 0
        %907 = vmatprep.subr.bf16.mxu0 0
        %908 = vmatpush1.bf16.msra.mxu0 0
        %909 = vmatprep.subr.bf16.mxu0 0
        %910 = vmatpush1.bf16.msra.mxu0 0
        %911 = vmatprep.subr.bf16.mxu0 0
        %912 = vmatpush1.bf16.msra.mxu0 0
        %913 = vmatprep.subr.bf16.mxu0 0
        %914 = vmatpush1.bf16.msra.mxu0 0
        %915 = vmatprep.subr.bf16.mxu0 0
        %916 = vmatpush1.bf16.msra.mxu0 0
        %917 = vmatprep.subr.bf16.mxu0 0
        %918 = vmatpush1.bf16.msra.mxu0 0
        %919 = vmatprep.subr.bf16.mxu0 0
        %920 = vmatpush1.bf16.msra.mxu0 0
        %921 = vmatprep.subr.bf16.mxu0 0
        %922 = vmatpush1.bf16.msra.mxu0 0
        %923 = vmatprep.subr.bf16.mxu0 0
        %924 = vmatpush1.bf16.msra.mxu0 0
        %925 = vmatprep.subr.bf16.mxu0 0
        %926 = vmatpush1.bf16.msra.mxu0 0
        %927 = vmatprep.subr.bf16.mxu0 0
        %928 = vmatpush1.bf16.msra.mxu0 0
        %929 = vmatprep.subr.bf16.mxu0 0
        %930 = vmatpush1.bf16.msra.mxu0 0
        %931 = vmatprep.mubr.bf16.mxu0 0
        %932 = vmatmul.mubr.bf16.gmra.mrb[0].mxu0 %v897
        %v933 = vpop.f32.mrb[0].mxu0
        %v934 = vadd.f32 0.0, %v933
        %v935 = vpop.f32.mrb[0].mxu0
        %v936 = vpop.f32.mrb[0].mxu0
        %v937 = vpop.f32.mrb[0].mxu0
        %938 = vdwg.mxu0
        %v939 = vadd.f32 %v879, %v934
        %v940 = vpack.c.bf16 %v885, %v885
        %s941 = scalar_lea.vmem [#allocation5], 56
        %v942 = vld [vmem:[%s941] sm:$0xf]
        %v943 = vld [vmem:[%s941 + $0x4] sm:$0xf]
        %v946 = vunpack.c.l.b16 %v942
        %v947 = vunpack.c.l.b16 %v943
        %v948 = vpack.c.b16 %v947, %v946
        %v951 = vsel %vm560, %v940, 0
        %953 = vmatprep.subr.bf16.mxu0 0
        %954 = vmatpush1.bf16.msra.mxu0 %v948
        %955 = vmatprep.subr.bf16.mxu0 0
        %956 = vmatpush1.bf16.msra.mxu0 0
        %957 = vmatprep.subr.bf16.mxu0 0
        %958 = vmatpush1.bf16.msra.mxu0 0
        %959 = vmatprep.subr.bf16.mxu0 0
        %960 = vmatpush1.bf16.msra.mxu0 0
        %961 = vmatprep.subr.bf16.mxu0 0
        %962 = vmatpush1.bf16.msra.mxu0 0
        %963 = vmatprep.subr.bf16.mxu0 0
        %964 = vmatpush1.bf16.msra.mxu0 0
        %965 = vmatprep.subr.bf16.mxu0 0
        %966 = vmatpush1.bf16.msra.mxu0 0
        %967 = vmatprep.subr.bf16.mxu0 0
        %968 = vmatpush1.bf16.msra.mxu0 0
        %969 = vmatprep.subr.bf16.mxu0 0
        %970 = vmatpush1.bf16.msra.mxu0 0
        %971 = vmatprep.subr.bf16.mxu0 0
        %972 = vmatpush1.bf16.msra.mxu0 0
        %973 = vmatprep.subr.bf16.mxu0 0
        %974 = vmatpush1.bf16.msra.mxu0 0
        %975 = vmatprep.subr.bf16.mxu0 0
        %976 = vmatpush1.bf16.msra.mxu0 0
        %977 = vmatprep.subr.bf16.mxu0 0
        %978 = vmatpush1.bf16.msra.mxu0 0
        %979 = vmatprep.subr.bf16.mxu0 0
        %980 = vmatpush1.bf16.msra.mxu0 0
        %981 = vmatprep.subr.bf16.mxu0 0
        %982 = vmatpush1.bf16.msra.mxu0 0
        %983 = vmatprep.subr.bf16.mxu0 0
        %984 = vmatpush1.bf16.msra.mxu0 0
        %985 = vmatprep.mubr.bf16.mxu0 0
        %986 = vmatmul.mubr.bf16.gmra.mrb[0].mxu0 %v951
        %v987 = vpop.f32.mrb[0].mxu0
        %v988 = vadd.f32 0.0, %v987
        %v989 = vpop.f32.mrb[0].mxu0
        %v990 = vpop.f32.mrb[0].mxu0
        %v991 = vpop.f32.mrb[0].mxu0
        %992 = vdwg.mxu0
        %v993 = vadd.f32 %v939, %v988
        %v994 = vmul.f32 %v882, %v442
        %v995 = vmul.f32 %v885, %v546
        %v996 = vsub.f32 %v994, %v995
        %v997 = vmul.f32 %v885, %v442
        %v998 = vmul.f32 %v882, %v546
        %v999 = vadd.f32 %v997, %v998
        %v1000 = vpack.c.bf16 %v996, %v996
        %s1001 = scalar_lea.vmem [#allocation5], 64
        %v1002 = vld [vmem:[%s1001] sm:$0xf]
        %v1003 = vld [vmem:[%s1001 + $0x4] sm:$0xf]
        %v1006 = vunpack.c.l.b16 %v1002
        %v1007 = vunpack.c.l.b16 %v1003
        %v1008 = vpack.c.b16 %v1007, %v1006
        %v1011 = vsel %vm560, %v1000, 0
        %1013 = vmatprep.subr.bf16.mxu0 0
        %1014 = vmatpush1.bf16.msra.mxu0 %v1008
        %1015 = vmatprep.subr.bf16.mxu0 0
        %1016 = vmatpush1.bf16.msra.mxu0 0
        %1017 = vmatprep.subr.bf16.mxu0 0
        %1018 = vmatpush1.bf16.msra.mxu0 0
        %1019 = vmatprep.subr.bf16.mxu0 0
        %1020 = vmatpush1.bf16.msra.mxu0 0
        %1021 = vmatprep.subr.bf16.mxu0 0
        %1022 = vmatpush1.bf16.msra.mxu0 0
        %1023 = vmatprep.subr.bf16.mxu0 0
        %1024 = vmatpush1.bf16.msra.mxu0 0
        %1025 = vmatprep.subr.bf16.mxu0 0
        %1026 = vmatpush1.bf16.msra.mxu0 0
        %1027 = vmatprep.subr.bf16.mxu0 0
        %1028 = vmatpush1.bf16.msra.mxu0 0
        %1029 = vmatprep.subr.bf16.mxu0 0
        %1030 = vmatpush1.bf16.msra.mxu0 0
        %1031 = vmatprep.subr.bf16.mxu0 0
        %1032 = vmatpush1.bf16.msra.mxu0 0
        %1033 = vmatprep.subr.bf16.mxu0 0
        %1034 = vmatpush1.bf16.msra.mxu0 0
        %1035 = vmatprep.subr.bf16.mxu0 0
        %1036 = vmatpush1.bf16.msra.mxu0 0
        %1037 = vmatprep.subr.bf16.mxu0 0
        %1038 = vmatpush1.bf16.msra.mxu0 0
        %1039 = vmatprep.subr.bf16.mxu0 0
        %1040 = vmatpush1.bf16.msra.mxu0 0
        %1041 = vmatprep.subr.bf16.mxu0 0
        %1042 = vmatpush1.bf16.msra.mxu0 0
        %1043 = vmatprep.subr.bf16.mxu0 0
        %1044 = vmatpush1.bf16.msra.mxu0 0
        %1045 = vmatprep.mubr.bf16.mxu0 0
        %1046 = vmatmul.mubr.bf16.gmra.mrb[0].mxu0 %v1011
        %v1047 = vpop.f32.mrb[0].mxu0
        %v1048 = vadd.f32 0.0, %v1047
        %v1049 = vpop.f32.mrb[0].mxu0
        %v1050 = vpop.f32.mrb[0].mxu0
        %v1051 = vpop.f32.mrb[0].mxu0
        %1052 = vdwg.mxu0
        %v1053 = vadd.f32 %v993, %v1048
        %v1054 = vpack.c.bf16 %v999, %v999
        %s1055 = scalar_lea.vmem [#allocation5], 72
        %v1056 = vld [vmem:[%s1055] sm:$0xf]
        %v1057 = vld [vmem:[%s1055 + $0x4] sm:$0xf]
        %v1060 = vunpack.c.l.b16 %v1056
        %v1061 = vunpack.c.l.b16 %v1057
        %v1062 = vpack.c.b16 %v1061, %v1060
        %v1065 = vsel %vm560, %v1054, 0
        %1067 = vmatprep.subr.bf16.mxu0 0
        %1068 = vmatpush1.bf16.msra.mxu0 %v1062
        %1069 = vmatprep.subr.bf16.mxu0 0
        %1070 = vmatpush1.bf16.msra.mxu0 0
        %1071 = vmatprep.subr.bf16.mxu0 0
        %1072 = vmatpush1.bf16.msra.mxu0 0
        %1073 = vmatprep.subr.bf16.mxu0 0
        %1074 = vmatpush1.bf16.msra.mxu0 0
        %1075 = vmatprep.subr.bf16.mxu0 0
        %1076 = vmatpush1.bf16.msra.mxu0 0
        %1077 = vmatprep.subr.bf16.mxu0 0
        %1078 = vmatpush1.bf16.msra.mxu0 0
        %1079 = vmatprep.subr.bf16.mxu0 0
        %1080 = vmatpush1.bf16.msra.mxu0 0
        %1081 = vmatprep.subr.bf16.mxu0 0
        %1082 = vmatpush1.bf16.msra.mxu0 0
        %1083 = vmatprep.subr.bf16.mxu0 0
        %1084 = vmatpush1.bf16.msra.mxu0 0
        %1085 = vmatprep.subr.bf16.mxu0 0
        %1086 = vmatpush1.bf16.msra.mxu0 0
        %1087 = vmatprep.subr.bf16.mxu0 0
        %1088 = vmatpush1.bf16.msra.mxu0 0
        %1089 = vmatprep.subr.bf16.mxu0 0
        %1090 = vmatpush1.bf16.msra.mxu0 0
        %1091 = vmatprep.subr.bf16.mxu0 0
        %1092 = vmatpush1.bf16.msra.mxu0 0
        %1093 = vmatprep.subr.bf16.mxu0 0
        %1094 = vmatpush1.bf16.msra.mxu0 0
        %1095 = vmatprep.subr.bf16.mxu0 0
        %1096 = vmatpush1.bf16.msra.mxu0 0
        %1097 = vmatprep.subr.bf16.mxu0 0
        %1098 = vmatpush1.bf16.msra.mxu0 0
        %1099 = vmatprep.mubr.bf16.mxu0 0
        %1100 = vmatmul.mubr.bf16.gmra.mrb[0].mxu0 %v1065
        %v1101 = vpop.f32.mrb[0].mxu0
        %v1102 = vadd.f32 0.0, %v1101
        %v1103 = vpop.f32.mrb[0].mxu0
        %v1104 = vpop.f32.mrb[0].mxu0
        %v1105 = vpop.f32.mrb[0].mxu0
        %1106 = vdwg.mxu0
        %v1107 = vadd.f32 %v1053, %v1102
        %v1108 = vld [vmem:[%s2] sm:$0x1]
        %v1110 = vlaneseq
        %v1111 = vshrl.u32 %v1110, 7
        %v1112 = vsub.s32 0, %v1111
        %v1113 = vrot.slane %v1108, %v1112
        %v1115 = vadd.f32 %v1107, %v1113
        %v1116 = vtanh.pop %v1115
        %v1117 = vand.u32 2147483647, %v1116
        %vm1118 = vcmp.le.f32.partialorder %v1117, 0.7853982
        %vm1119 = vcmp.lt.s32.totalorder %v1116, 0
        %v1120 = vand.u32 %v1116, 2139095040
        %v1121 = vshrl.u32 %v1120, 23
        %v1122 = vsub.s32 %v1121, 127
        %v1123 = vand.u32 2147483647, %v1116
        %v1124 = vand.u32 %v1123, 8388607
        %v1125 = vor.u32 %v1124, 8388608
        %v1126 = vsub.s32 0, %v1125
        %v1127 = vadd.s32 %v1122, 1
        %vm1128 = vcmp.gt.s32.totalorder %v1127, 0
        %v1129 = vsel %vm1128, %v1127, 0
        %v1130 = vshrl.u32 %v1129, 5
        %v1131 = vand.u32 %v1129, 31
        %v1132 = vsub.s32 32, %v1131
        %v1133 = vshrl.u32 683565275, %v1132
        %v1134 = vshll.u32 683565275, %v1131
        %v1135 = vshrl.u32 2475754826, %v1132
        %v1136 = vor.u32 %v1134, %v1135
        %v1137 = vshll.u32 2475754826, %v1131
        %v1138 = vshrl.u32 2131351028, %v1132
        %v1139 = vor.u32 %v1137, %v1138
        %v1140 = vshll.u32 2131351028, %v1131
        %v1141 = vshrl.u32 2102212464, %v1132
        %v1142 = vor.u32 %v1140, %v1141
        %v1143 = vshll.u32 2102212464, %v1131
        %v1144 = vshrl.u32 920167782, %v1132
        %v1145 = vor.u32 %v1143, %v1144
        %v1146 = vshll.u32 920167782, %v1131
        %v1147 = vshrl.u32 1326507024, %v1132
        %v1148 = vor.u32 %v1146, %v1147
        %vm1149 = vcmp.lt.s32.totalorder %v1130, 1
        %vm1150 = vcmp.lt.s32.totalorder %v1130, 2
        %vm1151 = vcmp.lt.s32.totalorder %v1130, 3
        %vm1152 = vcmp.lt.s32.totalorder %v1130, 4
        %v1153 = vsel %vm1149, %v1133, %v1136
        %v1154 = vsel %vm1152, %v1142, 2102212464
        %v1155 = vsel %vm1151, %v1139, %v1154
        %v1156 = vsel %vm1150, %v1153, %v1155
        %v1157 = vsel %vm1149, %v1136, %v1139
        %v1158 = vsel %vm1152, %v1145, 920167782
        %v1159 = vsel %vm1151, %v1142, %v1158
        %v1160 = vsel %vm1150, %v1157, %v1159
        %v1161 = vsel %vm1149, %v1139, %v1142
        %v1162 = vsel %vm1152, %v1148, 1326507024
        %v1163 = vsel %vm1151, %v1145, %v1162
        %v1164 = vsel %vm1150, %v1161, %v1163
        %v1165 = vshll.u32 %v1125, 8
        %v1166 = vmul.u32.u64.compose %v1165, %v1164
        %v1167 = vextract.low.u32 %v1166
        %v1168 = vextract.high.u32 %v1166
        %v1169 = vmul.u32.u64.compose %v1165, %v1160
        %v1170 = vextract.low.u32 %v1169
        %v1171 = vextract.high.u32 %v1169
        %v1172 = vmul.u32 %v1165, %v1156
        %v1173 = vadd.s32 %v1168, %v1170
        %vm1174 = vc.u32 %v1168, %v1170
        %v1175 = vadd.s32 %v1171, 1
        %v1176 = vsel %vm1174, %v1175, %v1171
        %v1177 = vadd.s32 %v1172, %v1176
        %v1178 = vadd.s32 %v1177, 536870912
        %v1179 = vshrl.u32 %v1178, 30
        %v1180 = vshll.u32 %v1179, 30
        %v1181 = vsub.s32 %v1177, %v1180
        %vm1182 = vcmp.lt.s32.totalorder %v1181, 0
        %v1183 = vsub.s32 0, %v1181
        %v1184 = vsel %vm1182, %v1183, %v1181
        %v1185 = vclz %v1184
        %v1186 = vsub.s32 %v1185, 2
        %vm1187 = vcmp.gt.s32.totalorder 0, %v1186
        %v1188 = vsel %vm1187, 0, %v1186
        %v1189 = vsub.s32 32, %v1188
        %v1190 = vshll.u32 %v1181, %v1188
        %v1191 = vshrl.u32 %v1173, %v1189
        %v1192 = vor.u32 %v1190, %v1191
        %v1193 = vsub.s32 4294967266, %v1188
        %v1194 = vadd.s32 %v1193, 127
        %v1195 = vshll.u32 %v1194, 23
        %v1196 = vor.u32 4788187, %v1195
        %v1197 = vand.u32 2147483647, %v1196
        %v1199 = vcvt.s32.f32 %v1192
        %v1200 = vmul.f32 %v1199, %v1197
        %v1201 = vxor.u32 %v1200, 2147483648
        %v1202 = vsel %vm1119, %v1201, %v1200
        %v1203 = vsub.s32 4, %v1179
        %v1204 = vsel %vm1119, %v1203, %v1179
        %v1205 = vsel %vm1118, %v1116, %v1202
        %v1206 = vsel %vm1118, 0, %v1204
        %v1207 = vcosq.f32.pop %v1205
        %v1208 = vsinq.f32.pop %v1205
        %vm1209 = vweird.f32 %v1116
        %v1210 = vand.u32 %v1206, 3
        %vm1211 = vcmp.lt.s32.totalorder %v1210, 2
        %vm1212 = vcmp.eq.s32.totalorder %v1210, 0
        %v1213 = vxor.u32 %v1208, 2147483648
        %v1214 = vsel %vm1212, %v1207, %v1213
        %vm1215 = vcmp.eq.s32.totalorder %v1210, 2
        %v1216 = vxor.u32 %v1207, 2147483648
        %v1217 = vsel %vm1215, %v1216, %v1208
        %v1218 = vsel %vm1211, %v1214, %v1217
        %v1219 = vsel %vm1209, nan, %v1218
        %v1220 = vand.u32 2147483647, %v1116
        %vm1221 = vcmp.le.f32.partialorder %v1220, 0.7853982
        %vm1222 = vcmp.lt.s32.totalorder %v1116, 0
        %v1223 = vand.u32 %v1116, 2139095040
        %v1224 = vshrl.u32 %v1223, 23
        %v1225 = vsub.s32 %v1224, 127
        %v1226 = vand.u32 2147483647, %v1116
        %v1227 = vand.u32 %v1226, 8388607
        %v1228 = vor.u32 %v1227, 8388608
        %v1229 = vsub.s32 0, %v1228
        %v1230 = vadd.s32 %v1225, 1
        %vm1231 = vcmp.gt.s32.totalorder %v1230, 0
        %v1232 = vsel %vm1231, %v1230, 0
        %v1233 = vshrl.u32 %v1232, 5
        %v1234 = vand.u32 %v1232, 31
        %v1235 = vsub.s32 32, %v1234
        %v1236 = vshrl.u32 683565275, %v1235
        %v1237 = vshll.u32 683565275, %v1234
        %v1238 = vshrl.u32 2475754826, %v1235
        %v1239 = vor.u32 %v1237, %v1238
        %v1240 = vshll.u32 2475754826, %v1234
        %v1241 = vshrl.u32 2131351028, %v1235
        %v1242 = vor.u32 %v1240, %v1241
        %v1243 = vshll.u32 2131351028, %v1234
        %v1244 = vshrl.u32 2102212464, %v1235
        %v1245 = vor.u32 %v1243, %v1244
        %v1246 = vshll.u32 2102212464, %v1234
        %v1247 = vshrl.u32 920167782, %v1235
        %v1248 = vor.u32 %v1246, %v1247
        %v1249 = vshll.u32 920167782, %v1234
        %v1250 = vshrl.u32 1326507024, %v1235
        %v1251 = vor.u32 %v1249, %v1250
        %vm1252 = vcmp.lt.s32.totalorder %v1233, 1
        %vm1253 = vcmp.lt.s32.totalorder %v1233, 2
        %vm1254 = vcmp.lt.s32.totalorder %v1233, 3
        %vm1255 = vcmp.lt.s32.totalorder %v1233, 4
        %v1256 = vsel %vm1252, %v1236, %v1239
        %v1257 = vsel %vm1255, %v1245, 2102212464
        %v1258 = vsel %vm1254, %v1242, %v1257
        %v1259 = vsel %vm1253, %v1256, %v1258
        %v1260 = vsel %vm1252, %v1239, %v1242
        %v1261 = vsel %vm1255, %v1248, 920167782
        %v1262 = vsel %vm1254, %v1245, %v1261
        %v1263 = vsel %vm1253, %v1260, %v1262
        %v1264 = vsel %vm1252, %v1242, %v1245
        %v1265 = vsel %vm1255, %v1251, 1326507024
        %v1266 = vsel %vm1254, %v1248, %v1265
        %v1267 = vsel %vm1253, %v1264, %v1266
        %v1268 = vshll.u32 %v1228, 8
        %v1269 = vmul.u32.u64.compose %v1268, %v1267
        %v1270 = vextract.low.u32 %v1269
        %v1271 = vextract.high.u32 %v1269
        %v1272 = vmul.u32.u64.compose %v1268, %v1263
        %v1273 = vextract.low.u32 %v1272
        %v1274 = vextract.high.u32 %v1272
        %v1275 = vmul.u32 %v1268, %v1259
        %v1276 = vadd.s32 %v1271, %v1273
        %vm1277 = vc.u32 %v1271, %v1273
        %v1278 = vadd.s32 %v1274, 1
        %v1279 = vsel %vm1277, %v1278, %v1274
        %v1280 = vadd.s32 %v1275, %v1279
        %v1281 = vadd.s32 %v1280, 536870912
        %v1282 = vshrl.u32 %v1281, 30
        %v1283 = vshll.u32 %v1282, 30
        %v1284 = vsub.s32 %v1280, %v1283
        %vm1285 = vcmp.lt.s32.totalorder %v1284, 0
        %v1286 = vsub.s32 0, %v1284
        %v1287 = vsel %vm1285, %v1286, %v1284
        %v1288 = vclz %v1287
        %v1289 = vsub.s32 %v1288, 2
        %vm1290 = vcmp.gt.s32.totalorder 0, %v1289
        %v1291 = vsel %vm1290, 0, %v1289
        %v1292 = vsub.s32 32, %v1291
        %v1293 = vshll.u32 %v1284, %v1291
        %v1294 = vshrl.u32 %v1276, %v1292
        %v1295 = vor.u32 %v1293, %v1294
        %v1296 = vsub.s32 4294967266, %v1291
        %v1297 = vadd.s32 %v1296, 127
        %v1298 = vshll.u32 %v1297, 23
        %v1299 = vor.u32 4788187, %v1298
        %v1300 = vand.u32 2147483647, %v1299
        %v1302 = vcvt.s32.f32 %v1295
        %v1303 = vmul.f32 %v1302, %v1300
        %v1304 = vxor.u32 %v1303, 2147483648
        %v1305 = vsel %vm1222, %v1304, %v1303
        %v1306 = vsub.s32 4, %v1282
        %v1307 = vsel %vm1222, %v1306, %v1282
        %v1308 = vsel %vm1221, %v1116, %v1305
        %v1309 = vsel %vm1221, 0, %v1307
        %v1310 = vcosq.f32.pop %v1308
        %v1311 = vsinq.f32.pop %v1308
        %vm1312 = vweird.f32 %v1116
        %v1313 = vadd.s32 %v1309, 3
        %v1314 = vand.u32 %v1313, 3
        %vm1315 = vcmp.lt.s32.totalorder %v1314, 2
        %vm1316 = vcmp.eq.s32.totalorder %v1314, 0
        %v1317 = vxor.u32 %v1311, 2147483648
        %v1318 = vsel %vm1316, %v1310, %v1317
        %vm1319 = vcmp.eq.s32.totalorder %v1314, 2
        %v1320 = vxor.u32 %v1310, 2147483648
        %v1321 = vsel %vm1319, %v1320, %v1311
        %v1322 = vsel %vm1315, %v1318, %v1321
        %v1323 = vsel %vm1312, nan, %v1322
        %v1324 = vpack.c.bf16 %v1219, %v1219
        %v1325 = vld [vmem:[#allocation7] sm:$0xf]
        %v1326 = vld [vmem:[#allocation7 + $0x4] sm:$0xf]
        %v1327 = vld [vmem:[#allocation7 + $0x8] sm:$0xf]
        %v1328 = vld [vmem:[#allocation7 + $0xc] sm:$0xf]
        %v1329 = vpack.c.bf16 %v1323, %v1323
        %s1330 = scalar_lea.vmem [#allocation7], 16
        %v1331 = vld [vmem:[%s1330] sm:$0xf]
        %v1332 = vld [vmem:[%s1330 + $0x4] sm:$0xf]
        %v1333 = vld [vmem:[%s1330 + $0x8] sm:$0xf]
        %v1334 = vld [vmem:[%s1330 + $0xc] sm:$0xf]
        %v1339 = vunpack.c.l.b16 %v1331
        %v1340 = vunpack.c.l.b16 %v1332
        %v1341 = vunpack.c.l.b16 %v1333
        %v1342 = vunpack.c.l.b16 %v1334
        %v1343 = vpack.c.b16 %v1340, %v1339
        %v1344 = vpack.c.b16 %v1342, %v1341
        %vm1347 = vcmask 261120
        %v1349 = vsel %vm1347, %v1329, 0
        %1351 = vmatprep.subr.bf16.mxu0 0
        %1352 = vmatpush1.bf16.msra.mxu0 %v1343
        %1353 = vmatprep.subr.bf16.mxu0 0
        %1354 = vmatpush1.bf16.msra.mxu0 %v1344
        %1355 = vmatprep.subr.bf16.mxu0 0
        %1356 = vmatpush1.bf16.msra.mxu0 0
        %1357 = vmatprep.subr.bf16.mxu0 0
        %1358 = vmatpush1.bf16.msra.mxu0 0
        %1359 = vmatprep.subr.bf16.mxu0 0
        %1360 = vmatpush1.bf16.msra.mxu0 0
        %1361 = vmatprep.subr.bf16.mxu0 0
        %1362 = vmatpush1.bf16.msra.mxu0 0
        %1363 = vmatprep.subr.bf16.mxu0 0
        %1364 = vmatpush1.bf16.msra.mxu0 0
        %1365 = vmatprep.subr.bf16.mxu0 0
        %1366 = vmatpush1.bf16.msra.mxu0 0
        %1367 = vmatprep.subr.bf16.mxu0 0
        %1368 = vmatpush1.bf16.msra.mxu0 0
        %1369 = vmatprep.subr.bf16.mxu0 0
        %1370 = vmatpush1.bf16.msra.mxu0 0
        %1371 = vmatprep.subr.bf16.mxu0 0
        %1372 = vmatpush1.bf16.msra.mxu0 0
        %1373 = vmatprep.subr.bf16.mxu0 0
        %1374 = vmatpush1.bf16.msra.mxu0 0
        %1375 = vmatprep.subr.bf16.mxu0 0
        %1376 = vmatpush1.bf16.msra.mxu0 0
        %1377 = vmatprep.subr.bf16.mxu0 0
        %1378 = vmatpush1.bf16.msra.mxu0 0
        %1379 = vmatprep.subr.bf16.mxu0 0
        %1380 = vmatpush1.bf16.msra.mxu0 0
        %1381 = vmatprep.subr.bf16.mxu0 0
        %1382 = vmatpush1.bf16.msra.mxu0 0
        %1383 = vmatprep.mubr.bf16.mxu0 0
        %1384 = vmatmul.mubr.bf16.gmra.mrb[0].mxu0 %v1349
        %v1385 = vpop.f32.mrb[0].mxu0
        %v1386 = vadd.f32 0.0, %v1385
        %v1387 = vpop.f32.mrb[0].mxu0
        %v1388 = vpop.f32.mrb[0].mxu0
        %v1389 = vpop.f32.mrb[0].mxu0
        %1390 = vdwg.mxu0
        %v1395 = vunpack.c.l.b16 %v1325
        %v1396 = vunpack.c.l.b16 %v1326
        %v1397 = vunpack.c.l.b16 %v1327
        %v1398 = vunpack.c.l.b16 %v1328
        %v1399 = vpack.c.b16 %v1396, %v1395
        %v1400 = vpack.c.b16 %v1398, %v1397
        %v1404 = vsel %vm1347, %v1324, 0
        %1406 = vmatprep.subr.bf16.mxu0 0
        %1407 = vmatpush1.bf16.msra.mxu0 %v1399
        %1408 = vmatprep.subr.bf16.mxu0 0
        %1409 = vmatpush1.bf16.msra.mxu0 %v1400
        %1410 = vmatprep.subr.bf16.mxu0 0
        %1411 = vmatpush1.bf16.msra.mxu0 0
        %1412 = vmatprep.subr.bf16.mxu0 0
        %1413 = vmatpush1.bf16.msra.mxu0 0
        %1414 = vmatprep.subr.bf16.mxu0 0
        %1415 = vmatpush1.bf16.msra.mxu0 0
        %1416 = vmatprep.subr.bf16.mxu0 0
        %1417 = vmatpush1.bf16.msra.mxu0 0
        %1418 = vmatprep.subr.bf16.mxu0 0
        %1419 = vmatpush1.bf16.msra.mxu0 0
        %1420 = vmatprep.subr.bf16.mxu0 0
        %1421 = vmatpush1.bf16.msra.mxu0 0
        %1422 = vmatprep.subr.bf16.mxu0 0
        %1423 = vmatpush1.bf16.msra.mxu0 0
        %1424 = vmatprep.subr.bf16.mxu0 0
        %1425 = vmatpush1.bf16.msra.mxu0 0
        %1426 = vmatprep.subr.bf16.mxu0 0
        %1427 = vmatpush1.bf16.msra.mxu0 0
        %1428 = vmatprep.subr.bf16.mxu0 0
        %1429 = vmatpush1.bf16.msra.mxu0 0
        %1430 = vmatprep.subr.bf16.mxu0 0
        %1431 = vmatpush1.bf16.msra.mxu0 0
        %1432 = vmatprep.subr.bf16.mxu0 0
        %1433 = vmatpush1.bf16.msra.mxu0 0
        %1434 = vmatprep.subr.bf16.mxu0 0
        %1435 = vmatpush1.bf16.msra.mxu0 0
        %1436 = vmatprep.subr.bf16.mxu0 0
        %1437 = vmatpush1.bf16.msra.mxu0 0
        %1438 = vmatprep.mubr.bf16.mxu0 0
        %1439 = vmatmul.mubr.bf16.gmra.mrb[0].mxu0 %v1404
        %v1440 = vpop.f32.mrb[0].mxu0
        %v1441 = vadd.f32 %v1386, %v1440
        %v1442 = vpop.f32.mrb[0].mxu0
        %v1443 = vpop.f32.mrb[0].mxu0
        %v1444 = vpop.f32.mrb[0].mxu0
        %1445 = vdwg.mxu0
        %v1446 = vmul.f32 %v1219, %v1219
        %v1447 = vmul.f32 %v1323, %v1323
        %v1448 = vsub.f32 %v1446, %v1447
        %v1449 = vmul.f32 %v1323, %v1219
        %v1450 = vadd.f32 %v1449, %v1449
        %v1451 = vpack.c.bf16 %v1448, %v1448
        %s1452 = scalar_lea.vmem [#allocation7], 32
        %v1453 = vld [vmem:[%s1452] sm:$0xf]
        %v1454 = vld [vmem:[%s1452 + $0x4] sm:$0xf]
        %v1455 = vld [vmem:[%s1452 + $0x8] sm:$0xf]
        %v1456 = vld [vmem:[%s1452 + $0xc] sm:$0xf]
        %v1461 = vunpack.c.l.b16 %v1453
        %v1462 = vunpack.c.l.b16 %v1454
        %v1463 = vunpack.c.l.b16 %v1455
        %v1464 = vunpack.c.l.b16 %v1456
        %v1465 = vpack.c.b16 %v1462, %v1461
        %v1466 = vpack.c.b16 %v1464, %v1463
        %v1470 = vsel %vm1347, %v1451, 0
        %1472 = vmatprep.subr.bf16.mxu0 0
        %1473 = vmatpush1.bf16.msra.mxu0 %v1465
        %1474 = vmatprep.subr.bf16.mxu0 0
        %1475 = vmatpush1.bf16.msra.mxu0 %v1466
        %1476 = vmatprep.subr.bf16.mxu0 0
        %1477 = vmatpush1.bf16.msra.mxu0 0
        %1478 = vmatprep.subr.bf16.mxu0 0
        %1479 = vmatpush1.bf16.msra.mxu0 0
        %1480 = vmatprep.subr.bf16.mxu0 0
        %1481 = vmatpush1.bf16.msra.mxu0 0
        %1482 = vmatprep.subr.bf16.mxu0 0
        %1483 = vmatpush1.bf16.msra.mxu0 0
        %1484 = vmatprep.subr.bf16.mxu0 0
        %1485 = vmatpush1.bf16.msra.mxu0 0
        %1486 = vmatprep.subr.bf16.mxu0 0
        %1487 = vmatpush1.bf16.msra.mxu0 0
        %1488 = vmatprep.subr.bf16.mxu0 0
        %1489 = vmatpush1.bf16.msra.mxu0 0
        %1490 = vmatprep.subr.bf16.mxu0 0
        %1491 = vmatpush1.bf16.msra.mxu0 0
        %1492 = vmatprep.subr.bf16.mxu0 0
        %1493 = vmatpush1.bf16.msra.mxu0 0
        %1494 = vmatprep.subr.bf16.mxu0 0
        %1495 = vmatpush1.bf16.msra.mxu0 0
        %1496 = vmatprep.subr.bf16.mxu0 0
        %1497 = vmatpush1.bf16.msra.mxu0 0
        %1498 = vmatprep.subr.bf16.mxu0 0
        %1499 = vmatpush1.bf16.msra.mxu0 0
        %1500 = vmatprep.subr.bf16.mxu0 0
        %1501 = vmatpush1.bf16.msra.mxu0 0
        %1502 = vmatprep.subr.bf16.mxu0 0
        %1503 = vmatpush1.bf16.msra.mxu0 0
        %1504 = vmatprep.mubr.bf16.mxu0 0
        %1505 = vmatmul.mubr.bf16.gmra.mrb[0].mxu0 %v1470
        %v1506 = vpop.f32.mrb[0].mxu0
        %v1507 = vadd.f32 0.0, %v1506
        %v1508 = vpop.f32.mrb[0].mxu0
        %v1509 = vpop.f32.mrb[0].mxu0
        %v1510 = vpop.f32.mrb[0].mxu0
        %1511 = vdwg.mxu0
        %v1512 = vadd.f32 %v1441, %v1507
        %v1513 = vpack.c.bf16 %v1450, %v1450
        %s1514 = scalar_lea.vmem [#allocation7], 48
        %v1515 = vld [vmem:[%s1514] sm:$0xf]
        %v1516 = vld [vmem:[%s1514 + $0x4] sm:$0xf]
        %v1517 = vld [vmem:[%s1514 + $0x8] sm:$0xf]
        %v1518 = vld [vmem:[%s1514 + $0xc] sm:$0xf]
        %v1523 = vunpack.c.l.b16 %v1515
        %v1524 = vunpack.c.l.b16 %v1516
        %v1525 = vunpack.c.l.b16 %v1517
        %v1526 = vunpack.c.l.b16 %v1518
        %v1527 = vpack.c.b16 %v1524, %v1523
        %v1528 = vpack.c.b16 %v1526, %v1525
        %v1532 = vsel %vm1347, %v1513, 0
        %1534 = vmatprep.subr.bf16.mxu0 0
        %1535 = vmatpush1.bf16.msra.mxu0 %v1527
        %1536 = vmatprep.subr.bf16.mxu0 0
        %1537 = vmatpush1.bf16.msra.mxu0 %v1528
        %1538 = vmatprep.subr.bf16.mxu0 0
        %1539 = vmatpush1.bf16.msra.mxu0 0
        %1540 = vmatprep.subr.bf16.mxu0 0
        %1541 = vmatpush1.bf16.msra.mxu0 0
        %1542 = vmatprep.subr.bf16.mxu0 0
        %1543 = vmatpush1.bf16.msra.mxu0 0
        %1544 = vmatprep.subr.bf16.mxu0 0
        %1545 = vmatpush1.bf16.msra.mxu0 0
        %1546 = vmatprep.subr.bf16.mxu0 0
        %1547 = vmatpush1.bf16.msra.mxu0 0
        %1548 = vmatprep.subr.bf16.mxu0 0
        %1549 = vmatpush1.bf16.msra.mxu0 0
        %1550 = vmatprep.subr.bf16.mxu0 0
        %1551 = vmatpush1.bf16.msra.mxu0 0
        %1552 = vmatprep.subr.bf16.mxu0 0
        %1553 = vmatpush1.bf16.msra.mxu0 0
        %1554 = vmatprep.subr.bf16.mxu0 0
        %1555 = vmatpush1.bf16.msra.mxu0 0
        %1556 = vmatprep.subr.bf16.mxu0 0
        %1557 = vmatpush1.bf16.msra.mxu0 0
        %1558 = vmatprep.subr.bf16.mxu0 0
        %1559 = vmatpush1.bf16.msra.mxu0 0
        %1560 = vmatprep.subr.bf16.mxu0 0
        %1561 = vmatpush1.bf16.msra.mxu0 0
        %1562 = vmatprep.subr.bf16.mxu0 0
        %1563 = vmatpush1.bf16.msra.mxu0 0
        %1564 = vmatprep.subr.bf16.mxu0 0
        %1565 = vmatpush1.bf16.msra.mxu0 0
        %1566 = vmatprep.mubr.bf16.mxu0 0
        %1567 = vmatmul.mubr.bf16.gmra.mrb[0].mxu0 %v1532
        %v1568 = vpop.f32.mrb[0].mxu0
        %v1569 = vadd.f32 0.0, %v1568
        %v1570 = vpop.f32.mrb[0].mxu0
        %v1571 = vpop.f32.mrb[0].mxu0
        %v1572 = vpop.f32.mrb[0].mxu0
        %1573 = vdwg.mxu0
        %v1574 = vadd.f32 %v1512, %v1569
        %v1575 = vmul.f32 %v1448, %v1219
        %v1576 = vmul.f32 %v1450, %v1323
        %v1577 = vsub.f32 %v1575, %v1576
        %v1578 = vmul.f32 %v1450, %v1219
        %v1579 = vmul.f32 %v1448, %v1323
        %v1580 = vadd.f32 %v1578, %v1579
        %v1581 = vpack.c.bf16 %v1577, %v1577
        %s1582 = scalar_lea.vmem [#allocation7], 64
        %v1583 = vld [vmem:[%s1582] sm:$0xf]
        %v1584 = vld [vmem:[%s1582 + $0x4] sm:$0xf]
        %v1585 = vld [vmem:[%s1582 + $0x8] sm:$0xf]
        %v1586 = vld [vmem:[%s1582 + $0xc] sm:$0xf]
        %v1591 = vunpack.c.l.b16 %v1583
        %v1592 = vunpack.c.l.b16 %v1584
        %v1593 = vunpack.c.l.b16 %v1585
        %v1594 = vunpack.c.l.b16 %v1586
        %v1595 = vpack.c.b16 %v1592, %v1591
        %v1596 = vpack.c.b16 %v1594, %v1593
        %v1600 = vsel %vm1347, %v1581, 0
        %1602 = vmatprep.subr.bf16.mxu0 0
        %1603 = vmatpush1.bf16.msra.mxu0 %v1595
        %1604 = vmatprep.subr.bf16.mxu0 0
        %1605 = vmatpush1.bf16.msra.mxu0 %v1596
        %1606 = vmatprep.subr.bf16.mxu0 0
        %1607 = vmatpush1.bf16.msra.mxu0 0
        %1608 = vmatprep.subr.bf16.mxu0 0
        %1609 = vmatpush1.bf16.msra.mxu0 0
        %1610 = vmatprep.subr.bf16.mxu0 0
        %1611 = vmatpush1.bf16.msra.mxu0 0
        %1612 = vmatprep.subr.bf16.mxu0 0
        %1613 = vmatpush1.bf16.msra.mxu0 0
        %1614 = vmatprep.subr.bf16.mxu0 0
        %1615 = vmatpush1.bf16.msra.mxu0 0
        %1616 = vmatprep.subr.bf16.mxu0 0
        %1617 = vmatpush1.bf16.msra.mxu0 0
        %1618 = vmatprep.subr.bf16.mxu0 0
        %1619 = vmatpush1.bf16.msra.mxu0 0
        %1620 = vmatprep.subr.bf16.mxu0 0
        %1621 = vmatpush1.bf16.msra.mxu0 0
        %1622 = vmatprep.subr.bf16.mxu0 0
        %1623 = vmatpush1.bf16.msra.mxu0 0
        %1624 = vmatprep.subr.bf16.mxu0 0
        %1625 = vmatpush1.bf16.msra.mxu0 0
        %1626 = vmatprep.subr.bf16.mxu0 0
        %1627 = vmatpush1.bf16.msra.mxu0 0
        %1628 = vmatprep.subr.bf16.mxu0 0
        %1629 = vmatpush1.bf16.msra.mxu0 0
        %1630 = vmatprep.subr.bf16.mxu0 0
        %1631 = vmatpush1.bf16.msra.mxu0 0
        %1632 = vmatprep.subr.bf16.mxu0 0
        %1633 = vmatpush1.bf16.msra.mxu0 0
        %1634 = vmatprep.mubr.bf16.mxu0 0
        %1635 = vmatmul.mubr.bf16.gmra.mrb[0].mxu0 %v1600
        %v1636 = vpop.f32.mrb[0].mxu0
        %v1637 = vadd.f32 0.0, %v1636
        %v1638 = vpop.f32.mrb[0].mxu0
        %v1639 = vpop.f32.mrb[0].mxu0
        %v1640 = vpop.f32.mrb[0].mxu0
        %1641 = vdwg.mxu0
        %v1642 = vadd.f32 %v1574, %v1637
        %v1643 = vpack.c.bf16 %v1580, %v1580
        %s1644 = scalar_lea.vmem [#allocation7], 80
        %v1645 = vld [vmem:[%s1644] sm:$0xf]
        %v1646 = vld [vmem:[%s1644 + $0x4] sm:$0xf]
        %v1647 = vld [vmem:[%s1644 + $0x8] sm:$0xf]
        %v1648 = vld [vmem:[%s1644 + $0xc] sm:$0xf]
        %v1653 = vunpack.c.l.b16 %v1645
        %v1654 = vunpack.c.l.b16 %v1646
        %v1655 = vunpack.c.l.b16 %v1647
        %v1656 = vunpack.c.l.b16 %v1648
        %v1657 = vpack.c.b16 %v1654, %v1653
        %v1658 = vpack.c.b16 %v1656, %v1655
        %v1662 = vsel %vm1347, %v1643, 0
        %1664 = vmatprep.subr.bf16.mxu0 0
        %1665 = vmatpush1.bf16.msra.mxu0 %v1657
        %1666 = vmatprep.subr.bf16.mxu0 0
        %1667 = vmatpush1.bf16.msra.mxu0 %v1658
        %1668 = vmatprep.subr.bf16.mxu0 0
        %1669 = vmatpush1.bf16.msra.mxu0 0
        %1670 = vmatprep.subr.bf16.mxu0 0
        %1671 = vmatpush1.bf16.msra.mxu0 0
        %1672 = vmatprep.subr.bf16.mxu0 0
        %1673 = vmatpush1.bf16.msra.mxu0 0
        %1674 = vmatprep.subr.bf16.mxu0 0
        %1675 = vmatpush1.bf16.msra.mxu0 0
        %1676 = vmatprep.subr.bf16.mxu0 0
        %1677 = vmatpush1.bf16.msra.mxu0 0
        %1678 = vmatprep.subr.bf16.mxu0 0
        %1679 = vmatpush1.bf16.msra.mxu0 0
        %1680 = vmatprep.subr.bf16.mxu0 0
        %1681 = vmatpush1.bf16.msra.mxu0 0
        %1682 = vmatprep.subr.bf16.mxu0 0
        %1683 = vmatpush1.bf16.msra.mxu0 0
        %1684 = vmatprep.subr.bf16.mxu0 0
        %1685 = vmatpush1.bf16.msra.mxu0 0
        %1686 = vmatprep.subr.bf16.mxu0 0
        %1687 = vmatpush1.bf16.msra.mxu0 0
        %1688 = vmatprep.subr.bf16.mxu0 0
        %1689 = vmatpush1.bf16.msra.mxu0 0
        %1690 = vmatprep.subr.bf16.mxu0 0
        %1691 = vmatpush1.bf16.msra.mxu0 0
        %1692 = vmatprep.subr.bf16.mxu0 0
        %1693 = vmatpush1.bf16.msra.mxu0 0
        %1694 = vmatprep.subr.bf16.mxu0 0
        %1695 = vmatpush1.bf16.msra.mxu0 0
        %1696 = vmatprep.mubr.bf16.mxu0 0
        %1697 = vmatmul.mubr.bf16.gmra.mrb[0].mxu0 %v1662
        %v1698 = vpop.f32.mrb[0].mxu0
        %v1699 = vadd.f32 0.0, %v1698
        %v1700 = vpop.f32.mrb[0].mxu0
        %v1701 = vpop.f32.mrb[0].mxu0
        %v1702 = vpop.f32.mrb[0].mxu0
        %1703 = vdwg.mxu0
        %v1704 = vadd.f32 %v1642, %v1699
        %v1705 = vmul.f32 %v1577, %v1219
        %v1706 = vmul.f32 %v1580, %v1323
        %v1707 = vsub.f32 %v1705, %v1706
        %v1708 = vmul.f32 %v1580, %v1219
        %v1709 = vmul.f32 %v1577, %v1323
        %v1710 = vadd.f32 %v1708, %v1709
        %v1711 = vpack.c.bf16 %v1707, %v1707
        %s1712 = scalar_lea.vmem [#allocation7], 96
        %v1713 = vld [vmem:[%s1712] sm:$0xf]
        %v1714 = vld [vmem:[%s1712 + $0x4] sm:$0xf]
        %v1715 = vld [vmem:[%s1712 + $0x8] sm:$0xf]
        %v1716 = vld [vmem:[%s1712 + $0xc] sm:$0xf]
        %v1721 = vunpack.c.l.b16 %v1713
        %v1722 = vunpack.c.l.b16 %v1714
        %v1723 = vunpack.c.l.b16 %v1715
        %v1724 = vunpack.c.l.b16 %v1716
        %v1725 = vpack.c.b16 %v1722, %v1721
        %v1726 = vpack.c.b16 %v1724, %v1723
        %v1730 = vsel %vm1347, %v1711, 0
        %1732 = vmatprep.subr.bf16.mxu0 0
        %1733 = vmatpush1.bf16.msra.mxu0 %v1725
        %1734 = vmatprep.subr.bf16.mxu0 0
        %1735 = vmatpush1.bf16.msra.mxu0 %v1726
        %1736 = vmatprep.subr.bf16.mxu0 0
        %1737 = vmatpush1.bf16.msra.mxu0 0
        %1738 = vmatprep.subr.bf16.mxu0 0
        %1739 = vmatpush1.bf16.msra.mxu0 0
        %1740 = vmatprep.subr.bf16.mxu0 0
        %1741 = vmatpush1.bf16.msra.mxu0 0
        %1742 = vmatprep.subr.bf16.mxu0 0
        %1743 = vmatpush1.bf16.msra.mxu0 0
        %1744 = vmatprep.subr.bf16.mxu0 0
        %1745 = vmatpush1.bf16.msra.mxu0 0
        %1746 = vmatprep.subr.bf16.mxu0 0
        %1747 = vmatpush1.bf16.msra.mxu0 0
        %1748 = vmatprep.subr.bf16.mxu0 0
        %1749 = vmatpush1.bf16.msra.mxu0 0
        %1750 = vmatprep.subr.bf16.mxu0 0
        %1751 = vmatpush1.bf16.msra.mxu0 0
        %1752 = vmatprep.subr.bf16.mxu0 0
        %1753 = vmatpush1.bf16.msra.mxu0 0
        %1754 = vmatprep.subr.bf16.mxu0 0
        %1755 = vmatpush1.bf16.msra.mxu0 0
        %1756 = vmatprep.subr.bf16.mxu0 0
        %1757 = vmatpush1.bf16.msra.mxu0 0
        %1758 = vmatprep.subr.bf16.mxu0 0
        %1759 = vmatpush1.bf16.msra.mxu0 0
        %1760 = vmatprep.subr.bf16.mxu0 0
        %1761 = vmatpush1.bf16.msra.mxu0 0
        %1762 = vmatprep.subr.bf16.mxu0 0
        %1763 = vmatpush1.bf16.msra.mxu0 0
        %1764 = vmatprep.mubr.bf16.mxu0 0
        %1765 = vmatmul.mubr.bf16.gmra.mrb[0].mxu0 %v1730
        %v1766 = vpop.f32.mrb[0].mxu0
        %v1767 = vadd.f32 0.0, %v1766
        %v1768 = vpop.f32.mrb[0].mxu0
        %v1769 = vpop.f32.mrb[0].mxu0
        %v1770 = vpop.f32.mrb[0].mxu0
        %1771 = vdwg.mxu0
        %v1772 = vadd.f32 %v1704, %v1767
        %v1773 = vpack.c.bf16 %v1710, %v1710
        %s1774 = scalar_lea.vmem [#allocation7], 112
        %v1775 = vld [vmem:[%s1774] sm:$0xf]
        %v1776 = vld [vmem:[%s1774 + $0x4] sm:$0xf]
        %v1777 = vld [vmem:[%s1774 + $0x8] sm:$0xf]
        %v1778 = vld [vmem:[%s1774 + $0xc] sm:$0xf]
        %v1783 = vunpack.c.l.b16 %v1775
        %v1784 = vunpack.c.l.b16 %v1776
        %v1785 = vunpack.c.l.b16 %v1777
        %v1786 = vunpack.c.l.b16 %v1778
        %v1787 = vpack.c.b16 %v1784, %v1783
        %v1788 = vpack.c.b16 %v1786, %v1785
        %v1792 = vsel %vm1347, %v1773, 0
        %1794 = vmatprep.subr.bf16.mxu0 0
        %1795 = vmatpush1.bf16.msra.mxu0 %v1787
        %1796 = vmatprep.subr.bf16.mxu0 0
        %1797 = vmatpush1.bf16.msra.mxu0 %v1788
        %1798 = vmatprep.subr.bf16.mxu0 0
        %1799 = vmatpush1.bf16.msra.mxu0 0
        %1800 = vmatprep.subr.bf16.mxu0 0
        %1801 = vmatpush1.bf16.msra.mxu0 0
        %1802 = vmatprep.subr.bf16.mxu0 0
        %1803 = vmatpush1.bf16.msra.mxu0 0
        %1804 = vmatprep.subr.bf16.mxu0 0
        %1805 = vmatpush1.bf16.msra.mxu0 0
        %1806 = vmatprep.subr.bf16.mxu0 0
        %1807 = vmatpush1.bf16.msra.mxu0 0
        %1808 = vmatprep.subr.bf16.mxu0 0
        %1809 = vmatpush1.bf16.msra.mxu0 0
        %1810 = vmatprep.subr.bf16.mxu0 0
        %1811 = vmatpush1.bf16.msra.mxu0 0
        %1812 = vmatprep.subr.bf16.mxu0 0
        %1813 = vmatpush1.bf16.msra.mxu0 0
        %1814 = vmatprep.subr.bf16.mxu0 0
        %1815 = vmatpush1.bf16.msra.mxu0 0
        %1816 = vmatprep.subr.bf16.mxu0 0
        %1817 = vmatpush1.bf16.msra.mxu0 0
        %1818 = vmatprep.subr.bf16.mxu0 0
        %1819 = vmatpush1.bf16.msra.mxu0 0
        %1820 = vmatprep.subr.bf16.mxu0 0
        %1821 = vmatpush1.bf16.msra.mxu0 0
        %1822 = vmatprep.subr.bf16.mxu0 0
        %1823 = vmatpush1.bf16.msra.mxu0 0
        %1824 = vmatprep.subr.bf16.mxu0 0
        %1825 = vmatpush1.bf16.msra.mxu0 0
        %1826 = vmatprep.mubr.bf16.mxu0 0
        %1827 = vmatmul.mubr.bf16.gmra.mrb[0].mxu0 %v1792
        %v1828 = vpop.f32.mrb[0].mxu0
        %v1829 = vadd.f32 0.0, %v1828
        %v1830 = vpop.f32.mrb[0].mxu0
        %v1831 = vpop.f32.mrb[0].mxu0
        %v1832 = vpop.f32.mrb[0].mxu0
        %1833 = vdwg.mxu0
        %v1834 = vadd.f32 %v1772, %v1829
        %v1835 = vmul.f32 %v1707, %v1219
        %v1836 = vmul.f32 %v1710, %v1323
        %v1837 = vsub.f32 %v1835, %v1836
        %v1838 = vmul.f32 %v1710, %v1219
        %v1839 = vmul.f32 %v1707, %v1323
        %v1840 = vadd.f32 %v1838, %v1839
        %v1841 = vpack.c.bf16 %v1837, %v1837
        %s1842 = scalar_lea.vmem [#allocation7], 128
        %v1843 = vld [vmem:[%s1842] sm:$0xf]
        %v1844 = vld [vmem:[%s1842 + $0x4] sm:$0xf]
        %v1845 = vld [vmem:[%s1842 + $0x8] sm:$0xf]
        %v1846 = vld [vmem:[%s1842 + $0xc] sm:$0xf]
        %v1851 = vunpack.c.l.b16 %v1843
        %v1852 = vunpack.c.l.b16 %v1844
        %v1853 = vunpack.c.l.b16 %v1845
        %v1854 = vunpack.c.l.b16 %v1846
        %v1855 = vpack.c.b16 %v1852, %v1851
        %v1856 = vpack.c.b16 %v1854, %v1853
        %v1860 = vsel %vm1347, %v1841, 0
        %1862 = vmatprep.subr.bf16.mxu0 0
        %1863 = vmatpush1.bf16.msra.mxu0 %v1855
        %1864 = vmatprep.subr.bf16.mxu0 0
        %1865 = vmatpush1.bf16.msra.mxu0 %v1856
        %1866 = vmatprep.subr.bf16.mxu0 0
        %1867 = vmatpush1.bf16.msra.mxu0 0
        %1868 = vmatprep.subr.bf16.mxu0 0
        %1869 = vmatpush1.bf16.msra.mxu0 0
        %1870 = vmatprep.subr.bf16.mxu0 0
        %1871 = vmatpush1.bf16.msra.mxu0 0
        %1872 = vmatprep.subr.bf16.mxu0 0
        %1873 = vmatpush1.bf16.msra.mxu0 0
        %1874 = vmatprep.subr.bf16.mxu0 0
        %1875 = vmatpush1.bf16.msra.mxu0 0
        %1876 = vmatprep.subr.bf16.mxu0 0
        %1877 = vmatpush1.bf16.msra.mxu0 0
        %1878 = vmatprep.subr.bf16.mxu0 0
        %1879 = vmatpush1.bf16.msra.mxu0 0
        %1880 = vmatprep.subr.bf16.mxu0 0
        %1881 = vmatpush1.bf16.msra.mxu0 0
        %1882 = vmatprep.subr.bf16.mxu0 0
        %1883 = vmatpush1.bf16.msra.mxu0 0
        %1884 = vmatprep.subr.bf16.mxu0 0
        %1885 = vmatpush1.bf16.msra.mxu0 0
        %1886 = vmatprep.subr.bf16.mxu0 0
        %1887 = vmatpush1.bf16.msra.mxu0 0
        %1888 = vmatprep.subr.bf16.mxu0 0
        %1889 = vmatpush1.bf16.msra.mxu0 0
        %1890 = vmatprep.subr.bf16.mxu0 0
        %1891 = vmatpush1.bf16.msra.mxu0 0
        %1892 = vmatprep.subr.bf16.mxu0 0
        %1893 = vmatpush1.bf16.msra.mxu0 0
        %1894 = vmatprep.mubr.bf16.mxu0 0
        %1895 = vmatmul.mubr.bf16.gmra.mrb[0].mxu0 %v1860
        %v1896 = vpop.f32.mrb[0].mxu0
        %v1897 = vadd.f32 0.0, %v1896
        %v1898 = vpop.f32.mrb[0].mxu0
        %v1899 = vpop.f32.mrb[0].mxu0
        %v1900 = vpop.f32.mrb[0].mxu0
        %1901 = vdwg.mxu0
        %v1902 = vadd.f32 %v1834, %v1897
        %v1903 = vpack.c.bf16 %v1840, %v1840
        %s1904 = scalar_lea.vmem [#allocation7], 144
        %v1905 = vld [vmem:[%s1904] sm:$0xf]
        %v1906 = vld [vmem:[%s1904 + $0x4] sm:$0xf]
        %v1907 = vld [vmem:[%s1904 + $0x8] sm:$0xf]
        %v1908 = vld [vmem:[%s1904 + $0xc] sm:$0xf]
        %v1913 = vunpack.c.l.b16 %v1905
        %v1914 = vunpack.c.l.b16 %v1906
        %v1915 = vunpack.c.l.b16 %v1907
        %v1916 = vunpack.c.l.b16 %v1908
        %v1917 = vpack.c.b16 %v1914, %v1913
        %v1918 = vpack.c.b16 %v1916, %v1915
        %v1922 = vsel %vm1347, %v1903, 0
        %1924 = vmatprep.subr.bf16.mxu0 0
        %1925 = vmatpush1.bf16.msra.mxu0 %v1917
        %1926 = vmatprep.subr.bf16.mxu0 0
        %1927 = vmatpush1.bf16.msra.mxu0 %v1918
        %1928 = vmatprep.subr.bf16.mxu0 0
        %1929 = vmatpush1.bf16.msra.mxu0 0
        %1930 = vmatprep.subr.bf16.mxu0 0
        %1931 = vmatpush1.bf16.msra.mxu0 0
        %1932 = vmatprep.subr.bf16.mxu0 0
        %1933 = vmatpush1.bf16.msra.mxu0 0
        %1934 = vmatprep.subr.bf16.mxu0 0
        %1935 = vmatpush1.bf16.msra.mxu0 0
        %1936 = vmatprep.subr.bf16.mxu0 0
        %1937 = vmatpush1.bf16.msra.mxu0 0
        %1938 = vmatprep.subr.bf16.mxu0 0
        %1939 = vmatpush1.bf16.msra.mxu0 0
        %1940 = vmatprep.subr.bf16.mxu0 0
        %1941 = vmatpush1.bf16.msra.mxu0 0
        %1942 = vmatprep.subr.bf16.mxu0 0
        %1943 = vmatpush1.bf16.msra.mxu0 0
        %1944 = vmatprep.subr.bf16.mxu0 0
        %1945 = vmatpush1.bf16.msra.mxu0 0
        %1946 = vmatprep.subr.bf16.mxu0 0
        %1947 = vmatpush1.bf16.msra.mxu0 0
        %1948 = vmatprep.subr.bf16.mxu0 0
        %1949 = vmatpush1.bf16.msra.mxu0 0
        %1950 = vmatprep.subr.bf16.mxu0 0
        %1951 = vmatpush1.bf16.msra.mxu0 0
        %1952 = vmatprep.subr.bf16.mxu0 0
        %1953 = vmatpush1.bf16.msra.mxu0 0
        %1954 = vmatprep.subr.bf16.mxu0 0
        %1955 = vmatpush1.bf16.msra.mxu0 0
        %1956 = vmatprep.mubr.bf16.mxu0 0
        %1957 = vmatmul.mubr.bf16.gmra.mrb[0].mxu0 %v1922
        %v1958 = vpop.f32.mrb[0].mxu0
        %v1959 = vadd.f32 0.0, %v1958
        %v1960 = vpop.f32.mrb[0].mxu0
        %v1961 = vpop.f32.mrb[0].mxu0
        %v1962 = vpop.f32.mrb[0].mxu0
        %1963 = vdwg.mxu0
        %v1964 = vadd.f32 %v1902, %v1959
        %v1965 = vld [vmem:[%s4] sm:$0x1]
        %v1967 = vlaneseq
        %v1968 = vshrl.u32 %v1967, 7
        %v1969 = vsub.s32 0, %v1968
        %v1970 = vrot.slane %v1965, %v1969
        %v1972 = vadd.f32 %v1964, %v1970
        %v1973 = vtanh.pop %v1972
        %v1974 = vand.u32 2147483647, %v1973
        %vm1975 = vcmp.le.f32.partialorder %v1974, 0.7853982
        %vm1976 = vcmp.lt.s32.totalorder %v1973, 0
        %v1977 = vand.u32 %v1973, 2139095040
        %v1978 = vshrl.u32 %v1977, 23
        %v1979 = vsub.s32 %v1978, 127
        %v1980 = vand.u32 2147483647, %v1973
        %v1981 = vand.u32 %v1980, 8388607
        %v1982 = vor.u32 %v1981, 8388608
        %v1983 = vsub.s32 0, %v1982
        %v1984 = vadd.s32 %v1979, 1
        %vm1985 = vcmp.gt.s32.totalorder %v1984, 0
        %v1986 = vsel %vm1985, %v1984, 0
        %v1987 = vshrl.u32 %v1986, 5
        %v1988 = vand.u32 %v1986, 31
        %v1989 = vsub.s32 32, %v1988
        %v1990 = vshrl.u32 683565275, %v1989
        %v1991 = vshll.u32 683565275, %v1988
        %v1992 = vshrl.u32 2475754826, %v1989
        %v1993 = vor.u32 %v1991, %v1992
        %v1994 = vshll.u32 2475754826, %v1988
        %v1995 = vshrl.u32 2131351028, %v1989
        %v1996 = vor.u32 %v1994, %v1995
        %v1997 = vshll.u32 2131351028, %v1988
        %v1998 = vshrl.u32 2102212464, %v1989
        %v1999 = vor.u32 %v1997, %v1998
        %v2000 = vshll.u32 2102212464, %v1988
        %v2001 = vshrl.u32 920167782, %v1989
        %v2002 = vor.u32 %v2000, %v2001
        %v2003 = vshll.u32 920167782, %v1988
        %v2004 = vshrl.u32 1326507024, %v1989
        %v2005 = vor.u32 %v2003, %v2004
        %vm2006 = vcmp.lt.s32.totalorder %v1987, 1
        %vm2007 = vcmp.lt.s32.totalorder %v1987, 2
        %vm2008 = vcmp.lt.s32.totalorder %v1987, 3
        %vm2009 = vcmp.lt.s32.totalorder %v1987, 4
        %v2010 = vsel %vm2006, %v1990, %v1993
        %v2011 = vsel %vm2009, %v1999, 2102212464
        %v2012 = vsel %vm2008, %v1996, %v2011
        %v2013 = vsel %vm2007, %v2010, %v2012
        %v2014 = vsel %vm2006, %v1993, %v1996
        %v2015 = vsel %vm2009, %v2002, 920167782
        %v2016 = vsel %vm2008, %v1999, %v2015
        %v2017 = vsel %vm2007, %v2014, %v2016
        %v2018 = vsel %vm2006, %v1996, %v1999
        %v2019 = vsel %vm2009, %v2005, 1326507024
        %v2020 = vsel %vm2008, %v2002, %v2019
        %v2021 = vsel %vm2007, %v2018, %v2020
        %v2022 = vshll.u32 %v1982, 8
        %v2023 = vmul.u32.u64.compose %v2022, %v2021
        %v2024 = vextract.low.u32 %v2023
        %v2025 = vextract.high.u32 %v2023
        %v2026 = vmul.u32.u64.compose %v2022, %v2017
        %v2027 = vextract.low.u32 %v2026
        %v2028 = vextract.high.u32 %v2026
        %v2029 = vmul.u32 %v2022, %v2013
        %v2030 = vadd.s32 %v2025, %v2027
        %vm2031 = vc.u32 %v2025, %v2027
        %v2032 = vadd.s32 %v2028, 1
        %v2033 = vsel %vm2031, %v2032, %v2028
        %v2034 = vadd.s32 %v2029, %v2033
        %v2035 = vadd.s32 %v2034, 536870912
        %v2036 = vshrl.u32 %v2035, 30
        %v2037 = vshll.u32 %v2036, 30
        %v2038 = vsub.s32 %v2034, %v2037
        %vm2039 = vcmp.lt.s32.totalorder %v2038, 0
        %v2040 = vsub.s32 0, %v2038
        %v2041 = vsel %vm2039, %v2040, %v2038
        %v2042 = vclz %v2041
        %v2043 = vsub.s32 %v2042, 2
        %vm2044 = vcmp.gt.s32.totalorder 0, %v2043
        %v2045 = vsel %vm2044, 0, %v2043
        %v2046 = vsub.s32 32, %v2045
        %v2047 = vshll.u32 %v2038, %v2045
        %v2048 = vshrl.u32 %v2030, %v2046
        %v2049 = vor.u32 %v2047, %v2048
        %v2050 = vsub.s32 4294967266, %v2045
        %v2051 = vadd.s32 %v2050, 127
        %v2052 = vshll.u32 %v2051, 23
        %v2053 = vor.u32 4788187, %v2052
        %v2054 = vand.u32 2147483647, %v2053
        %v2056 = vcvt.s32.f32 %v2049
        %v2057 = vmul.f32 %v2056, %v2054
        %v2058 = vxor.u32 %v2057, 2147483648
        %v2059 = vsel %vm1976, %v2058, %v2057
        %v2060 = vsub.s32 4, %v2036
        %v2061 = vsel %vm1976, %v2060, %v2036
        %v2062 = vsel %vm1975, %v1973, %v2059
        %v2063 = vsel %vm1975, 0, %v2061
        %v2064 = vcosq.f32.pop %v2062
        %v2065 = vsinq.f32.pop %v2062
        %vm2066 = vweird.f32 %v1973
        %v2067 = vand.u32 %v2063, 3
        %vm2068 = vcmp.lt.s32.totalorder %v2067, 2
        %vm2069 = vcmp.eq.s32.totalorder %v2067, 0
        %v2070 = vxor.u32 %v2065, 2147483648
        %v2071 = vsel %vm2069, %v2064, %v2070
        %vm2072 = vcmp.eq.s32.totalorder %v2067, 2
        %v2073 = vxor.u32 %v2064, 2147483648
        %v2074 = vsel %vm2072, %v2073, %v2065
        %v2075 = vsel %vm2068, %v2071, %v2074
        %v2076 = vsel %vm2066, nan, %v2075
        %v2077 = vand.u32 2147483647, %v1973
        %vm2078 = vcmp.le.f32.partialorder %v2077, 0.7853982
        %vm2079 = vcmp.lt.s32.totalorder %v1973, 0
        %v2080 = vand.u32 %v1973, 2139095040
        %v2081 = vshrl.u32 %v2080, 23
        %v2082 = vsub.s32 %v2081, 127
        %v2083 = vand.u32 2147483647, %v1973
        %v2084 = vand.u32 %v2083, 8388607
        %v2085 = vor.u32 %v2084, 8388608
        %v2086 = vsub.s32 0, %v2085
        %v2087 = vadd.s32 %v2082, 1
        %vm2088 = vcmp.gt.s32.totalorder %v2087, 0
        %v2089 = vsel %vm2088, %v2087, 0
        %v2090 = vshrl.u32 %v2089, 5
        %v2091 = vand.u32 %v2089, 31
        %v2092 = vsub.s32 32, %v2091
        %v2093 = vshrl.u32 683565275, %v2092
        %v2094 = vshll.u32 683565275, %v2091
        %v2095 = vshrl.u32 2475754826, %v2092
        %v2096 = vor.u32 %v2094, %v2095
        %v2097 = vshll.u32 2475754826, %v2091
        %v2098 = vshrl.u32 2131351028, %v2092
        %v2099 = vor.u32 %v2097, %v2098
        %v2100 = vshll.u32 2131351028, %v2091
        %v2101 = vshrl.u32 2102212464, %v2092
        %v2102 = vor.u32 %v2100, %v2101
        %v2103 = vshll.u32 2102212464, %v2091
        %v2104 = vshrl.u32 920167782, %v2092
        %v2105 = vor.u32 %v2103, %v2104
        %v2106 = vshll.u32 920167782, %v2091
        %v2107 = vshrl.u32 1326507024, %v2092
        %v2108 = vor.u32 %v2106, %v2107
        %vm2109 = vcmp.lt.s32.totalorder %v2090, 1
        %vm2110 = vcmp.lt.s32.totalorder %v2090, 2
        %vm2111 = vcmp.lt.s32.totalorder %v2090, 3
        %vm2112 = vcmp.lt.s32.totalorder %v2090, 4
        %v2113 = vsel %vm2109, %v2093, %v2096
        %v2114 = vsel %vm2112, %v2102, 2102212464
        %v2115 = vsel %vm2111, %v2099, %v2114
        %v2116 = vsel %vm2110, %v2113, %v2115
        %v2117 = vsel %vm2109, %v2096, %v2099
        %v2118 = vsel %vm2112, %v2105, 920167782
        %v2119 = vsel %vm2111, %v2102, %v2118
        %v2120 = vsel %vm2110, %v2117, %v2119
        %v2121 = vsel %vm2109, %v2099, %v2102
        %v2122 = vsel %vm2112, %v2108, 1326507024
        %v2123 = vsel %vm2111, %v2105, %v2122
        %v2124 = vsel %vm2110, %v2121, %v2123
        %v2125 = vshll.u32 %v2085, 8
        %v2126 = vmul.u32.u64.compose %v2125, %v2124
        %v2127 = vextract.low.u32 %v2126
        %v2128 = vextract.high.u32 %v2126
        %v2129 = vmul.u32.u64.compose %v2125, %v2120
        %v2130 = vextract.low.u32 %v2129
        %v2131 = vextract.high.u32 %v2129
        %v2132 = vmul.u32 %v2125, %v2116
        %v2133 = vadd.s32 %v2128, %v2130
        %vm2134 = vc.u32 %v2128, %v2130
        %v2135 = vadd.s32 %v2131, 1
        %v2136 = vsel %vm2134, %v2135, %v2131
        %v2137 = vadd.s32 %v2132, %v2136
        %v2138 = vadd.s32 %v2137, 536870912
        %v2139 = vshrl.u32 %v2138, 30
        %v2140 = vshll.u32 %v2139, 30
        %v2141 = vsub.s32 %v2137, %v2140
        %vm2142 = vcmp.lt.s32.totalorder %v2141, 0
        %v2143 = vsub.s32 0, %v2141
        %v2144 = vsel %vm2142, %v2143, %v2141
        %v2145 = vclz %v2144
        %v2146 = vsub.s32 %v2145, 2
        %vm2147 = vcmp.gt.s32.totalorder 0, %v2146
        %v2148 = vsel %vm2147, 0, %v2146
        %v2149 = vsub.s32 32, %v2148
        %v2150 = vshll.u32 %v2141, %v2148
        %v2151 = vshrl.u32 %v2133, %v2149
        %v2152 = vor.u32 %v2150, %v2151
        %v2153 = vsub.s32 4294967266, %v2148
        %v2154 = vadd.s32 %v2153, 127
        %v2155 = vshll.u32 %v2154, 23
        %v2156 = vor.u32 4788187, %v2155
        %v2157 = vand.u32 2147483647, %v2156
        %v2159 = vcvt.s32.f32 %v2152
        %v2160 = vmul.f32 %v2159, %v2157
        %v2161 = vxor.u32 %v2160, 2147483648
        %v2162 = vsel %vm2079, %v2161, %v2160
        %v2163 = vsub.s32 4, %v2139
        %v2164 = vsel %vm2079, %v2163, %v2139
        %v2165 = vsel %vm2078, %v1973, %v2162
        %v2166 = vsel %vm2078, 0, %v2164
        %v2167 = vcosq.f32.pop %v2165
        %v2168 = vsinq.f32.pop %v2165
        %vm2169 = vweird.f32 %v1973
        %v2170 = vadd.s32 %v2166, 3
        %v2171 = vand.u32 %v2170, 3
        %vm2172 = vcmp.lt.s32.totalorder %v2171, 2
        %vm2173 = vcmp.eq.s32.totalorder %v2171, 0
        %v2174 = vxor.u32 %v2168, 2147483648
        %v2175 = vsel %vm2173, %v2167, %v2174
        %vm2176 = vcmp.eq.s32.totalorder %v2171, 2
        %v2177 = vxor.u32 %v2167, 2147483648
        %v2178 = vsel %vm2176, %v2177, %v2168
        %v2179 = vsel %vm2172, %v2175, %v2178
        %v2180 = vsel %vm2169, nan, %v2179
        %v2181 = vpack.c.bf16 %v2076, %v2076
        %v2182 = vld [vmem:[#allocation8] sm:$0xf]
        %v2183 = vld [vmem:[#allocation8 + $0x4] sm:$0xf]
        %v2184 = vld [vmem:[#allocation8 + $0x8] sm:$0xf]
        %v2185 = vld [vmem:[#allocation8 + $0xc] sm:$0xf]
        %v2186 = vpack.c.bf16 %v2180, %v2180
        %s2187 = scalar_lea.vmem [#allocation8], 16
        %v2188 = vld [vmem:[%s2187] sm:$0xf]
        %v2189 = vld [vmem:[%s2187 + $0x4] sm:$0xf]
        %v2190 = vld [vmem:[%s2187 + $0x8] sm:$0xf]
        %v2191 = vld [vmem:[%s2187 + $0xc] sm:$0xf]
        %v2196 = vunpack.c.l.b16 %v2188
        %v2197 = vunpack.c.l.b16 %v2189
        %v2198 = vunpack.c.l.b16 %v2190
        %v2199 = vunpack.c.l.b16 %v2191
        %v2200 = vpack.c.b16 %v2197, %v2196
        %v2201 = vpack.c.b16 %v2199, %v2198
        %v2205 = vsel %vm1347, %v2186, 0
        %2207 = vmatprep.subr.bf16.mxu0 0
        %2208 = vmatpush1.bf16.msra.mxu0 %v2200
        %2209 = vmatprep.subr.bf16.mxu0 0
        %2210 = vmatpush1.bf16.msra.mxu0 %v2201
        %2211 = vmatprep.subr.bf16.mxu0 0
        %2212 = vmatpush1.bf16.msra.mxu0 0
        %2213 = vmatprep.subr.bf16.mxu0 0
        %2214 = vmatpush1.bf16.msra.mxu0 0
        %2215 = vmatprep.subr.bf16.mxu0 0
        %2216 = vmatpush1.bf16.msra.mxu0 0
        %2217 = vmatprep.subr.bf16.mxu0 0
        %2218 = vmatpush1.bf16.msra.mxu0 0
        %2219 = vmatprep.subr.bf16.mxu0 0
        %2220 = vmatpush1.bf16.msra.mxu0 0
        %2221 = vmatprep.subr.bf16.mxu0 0
        %2222 = vmatpush1.bf16.msra.mxu0 0
        %2223 = vmatprep.subr.bf16.mxu0 0
        %2224 = vmatpush1.bf16.msra.mxu0 0
        %2225 = vmatprep.subr.bf16.mxu0 0
        %2226 = vmatpush1.bf16.msra.mxu0 0
        %2227 = vmatprep.subr.bf16.mxu0 0
        %2228 = vmatpush1.bf16.msra.mxu0 0
        %2229 = vmatprep.subr.bf16.mxu0 0
        %2230 = vmatpush1.bf16.msra.mxu0 0
        %2231 = vmatprep.subr.bf16.mxu0 0
        %2232 = vmatpush1.bf16.msra.mxu0 0
        %2233 = vmatprep.subr.bf16.mxu0 0
        %2234 = vmatpush1.bf16.msra.mxu0 0
        %2235 = vmatprep.subr.bf16.mxu0 0
        %2236 = vmatpush1.bf16.msra.mxu0 0
        %2237 = vmatprep.subr.bf16.mxu0 0
        %2238 = vmatpush1.bf16.msra.mxu0 0
        %2239 = vmatprep.mubr.bf16.mxu0 0
        %2240 = vmatmul.mubr.bf16.gmra.mrb[0].mxu0 %v2205
        %v2241 = vpop.f32.mrb[0].mxu0
        %v2242 = vadd.f32 0.0, %v2241
        %v2243 = vpop.f32.mrb[0].mxu0
        %v2244 = vpop.f32.mrb[0].mxu0
        %v2245 = vpop.f32.mrb[0].mxu0
        %2246 = vdwg.mxu0
        %v2251 = vunpack.c.l.b16 %v2182
        %v2252 = vunpack.c.l.b16 %v2183
        %v2253 = vunpack.c.l.b16 %v2184
        %v2254 = vunpack.c.l.b16 %v2185
        %v2255 = vpack.c.b16 %v2252, %v2251
        %v2256 = vpack.c.b16 %v2254, %v2253
        %v2260 = vsel %vm1347, %v2181, 0
        %2262 = vmatprep.subr.bf16.mxu0 0
        %2263 = vmatpush1.bf16.msra.mxu0 %v2255
        %2264 = vmatprep.subr.bf16.mxu0 0
        %2265 = vmatpush1.bf16.msra.mxu0 %v2256
        %2266 = vmatprep.subr.bf16.mxu0 0
        %2267 = vmatpush1.bf16.msra.mxu0 0
        %2268 = vmatprep.subr.bf16.mxu0 0
        %2269 = vmatpush1.bf16.msra.mxu0 0
        %2270 = vmatprep.subr.bf16.mxu0 0
        %2271 = vmatpush1.bf16.msra.mxu0 0
        %2272 = vmatprep.subr.bf16.mxu0 0
        %2273 = vmatpush1.bf16.msra.mxu0 0
        %2274 = vmatprep.subr.bf16.mxu0 0
        %2275 = vmatpush1.bf16.msra.mxu0 0
        %2276 = vmatprep.subr.bf16.mxu0 0
        %2277 = vmatpush1.bf16.msra.mxu0 0
        %2278 = vmatprep.subr.bf16.mxu0 0
        %2279 = vmatpush1.bf16.msra.mxu0 0
        %2280 = vmatprep.subr.bf16.mxu0 0
        %2281 = vmatpush1.bf16.msra.mxu0 0
        %2282 = vmatprep.subr.bf16.mxu0 0
        %2283 = vmatpush1.bf16.msra.mxu0 0
        %2284 = vmatprep.subr.bf16.mxu0 0
        %2285 = vmatpush1.bf16.msra.mxu0 0
        %2286 = vmatprep.subr.bf16.mxu0 0
        %2287 = vmatpush1.bf16.msra.mxu0 0
        %2288 = vmatprep.subr.bf16.mxu0 0
        %2289 = vmatpush1.bf16.msra.mxu0 0
        %2290 = vmatprep.subr.bf16.mxu0 0
        %2291 = vmatpush1.bf16.msra.mxu0 0
        %2292 = vmatprep.subr.bf16.mxu0 0
        %2293 = vmatpush1.bf16.msra.mxu0 0
        %2294 = vmatprep.mubr.bf16.mxu0 0
        %2295 = vmatmul.mubr.bf16.gmra.mrb[0].mxu0 %v2260
        %v2296 = vpop.f32.mrb[0].mxu0
        %v2297 = vadd.f32 %v2242, %v2296
        %v2298 = vpop.f32.mrb[0].mxu0
        %v2299 = vpop.f32.mrb[0].mxu0
        %v2300 = vpop.f32.mrb[0].mxu0
        %2301 = vdwg.mxu0
        %v2302 = vmul.f32 %v2076, %v2076
        %v2303 = vmul.f32 %v2180, %v2180
        %v2304 = vsub.f32 %v2302, %v2303
        %v2305 = vmul.f32 %v2180, %v2076
        %v2306 = vadd.f32 %v2305, %v2305
        %v2307 = vpack.c.bf16 %v2304, %v2304
        %s2308 = scalar_lea.vmem [#allocation8], 32
        %v2309 = vld [vmem:[%s2308] sm:$0xf]
        %v2310 = vld [vmem:[%s2308 + $0x4] sm:$0xf]
        %v2311 = vld [vmem:[%s2308 + $0x8] sm:$0xf]
        %v2312 = vld [vmem:[%s2308 + $0xc] sm:$0xf]
        %v2317 = vunpack.c.l.b16 %v2309
        %v2318 = vunpack.c.l.b16 %v2310
        %v2319 = vunpack.c.l.b16 %v2311
        %v2320 = vunpack.c.l.b16 %v2312
        %v2321 = vpack.c.b16 %v2318, %v2317
        %v2322 = vpack.c.b16 %v2320, %v2319
        %v2326 = vsel %vm1347, %v2307, 0
        %2328 = vmatprep.subr.bf16.mxu0 0
        %2329 = vmatpush1.bf16.msra.mxu0 %v2321
        %2330 = vmatprep.subr.bf16.mxu0 0
        %2331 = vmatpush1.bf16.msra.mxu0 %v2322
        %2332 = vmatprep.subr.bf16.mxu0 0
        %2333 = vmatpush1.bf16.msra.mxu0 0
        %2334 = vmatprep.subr.bf16.mxu0 0
        %2335 = vmatpush1.bf16.msra.mxu0 0
        %2336 = vmatprep.subr.bf16.mxu0 0
        %2337 = vmatpush1.bf16.msra.mxu0 0
        %2338 = vmatprep.subr.bf16.mxu0 0
        %2339 = vmatpush1.bf16.msra.mxu0 0
        %2340 = vmatprep.subr.bf16.mxu0 0
        %2341 = vmatpush1.bf16.msra.mxu0 0
        %2342 = vmatprep.subr.bf16.mxu0 0
        %2343 = vmatpush1.bf16.msra.mxu0 0
        %2344 = vmatprep.subr.bf16.mxu0 0
        %2345 = vmatpush1.bf16.msra.mxu0 0
        %2346 = vmatprep.subr.bf16.mxu0 0
        %2347 = vmatpush1.bf16.msra.mxu0 0
        %2348 = vmatprep.subr.bf16.mxu0 0
        %2349 = vmatpush1.bf16.msra.mxu0 0
        %2350 = vmatprep.subr.bf16.mxu0 0
        %2351 = vmatpush1.bf16.msra.mxu0 0
        %2352 = vmatprep.subr.bf16.mxu0 0
        %2353 = vmatpush1.bf16.msra.mxu0 0
        %2354 = vmatprep.subr.bf16.mxu0 0
        %2355 = vmatpush1.bf16.msra.mxu0 0
        %2356 = vmatprep.subr.bf16.mxu0 0
        %2357 = vmatpush1.bf16.msra.mxu0 0
        %2358 = vmatprep.subr.bf16.mxu0 0
        %2359 = vmatpush1.bf16.msra.mxu0 0
        %2360 = vmatprep.mubr.bf16.mxu0 0
        %2361 = vmatmul.mubr.bf16.gmra.mrb[0].mxu0 %v2326
        %v2362 = vpop.f32.mrb[0].mxu0
        %v2363 = vadd.f32 0.0, %v2362
        %v2364 = vpop.f32.mrb[0].mxu0
        %v2365 = vpop.f32.mrb[0].mxu0
        %v2366 = vpop.f32.mrb[0].mxu0
        %2367 = vdwg.mxu0
        %v2368 = vadd.f32 %v2297, %v2363
        %v2369 = vpack.c.bf16 %v2306, %v2306
        %s2370 = scalar_lea.vmem [#allocation8], 48
        %v2371 = vld [vmem:[%s2370] sm:$0xf]
        %v2372 = vld [vmem:[%s2370 + $0x4] sm:$0xf]
        %v2373 = vld [vmem:[%s2370 + $0x8] sm:$0xf]
        %v2374 = vld [vmem:[%s2370 + $0xc] sm:$0xf]
        %v2379 = vunpack.c.l.b16 %v2371
        %v2380 = vunpack.c.l.b16 %v2372
        %v2381 = vunpack.c.l.b16 %v2373
        %v2382 = vunpack.c.l.b16 %v2374
        %v2383 = vpack.c.b16 %v2380, %v2379
        %v2384 = vpack.c.b16 %v2382, %v2381
        %v2388 = vsel %vm1347, %v2369, 0
        %2390 = vmatprep.subr.bf16.mxu0 0
        %2391 = vmatpush1.bf16.msra.mxu0 %v2383
        %2392 = vmatprep.subr.bf16.mxu0 0
        %2393 = vmatpush1.bf16.msra.mxu0 %v2384
        %2394 = vmatprep.subr.bf16.mxu0 0
        %2395 = vmatpush1.bf16.msra.mxu0 0
        %2396 = vmatprep.subr.bf16.mxu0 0
        %2397 = vmatpush1.bf16.msra.mxu0 0
        %2398 = vmatprep.subr.bf16.mxu0 0
        %2399 = vmatpush1.bf16.msra.mxu0 0
        %2400 = vmatprep.subr.bf16.mxu0 0
        %2401 = vmatpush1.bf16.msra.mxu0 0
        %2402 = vmatprep.subr.bf16.mxu0 0
        %2403 = vmatpush1.bf16.msra.mxu0 0
        %2404 = vmatprep.subr.bf16.mxu0 0
        %2405 = vmatpush1.bf16.msra.mxu0 0
        %2406 = vmatprep.subr.bf16.mxu0 0
        %2407 = vmatpush1.bf16.msra.mxu0 0
        %2408 = vmatprep.subr.bf16.mxu0 0
        %2409 = vmatpush1.bf16.msra.mxu0 0
        %2410 = vmatprep.subr.bf16.mxu0 0
        %2411 = vmatpush1.bf16.msra.mxu0 0
        %2412 = vmatprep.subr.bf16.mxu0 0
        %2413 = vmatpush1.bf16.msra.mxu0 0
        %2414 = vmatprep.subr.bf16.mxu0 0
        %2415 = vmatpush1.bf16.msra.mxu0 0
        %2416 = vmatprep.subr.bf16.mxu0 0
        %2417 = vmatpush1.bf16.msra.mxu0 0
        %2418 = vmatprep.subr.bf16.mxu0 0
        %2419 = vmatpush1.bf16.msra.mxu0 0
        %2420 = vmatprep.subr.bf16.mxu0 0
        %2421 = vmatpush1.bf16.msra.mxu0 0
        %2422 = vmatprep.mubr.bf16.mxu0 0
        %2423 = vmatmul.mubr.bf16.gmra.mrb[0].mxu0 %v2388
        %v2424 = vpop.f32.mrb[0].mxu0
        %v2425 = vadd.f32 0.0, %v2424
        %v2426 = vpop.f32.mrb[0].mxu0
        %v2427 = vpop.f32.mrb[0].mxu0
        %v2428 = vpop.f32.mrb[0].mxu0
        %2429 = vdwg.mxu0
        %v2430 = vadd.f32 %v2368, %v2425
        %v2431 = vmul.f32 %v2304, %v2076
        %v2432 = vmul.f32 %v2306, %v2180
        %v2433 = vsub.f32 %v2431, %v2432
        %v2434 = vmul.f32 %v2306, %v2076
        %v2435 = vmul.f32 %v2304, %v2180
        %v2436 = vadd.f32 %v2434, %v2435
        %v2437 = vpack.c.bf16 %v2433, %v2433
        %s2438 = scalar_lea.vmem [#allocation8], 64
        %v2439 = vld [vmem:[%s2438] sm:$0xf]
        %v2440 = vld [vmem:[%s2438 + $0x4] sm:$0xf]
        %v2441 = vld [vmem:[%s2438 + $0x8] sm:$0xf]
        %v2442 = vld [vmem:[%s2438 + $0xc] sm:$0xf]
        %v2447 = vunpack.c.l.b16 %v2439
        %v2448 = vunpack.c.l.b16 %v2440
        %v2449 = vunpack.c.l.b16 %v2441
        %v2450 = vunpack.c.l.b16 %v2442
        %v2451 = vpack.c.b16 %v2448, %v2447
        %v2452 = vpack.c.b16 %v2450, %v2449
        %v2456 = vsel %vm1347, %v2437, 0
        %2458 = vmatprep.subr.bf16.mxu0 0
        %2459 = vmatpush1.bf16.msra.mxu0 %v2451
        %2460 = vmatprep.subr.bf16.mxu0 0
        %2461 = vmatpush1.bf16.msra.mxu0 %v2452
        %2462 = vmatprep.subr.bf16.mxu0 0
        %2463 = vmatpush1.bf16.msra.mxu0 0
        %2464 = vmatprep.subr.bf16.mxu0 0
        %2465 = vmatpush1.bf16.msra.mxu0 0
        %2466 = vmatprep.subr.bf16.mxu0 0
        %2467 = vmatpush1.bf16.msra.mxu0 0
        %2468 = vmatprep.subr.bf16.mxu0 0
        %2469 = vmatpush1.bf16.msra.mxu0 0
        %2470 = vmatprep.subr.bf16.mxu0 0
        %2471 = vmatpush1.bf16.msra.mxu0 0
        %2472 = vmatprep.subr.bf16.mxu0 0
        %2473 = vmatpush1.bf16.msra.mxu0 0
        %2474 = vmatprep.subr.bf16.mxu0 0
        %2475 = vmatpush1.bf16.msra.mxu0 0
        %2476 = vmatprep.subr.bf16.mxu0 0
        %2477 = vmatpush1.bf16.msra.mxu0 0
        %2478 = vmatprep.subr.bf16.mxu0 0
        %2479 = vmatpush1.bf16.msra.mxu0 0
        %2480 = vmatprep.subr.bf16.mxu0 0
        %2481 = vmatpush1.bf16.msra.mxu0 0
        %2482 = vmatprep.subr.bf16.mxu0 0
        %2483 = vmatpush1.bf16.msra.mxu0 0
        %2484 = vmatprep.subr.bf16.mxu0 0
        %2485 = vmatpush1.bf16.msra.mxu0 0
        %2486 = vmatprep.subr.bf16.mxu0 0
        %2487 = vmatpush1.bf16.msra.mxu0 0
        %2488 = vmatprep.subr.bf16.mxu0 0
        %2489 = vmatpush1.bf16.msra.mxu0 0
        %2490 = vmatprep.mubr.bf16.mxu0 0
        %2491 = vmatmul.mubr.bf16.gmra.mrb[0].mxu0 %v2456
        %v2492 = vpop.f32.mrb[0].mxu0
        %v2493 = vadd.f32 0.0, %v2492
        %v2494 = vpop.f32.mrb[0].mxu0
        %v2495 = vpop.f32.mrb[0].mxu0
        %v2496 = vpop.f32.mrb[0].mxu0
        %2497 = vdwg.mxu0
        %v2498 = vadd.f32 %v2430, %v2493
        %v2499 = vpack.c.bf16 %v2436, %v2436
        %s2500 = scalar_lea.vmem [#allocation8], 80
        %v2501 = vld [vmem:[%s2500] sm:$0xf]
        %v2502 = vld [vmem:[%s2500 + $0x4] sm:$0xf]
        %v2503 = vld [vmem:[%s2500 + $0x8] sm:$0xf]
        %v2504 = vld [vmem:[%s2500 + $0xc] sm:$0xf]
        %v2509 = vunpack.c.l.b16 %v2501
        %v2510 = vunpack.c.l.b16 %v2502
        %v2511 = vunpack.c.l.b16 %v2503
        %v2512 = vunpack.c.l.b16 %v2504
        %v2513 = vpack.c.b16 %v2510, %v2509
        %v2514 = vpack.c.b16 %v2512, %v2511
        %v2518 = vsel %vm1347, %v2499, 0
        %2520 = vmatprep.subr.bf16.mxu0 0
        %2521 = vmatpush1.bf16.msra.mxu0 %v2513
        %2522 = vmatprep.subr.bf16.mxu0 0
        %2523 = vmatpush1.bf16.msra.mxu0 %v2514
        %2524 = vmatprep.subr.bf16.mxu0 0
        %2525 = vmatpush1.bf16.msra.mxu0 0
        %2526 = vmatprep.subr.bf16.mxu0 0
        %2527 = vmatpush1.bf16.msra.mxu0 0
        %2528 = vmatprep.subr.bf16.mxu0 0
        %2529 = vmatpush1.bf16.msra.mxu0 0
        %2530 = vmatprep.subr.bf16.mxu0 0
        %2531 = vmatpush1.bf16.msra.mxu0 0
        %2532 = vmatprep.subr.bf16.mxu0 0
        %2533 = vmatpush1.bf16.msra.mxu0 0
        %2534 = vmatprep.subr.bf16.mxu0 0
        %2535 = vmatpush1.bf16.msra.mxu0 0
        %2536 = vmatprep.subr.bf16.mxu0 0
        %2537 = vmatpush1.bf16.msra.mxu0 0
        %2538 = vmatprep.subr.bf16.mxu0 0
        %2539 = vmatpush1.bf16.msra.mxu0 0
        %2540 = vmatprep.subr.bf16.mxu0 0
        %2541 = vmatpush1.bf16.msra.mxu0 0
        %2542 = vmatprep.subr.bf16.mxu0 0
        %2543 = vmatpush1.bf16.msra.mxu0 0
        %2544 = vmatprep.subr.bf16.mxu0 0
        %2545 = vmatpush1.bf16.msra.mxu0 0
        %2546 = vmatprep.subr.bf16.mxu0 0
        %2547 = vmatpush1.bf16.msra.mxu0 0
        %2548 = vmatprep.subr.bf16.mxu0 0
        %2549 = vmatpush1.bf16.msra.mxu0 0
        %2550 = vmatprep.subr.bf16.mxu0 0
        %2551 = vmatpush1.bf16.msra.mxu0 0
        %2552 = vmatprep.mubr.bf16.mxu0 0
        %2553 = vmatmul.mubr.bf16.gmra.mrb[0].mxu0 %v2518
        %v2554 = vpop.f32.mrb[0].mxu0
        %v2555 = vadd.f32 0.0, %v2554
        %v2556 = vpop.f32.mrb[0].mxu0
        %v2557 = vpop.f32.mrb[0].mxu0
        %v2558 = vpop.f32.mrb[0].mxu0
        %2559 = vdwg.mxu0
        %v2560 = vadd.f32 %v2498, %v2555
        %v2561 = vmul.f32 %v2433, %v2076
        %v2562 = vmul.f32 %v2436, %v2180
        %v2563 = vsub.f32 %v2561, %v2562
        %v2564 = vmul.f32 %v2436, %v2076
        %v2565 = vmul.f32 %v2433, %v2180
        %v2566 = vadd.f32 %v2564, %v2565
        %v2567 = vpack.c.bf16 %v2563, %v2563
        %s2568 = scalar_lea.vmem [#allocation8], 96
        %v2569 = vld [vmem:[%s2568] sm:$0xf]
        %v2570 = vld [vmem:[%s2568 + $0x4] sm:$0xf]
        %v2571 = vld [vmem:[%s2568 + $0x8] sm:$0xf]
        %v2572 = vld [vmem:[%s2568 + $0xc] sm:$0xf]
        %v2577 = vunpack.c.l.b16 %v2569
        %v2578 = vunpack.c.l.b16 %v2570
        %v2579 = vunpack.c.l.b16 %v2571
        %v2580 = vunpack.c.l.b16 %v2572
        %v2581 = vpack.c.b16 %v2578, %v2577
        %v2582 = vpack.c.b16 %v2580, %v2579
        %v2586 = vsel %vm1347, %v2567, 0
        %2588 = vmatprep.subr.bf16.mxu0 0
        %2589 = vmatpush1.bf16.msra.mxu0 %v2581
        %2590 = vmatprep.subr.bf16.mxu0 0
        %2591 = vmatpush1.bf16.msra.mxu0 %v2582
        %2592 = vmatprep.subr.bf16.mxu0 0
        %2593 = vmatpush1.bf16.msra.mxu0 0
        %2594 = vmatprep.subr.bf16.mxu0 0
        %2595 = vmatpush1.bf16.msra.mxu0 0
        %2596 = vmatprep.subr.bf16.mxu0 0
        %2597 = vmatpush1.bf16.msra.mxu0 0
        %2598 = vmatprep.subr.bf16.mxu0 0
        %2599 = vmatpush1.bf16.msra.mxu0 0
        %2600 = vmatprep.subr.bf16.mxu0 0
        %2601 = vmatpush1.bf16.msra.mxu0 0
        %2602 = vmatprep.subr.bf16.mxu0 0
        %2603 = vmatpush1.bf16.msra.mxu0 0
        %2604 = vmatprep.subr.bf16.mxu0 0
        %2605 = vmatpush1.bf16.msra.mxu0 0
        %2606 = vmatprep.subr.bf16.mxu0 0
        %2607 = vmatpush1.bf16.msra.mxu0 0
        %2608 = vmatprep.subr.bf16.mxu0 0
        %2609 = vmatpush1.bf16.msra.mxu0 0
        %2610 = vmatprep.subr.bf16.mxu0 0
        %2611 = vmatpush1.bf16.msra.mxu0 0
        %2612 = vmatprep.subr.bf16.mxu0 0
        %2613 = vmatpush1.bf16.msra.mxu0 0
        %2614 = vmatprep.subr.bf16.mxu0 0
        %2615 = vmatpush1.bf16.msra.mxu0 0
        %2616 = vmatprep.subr.bf16.mxu0 0
        %2617 = vmatpush1.bf16.msra.mxu0 0
        %2618 = vmatprep.subr.bf16.mxu0 0
        %2619 = vmatpush1.bf16.msra.mxu0 0
        %2620 = vmatprep.mubr.bf16.mxu0 0
        %2621 = vmatmul.mubr.bf16.gmra.mrb[0].mxu0 %v2586
        %v2622 = vpop.f32.mrb[0].mxu0
        %v2623 = vadd.f32 0.0, %v2622
        %v2624 = vpop.f32.mrb[0].mxu0
        %v2625 = vpop.f32.mrb[0].mxu0
        %v2626 = vpop.f32.mrb[0].mxu0
        %2627 = vdwg.mxu0
        %v2628 = vadd.f32 %v2560, %v2623
        %v2629 = vpack.c.bf16 %v2566, %v2566
        %s2630 = scalar_lea.vmem [#allocation8], 112
        %v2631 = vld [vmem:[%s2630] sm:$0xf]
        %v2632 = vld [vmem:[%s2630 + $0x4] sm:$0xf]
        %v2633 = vld [vmem:[%s2630 + $0x8] sm:$0xf]
        %v2634 = vld [vmem:[%s2630 + $0xc] sm:$0xf]
        %v2639 = vunpack.c.l.b16 %v2631
        %v2640 = vunpack.c.l.b16 %v2632
        %v2641 = vunpack.c.l.b16 %v2633
        %v2642 = vunpack.c.l.b16 %v2634
        %v2643 = vpack.c.b16 %v2640, %v2639
        %v2644 = vpack.c.b16 %v2642, %v2641
        %v2648 = vsel %vm1347, %v2629, 0
        %2650 = vmatprep.subr.bf16.mxu0 0
        %2651 = vmatpush1.bf16.msra.mxu0 %v2643
        %2652 = vmatprep.subr.bf16.mxu0 0
        %2653 = vmatpush1.bf16.msra.mxu0 %v2644
        %2654 = vmatprep.subr.bf16.mxu0 0
        %2655 = vmatpush1.bf16.msra.mxu0 0
        %2656 = vmatprep.subr.bf16.mxu0 0
        %2657 = vmatpush1.bf16.msra.mxu0 0
        %2658 = vmatprep.subr.bf16.mxu0 0
        %2659 = vmatpush1.bf16.msra.mxu0 0
        %2660 = vmatprep.subr.bf16.mxu0 0
        %2661 = vmatpush1.bf16.msra.mxu0 0
        %2662 = vmatprep.subr.bf16.mxu0 0
        %2663 = vmatpush1.bf16.msra.mxu0 0
        %2664 = vmatprep.subr.bf16.mxu0 0
        %2665 = vmatpush1.bf16.msra.mxu0 0
        %2666 = vmatprep.subr.bf16.mxu0 0
        %2667 = vmatpush1.bf16.msra.mxu0 0
        %2668 = vmatprep.subr.bf16.mxu0 0
        %2669 = vmatpush1.bf16.msra.mxu0 0
        %2670 = vmatprep.subr.bf16.mxu0 0
        %2671 = vmatpush1.bf16.msra.mxu0 0
        %2672 = vmatprep.subr.bf16.mxu0 0
        %2673 = vmatpush1.bf16.msra.mxu0 0
        %2674 = vmatprep.subr.bf16.mxu0 0
        %2675 = vmatpush1.bf16.msra.mxu0 0
        %2676 = vmatprep.subr.bf16.mxu0 0
        %2677 = vmatpush1.bf16.msra.mxu0 0
        %2678 = vmatprep.subr.bf16.mxu0 0
        %2679 = vmatpush1.bf16.msra.mxu0 0
        %2680 = vmatprep.subr.bf16.mxu0 0
        %2681 = vmatpush1.bf16.msra.mxu0 0
        %2682 = vmatprep.mubr.bf16.mxu0 0
        %2683 = vmatmul.mubr.bf16.gmra.mrb[0].mxu0 %v2648
        %v2684 = vpop.f32.mrb[0].mxu0
        %v2685 = vadd.f32 0.0, %v2684
        %v2686 = vpop.f32.mrb[0].mxu0
        %v2687 = vpop.f32.mrb[0].mxu0
        %v2688 = vpop.f32.mrb[0].mxu0
        %2689 = vdwg.mxu0
        %v2690 = vadd.f32 %v2628, %v2685
        %v2691 = vmul.f32 %v2563, %v2076
        %v2692 = vmul.f32 %v2566, %v2180
        %v2693 = vsub.f32 %v2691, %v2692
        %v2694 = vmul.f32 %v2566, %v2076
        %v2695 = vmul.f32 %v2563, %v2180
        %v2696 = vadd.f32 %v2694, %v2695
        %v2697 = vpack.c.bf16 %v2693, %v2693
        %s2698 = scalar_lea.vmem [#allocation8], 128
        %v2699 = vld [vmem:[%s2698] sm:$0xf]
        %v2700 = vld [vmem:[%s2698 + $0x4] sm:$0xf]
        %v2701 = vld [vmem:[%s2698 + $0x8] sm:$0xf]
        %v2702 = vld [vmem:[%s2698 + $0xc] sm:$0xf]
        %v2707 = vunpack.c.l.b16 %v2699
        %v2708 = vunpack.c.l.b16 %v2700
        %v2709 = vunpack.c.l.b16 %v2701
        %v2710 = vunpack.c.l.b16 %v2702
        %v2711 = vpack.c.b16 %v2708, %v2707
        %v2712 = vpack.c.b16 %v2710, %v2709
        %v2716 = vsel %vm1347, %v2697, 0
        %2718 = vmatprep.subr.bf16.mxu0 0
        %2719 = vmatpush1.bf16.msra.mxu0 %v2711
        %2720 = vmatprep.subr.bf16.mxu0 0
        %2721 = vmatpush1.bf16.msra.mxu0 %v2712
        %2722 = vmatprep.subr.bf16.mxu0 0
        %2723 = vmatpush1.bf16.msra.mxu0 0
        %2724 = vmatprep.subr.bf16.mxu0 0
        %2725 = vmatpush1.bf16.msra.mxu0 0
        %2726 = vmatprep.subr.bf16.mxu0 0
        %2727 = vmatpush1.bf16.msra.mxu0 0
        %2728 = vmatprep.subr.bf16.mxu0 0
        %2729 = vmatpush1.bf16.msra.mxu0 0
        %2730 = vmatprep.subr.bf16.mxu0 0
        %2731 = vmatpush1.bf16.msra.mxu0 0
        %2732 = vmatprep.subr.bf16.mxu0 0
        %2733 = vmatpush1.bf16.msra.mxu0 0
        %2734 = vmatprep.subr.bf16.mxu0 0
        %2735 = vmatpush1.bf16.msra.mxu0 0
        %2736 = vmatprep.subr.bf16.mxu0 0
        %2737 = vmatpush1.bf16.msra.mxu0 0
        %2738 = vmatprep.subr.bf16.mxu0 0
        %2739 = vmatpush1.bf16.msra.mxu0 0
        %2740 = vmatprep.subr.bf16.mxu0 0
        %2741 = vmatpush1.bf16.msra.mxu0 0
        %2742 = vmatprep.subr.bf16.mxu0 0
        %2743 = vmatpush1.bf16.msra.mxu0 0
        %2744 = vmatprep.subr.bf16.mxu0 0
        %2745 = vmatpush1.bf16.msra.mxu0 0
        %2746 = vmatprep.subr.bf16.mxu0 0
        %2747 = vmatpush1.bf16.msra.mxu0 0
        %2748 = vmatprep.subr.bf16.mxu0 0
        %2749 = vmatpush1.bf16.msra.mxu0 0
        %2750 = vmatprep.mubr.bf16.mxu0 0
        %2751 = vmatmul.mubr.bf16.gmra.mrb[0].mxu0 %v2716
        %v2752 = vpop.f32.mrb[0].mxu0
        %v2753 = vadd.f32 0.0, %v2752
        %v2754 = vpop.f32.mrb[0].mxu0
        %v2755 = vpop.f32.mrb[0].mxu0
        %v2756 = vpop.f32.mrb[0].mxu0
        %2757 = vdwg.mxu0
        %v2758 = vadd.f32 %v2690, %v2753
        %v2759 = vpack.c.bf16 %v2696, %v2696
        %s2760 = scalar_lea.vmem [#allocation8], 144
        %v2761 = vld [vmem:[%s2760] sm:$0xf]
        %v2762 = vld [vmem:[%s2760 + $0x4] sm:$0xf]
        %v2763 = vld [vmem:[%s2760 + $0x8] sm:$0xf]
        %v2764 = vld [vmem:[%s2760 + $0xc] sm:$0xf]
        %v2769 = vunpack.c.l.b16 %v2761
        %v2770 = vunpack.c.l.b16 %v2762
        %v2771 = vunpack.c.l.b16 %v2763
        %v2772 = vunpack.c.l.b16 %v2764
        %v2773 = vpack.c.b16 %v2770, %v2769
        %v2774 = vpack.c.b16 %v2772, %v2771
        %v2778 = vsel %vm1347, %v2759, 0
        %2780 = vmatprep.subr.bf16.mxu0 0
        %2781 = vmatpush1.bf16.msra.mxu0 %v2773
        %2782 = vmatprep.subr.bf16.mxu0 0
        %2783 = vmatpush1.bf16.msra.mxu0 %v2774
        %2784 = vmatprep.subr.bf16.mxu0 0
        %2785 = vmatpush1.bf16.msra.mxu0 0
        %2786 = vmatprep.subr.bf16.mxu0 0
        %2787 = vmatpush1.bf16.msra.mxu0 0
        %2788 = vmatprep.subr.bf16.mxu0 0
        %2789 = vmatpush1.bf16.msra.mxu0 0
        %2790 = vmatprep.subr.bf16.mxu0 0
        %2791 = vmatpush1.bf16.msra.mxu0 0
        %2792 = vmatprep.subr.bf16.mxu0 0
        %2793 = vmatpush1.bf16.msra.mxu0 0
        %2794 = vmatprep.subr.bf16.mxu0 0
        %2795 = vmatpush1.bf16.msra.mxu0 0
        %2796 = vmatprep.subr.bf16.mxu0 0
        %2797 = vmatpush1.bf16.msra.mxu0 0
        %2798 = vmatprep.subr.bf16.mxu0 0
        %2799 = vmatpush1.bf16.msra.mxu0 0
        %2800 = vmatprep.subr.bf16.mxu0 0
        %2801 = vmatpush1.bf16.msra.mxu0 0
        %2802 = vmatprep.subr.bf16.mxu0 0
        %2803 = vmatpush1.bf16.msra.mxu0 0
        %2804 = vmatprep.subr.bf16.mxu0 0
        %2805 = vmatpush1.bf16.msra.mxu0 0
        %2806 = vmatprep.subr.bf16.mxu0 0
        %2807 = vmatpush1.bf16.msra.mxu0 0
        %2808 = vmatprep.subr.bf16.mxu0 0
        %2809 = vmatpush1.bf16.msra.mxu0 0
        %2810 = vmatprep.subr.bf16.mxu0 0
        %2811 = vmatpush1.bf16.msra.mxu0 0
        %2812 = vmatprep.mubr.bf16.mxu0 0
        %2813 = vmatmul.mubr.bf16.gmra.mrb[0].mxu0 %v2778
        %v2814 = vpop.f32.mrb[0].mxu0
        %v2815 = vadd.f32 0.0, %v2814
        %v2816 = vpop.f32.mrb[0].mxu0
        %v2817 = vpop.f32.mrb[0].mxu0
        %v2818 = vpop.f32.mrb[0].mxu0
        %2819 = vdwg.mxu0
        %v2820 = vadd.f32 %v2758, %v2815
        %v2821 = vld [vmem:[%s6] sm:$0x1]
        %v2823 = vlaneseq
        %v2824 = vshrl.u32 %v2823, 7
        %v2825 = vsub.s32 0, %v2824
        %v2826 = vrot.slane %v2821, %v2825
        %v2828 = vadd.f32 %v2820, %v2826
        %2829 = vst [vmem:[%s337] sm:$0xff] %v2828
        %s2830 = sand.u32 %s186, 1
        %s2831 = scalar_lea.sflag [#allocation4], %s2830
        %s2832 = sand.u32 %s186, 1
        %s2833 = smul.addr %s2832, 8
        %s2834 = scalar_lea.vmem [#allocation10], %s2833
        // Predicated region
        $region65: #{tpu_custom_call.1} parent=47 // pred_check
          %p2835 = pneg %p196
        $region66: #{tpu_custom_call.1} parent=47 // pred_check_branch
          %2837 = sbr.rel (%p2835) target = $region68
        $region67: #{tpu_custom_call.1} parent=47 // pred_region
          %s2839 = ssub.s32 128, 128
          %2840 = vsyncadd %s2831, %s2839
          %s2841 = smul.addr %s26, 128
          %s2842 = scalar_lea.hbm %s7, %s2841
          %s2844 = sshll.u32 %s2834, 4
          %s2845 = int_to_ptr.vmem [resolvable:$true] %s2844
          %2847 = dma.vmem_to_hbm [thread:$0]  %s2845, 128, %s2842, %s2831
        $region68: #{tpu_custom_call.1} parent=47 // pred_fallthru
          _
      $region48: #{tpu_custom_call.1} parent=5 // pred_fallthru
        _
      %p2848 = scmp.le.s32.totalorder 2, %s21
      // Predicated region
      $region69: #{tpu_custom_call.1} parent=5 // pred_check
        %p2849 = pneg %p2848
      $region70: #{tpu_custom_call.1} parent=5 // pred_check_branch
        %2851 = sbr.rel (%p2849) target = $region72
      $region71: #{tpu_custom_call.1} parent=5 // pred_region
        %s2852 = ssub.s32 %s21, 2
        // Predicated region
        $region73: #{tpu_custom_call.1} parent=71 // pred_check
          %p2853 = pneg %p202
        $region74: #{tpu_custom_call.1} parent=71 // pred_check_branch
          %2855 = sbr.rel (%p2853) target = $region76
        $region75: #{tpu_custom_call.1} parent=71 // pred_region
          %s2856 = sand.u32 %s187, 1
          %s2857 = scalar_lea.sflag [#allocation4], %s2856
          %s2858 = sand.u32 %s187, 1
          %s2859 = smul.addr %s2858, 8
          %s2860 = scalar_lea.vmem [#allocation10], %s2859
          %2861 = dma.done %s2857, 128
        $region76: #{tpu_custom_call.1} parent=71 // pred_fallthru
          _
      $region72: #{tpu_custom_call.1} parent=5 // pred_fallthru
        _
    $region6: #{tpu_custom_call.1} parent=1 // loop_footer
      %s25 = sadd.s32 1, %s21
    $region7: #{tpu_custom_call.1} parent=1 // loop_footer_branch
      %20 = sbr.rel target = $region3
    $region8: #{tpu_custom_call.1} parent=1 // loop_exit
      _
    %2862 = vsyncpa [#allocation3], 1
    %s2863 = scalar_lea.sflag [#allocation3], 1
    %2864 = vsyncpa %s2863, 1
    %2865 = vsyncpa [#allocation6], 1
    %2866 = vsyncpa [#allocation9], 1
    %2867 = vsyncpa [#allocation4], 1
    %s2868 = scalar_lea.sflag [#allocation4], 1
    %2869 = vsyncpa %s2868, 1

// kernel: tpu_custom_call.1
$region0: #{tpu_custom_call.1}
  #allocation0 [shape = 'u32[]', space=smem, size = 0x4, offset = 0x4, fixed_abs, tag = 'smem constant byte address 0x4 - core index']
  #allocation1 [shape = 'u32[144,128]{1,0:T(1,128)}', space=vmem, size = 0x12000, scoped, tag = 'internal scratch']
  %s0 = inlined_call_operand.hbm [shape: f32[16,16], index: 0, kind: input, shape index: {}]
  %s1 = inlined_call_operand.hbm [shape: bf16[10,16,128], index: 1, kind: input, shape index: {}]
  %s2 = inlined_call_operand.vmem [shape: f32[1,128], index: 2, kind: input, shape index: {}]
  %s3 = inlined_call_operand.hbm [shape: bf16[10,32,128], index: 3, kind: input, shape index: {}]
  %s4 = inlined_call_operand.vmem [shape: f32[1,128], index: 4, kind: input, shape index: {}]
  %s5 = inlined_call_operand.hbm [shape: bf16[10,32,128], index: 5, kind: input, shape index: {}]
  %s6 = inlined_call_operand.vmem [shape: f32[1,128], index: 6, kind: input, shape index: {}]
  %s7 = inlined_call_operand.hbm [shape: f32[16,128], index: 7, kind: output, shape index: {}]
  %s8 = sld [smem:[#allocation0]]
  $region77: #{tpu_custom_call.1} parent=0
    _
  %s10 = ssub.s32 1, %s8
  %s11 = scalar_select 0, %s10, %s8
  $region1: #{tpu_custom_call.1} parent=0
    #allocation2 [shape = 'u8[8192]{0}', space=vmem, size = 0x2000, scoped, tag = 'input window, operand 0']
    #allocation3 [shape = 's32[2]{0}', space=sflag, size = 0x8, scoped, tag = 'scoped memory for tpu_custom_call.1']
    #allocation4 [shape = 's32[2]{0}', space=sflag, size = 0x8, scoped, tag = 'scoped memory for tpu_custom_call.1']
    #allocation5 [shape = 'u8[40960]{0}', space=vmem, size = 0xa000, scoped, tag = 'input window, operand 1, single buffered']
    #allocation6 [shape = 's32[1]{0}', space=sflag, size = 0x4, scoped, tag = 'scoped memory for tpu_custom_call.1']
    #allocation7 [shape = 'u8[81920]{0}', space=vmem, size = 0x14000, scoped, tag = 'input window, operand 3, single buffered']
    #allocation8 [shape = 'u8[81920]{0}', space=vmem, size = 0x14000, scoped, tag = 'input window, operand 5, single buffered']
    #allocation9 [shape = 's32[1]{0}', space=sflag, size = 0x4, scoped, tag = 'scoped memory for tpu_custom_call.1']
    #allocation10 [shape = 'u8[8192]{0}', space=vmem, size = 0x2000, scoped, tag = 'output window, operand 0']
    %12 = vsyncpa [#allocation3], 0
    %s13 = scalar_lea.sflag [#allocation3], 1
    %14 = vsyncpa %s13, 0
    %15 = vsyncpa [#allocation6], 0
    %16 = vsyncpa [#allocation9], 0
    %17 = vsyncpa [#allocation4], 0
    %s18 = scalar_lea.sflag [#allocation4], 1
    %19 = vsyncpa %s18, 0
    loop: start=0, step=1, limit=4
    $region2: #{tpu_custom_call.1} parent=1 // loop_pre_header
      _
    $region3: #{tpu_custom_call.1} parent=1 // loop_header
      %s21 = sphi 0, %s25
      %p22 = scmp.ge.s32.totalorder %s21, 4
      %s31 = sphi 0, %s33
      %s34 = sphi 0, %s31
      %s35 = sphi 0, %s34
      %s51 = sphi 0, %s35
      %s55 = sphi 0, %s55
      %s57 = sphi 0, %s55
      %s58 = sphi 0, %s57
      %s72 = sphi 0, %s58
      %s76 = sphi 0, %s76
      %s78 = sphi 0, %s76
      %s79 = sphi 0, %s78
      %s93 = sphi 0, %s79
      %s97 = sphi 0, %s97
      %s99 = sphi 0, %s97
      %s100 = sphi 0, %s99
      %s114 = sphi 0, %s100
      %s118 = sphi 0, %s118
      %s120 = sphi 0, %s118
      %s121 = sphi 0, %s120
      %s135 = sphi 0, %s121
      %s139 = sphi 0, %s139
      %s141 = sphi 0, %s139
      %s142 = sphi 0, %s141
      %s156 = sphi 0, %s142
      %s160 = sphi 0, %s160
      %s162 = sphi 0, %s160
      %s163 = sphi 0, %s162
      %s177 = sphi 0, %s163
      %s183 = sphi 0, %s185
      %s186 = sphi 0, %s183
      %s187 = sphi 0, %s186
      %s203 = sphi 0, %s187
    $region4: #{tpu_custom_call.1} parent=1 // loop_header_branch
      %24 = sbr.rel (%p22) target = $region8
    $region5: #{tpu_custom_call.1} parent=1 // loop_body
      %s26 = ssub.s32 %s21, 1
      %s27 = ssub.s32 %s21, 2
      %s28 = sadd.s32 %s21, 1
      %s29 = ssub.s32 %s21, %s28
      %p30 = scmp.eq.s32.totalorder %s29, 0
      %s32 = sadd.s32 %s31, 1
      %s33 = scalar_select %p30, %s31, %s32
      %p36 = pneg %p30
      %p37 = scmp.eq.s32.totalorder %s21, 1
      %p38 = por %p36, %p37
      %p39 = scmp.ne.s32.totalorder %s31, %s34
      %p40 = scmp.eq.s32.totalorder %s21, 0
      %p41 = por %p39, %p40
      %p42 = scmp.ne.s32.totalorder %s31, %s34
      %p43 = scmp.eq.s32.totalorder %s26, 1
      %p44 = por %p42, %p43
      %p45 = scmp.ne.s32.totalorder %s34, %s35
      %p46 = scmp.eq.s32.totalorder %s26, 0
      %p47 = por %p45, %p46
      %p48 = scmp.ne.s32.totalorder %s34, %s35
      %p49 = scmp.eq.s32.totalorder %s27, 1
      %p50 = por %p48, %p49
      %p52 = scmp.ne.s32.totalorder %s35, %s51
      %p53 = scmp.eq.s32.totalorder %s27, 0
      %p54 = por %p52, %p53
      %s56 = sadd.s32 %s55, 1
      %p59 = scmp.eq.s32.totalorder %s21, 1
      %p60 = scmp.ne.s32.totalorder %s55, %s57
      %p61 = scmp.eq.s32.totalorder %s21, 0
      %p62 = por %p60, %p61
      %p63 = scmp.ne.s32.totalorder %s55, %s57
      %p64 = scmp.eq.s32.totalorder %s26, 1
      %p65 = por %p63, %p64
      %p66 = scmp.ne.s32.totalorder %s57, %s58
      %p67 = scmp.eq.s32.totalorder %s26, 0
      %p68 = por %p66, %p67
      %p69 = scmp.ne.s32.totalorder %s57, %s58
      %p70 = scmp.eq.s32.totalorder %s27, 1
      %p71 = por %p69, %p70
      %p73 = scmp.ne.s32.totalorder %s58, %s72
      %p74 = scmp.eq.s32.totalorder %s27, 0
      %p75 = por %p73, %p74
      %s77 = sadd.s32 %s76, 1
      %p80 = scmp.eq.s32.totalorder %s21, 1
      %p81 = scmp.ne.s32.totalorder %s76, %s78
      %p82 = scmp.eq.s32.totalorder %s21, 0
      %p83 = por %p81, %p82
      %p84 = scmp.ne.s32.totalorder %s76, %s78
      %p85 = scmp.eq.s32.totalorder %s26, 1
      %p86 = por %p84, %p85
      %p87 = scmp.ne.s32.totalorder %s78, %s79
      %p88 = scmp.eq.s32.totalorder %s26, 0
      %p89 = por %p87, %p88
      %p90 = scmp.ne.s32.totalorder %s78, %s79
      %p91 = scmp.eq.s32.totalorder %s27, 1
      %p92 = por %p90, %p91
      %p94 = scmp.ne.s32.totalorder %s79, %s93
      %p95 = scmp.eq.s32.totalorder %s27, 0
      %p96 = por %p94, %p95
      %s98 = sadd.s32 %s97, 1
      %p101 = scmp.eq.s32.totalorder %s21, 1
      %p102 = scmp.ne.s32.totalorder %s97, %s99
      %p103 = scmp.eq.s32.totalorder %s21, 0
      %p104 = por %p102, %p103
      %p105 = scmp.ne.s32.totalorder %s97, %s99
      %p106 = scmp.eq.s32.totalorder %s26, 1
      %p107 = por %p105, %p106
      %p108 = scmp.ne.s32.totalorder %s99, %s100
      %p109 = scmp.eq.s32.totalorder %s26, 0
      %p110 = por %p108, %p109
      %p111 = scmp.ne.s32.totalorder %s99, %s100
      %p112 = scmp.eq.s32.totalorder %s27, 1
      %p113 = por %p111, %p112
      %p115 = scmp.ne.s32.totalorder %s100, %s114
      %p116 = scmp.eq.s32.totalorder %s27, 0
      %p117 = por %p115, %p116
      %s119 = sadd.s32 %s118, 1
      %p122 = scmp.eq.s32.totalorder %s21, 1
      %p123 = scmp.ne.s32.totalorder %s118, %s120
      %p124 = scmp.eq.s32.totalorder %s21, 0
      %p125 = por %p123, %p124
      %p126 = scmp.ne.s32.totalorder %s118, %s120
      %p127 = scmp.eq.s32.totalorder %s26, 1
      %p128 = por %p126, %p127
      %p129 = scmp.ne.s32.totalorder %s120, %s121
      %p130 = scmp.eq.s32.totalorder %s26, 0
      %p131 = por %p129, %p130
      %p132 = scmp.ne.s32.totalorder %s120, %s121
      %p133 = scmp.eq.s32.totalorder %s27, 1
      %p134 = por %p132, %p133
      %p136 = scmp.ne.s32.totalorder %s121, %s135
      %p137 = scmp.eq.s32.totalorder %s27, 0
      %p138 = por %p136, %p137
      %s140 = sadd.s32 %s139, 1
      %p143 = scmp.eq.s32.totalorder %s21, 1
      %p144 = scmp.ne.s32.totalorder %s139, %s141
      %p145 = scmp.eq.s32.totalorder %s21, 0
      %p146 = por %p144, %p145
      %p147 = scmp.ne.s32.totalorder %s139, %s141
      %p148 = scmp.eq.s32.totalorder %s26, 1
      %p149 = por %p147, %p148
      %p150 = scmp.ne.s32.totalorder %s141, %s142
      %p151 = scmp.eq.s32.totalorder %s26, 0
      %p152 = por %p150, %p151
      %p153 = scmp.ne.s32.totalorder %s141, %s142
      %p154 = scmp.eq.s32.totalorder %s27, 1
      %p155 = por %p153, %p154
      %p157 = scmp.ne.s32.totalorder %s142, %s156
      %p158 = scmp.eq.s32.totalorder %s27, 0
      %p159 = por %p157, %p158
      %s161 = sadd.s32 %s160, 1
      %p164 = scmp.eq.s32.totalorder %s21, 1
      %p165 = scmp.ne.s32.totalorder %s160, %s162
      %p166 = scmp.eq.s32.totalorder %s21, 0
      %p167 = por %p165, %p166
      %p168 = scmp.ne.s32.totalorder %s160, %s162
      %p169 = scmp.eq.s32.totalorder %s26, 1
      %p170 = por %p168, %p169
      %p171 = scmp.ne.s32.totalorder %s162, %s163
      %p172 = scmp.eq.s32.totalorder %s26, 0
      %p173 = por %p171, %p172
      %p174 = scmp.ne.s32.totalorder %s162, %s163
      %p175 = scmp.eq.s32.totalorder %s27, 1
      %p176 = por %p174, %p175
      %p178 = scmp.ne.s32.totalorder %s163, %s177
      %p179 = scmp.eq.s32.totalorder %s27, 0
      %p180 = por %p178, %p179
      %s181 = ssub.s32 %s21, %s28
      %p182 = scmp.eq.s32.totalorder %s181, 0
      %s184 = sadd.s32 %s183, 1
      %s185 = scalar_select %p182, %s183, %s184
      %p188 = pneg %p182
      %p189 = scmp.eq.s32.totalorder %s21, 1
      %p190 = por %p188, %p189
      %p191 = scmp.ne.s32.totalorder %s183, %s186
      %p192 = scmp.eq.s32.totalorder %s21, 0
      %p193 = por %p191, %p192
      %p194 = scmp.ne.s32.totalorder %s183, %s186
      %p195 = scmp.eq.s32.totalorder %s26, 1
      %p196 = por %p194, %p195
      %p197 = scmp.ne.s32.totalorder %s186, %s187
      %p198 = scmp.eq.s32.totalorder %s26, 0
      %p199 = por %p197, %p198
      %p200 = scmp.ne.s32.totalorder %s186, %s187
      %p201 = scmp.eq.s32.totalorder %s27, 1
      %p202 = por %p200, %p201
      %p204 = scmp.ne.s32.totalorder %s187, %s203
      %p205 = scmp.eq.s32.totalorder %s27, 0
      %p206 = por %p204, %p205
      %p207 = scmp.le.s32.totalorder 1, %s21
      %p208 = scmp.lt.s32.totalorder %s21, 3
      %p209 = pnand %p207, %p208
      %p210 = pneg %p209
      // Predicated region
      $region9: #{tpu_custom_call.1} parent=5 // pred_check
        _
      $region10: #{tpu_custom_call.1} parent=5 // pred_check_branch
        %212 = sbr.rel (%p209) target = $region12
      $region11: #{tpu_custom_call.1} parent=5 // pred_region
        %s213 = ssub.s32 %s21, 1
        // Predicated region
        $region13: #{tpu_custom_call.1} parent=11 // pred_check
          %p214 = pneg %p68
        $region14: #{tpu_custom_call.1} parent=11 // pred_check_branch
          %216 = sbr.rel (%p214) target = $region16
        $region15: #{tpu_custom_call.1} parent=11 // pred_region
          %s218 = ssub.s32 1280, 1280
          %219 = vsyncadd [#allocation6], %s218
          %s220 = sshll.u32 [#allocation5], 4
          %s221 = int_to_ptr.vmem [resolvable:$true] %s220
          %226 = dma.hbm_to_vmem [thread:$0]  %s1, 1280, %s221, [#allocation6], 64, 64, 4
        $region16: #{tpu_custom_call.1} parent=11 // pred_fallthru
          _
        // Predicated region
        $region17: #{tpu_custom_call.1} parent=11 // pred_check
          %p227 = pneg %p89
        $region18: #{tpu_custom_call.1} parent=11 // pred_check_branch
          %229 = sbr.rel (%p227) target = $region20
        $region19: #{tpu_custom_call.1} parent=11 // pred_region
          _
        $region20: #{tpu_custom_call.1} parent=11 // pred_fallthru
          _
        // Predicated region
        $region21: #{tpu_custom_call.1} parent=11 // pred_check
          %p230 = pneg %p110
        $region22: #{tpu_custom_call.1} parent=11 // pred_check_branch
          %232 = sbr.rel (%p230) target = $region24
        $region23: #{tpu_custom_call.1} parent=11 // pred_region
          %s234 = ssub.s32 2560, 2560
          %235 = vsyncadd [#allocation6], %s234
          %s236 = sshll.u32 [#allocation7], 4
          %s237 = int_to_ptr.vmem [resolvable:$true] %s236
          %242 = dma.hbm_to_vmem [thread:$0]  %s3, 2560, %s237, [#allocation6], 64, 64, 4
        $region24: #{tpu_custom_call.1} parent=11 // pred_fallthru
          _
        // Predicated region
        $region25: #{tpu_custom_call.1} parent=11 // pred_check
          %p243 = pneg %p131
        $region26: #{tpu_custom_call.1} parent=11 // pred_check_branch
          %245 = sbr.rel (%p243) target = $region28
        $region27: #{tpu_custom_call.1} parent=11 // pred_region
          _
        $region28: #{tpu_custom_call.1} parent=11 // pred_fallthru
          _
        // Predicated region
        $region29: #{tpu_custom_call.1} parent=11 // pred_check
          %p246 = pneg %p152
        $region30: #{tpu_custom_call.1} parent=11 // pred_check_branch
          %248 = sbr.rel (%p246) target = $region32
        $region31: #{tpu_custom_call.1} parent=11 // pred_region
          %s250 = ssub.s32 2560, 2560
          %251 = vsyncadd [#allocation9], %s250
          %s252 = sshll.u32 [#allocation8], 4
          %s253 = int_to_ptr.vmem [resolvable:$true] %s252
          %258 = dma.hbm_to_vmem [thread:$0]  %s5, 2560, %s253, [#allocation9], 64, 64, 4
        $region32: #{tpu_custom_call.1} parent=11 // pred_fallthru
          _
        // Predicated region
        $region33: #{tpu_custom_call.1} parent=11 // pred_check
          %p259 = pneg %p173
        $region34: #{tpu_custom_call.1} parent=11 // pred_check_branch
          %261 = sbr.rel (%p259) target = $region36
        $region35: #{tpu_custom_call.1} parent=11 // pred_region
          _
        $region36: #{tpu_custom_call.1} parent=11 // pred_fallthru
          _
      $region12: #{tpu_custom_call.1} parent=5 // pred_fallthru
        _
      %p262 = scmp.lt.s32.totalorder %s21, 2
      // Predicated region
      $region37: #{tpu_custom_call.1} parent=5 // pred_check
        %p263 = pneg %p262
      $region38: #{tpu_custom_call.1} parent=5 // pred_check_branch
        %265 = sbr.rel (%p263) target = $region40
      $region39: #{tpu_custom_call.1} parent=5 // pred_region
        // Predicated region
        $region41: #{tpu_custom_call.1} parent=39 // pred_check
          %p266 = pneg %p41
        $region42: #{tpu_custom_call.1} parent=39 // pred_check_branch
          %268 = sbr.rel (%p266) target = $region44
        $region43: #{tpu_custom_call.1} parent=39 // pred_region
          %s269 = sand.u32 %s31, 1
          %s270 = scalar_lea.sflag [#allocation3], %s269
          %s271 = sand.u32 %s31, 1
          %s272 = smul.addr %s271, 8
          %s273 = scalar_lea.vmem [#allocation2], %s272
          %s275 = ssub.s32 128, 128
          %276 = vsyncadd %s270, %s275
          %s277 = smul.addr %s21, 128
          %s278 = scalar_lea.hbm %s0, %s277
          %s280 = sshll.u32 %s273, 4
          %s281 = int_to_ptr.vmem [resolvable:$true] %s280
          %283 = dma.hbm_to_vmem [thread:$0]  %s278, 128, %s281, %s270
        $region44: #{tpu_custom_call.1} parent=39 // pred_fallthru
          _
      $region40: #{tpu_custom_call.1} parent=5 // pred_fallthru
        _
      %p284 = scmp.le.s32.totalorder 1, %s21
      %p285 = scmp.lt.s32.totalorder %s21, 3
      %p286 = pnand %p284, %p285
      %p287 = pneg %p286
      // Predicated region
      $region45: #{tpu_custom_call.1} parent=5 // pred_check
        _
      $region46: #{tpu_custom_call.1} parent=5 // pred_check_branch
        %289 = sbr.rel (%p286) target = $region48
      $region47: #{tpu_custom_call.1} parent=5 // pred_region
        %s290 = ssub.s32 %s21, 1
        %s291 = sand.u32 %s34, 1
        %s292 = scalar_lea.sflag [#allocation3], %s291
        %s293 = sand.u32 %s34, 1
        %s294 = smul.addr %s293, 8
        %s295 = scalar_lea.vmem [#allocation2], %s294
        // Predicated region
        $region49: #{tpu_custom_call.1} parent=47 // pred_check
          %p296 = pneg %p47
        $region50: #{tpu_custom_call.1} parent=47 // pred_check_branch
          %298 = sbr.rel (%p296) target = $region52
        $region51: #{tpu_custom_call.1} parent=47 // pred_region
          %299 = dma.done %s292, 128
        $region52: #{tpu_custom_call.1} parent=47 // pred_fallthru
          _
        // Predicated region
        $region53: #{tpu_custom_call.1} parent=47 // pred_check
          %p300 = pneg %p68
        $region54: #{tpu_custom_call.1} parent=47 // pred_check_branch
          %302 = sbr.rel (%p300) target = $region56
        $region55: #{tpu_custom_call.1} parent=47 // pred_region
          %303 = dma.done [#allocation6], 1280
        $region56: #{tpu_custom_call.1} parent=47 // pred_fallthru
          _
        // Predicated region
        $region57: #{tpu_custom_call.1} parent=47 // pred_check
          %p304 = pneg %p110
        $region58: #{tpu_custom_call.1} parent=47 // pred_check_branch
          %306 = sbr.rel (%p304) target = $region60
        $region59: #{tpu_custom_call.1} parent=47 // pred_region
          %307 = dma.done [#allocation6], 2560
        $region60: #{tpu_custom_call.1} parent=47 // pred_fallthru
          _
        // Predicated region
        $region61: #{tpu_custom_call.1} parent=47 // pred_check
          %p308 = pneg %p152
        $region62: #{tpu_custom_call.1} parent=47 // pred_check_branch
          %310 = sbr.rel (%p308) target = $region64
        $region63: #{tpu_custom_call.1} parent=47 // pred_region
          %311 = dma.done [#allocation9], 2560
        $region64: #{tpu_custom_call.1} parent=47 // pred_fallthru
          _
        %s312 = sand.u32 %s34, 1
        %s313 = scalar_lea.sflag [#allocation3], %s312
        %s314 = sand.u32 %s34, 1
        %s315 = smul.addr %s314, 8
        %s316 = scalar_lea.vmem [#allocation2], %s315
        %p317 = pneg %p47
        %p318 = pneg %p44
        %p319 = pneg %p68
        %p320 = pneg %p65
        %p321 = pneg %p89
        %p322 = pneg %p86
        %p323 = pneg %p110
        %p324 = pneg %p107
        %p325 = pneg %p131
        %p326 = pneg %p128
        %p327 = pneg %p152
        %p328 = pneg %p149
        %p329 = pneg %p173
        %p330 = pneg %p170
        %p331 = pneg %p199
        %p332 = pneg %p196
        %s333 = sand.u32 %s186, 1
        %s334 = scalar_lea.sflag [#allocation4], %s333
        %s335 = sand.u32 %s186, 1
        %s336 = smul.addr %s335, 8
        %s337 = scalar_lea.vmem [#allocation10], %s336
        %v339 = vld [vmem:[%s295] sm:$0xff]
        %v340 = vand.u32 2147483647, %v339
        %vm341 = vcmp.le.f32.partialorder %v340, 0.7853982
        %vm342 = vcmp.lt.s32.totalorder %v339, 0
        %v343 = vand.u32 %v339, 2139095040
        %v344 = vshrl.u32 %v343, 23
        %v345 = vsub.s32 %v344, 127
        %v346 = vand.u32 2147483647, %v339
        %v347 = vand.u32 %v346, 8388607
        %v348 = vor.u32 %v347, 8388608
        %v349 = vsub.s32 0, %v348
        %v350 = vadd.s32 %v345, 1
        %vm351 = vcmp.gt.s32.totalorder %v350, 0
        %v352 = vsel %vm351, %v350, 0
        %v353 = vshrl.u32 %v352, 5
        %v354 = vand.u32 %v352, 31
        %v355 = vsub.s32 32, %v354
        %v356 = vshrl.u32 683565275, %v355
        %v357 = vshll.u32 683565275, %v354
        %v358 = vshrl.u32 2475754826, %v355
        %v359 = vor.u32 %v357, %v358
        %v360 = vshll.u32 2475754826, %v354
        %v361 = vshrl.u32 2131351028, %v355
        %v362 = vor.u32 %v360, %v361
        %v363 = vshll.u32 2131351028, %v354
        %v364 = vshrl.u32 2102212464, %v355
        %v365 = vor.u32 %v363, %v364
        %v366 = vshll.u32 2102212464, %v354
        %v367 = vshrl.u32 920167782, %v355
        %v368 = vor.u32 %v366, %v367
        %v369 = vshll.u32 920167782, %v354
        %v370 = vshrl.u32 1326507024, %v355
        %v371 = vor.u32 %v369, %v370
        %vm372 = vcmp.lt.s32.totalorder %v353, 1
        %vm373 = vcmp.lt.s32.totalorder %v353, 2
        %vm374 = vcmp.lt.s32.totalorder %v353, 3
        %vm375 = vcmp.lt.s32.totalorder %v353, 4
        %v376 = vsel %vm372, %v356, %v359
        %v377 = vsel %vm375, %v365, 2102212464
        %v378 = vsel %vm374, %v362, %v377
        %v379 = vsel %vm373, %v376, %v378
        %v380 = vsel %vm372, %v359, %v362
        %v381 = vsel %vm375, %v368, 920167782
        %v382 = vsel %vm374, %v365, %v381
        %v383 = vsel %vm373, %v380, %v382
        %v384 = vsel %vm372, %v362, %v365
        %v385 = vsel %vm375, %v371, 1326507024
        %v386 = vsel %vm374, %v368, %v385
        %v387 = vsel %vm373, %v384, %v386
        %v388 = vshll.u32 %v348, 8
        %v389 = vmul.u32.u64.compose %v388, %v387
        %v390 = vextract.low.u32 %v389
        %v391 = vextract.high.u32 %v389
        %v392 = vmul.u32.u64.compose %v388, %v383
        %v393 = vextract.low.u32 %v392
        %v394 = vextract.high.u32 %v392
        %v395 = vmul.u32 %v388, %v379
        %v396 = vadd.s32 %v391, %v393
        %vm397 = vc.u32 %v391, %v393
        %v398 = vadd.s32 %v394, 1
        %v399 = vsel %vm397, %v398, %v394
        %v400 = vadd.s32 %v395, %v399
        %v401 = vadd.s32 %v400, 536870912
        %v402 = vshrl.u32 %v401, 30
        %v403 = vshll.u32 %v402, 30
        %v404 = vsub.s32 %v400, %v403
        %vm405 = vcmp.lt.s32.totalorder %v404, 0
        %v406 = vsub.s32 0, %v404
        %v407 = vsel %vm405, %v406, %v404
        %v408 = vclz %v407
        %v409 = vsub.s32 %v408, 2
        %vm410 = vcmp.gt.s32.totalorder 0, %v409
        %v411 = vsel %vm410, 0, %v409
        %v412 = vsub.s32 32, %v411
        %v413 = vshll.u32 %v404, %v411
        %v414 = vshrl.u32 %v396, %v412
        %v415 = vor.u32 %v413, %v414
        %v416 = vsub.s32 4294967266, %v411
        %v417 = vadd.s32 %v416, 127
        %v418 = vshll.u32 %v417, 23
        %v419 = vor.u32 4788187, %v418
        %v420 = vand.u32 2147483647, %v419
        %v422 = vcvt.s32.f32 %v415
        %v423 = vmul.f32 %v422, %v420
        %v424 = vxor.u32 %v423, 2147483648
        %v425 = vsel %vm342, %v424, %v423
        %v426 = vsub.s32 4, %v402
        %v427 = vsel %vm342, %v426, %v402
        %v428 = vsel %vm341, %v339, %v425
        %v429 = vsel %vm341, 0, %v427
        %v430 = vcosq.f32.pop %v428
        %v431 = vsinq.f32.pop %v428
        %vm432 = vweird.f32 %v339
        %v433 = vand.u32 %v429, 3
        %vm434 = vcmp.lt.s32.totalorder %v433, 2
        %vm435 = vcmp.eq.s32.totalorder %v433, 0
        %v436 = vxor.u32 %v431, 2147483648
        %v437 = vsel %vm435, %v430, %v436
        %vm438 = vcmp.eq.s32.totalorder %v433, 2
        %v439 = vxor.u32 %v430, 2147483648
        %v440 = vsel %vm438, %v439, %v431
        %v441 = vsel %vm434, %v437, %v440
        %v442 = vsel %vm432, nan, %v441
        %v443 = vand.u32 2147483647, %v339
        %vm444 = vcmp.le.f32.partialorder %v443, 0.7853982
        %vm445 = vcmp.lt.s32.totalorder %v339, 0
        %v446 = vand.u32 %v339, 2139095040
        %v447 = vshrl.u32 %v446, 23
        %v448 = vsub.s32 %v447, 127
        %v449 = vand.u32 2147483647, %v339
        %v450 = vand.u32 %v449, 8388607
        %v451 = vor.u32 %v450, 8388608
        %v452 = vsub.s32 0, %v451
        %v453 = vadd.s32 %v448, 1
        %vm454 = vcmp.gt.s32.totalorder %v453, 0
        %v455 = vsel %vm454, %v453, 0
        %v456 = vshrl.u32 %v455, 5
        %v457 = vand.u32 %v455, 31
        %v458 = vsub.s32 32, %v457
        %v459 = vshrl.u32 683565275, %v458
        %v460 = vshll.u32 683565275, %v457
        %v461 = vshrl.u32 2475754826, %v458
        %v462 = vor.u32 %v460, %v461
        %v463 = vshll.u32 2475754826, %v457
        %v464 = vshrl.u32 2131351028, %v458
        %v465 = vor.u32 %v463, %v464
        %v466 = vshll.u32 2131351028, %v457
        %v467 = vshrl.u32 2102212464, %v458
        %v468 = vor.u32 %v466, %v467
        %v469 = vshll.u32 2102212464, %v457
        %v470 = vshrl.u32 920167782, %v458
        %v471 = vor.u32 %v469, %v470
        %v472 = vshll.u32 920167782, %v457
        %v473 = vshrl.u32 1326507024, %v458
        %v474 = vor.u32 %v472, %v473
        %vm475 = vcmp.lt.s32.totalorder %v456, 1
        %vm476 = vcmp.lt.s32.totalorder %v456, 2
        %vm477 = vcmp.lt.s32.totalorder %v456, 3
        %vm478 = vcmp.lt.s32.totalorder %v456, 4
        %v479 = vsel %vm475, %v459, %v462
        %v480 = vsel %vm478, %v468, 2102212464
        %v481 = vsel %vm477, %v465, %v480
        %v482 = vsel %vm476, %v479, %v481
        %v483 = vsel %vm475, %v462, %v465
        %v484 = vsel %vm478, %v471, 920167782
        %v485 = vsel %vm477, %v468, %v484
        %v486 = vsel %vm476, %v483, %v485
        %v487 = vsel %vm475, %v465, %v468
        %v488 = vsel %vm478, %v474, 1326507024
        %v489 = vsel %vm477, %v471, %v488
        %v490 = vsel %vm476, %v487, %v489
        %v491 = vshll.u32 %v451, 8
        %v492 = vmul.u32.u64.compose %v491, %v490
        %v493 = vextract.low.u32 %v492
        %v494 = vextract.high.u32 %v492
        %v495 = vmul.u32.u64.compose %v491, %v486
        %v496 = vextract.low.u32 %v495
        %v497 = vextract.high.u32 %v495
        %v498 = vmul.u32 %v491, %v482
        %v499 = vadd.s32 %v494, %v496
        %vm500 = vc.u32 %v494, %v496
        %v501 = vadd.s32 %v497, 1
        %v502 = vsel %vm500, %v501, %v497
        %v503 = vadd.s32 %v498, %v502
        %v504 = vadd.s32 %v503, 536870912
        %v505 = vshrl.u32 %v504, 30
        %v506 = vshll.u32 %v505, 30
        %v507 = vsub.s32 %v503, %v506
        %vm508 = vcmp.lt.s32.totalorder %v507, 0
        %v509 = vsub.s32 0, %v507
        %v510 = vsel %vm508, %v509, %v507
        %v511 = vclz %v510
        %v512 = vsub.s32 %v511, 2
        %vm513 = vcmp.gt.s32.totalorder 0, %v512
        %v514 = vsel %vm513, 0, %v512
        %v515 = vsub.s32 32, %v514
        %v516 = vshll.u32 %v507, %v514
        %v517 = vshrl.u32 %v499, %v515
        %v518 = vor.u32 %v516, %v517
        %v519 = vsub.s32 4294967266, %v514
        %v520 = vadd.s32 %v519, 127
        %v521 = vshll.u32 %v520, 23
        %v522 = vor.u32 4788187, %v521
        %v523 = vand.u32 2147483647, %v522
        %v525 = vcvt.s32.f32 %v518
        %v526 = vmul.f32 %v525, %v523
        %v527 = vxor.u32 %v526, 2147483648
        %v528 = vsel %vm445, %v527, %v526
        %v529 = vsub.s32 4, %v505
        %v530 = vsel %vm445, %v529, %v505
        %v531 = vsel %vm444, %v339, %v528
        %v532 = vsel %vm444, 0, %v530
        %v533 = vcosq.f32.pop %v531
        %v534 = vsinq.f32.pop %v531
        %vm535 = vweird.f32 %v339
        %v536 = vadd.s32 %v532, 3
        %v537 = vand.u32 %v536, 3
        %vm538 = vcmp.lt.s32.totalorder %v537, 2
        %vm539 = vcmp.eq.s32.totalorder %v537, 0
        %v540 = vxor.u32 %v534, 2147483648
        %v541 = vsel %vm539, %v533, %v540
        %vm542 = vcmp.eq.s32.totalorder %v537, 2
        %v543 = vxor.u32 %v533, 2147483648
        %v544 = vsel %vm542, %v543, %v534
        %v545 = vsel %vm538, %v541, %v544
        %v546 = vsel %vm535, nan, %v545
        %v547 = vpack.c.bf16 %v442, %v442
        %v548 = vld [vmem:[#allocation5] sm:$0xf]
        %v549 = vld [vmem:[#allocation5 + $0x4] sm:$0xf]
        %v550 = vpack.c.bf16 %v546, %v546
        %s551 = scalar_lea.vmem [#allocation5], 8
        %v552 = vld [vmem:[%s551] sm:$0xf]
        %v553 = vld [vmem:[%s551 + $0x4] sm:$0xf]
        %v556 = vunpack.c.l.b16 %v552
        %v557 = vunpack.c.l.b16 %v553
        %v558 = vpack.c.b16 %v557, %v556
        %vm560 = vcmask 130048
        %v562 = vsel %vm560, %v550, 0
        %564 = vmatprep.subr.bf16.mxu0 0
        %565 = vmatpush1.bf16.msra.mxu0 %v558
        %566 = vmatprep.subr.bf16.mxu0 0
        %567 = vmatpush1.bf16.msra.mxu0 0
        %568 = vmatprep.subr.bf16.mxu0 0
        %569 = vmatpush1.bf16.msra.mxu0 0
        %570 = vmatprep.subr.bf16.mxu0 0
        %571 = vmatpush1.bf16.msra.mxu0 0
        %572 = vmatprep.subr.bf16.mxu0 0
        %573 = vmatpush1.bf16.msra.mxu0 0
        %574 = vmatprep.subr.bf16.mxu0 0
        %575 = vmatpush1.bf16.msra.mxu0 0
        %576 = vmatprep.subr.bf16.mxu0 0
        %577 = vmatpush1.bf16.msra.mxu0 0
        %578 = vmatprep.subr.bf16.mxu0 0
        %579 = vmatpush1.bf16.msra.mxu0 0
        %580 = vmatprep.subr.bf16.mxu0 0
        %581 = vmatpush1.bf16.msra.mxu0 0
        %582 = vmatprep.subr.bf16.mxu0 0
        %583 = vmatpush1.bf16.msra.mxu0 0
        %584 = vmatprep.subr.bf16.mxu0 0
        %585 = vmatpush1.bf16.msra.mxu0 0
        %586 = vmatprep.subr.bf16.mxu0 0
        %587 = vmatpush1.bf16.msra.mxu0 0
        %588 = vmatprep.subr.bf16.mxu0 0
        %589 = vmatpush1.bf16.msra.mxu0 0
        %590 = vmatprep.subr.bf16.mxu0 0
        %591 = vmatpush1.bf16.msra.mxu0 0
        %592 = vmatprep.subr.bf16.mxu0 0
        %593 = vmatpush1.bf16.msra.mxu0 0
        %594 = vmatprep.subr.bf16.mxu0 0
        %595 = vmatpush1.bf16.msra.mxu0 0
        %596 = vmatprep.mubr.bf16.mxu0 0
        %597 = vmatmul.mubr.bf16.gmra.mrb[0].mxu0 %v562
        %v598 = vpop.f32.mrb[0].mxu0
        %v599 = vadd.f32 0.0, %v598
        %v600 = vpop.f32.mrb[0].mxu0
        %v601 = vpop.f32.mrb[0].mxu0
        %v602 = vpop.f32.mrb[0].mxu0
        %603 = vdwg.mxu0
        %v606 = vunpack.c.l.b16 %v548
        %v607 = vunpack.c.l.b16 %v549
        %v608 = vpack.c.b16 %v607, %v606
        %v611 = vsel %vm560, %v547, 0
        %613 = vmatprep.subr.bf16.mxu0 0
        %614 = vmatpush1.bf16.msra.mxu0 %v608
        %615 = vmatprep.subr.bf16.mxu0 0
        %616 = vmatpush1.bf16.msra.mxu0 0
        %617 = vmatprep.subr.bf16.mxu0 0
        %618 = vmatpush1.bf16.msra.mxu0 0
        %619 = vmatprep.subr.bf16.mxu0 0
        %620 = vmatpush1.bf16.msra.mxu0 0
        %621 = vmatprep.subr.bf16.mxu0 0
        %622 = vmatpush1.bf16.msra.mxu0 0
        %623 = vmatprep.subr.bf16.mxu0 0
        %624 = vmatpush1.bf16.msra.mxu0 0
        %625 = vmatprep.subr.bf16.mxu0 0
        %626 = vmatpush1.bf16.msra.mxu0 0
        %627 = vmatprep.subr.bf16.mxu0 0
        %628 = vmatpush1.bf16.msra.mxu0 0
        %629 = vmatprep.subr.bf16.mxu0 0
        %630 = vmatpush1.bf16.msra.mxu0 0
        %631 = vmatprep.subr.bf16.mxu0 0
        %632 = vmatpush1.bf16.msra.mxu0 0
        %633 = vmatprep.subr.bf16.mxu0 0
        %634 = vmatpush1.bf16.msra.mxu0 0
        %635 = vmatprep.subr.bf16.mxu0 0
        %636 = vmatpush1.bf16.msra.mxu0 0
        %637 = vmatprep.subr.bf16.mxu0 0
        %638 = vmatpush1.bf16.msra.mxu0 0
        %639 = vmatprep.subr.bf16.mxu0 0
        %640 = vmatpush1.bf16.msra.mxu0 0
        %641 = vmatprep.subr.bf16.mxu0 0
        %642 = vmatpush1.bf16.msra.mxu0 0
        %643 = vmatprep.subr.bf16.mxu0 0
        %644 = vmatpush1.bf16.msra.mxu0 0
        %645 = vmatprep.mubr.bf16.mxu0 0
        %646 = vmatmul.mubr.bf16.gmra.mrb[0].mxu0 %v611
        %v647 = vpop.f32.mrb[0].mxu0
        %v648 = vadd.f32 %v599, %v647
        %v649 = vpop.f32.mrb[0].mxu0
        %v650 = vpop.f32.mrb[0].mxu0
        %v651 = vpop.f32.mrb[0].mxu0
        %652 = vdwg.mxu0
        %v653 = vmul.f32 %v442, %v442
        %v654 = vmul.f32 %v546, %v546
        %v655 = vsub.f32 %v653, %v654
        %v656 = vmul.f32 %v546, %v442
        %v657 = vadd.f32 %v656, %v656
        %v658 = vpack.c.bf16 %v655, %v655
        %s659 = scalar_lea.vmem [#allocation5], 16
        %v660 = vld [vmem:[%s659] sm:$0xf]
        %v661 = vld [vmem:[%s659 + $0x4] sm:$0xf]
        %v664 = vunpack.c.l.b16 %v660
        %v665 = vunpack.c.l.b16 %v661
        %v666 = vpack.c.b16 %v665, %v664
        %v669 = vsel %vm560, %v658, 0
        %671 = vmatprep.subr.bf16.mxu0 0
        %672 = vmatpush1.bf16.msra.mxu0 %v666
        %673 = vmatprep.subr.bf16.mxu0 0
        %674 = vmatpush1.bf16.msra.mxu0 0
        %675 = vmatprep.subr.bf16.mxu0 0
        %676 = vmatpush1.bf16.msra.mxu0 0
        %677 = vmatprep.subr.bf16.mxu0 0
        %678 = vmatpush1.bf16.msra.mxu0 0
        %679 = vmatprep.subr.bf16.mxu0 0
        %680 = vmatpush1.bf16.msra.mxu0 0
        %681 = vmatprep.subr.bf16.mxu0 0
        %682 = vmatpush1.bf16.msra.mxu0 0
        %683 = vmatprep.subr.bf16.mxu0 0
        %684 = vmatpush1.bf16.msra.mxu0 0
        %685 = vmatprep.subr.bf16.mxu0 0
        %686 = vmatpush1.bf16.msra.mxu0 0
        %687 = vmatprep.subr.bf16.mxu0 0
        %688 = vmatpush1.bf16.msra.mxu0 0
        %689 = vmatprep.subr.bf16.mxu0 0
        %690 = vmatpush1.bf16.msra.mxu0 0
        %691 = vmatprep.subr.bf16.mxu0 0
        %692 = vmatpush1.bf16.msra.mxu0 0
        %693 = vmatprep.subr.bf16.mxu0 0
        %694 = vmatpush1.bf16.msra.mxu0 0
        %695 = vmatprep.subr.bf16.mxu0 0
        %696 = vmatpush1.bf16.msra.mxu0 0
        %697 = vmatprep.subr.bf16.mxu0 0
        %698 = vmatpush1.bf16.msra.mxu0 0
        %699 = vmatprep.subr.bf16.mxu0 0
        %700 = vmatpush1.bf16.msra.mxu0 0
        %701 = vmatprep.subr.bf16.mxu0 0
        %702 = vmatpush1.bf16.msra.mxu0 0
        %703 = vmatprep.mubr.bf16.mxu0 0
        %704 = vmatmul.mubr.bf16.gmra.mrb[0].mxu0 %v669
        %v705 = vpop.f32.mrb[0].mxu0
        %v706 = vadd.f32 0.0, %v705
        %v707 = vpop.f32.mrb[0].mxu0
        %v708 = vpop.f32.mrb[0].mxu0
        %v709 = vpop.f32.mrb[0].mxu0
        %710 = vdwg.mxu0
        %v711 = vadd.f32 %v648, %v706
        %v712 = vpack.c.bf16 %v657, %v657
        %s713 = scalar_lea.vmem [#allocation5], 24
        %v714 = vld [vmem:[%s713] sm:$0xf]
        %v715 = vld [vmem:[%s713 + $0x4] sm:$0xf]
        %v718 = vunpack.c.l.b16 %v714
        %v719 = vunpack.c.l.b16 %v715
        %v720 = vpack.c.b16 %v719, %v718
        %v723 = vsel %vm560, %v712, 0
        %725 = vmatprep.subr.bf16.mxu0 0
        %726 = vmatpush1.bf16.msra.mxu0 %v720
        %727 = vmatprep.subr.bf16.mxu0 0
        %728 = vmatpush1.bf16.msra.mxu0 0
        %729 = vmatprep.subr.bf16.mxu0 0
        %730 = vmatpush1.bf16.msra.mxu0 0
        %731 = vmatprep.subr.bf16.mxu0 0
        %732 = vmatpush1.bf16.msra.mxu0 0
        %733 = vmatprep.subr.bf16.mxu0 0
        %734 = vmatpush1.bf16.msra.mxu0 0
        %735 = vmatprep.subr.bf16.mxu0 0
        %736 = vmatpush1.bf16.msra.mxu0 0
        %737 = vmatprep.subr.bf16.mxu0 0
        %738 = vmatpush1.bf16.msra.mxu0 0
        %739 = vmatprep.subr.bf16.mxu0 0
        %740 = vmatpush1.bf16.msra.mxu0 0
        %741 = vmatprep.subr.bf16.mxu0 0
        %742 = vmatpush1.bf16.msra.mxu0 0
        %743 = vmatprep.subr.bf16.mxu0 0
        %744 = vmatpush1.bf16.msra.mxu0 0
        %745 = vmatprep.subr.bf16.mxu0 0
        %746 = vmatpush1.bf16.msra.mxu0 0
        %747 = vmatprep.subr.bf16.mxu0 0
        %748 = vmatpush1.bf16.msra.mxu0 0
        %749 = vmatprep.subr.bf16.mxu0 0
        %750 = vmatpush1.bf16.msra.mxu0 0
        %751 = vmatprep.subr.bf16.mxu0 0
        %752 = vmatpush1.bf16.msra.mxu0 0
        %753 = vmatprep.subr.bf16.mxu0 0
        %754 = vmatpush1.bf16.msra.mxu0 0
        %755 = vmatprep.subr.bf16.mxu0 0
        %756 = vmatpush1.bf16.msra.mxu0 0
        %757 = vmatprep.mubr.bf16.mxu0 0
        %758 = vmatmul.mubr.bf16.gmra.mrb[0].mxu0 %v723
        %v759 = vpop.f32.mrb[0].mxu0
        %v760 = vadd.f32 0.0, %v759
        %v761 = vpop.f32.mrb[0].mxu0
        %v762 = vpop.f32.mrb[0].mxu0
        %v763 = vpop.f32.mrb[0].mxu0
        %764 = vdwg.mxu0
        %v765 = vadd.f32 %v711, %v760
        %v766 = vmul.f32 %v655, %v442
        %v767 = vmul.f32 %v657, %v546
        %v768 = vsub.f32 %v766, %v767
        %v769 = vmul.f32 %v657, %v442
        %v770 = vmul.f32 %v655, %v546
        %v771 = vadd.f32 %v769, %v770
        %v772 = vpack.c.bf16 %v768, %v768
        %s773 = scalar_lea.vmem [#allocation5], 32
        %v774 = vld [vmem:[%s773] sm:$0xf]
        %v775 = vld [vmem:[%s773 + $0x4] sm:$0xf]
        %v778 = vunpack.c.l.b16 %v774
        %v779 = vunpack.c.l.b16 %v775
        %v780 = vpack.c.b16 %v779, %v778
        %v783 = vsel %vm560, %v772, 0
        %785 = vmatprep.subr.bf16.mxu0 0
        %786 = vmatpush1.bf16.msra.mxu0 %v780
        %787 = vmatprep.subr.bf16.mxu0 0
        %788 = vmatpush1.bf16.msra.mxu0 0
        %789 = vmatprep.subr.bf16.mxu0 0
        %790 = vmatpush1.bf16.msra.mxu0 0
        %791 = vmatprep.subr.bf16.mxu0 0
        %792 = vmatpush1.bf16.msra.mxu0 0
        %793 = vmatprep.subr.bf16.mxu0 0
        %794 = vmatpush1.bf16.msra.mxu0 0
        %795 = vmatprep.subr.bf16.mxu0 0
        %796 = vmatpush1.bf16.msra.mxu0 0
        %797 = vmatprep.subr.bf16.mxu0 0
        %798 = vmatpush1.bf16.msra.mxu0 0
        %799 = vmatprep.subr.bf16.mxu0 0
        %800 = vmatpush1.bf16.msra.mxu0 0
        %801 = vmatprep.subr.bf16.mxu0 0
        %802 = vmatpush1.bf16.msra.mxu0 0
        %803 = vmatprep.subr.bf16.mxu0 0
        %804 = vmatpush1.bf16.msra.mxu0 0
        %805 = vmatprep.subr.bf16.mxu0 0
        %806 = vmatpush1.bf16.msra.mxu0 0
        %807 = vmatprep.subr.bf16.mxu0 0
        %808 = vmatpush1.bf16.msra.mxu0 0
        %809 = vmatprep.subr.bf16.mxu0 0
        %810 = vmatpush1.bf16.msra.mxu0 0
        %811 = vmatprep.subr.bf16.mxu0 0
        %812 = vmatpush1.bf16.msra.mxu0 0
        %813 = vmatprep.subr.bf16.mxu0 0
        %814 = vmatpush1.bf16.msra.mxu0 0
        %815 = vmatprep.subr.bf16.mxu0 0
        %816 = vmatpush1.bf16.msra.mxu0 0
        %817 = vmatprep.mubr.bf16.mxu0 0
        %818 = vmatmul.mubr.bf16.gmra.mrb[0].mxu0 %v783
        %v819 = vpop.f32.mrb[0].mxu0
        %v820 = vadd.f32 0.0, %v819
        %v821 = vpop.f32.mrb[0].mxu0
        %v822 = vpop.f32.mrb[0].mxu0
        %v823 = vpop.f32.mrb[0].mxu0
        %824 = vdwg.mxu0
        %v825 = vadd.f32 %v765, %v820
        %v826 = vpack.c.bf16 %v771, %v771
        %s827 = scalar_lea.vmem [#allocation5], 40
        %v828 = vld [vmem:[%s827] sm:$0xf]
        %v829 = vld [vmem:[%s827 + $0x4] sm:$0xf]
        %v832 = vunpack.c.l.b16 %v828
        %v833 = vunpack.c.l.b16 %v829
        %v834 = vpack.c.b16 %v833, %v832
        %v837 = vsel %vm560, %v826, 0
        %839 = vmatprep.subr.bf16.mxu0 0
        %840 = vmatpush1.bf16.msra.mxu0 %v834
        %841 = vmatprep.subr.bf16.mxu0 0
        %842 = vmatpush1.bf16.msra.mxu0 0
        %843 = vmatprep.subr.bf16.mxu0 0
        %844 = vmatpush1.bf16.msra.mxu0 0
        %845 = vmatprep.subr.bf16.mxu0 0
        %846 = vmatpush1.bf16.msra.mxu0 0
        %847 = vmatprep.subr.bf16.mxu0 0
        %848 = vmatpush1.bf16.msra.mxu0 0
        %849 = vmatprep.subr.bf16.mxu0 0
        %850 = vmatpush1.bf16.msra.mxu0 0
        %851 = vmatprep.subr.bf16.mxu0 0
        %852 = vmatpush1.bf16.msra.mxu0 0
        %853 = vmatprep.subr.bf16.mxu0 0
        %854 = vmatpush1.bf16.msra.mxu0 0
        %855 = vmatprep.subr.bf16.mxu0 0
        %856 = vmatpush1.bf16.msra.mxu0 0
        %857 = vmatprep.subr.bf16.mxu0 0
        %858 = vmatpush1.bf16.msra.mxu0 0
        %859 = vmatprep.subr.bf16.mxu0 0
        %860 = vmatpush1.bf16.msra.mxu0 0
        %861 = vmatprep.subr.bf16.mxu0 0
        %862 = vmatpush1.bf16.msra.mxu0 0
        %863 = vmatprep.subr.bf16.mxu0 0
        %864 = vmatpush1.bf16.msra.mxu0 0
        %865 = vmatprep.subr.bf16.mxu0 0
        %866 = vmatpush1.bf16.msra.mxu0 0
        %867 = vmatprep.subr.bf16.mxu0 0
        %868 = vmatpush1.bf16.msra.mxu0 0
        %869 = vmatprep.subr.bf16.mxu0 0
        %870 = vmatpush1.bf16.msra.mxu0 0
        %871 = vmatprep.mubr.bf16.mxu0 0
        %872 = vmatmul.mubr.bf16.gmra.mrb[0].mxu0 %v837
        %v873 = vpop.f32.mrb[0].mxu0
        %v874 = vadd.f32 0.0, %v873
        %v875 = vpop.f32.mrb[0].mxu0
        %v876 = vpop.f32.mrb[0].mxu0
        %v877 = vpop.f32.mrb[0].mxu0
        %878 = vdwg.mxu0
        %v879 = vadd.f32 %v825, %v874
        %v880 = vmul.f32 %v768, %v442
        %v881 = vmul.f32 %v771, %v546
        %v882 = vsub.f32 %v880, %v881
        %v883 = vmul.f32 %v771, %v442
        %v884 = vmul.f32 %v768, %v546
        %v885 = vadd.f32 %v883, %v884
        %v886 = vpack.c.bf16 %v882, %v882
        %s887 = scalar_lea.vmem [#allocation5], 48
        %v888 = vld [vmem:[%s887] sm:$0xf]
        %v889 = vld [vmem:[%s887 + $0x4] sm:$0xf]
        %v892 = vunpack.c.l.b16 %v888
        %v893 = vunpack.c.l.b16 %v889
        %v894 = vpack.c.b16 %v893, %v892
        %v897 = vsel %vm560, %v886, 0
        %899 = vmatprep.subr.bf16.mxu0 0
        %900 = vmatpush1.bf16.msra.mxu0 %v894
        %901 = vmatprep.subr.bf16.mxu0 0
        %902 = vmatpush1.bf16.msra.mxu0 0
        %903 = vmatprep.subr.bf16.mxu0 0
        %904 = vmatpush1.bf16.msra.mxu0 0
        %905 = vmatprep.subr.bf16.mxu0 0
        %906 = vmatpush1.bf16.msra.mxu0 0
        %907 = vmatprep.subr.bf16.mxu0 0
        %908 = vmatpush1.bf16.msra.mxu0 0
        %909 = vmatprep.subr.bf16.mxu0 0
        %910 = vmatpush1.bf16.msra.mxu0 0
        %911 = vmatprep.subr.bf16.mxu0 0
        %912 = vmatpush1.bf16.msra.mxu0 0
        %913 = vmatprep.subr.bf16.mxu0 0
        %914 = vmatpush1.bf16.msra.mxu0 0
        %915 = vmatprep.subr.bf16.mxu0 0
        %916 = vmatpush1.bf16.msra.mxu0 0
        %917 = vmatprep.subr.bf16.mxu0 0
        %918 = vmatpush1.bf16.msra.mxu0 0
        %919 = vmatprep.subr.bf16.mxu0 0
        %920 = vmatpush1.bf16.msra.mxu0 0
        %921 = vmatprep.subr.bf16.mxu0 0
        %922 = vmatpush1.bf16.msra.mxu0 0
        %923 = vmatprep.subr.bf16.mxu0 0
        %924 = vmatpush1.bf16.msra.mxu0 0
        %925 = vmatprep.subr.bf16.mxu0 0
        %926 = vmatpush1.bf16.msra.mxu0 0
        %927 = vmatprep.subr.bf16.mxu0 0
        %928 = vmatpush1.bf16.msra.mxu0 0
        %929 = vmatprep.subr.bf16.mxu0 0
        %930 = vmatpush1.bf16.msra.mxu0 0
        %931 = vmatprep.mubr.bf16.mxu0 0
        %932 = vmatmul.mubr.bf16.gmra.mrb[0].mxu0 %v897
        %v933 = vpop.f32.mrb[0].mxu0
        %v934 = vadd.f32 0.0, %v933
        %v935 = vpop.f32.mrb[0].mxu0
        %v936 = vpop.f32.mrb[0].mxu0
        %v937 = vpop.f32.mrb[0].mxu0
        %938 = vdwg.mxu0
        %v939 = vadd.f32 %v879, %v934
        %v940 = vpack.c.bf16 %v885, %v885
        %s941 = scalar_lea.vmem [#allocation5], 56
        %v942 = vld [vmem:[%s941] sm:$0xf]
        %v943 = vld [vmem:[%s941 + $0x4] sm:$0xf]
        %v946 = vunpack.c.l.b16 %v942
        %v947 = vunpack.c.l.b16 %v943
        %v948 = vpack.c.b16 %v947, %v946
        %v951 = vsel %vm560, %v940, 0
        %953 = vmatprep.subr.bf16.mxu0 0
        %954 = vmatpush1.bf16.msra.mxu0 %v948
        %955 = vmatprep.subr.bf16.mxu0 0
        %956 = vmatpush1.bf16.msra.mxu0 0
        %957 = vmatprep.subr.bf16.mxu0 0
        %958 = vmatpush1.bf16.msra.mxu0 0
        %959 = vmatprep.subr.bf16.mxu0 0
        %960 = vmatpush1.bf16.msra.mxu0 0
        %961 = vmatprep.subr.bf16.mxu0 0
        %962 = vmatpush1.bf16.msra.mxu0 0
        %963 = vmatprep.subr.bf16.mxu0 0
        %964 = vmatpush1.bf16.msra.mxu0 0
        %965 = vmatprep.subr.bf16.mxu0 0
        %966 = vmatpush1.bf16.msra.mxu0 0
        %967 = vmatprep.subr.bf16.mxu0 0
        %968 = vmatpush1.bf16.msra.mxu0 0
        %969 = vmatprep.subr.bf16.mxu0 0
        %970 = vmatpush1.bf16.msra.mxu0 0
        %971 = vmatprep.subr.bf16.mxu0 0
        %972 = vmatpush1.bf16.msra.mxu0 0
        %973 = vmatprep.subr.bf16.mxu0 0
        %974 = vmatpush1.bf16.msra.mxu0 0
        %975 = vmatprep.subr.bf16.mxu0 0
        %976 = vmatpush1.bf16.msra.mxu0 0
        %977 = vmatprep.subr.bf16.mxu0 0
        %978 = vmatpush1.bf16.msra.mxu0 0
        %979 = vmatprep.subr.bf16.mxu0 0
        %980 = vmatpush1.bf16.msra.mxu0 0
        %981 = vmatprep.subr.bf16.mxu0 0
        %982 = vmatpush1.bf16.msra.mxu0 0
        %983 = vmatprep.subr.bf16.mxu0 0
        %984 = vmatpush1.bf16.msra.mxu0 0
        %985 = vmatprep.mubr.bf16.mxu0 0
        %986 = vmatmul.mubr.bf16.gmra.mrb[0].mxu0 %v951
        %v987 = vpop.f32.mrb[0].mxu0
        %v988 = vadd.f32 0.0, %v987
        %v989 = vpop.f32.mrb[0].mxu0
        %v990 = vpop.f32.mrb[0].mxu0
        %v991 = vpop.f32.mrb[0].mxu0
        %992 = vdwg.mxu0
        %v993 = vadd.f32 %v939, %v988
        %v994 = vmul.f32 %v882, %v442
        %v995 = vmul.f32 %v885, %v546
        %v996 = vsub.f32 %v994, %v995
        %v997 = vmul.f32 %v885, %v442
        %v998 = vmul.f32 %v882, %v546
        %v999 = vadd.f32 %v997, %v998
        %v1000 = vpack.c.bf16 %v996, %v996
        %s1001 = scalar_lea.vmem [#allocation5], 64
        %v1002 = vld [vmem:[%s1001] sm:$0xf]
        %v1003 = vld [vmem:[%s1001 + $0x4] sm:$0xf]
        %v1006 = vunpack.c.l.b16 %v1002
        %v1007 = vunpack.c.l.b16 %v1003
        %v1008 = vpack.c.b16 %v1007, %v1006
        %v1011 = vsel %vm560, %v1000, 0
        %1013 = vmatprep.subr.bf16.mxu0 0
        %1014 = vmatpush1.bf16.msra.mxu0 %v1008
        %1015 = vmatprep.subr.bf16.mxu0 0
        %1016 = vmatpush1.bf16.msra.mxu0 0
        %1017 = vmatprep.subr.bf16.mxu0 0
        %1018 = vmatpush1.bf16.msra.mxu0 0
        %1019 = vmatprep.subr.bf16.mxu0 0
        %1020 = vmatpush1.bf16.msra.mxu0 0
        %1021 = vmatprep.subr.bf16.mxu0 0
        %1022 = vmatpush1.bf16.msra.mxu0 0
        %1023 = vmatprep.subr.bf16.mxu0 0
        %1024 = vmatpush1.bf16.msra.mxu0 0
        %1025 = vmatprep.subr.bf16.mxu0 0
        %1026 = vmatpush1.bf16.msra.mxu0 0
        %1027 = vmatprep.subr.bf16.mxu0 0
        %1028 = vmatpush1.bf16.msra.mxu0 0
        %1029 = vmatprep.subr.bf16.mxu0 0
        %1030 = vmatpush1.bf16.msra.mxu0 0
        %1031 = vmatprep.subr.bf16.mxu0 0
        %1032 = vmatpush1.bf16.msra.mxu0 0
        %1033 = vmatprep.subr.bf16.mxu0 0
        %1034 = vmatpush1.bf16.msra.mxu0 0
        %1035 = vmatprep.subr.bf16.mxu0 0
        %1036 = vmatpush1.bf16.msra.mxu0 0
        %1037 = vmatprep.subr.bf16.mxu0 0
        %1038 = vmatpush1.bf16.msra.mxu0 0
        %1039 = vmatprep.subr.bf16.mxu0 0
        %1040 = vmatpush1.bf16.msra.mxu0 0
        %1041 = vmatprep.subr.bf16.mxu0 0
        %1042 = vmatpush1.bf16.msra.mxu0 0
        %1043 = vmatprep.subr.bf16.mxu0 0
        %1044 = vmatpush1.bf16.msra.mxu0 0
        %1045 = vmatprep.mubr.bf16.mxu0 0
        %1046 = vmatmul.mubr.bf16.gmra.mrb[0].mxu0 %v1011
        %v1047 = vpop.f32.mrb[0].mxu0
        %v1048 = vadd.f32 0.0, %v1047
        %v1049 = vpop.f32.mrb[0].mxu0
        %v1050 = vpop.f32.mrb[0].mxu0
        %v1051 = vpop.f32.mrb[0].mxu0
        %1052 = vdwg.mxu0
        %v1053 = vadd.f32 %v993, %v1048
        %v1054 = vpack.c.bf16 %v999, %v999
        %s1055 = scalar_lea.vmem [#allocation5], 72
        %v1056 = vld [vmem:[%s1055] sm:$0xf]
        %v1057 = vld [vmem:[%s1055 + $0x4] sm:$0xf]
        %v1060 = vunpack.c.l.b16 %v1056
        %v1061 = vunpack.c.l.b16 %v1057
        %v1062 = vpack.c.b16 %v1061, %v1060
        %v1065 = vsel %vm560, %v1054, 0
        %1067 = vmatprep.subr.bf16.mxu0 0
        %1068 = vmatpush1.bf16.msra.mxu0 %v1062
        %1069 = vmatprep.subr.bf16.mxu0 0
        %1070 = vmatpush1.bf16.msra.mxu0 0
        %1071 = vmatprep.subr.bf16.mxu0 0
        %1072 = vmatpush1.bf16.msra.mxu0 0
        %1073 = vmatprep.subr.bf16.mxu0 0
        %1074 = vmatpush1.bf16.msra.mxu0 0
        %1075 = vmatprep.subr.bf16.mxu0 0
        %1076 = vmatpush1.bf16.msra.mxu0 0
        %1077 = vmatprep.subr.bf16.mxu0 0
        %1078 = vmatpush1.bf16.msra.mxu0 0
        %1079 = vmatprep.subr.bf16.mxu0 0
        %1080 = vmatpush1.bf16.msra.mxu0 0
        %1081 = vmatprep.subr.bf16.mxu0 0
        %1082 = vmatpush1.bf16.msra.mxu0 0
        %1083 = vmatprep.subr.bf16.mxu0 0
        %1084 = vmatpush1.bf16.msra.mxu0 0
        %1085 = vmatprep.subr.bf16.mxu0 0
        %1086 = vmatpush1.bf16.msra.mxu0 0
        %1087 = vmatprep.subr.bf16.mxu0 0
        %1088 = vmatpush1.bf16.msra.mxu0 0
        %1089 = vmatprep.subr.bf16.mxu0 0
        %1090 = vmatpush1.bf16.msra.mxu0 0
        %1091 = vmatprep.subr.bf16.mxu0 0
        %1092 = vmatpush1.bf16.msra.mxu0 0
        %1093 = vmatprep.subr.bf16.mxu0 0
        %1094 = vmatpush1.bf16.msra.mxu0 0
        %1095 = vmatprep.subr.bf16.mxu0 0
        %1096 = vmatpush1.bf16.msra.mxu0 0
        %1097 = vmatprep.subr.bf16.mxu0 0
        %1098 = vmatpush1.bf16.msra.mxu0 0
        %1099 = vmatprep.mubr.bf16.mxu0 0
        %1100 = vmatmul.mubr.bf16.gmra.mrb[0].mxu0 %v1065
        %v1101 = vpop.f32.mrb[0].mxu0
        %v1102 = vadd.f32 0.0, %v1101
        %v1103 = vpop.f32.mrb[0].mxu0
        %v1104 = vpop.f32.mrb[0].mxu0
        %v1105 = vpop.f32.mrb[0].mxu0
        %1106 = vdwg.mxu0
        %v1107 = vadd.f32 %v1053, %v1102
        %v1108 = vld [vmem:[%s2] sm:$0x1]
        %v1110 = vlaneseq
        %v1111 = vshrl.u32 %v1110, 7
        %v1112 = vsub.s32 0, %v1111
        %v1113 = vrot.slane %v1108, %v1112
        %v1115 = vadd.f32 %v1107, %v1113
        %v1116 = vtanh.pop %v1115
        %v1117 = vand.u32 2147483647, %v1116
        %vm1118 = vcmp.le.f32.partialorder %v1117, 0.7853982
        %vm1119 = vcmp.lt.s32.totalorder %v1116, 0
        %v1120 = vand.u32 %v1116, 2139095040
        %v1121 = vshrl.u32 %v1120, 23
        %v1122 = vsub.s32 %v1121, 127
        %v1123 = vand.u32 2147483647, %v1116
        %v1124 = vand.u32 %v1123, 8388607
        %v1125 = vor.u32 %v1124, 8388608
        %v1126 = vsub.s32 0, %v1125
        %v1127 = vadd.s32 %v1122, 1
        %vm1128 = vcmp.gt.s32.totalorder %v1127, 0
        %v1129 = vsel %vm1128, %v1127, 0
        %v1130 = vshrl.u32 %v1129, 5
        %v1131 = vand.u32 %v1129, 31
        %v1132 = vsub.s32 32, %v1131
        %v1133 = vshrl.u32 683565275, %v1132
        %v1134 = vshll.u32 683565275, %v1131
        %v1135 = vshrl.u32 2475754826, %v1132
        %v1136 = vor.u32 %v1134, %v1135
        %v1137 = vshll.u32 2475754826, %v1131
        %v1138 = vshrl.u32 2131351028, %v1132
        %v1139 = vor.u32 %v1137, %v1138
        %v1140 = vshll.u32 2131351028, %v1131
        %v1141 = vshrl.u32 2102212464, %v1132
        %v1142 = vor.u32 %v1140, %v1141
        %v1143 = vshll.u32 2102212464, %v1131
        %v1144 = vshrl.u32 920167782, %v1132
        %v1145 = vor.u32 %v1143, %v1144
        %v1146 = vshll.u32 920167782, %v1131
        %v1147 = vshrl.u32 1326507024, %v1132
        %v1148 = vor.u32 %v1146, %v1147
        %vm1149 = vcmp.lt.s32.totalorder %v1130, 1
        %vm1150 = vcmp.lt.s32.totalorder %v1130, 2
        %vm1151 = vcmp.lt.s32.totalorder %v1130, 3
        %vm1152 = vcmp.lt.s32.totalorder %v1130, 4
        %v1153 = vsel %vm1149, %v1133, %v1136
        %v1154 = vsel %vm1152, %v1142, 2102212464
        %v1155 = vsel %vm1151, %v1139, %v1154
        %v1156 = vsel %vm1150, %v1153, %v1155
        %v1157 = vsel %vm1149, %v1136, %v1139
        %v1158 = vsel %vm1152, %v1145, 920167782
        %v1159 = vsel %vm1151, %v1142, %v1158
        %v1160 = vsel %vm1150, %v1157, %v1159
        %v1161 = vsel %vm1149, %v1139, %v1142
        %v1162 = vsel %vm1152, %v1148, 1326507024
        %v1163 = vsel %vm1151, %v1145, %v1162
        %v1164 = vsel %vm1150, %v1161, %v1163
        %v1165 = vshll.u32 %v1125, 8
        %v1166 = vmul.u32.u64.compose %v1165, %v1164
        %v1167 = vextract.low.u32 %v1166
        %v1168 = vextract.high.u32 %v1166
        %v1169 = vmul.u32.u64.compose %v1165, %v1160
        %v1170 = vextract.low.u32 %v1169
        %v1171 = vextract.high.u32 %v1169
        %v1172 = vmul.u32 %v1165, %v1156
        %v1173 = vadd.s32 %v1168, %v1170
        %vm1174 = vc.u32 %v1168, %v1170
        %v1175 = vadd.s32 %v1171, 1
        %v1176 = vsel %vm1174, %v1175, %v1171
        %v1177 = vadd.s32 %v1172, %v1176
        %v1178 = vadd.s32 %v1177, 536870912
        %v1179 = vshrl.u32 %v1178, 30
        %v1180 = vshll.u32 %v1179, 30
        %v1181 = vsub.s32 %v1177, %v1180
        %vm1182 = vcmp.lt.s32.totalorder %v1181, 0
        %v1183 = vsub.s32 0, %v1181
        %v1184 = vsel %vm1182, %v1183, %v1181
        %v1185 = vclz %v1184
        %v1186 = vsub.s32 %v1185, 2
        %vm1187 = vcmp.gt.s32.totalorder 0, %v1186
        %v1188 = vsel %vm1187, 0, %v1186
        %v1189 = vsub.s32 32, %v1188
        %v1190 = vshll.u32 %v1181, %v1188
        %v1191 = vshrl.u32 %v1173, %v1189
        %v1192 = vor.u32 %v1190, %v1191
        %v1193 = vsub.s32 4294967266, %v1188
        %v1194 = vadd.s32 %v1193, 127
        %v1195 = vshll.u32 %v1194, 23
        %v1196 = vor.u32 4788187, %v1195
        %v1197 = vand.u32 2147483647, %v1196
        %v1199 = vcvt.s32.f32 %v1192
        %v1200 = vmul.f32 %v1199, %v1197
        %v1201 = vxor.u32 %v1200, 2147483648
        %v1202 = vsel %vm1119, %v1201, %v1200
        %v1203 = vsub.s32 4, %v1179
        %v1204 = vsel %vm1119, %v1203, %v1179
        %v1205 = vsel %vm1118, %v1116, %v1202
        %v1206 = vsel %vm1118, 0, %v1204
        %v1207 = vcosq.f32.pop %v1205
        %v1208 = vsinq.f32.pop %v1205
        %vm1209 = vweird.f32 %v1116
        %v1210 = vand.u32 %v1206, 3
        %vm1211 = vcmp.lt.s32.totalorder %v1210, 2
        %vm1212 = vcmp.eq.s32.totalorder %v1210, 0
        %v1213 = vxor.u32 %v1208, 2147483648
        %v1214 = vsel %vm1212, %v1207, %v1213
        %vm1215 = vcmp.eq.s32.totalorder %v1210, 2
        %v1216 = vxor.u32 %v1207, 2147483648
        %v1217 = vsel %vm1215, %v1216, %v1208
        %v1218 = vsel %vm1211, %v1214, %v1217
        %v1219 = vsel %vm1209, nan, %v1218
        %v1220 = vand.u32 2147483647, %v1116
        %vm1221 = vcmp.le.f32.partialorder %v1220, 0.7853982
        %vm1222 = vcmp.lt.s32.totalorder %v1116, 0
        %v1223 = vand.u32 %v1116, 2139095040
        %v1224 = vshrl.u32 %v1223, 23
        %v1225 = vsub.s32 %v1224, 127
        %v1226 = vand.u32 2147483647, %v1116
        %v1227 = vand.u32 %v1226, 8388607
        %v1228 = vor.u32 %v1227, 8388608
        %v1229 = vsub.s32 0, %v1228
        %v1230 = vadd.s32 %v1225, 1
        %vm1231 = vcmp.gt.s32.totalorder %v1230, 0
        %v1232 = vsel %vm1231, %v1230, 0
        %v1233 = vshrl.u32 %v1232, 5
        %v1234 = vand.u32 %v1232, 31
        %v1235 = vsub.s32 32, %v1234
        %v1236 = vshrl.u32 683565275, %v1235
        %v1237 = vshll.u32 683565275, %v1234
        %v1238 = vshrl.u32 2475754826, %v1235
        %v1239 = vor.u32 %v1237, %v1238
        %v1240 = vshll.u32 2475754826, %v1234
        %v1241 = vshrl.u32 2131351028, %v1235
        %v1242 = vor.u32 %v1240, %v1241
        %v1243 = vshll.u32 2131351028, %v1234
        %v1244 = vshrl.u32 2102212464, %v1235
        %v1245 = vor.u32 %v1243, %v1244
        %v1246 = vshll.u32 2102212464, %v1234
        %v1247 = vshrl.u32 920167782, %v1235
        %v1248 = vor.u32 %v1246, %v1247
        %v1249 = vshll.u32 920167782, %v1234
        %v1250 = vshrl.u32 1326507024, %v1235
        %v1251 = vor.u32 %v1249, %v1250
        %vm1252 = vcmp.lt.s32.totalorder %v1233, 1
        %vm1253 = vcmp.lt.s32.totalorder %v1233, 2
        %vm1254 = vcmp.lt.s32.totalorder %v1233, 3
        %vm1255 = vcmp.lt.s32.totalorder %v1233, 4
        %v1256 = vsel %vm1252, %v1236, %v1239
        %v1257 = vsel %vm1255, %v1245, 2102212464
        %v1258 = vsel %vm1254, %v1242, %v1257
        %v1259 = vsel %vm1253, %v1256, %v1258
        %v1260 = vsel %vm1252, %v1239, %v1242
        %v1261 = vsel %vm1255, %v1248, 920167782
        %v1262 = vsel %vm1254, %v1245, %v1261
        %v1263 = vsel %vm1253, %v1260, %v1262
        %v1264 = vsel %vm1252, %v1242, %v1245
        %v1265 = vsel %vm1255, %v1251, 1326507024
        %v1266 = vsel %vm1254, %v1248, %v1265
        %v1267 = vsel %vm1253, %v1264, %v1266
        %v1268 = vshll.u32 %v1228, 8
        %v1269 = vmul.u32.u64.compose %v1268, %v1267
        %v1270 = vextract.low.u32 %v1269
        %v1271 = vextract.high.u32 %v1269
        %v1272 = vmul.u32.u64.compose %v1268, %v1263
        %v1273 = vextract.low.u32 %v1272
        %v1274 = vextract.high.u32 %v1272
        %v1275 = vmul.u32 %v1268, %v1259
        %v1276 = vadd.s32 %v1271, %v1273
        %vm1277 = vc.u32 %v1271, %v1273
        %v1278 = vadd.s32 %v1274, 1
        %v1279 = vsel %vm1277, %v1278, %v1274
        %v1280 = vadd.s32 %v1275, %v1279
        %v1281 = vadd.s32 %v1280, 536870912
        %v1282 = vshrl.u32 %v1281, 30
        %v1283 = vshll.u32 %v1282, 30
        %v1284 = vsub.s32 %v1280, %v1283
        %vm1285 = vcmp.lt.s32.totalorder %v1284, 0
        %v1286 = vsub.s32 0, %v1284
        %v1287 = vsel %vm1285, %v1286, %v1284
        %v1288 = vclz %v1287
        %v1289 = vsub.s32 %v1288, 2
        %vm1290 = vcmp.gt.s32.totalorder 0, %v1289
        %v1291 = vsel %vm1290, 0, %v1289
        %v1292 = vsub.s32 32, %v1291
        %v1293 = vshll.u32 %v1284, %v1291
        %v1294 = vshrl.u32 %v1276, %v1292
        %v1295 = vor.u32 %v1293, %v1294
        %v1296 = vsub.s32 4294967266, %v1291
        %v1297 = vadd.s32 %v1296, 127
        %v1298 = vshll.u32 %v1297, 23
        %v1299 = vor.u32 4788187, %v1298
        %v1300 = vand.u32 2147483647, %v1299
        %v1302 = vcvt.s32.f32 %v1295
        %v1303 = vmul.f32 %v1302, %v1300
        %v1304 = vxor.u32 %v1303, 2147483648
        %v1305 = vsel %vm1222, %v1304, %v1303
        %v1306 = vsub.s32 4, %v1282
        %v1307 = vsel %vm1222, %v1306, %v1282
        %v1308 = vsel %vm1221, %v1116, %v1305
        %v1309 = vsel %vm1221, 0, %v1307
        %v1310 = vcosq.f32.pop %v1308
        %v1311 = vsinq.f32.pop %v1308
        %vm1312 = vweird.f32 %v1116
        %v1313 = vadd.s32 %v1309, 3
        %v1314 = vand.u32 %v1313, 3
        %vm1315 = vcmp.lt.s32.totalorder %v1314, 2
        %vm1316 = vcmp.eq.s32.totalorder %v1314, 0
        %v1317 = vxor.u32 %v1311, 2147483648
        %v1318 = vsel %vm1316, %v1310, %v1317
        %vm1319 = vcmp.eq.s32.totalorder %v1314, 2
        %v1320 = vxor.u32 %v1310, 2147483648
        %v1321 = vsel %vm1319, %v1320, %v1311
        %v1322 = vsel %vm1315, %v1318, %v1321
        %v1323 = vsel %vm1312, nan, %v1322
        %v1324 = vpack.c.bf16 %v1219, %v1219
        %v1325 = vld [vmem:[#allocation7] sm:$0xf]
        %v1326 = vld [vmem:[#allocation7 + $0x4] sm:$0xf]
        %v1327 = vld [vmem:[#allocation7 + $0x8] sm:$0xf]
        %v1328 = vld [vmem:[#allocation7 + $0xc] sm:$0xf]
        %v1329 = vpack.c.bf16 %v1323, %v1323
        %s1330 = scalar_lea.vmem [#allocation7], 16
        %v1331 = vld [vmem:[%s1330] sm:$0xf]
        %v1332 = vld [vmem:[%s1330 + $0x4] sm:$0xf]
        %v1333 = vld [vmem:[%s1330 + $0x8] sm:$0xf]
        %v1334 = vld [vmem:[%s1330 + $0xc] sm:$0xf]
        %v1339 = vunpack.c.l.b16 %v1331
        %v1340 = vunpack.c.l.b16 %v1332
        %v1341 = vunpack.c.l.b16 %v1333
        %v1342 = vunpack.c.l.b16 %v1334
        %v1343 = vpack.c.b16 %v1340, %v1339
        %v1344 = vpack.c.b16 %v1342, %v1341
        %vm1347 = vcmask 261120
        %v1349 = vsel %vm1347, %v1329, 0
        %1351 = vmatprep.subr.bf16.mxu0 0
        %1352 = vmatpush1.bf16.msra.mxu0 %v1343
        %1353 = vmatprep.subr.bf16.mxu0 0
        %1354 = vmatpush1.bf16.msra.mxu0 %v1344
        %1355 = vmatprep.subr.bf16.mxu0 0
        %1356 = vmatpush1.bf16.msra.mxu0 0
        %1357 = vmatprep.subr.bf16.mxu0 0
        %1358 = vmatpush1.bf16.msra.mxu0 0
        %1359 = vmatprep.subr.bf16.mxu0 0
        %1360 = vmatpush1.bf16.msra.mxu0 0
        %1361 = vmatprep.subr.bf16.mxu0 0
        %1362 = vmatpush1.bf16.msra.mxu0 0
        %1363 = vmatprep.subr.bf16.mxu0 0
        %1364 = vmatpush1.bf16.msra.mxu0 0
        %1365 = vmatprep.subr.bf16.mxu0 0
        %1366 = vmatpush1.bf16.msra.mxu0 0
        %1367 = vmatprep.subr.bf16.mxu0 0
        %1368 = vmatpush1.bf16.msra.mxu0 0
        %1369 = vmatprep.subr.bf16.mxu0 0
        %1370 = vmatpush1.bf16.msra.mxu0 0
        %1371 = vmatprep.subr.bf16.mxu0 0
        %1372 = vmatpush1.bf16.msra.mxu0 0
        %1373 = vmatprep.subr.bf16.mxu0 0
        %1374 = vmatpush1.bf16.msra.mxu0 0
        %1375 = vmatprep.subr.bf16.mxu0 0
        %1376 = vmatpush1.bf16.msra.mxu0 0
        %1377 = vmatprep.subr.bf16.mxu0 0
        %1378 = vmatpush1.bf16.msra.mxu0 0
        %1379 = vmatprep.subr.bf16.mxu0 0
        %1380 = vmatpush1.bf16.msra.mxu0 0
        %1381 = vmatprep.subr.bf16.mxu0 0
        %1382 = vmatpush1.bf16.msra.mxu0 0
        %1383 = vmatprep.mubr.bf16.mxu0 0
        %1384 = vmatmul.mubr.bf16.gmra.mrb[0].mxu0 %v1349
        %v1385 = vpop.f32.mrb[0].mxu0
        %v1386 = vadd.f32 0.0, %v1385
        %v1387 = vpop.f32.mrb[0].mxu0
        %v1388 = vpop.f32.mrb[0].mxu0
        %v1389 = vpop.f32.mrb[0].mxu0
        %1390 = vdwg.mxu0
        %v1395 = vunpack.c.l.b16 %v1325
        %v1396 = vunpack.c.l.b16 %v1326
        %v1397 = vunpack.c.l.b16 %v1327
        %v1398 = vunpack.c.l.b16 %v1328
        %v1399 = vpack.c.b16 %v1396, %v1395
        %v1400 = vpack.c.b16 %v1398, %v1397
        %v1404 = vsel %vm1347, %v1324, 0
        %1406 = vmatprep.subr.bf16.mxu0 0
        %1407 = vmatpush1.bf16.msra.mxu0 %v1399
        %1408 = vmatprep.subr.bf16.mxu0 0
        %1409 = vmatpush1.bf16.msra.mxu0 %v1400
        %1410 = vmatprep.subr.bf16.mxu0 0
        %1411 = vmatpush1.bf16.msra.mxu0 0
        %1412 = vmatprep.subr.bf16.mxu0 0
        %1413 = vmatpush1.bf16.msra.mxu0 0
        %1414 = vmatprep.subr.bf16.mxu0 0
        %1415 = vmatpush1.bf16.msra.mxu0 0
        %1416 = vmatprep.subr.bf16.mxu0 0
        %1417 = vmatpush1.bf16.msra.mxu0 0
        %1418 = vmatprep.subr.bf16.mxu0 0
        %1419 = vmatpush1.bf16.msra.mxu0 0
        %1420 = vmatprep.subr.bf16.mxu0 0
        %1421 = vmatpush1.bf16.msra.mxu0 0
        %1422 = vmatprep.subr.bf16.mxu0 0
        %1423 = vmatpush1.bf16.msra.mxu0 0
        %1424 = vmatprep.subr.bf16.mxu0 0
        %1425 = vmatpush1.bf16.msra.mxu0 0
        %1426 = vmatprep.subr.bf16.mxu0 0
        %1427 = vmatpush1.bf16.msra.mxu0 0
        %1428 = vmatprep.subr.bf16.mxu0 0
        %1429 = vmatpush1.bf16.msra.mxu0 0
        %1430 = vmatprep.subr.bf16.mxu0 0
        %1431 = vmatpush1.bf16.msra.mxu0 0
        %1432 = vmatprep.subr.bf16.mxu0 0
        %1433 = vmatpush1.bf16.msra.mxu0 0
        %1434 = vmatprep.subr.bf16.mxu0 0
        %1435 = vmatpush1.bf16.msra.mxu0 0
        %1436 = vmatprep.subr.bf16.mxu0 0
        %1437 = vmatpush1.bf16.msra.mxu0 0
        %1438 = vmatprep.mubr.bf16.mxu0 0
        %1439 = vmatmul.mubr.bf16.gmra.mrb[0].mxu0 %v1404
        %v1440 = vpop.f32.mrb[0].mxu0
        %v1441 = vadd.f32 %v1386, %v1440
        %v1442 = vpop.f32.mrb[0].mxu0
        %v1443 = vpop.f32.mrb[0].mxu0
        %v1444 = vpop.f32.mrb[0].mxu0
        %1445 = vdwg.mxu0
        %v1446 = vmul.f32 %v1219, %v1219
        %v1447 = vmul.f32 %v1323, %v1323
        %v1448 = vsub.f32 %v1446, %v1447
        %v1449 = vmul.f32 %v1323, %v1219
        %v1450 = vadd.f32 %v1449, %v1449
        %v1451 = vpack.c.bf16 %v1448, %v1448
        %s1452 = scalar_lea.vmem [#allocation7], 32
        %v1453 = vld [vmem:[%s1452] sm:$0xf]
        %v1454 = vld [vmem:[%s1452 + $0x4] sm:$0xf]
        %v1455 = vld [vmem:[%s1452 + $0x8] sm:$0xf]
        %v1456 = vld [vmem:[%s1452 + $0xc] sm:$0xf]
        %v1461 = vunpack.c.l.b16 %v1453
        %v1462 = vunpack.c.l.b16 %v1454
        %v1463 = vunpack.c.l.b16 %v1455
        %v1464 = vunpack.c.l.b16 %v1456
        %v1465 = vpack.c.b16 %v1462, %v1461
        %v1466 = vpack.c.b16 %v1464, %v1463
        %v1470 = vsel %vm1347, %v1451, 0
        %1472 = vmatprep.subr.bf16.mxu0 0
        %1473 = vmatpush1.bf16.msra.mxu0 %v1465
        %1474 = vmatprep.subr.bf16.mxu0 0
        %1475 = vmatpush1.bf16.msra.mxu0 %v1466
        %1476 = vmatprep.subr.bf16.mxu0 0
        %1477 = vmatpush1.bf16.msra.mxu0 0
        %1478 = vmatprep.subr.bf16.mxu0 0
        %1479 = vmatpush1.bf16.msra.mxu0 0
        %1480 = vmatprep.subr.bf16.mxu0 0
        %1481 = vmatpush1.bf16.msra.mxu0 0
        %1482 = vmatprep.subr.bf16.mxu0 0
        %1483 = vmatpush1.bf16.msra.mxu0 0
        %1484 = vmatprep.subr.bf16.mxu0 0
        %1485 = vmatpush1.bf16.msra.mxu0 0
        %1486 = vmatprep.subr.bf16.mxu0 0
        %1487 = vmatpush1.bf16.msra.mxu0 0
        %1488 = vmatprep.subr.bf16.mxu0 0
        %1489 = vmatpush1.bf16.msra.mxu0 0
        %1490 = vmatprep.subr.bf16.mxu0 0
        %1491 = vmatpush1.bf16.msra.mxu0 0
        %1492 = vmatprep.subr.bf16.mxu0 0
        %1493 = vmatpush1.bf16.msra.mxu0 0
        %1494 = vmatprep.subr.bf16.mxu0 0
        %1495 = vmatpush1.bf16.msra.mxu0 0
        %1496 = vmatprep.subr.bf16.mxu0 0
        %1497 = vmatpush1.bf16.msra.mxu0 0
        %1498 = vmatprep.subr.bf16.mxu0 0
        %1499 = vmatpush1.bf16.msra.mxu0 0
        %1500 = vmatprep.subr.bf16.mxu0 0
        %1501 = vmatpush1.bf16.msra.mxu0 0
        %1502 = vmatprep.subr.bf16.mxu0 0
        %1503 = vmatpush1.bf16.msra.mxu0 0
        %1504 = vmatprep.mubr.bf16.mxu0 0
        %1505 = vmatmul.mubr.bf16.gmra.mrb[0].mxu0 %v1470
        %v1506 = vpop.f32.mrb[0].mxu0
        %v1507 = vadd.f32 0.0, %v1506
        %v1508 = vpop.f32.mrb[0].mxu0
        %v1509 = vpop.f32.mrb[0].mxu0
        %v1510 = vpop.f32.mrb[0].mxu0
        %1511 = vdwg.mxu0
        %v1512 = vadd.f32 %v1441, %v1507
        %v1513 = vpack.c.bf16 %v1450, %v1450
        %s1514 = scalar_lea.vmem [#allocation7], 48
        %v1515 = vld [vmem:[%s1514] sm:$0xf]
        %v1516 = vld [vmem:[%s1514 + $0x4] sm:$0xf]
        %v1517 = vld [vmem:[%s1514 + $0x8] sm:$0xf]
        %v1518 = vld [vmem:[%s1514 + $0xc] sm:$0xf]
        %v1523 = vunpack.c.l.b16 %v1515
        %v1524 = vunpack.c.l.b16 %v1516
        %v1525 = vunpack.c.l.b16 %v1517
        %v1526 = vunpack.c.l.b16 %v1518
        %v1527 = vpack.c.b16 %v1524, %v1523
        %v1528 = vpack.c.b16 %v1526, %v1525
        %v1532 = vsel %vm1347, %v1513, 0
        %1534 = vmatprep.subr.bf16.mxu0 0
        %1535 = vmatpush1.bf16.msra.mxu0 %v1527
        %1536 = vmatprep.subr.bf16.mxu0 0
        %1537 = vmatpush1.bf16.msra.mxu0 %v1528
        %1538 = vmatprep.subr.bf16.mxu0 0
        %1539 = vmatpush1.bf16.msra.mxu0 0
        %1540 = vmatprep.subr.bf16.mxu0 0
        %1541 = vmatpush1.bf16.msra.mxu0 0
        %1542 = vmatprep.subr.bf16.mxu0 0
        %1543 = vmatpush1.bf16.msra.mxu0 0
        %1544 = vmatprep.subr.bf16.mxu0 0
        %1545 = vmatpush1.bf16.msra.mxu0 0
        %1546 = vmatprep.subr.bf16.mxu0 0
        %1547 = vmatpush1.bf16.msra.mxu0 0
        %1548 = vmatprep.subr.bf16.mxu0 0
        %1549 = vmatpush1.bf16.msra.mxu0 0
        %1550 = vmatprep.subr.bf16.mxu0 0
        %1551 = vmatpush1.bf16.msra.mxu0 0
        %1552 = vmatprep.subr.bf16.mxu0 0
        %1553 = vmatpush1.bf16.msra.mxu0 0
        %1554 = vmatprep.subr.bf16.mxu0 0
        %1555 = vmatpush1.bf16.msra.mxu0 0
        %1556 = vmatprep.subr.bf16.mxu0 0
        %1557 = vmatpush1.bf16.msra.mxu0 0
        %1558 = vmatprep.subr.bf16.mxu0 0
        %1559 = vmatpush1.bf16.msra.mxu0 0
        %1560 = vmatprep.subr.bf16.mxu0 0
        %1561 = vmatpush1.bf16.msra.mxu0 0
        %1562 = vmatprep.subr.bf16.mxu0 0
        %1563 = vmatpush1.bf16.msra.mxu0 0
        %1564 = vmatprep.subr.bf16.mxu0 0
        %1565 = vmatpush1.bf16.msra.mxu0 0
        %1566 = vmatprep.mubr.bf16.mxu0 0
        %1567 = vmatmul.mubr.bf16.gmra.mrb[0].mxu0 %v1532
        %v1568 = vpop.f32.mrb[0].mxu0
        %v1569 = vadd.f32 0.0, %v1568
        %v1570 = vpop.f32.mrb[0].mxu0
        %v1571 = vpop.f32.mrb[0].mxu0
        %v1572 = vpop.f32.mrb[0].mxu0
        %1573 = vdwg.mxu0
        %v1574 = vadd.f32 %v1512, %v1569
        %v1575 = vmul.f32 %v1448, %v1219
        %v1576 = vmul.f32 %v1450, %v1323
        %v1577 = vsub.f32 %v1575, %v1576
        %v1578 = vmul.f32 %v1450, %v1219
        %v1579 = vmul.f32 %v1448, %v1323
        %v1580 = vadd.f32 %v1578, %v1579
        %v1581 = vpack.c.bf16 %v1577, %v1577
        %s1582 = scalar_lea.vmem [#allocation7], 64
        %v1583 = vld [vmem:[%s1582] sm:$0xf]
        %v1584 = vld [vmem:[%s1582 + $0x4] sm:$0xf]
        %v1585 = vld [vmem:[%s1582 + $0x8] sm:$0xf]
        %v1586 = vld [vmem:[%s1582 + $0xc] sm:$0xf]
        %v1591 = vunpack.c.l.b16 %v1583
        %v1592 = vunpack.c.l.b16 %v1584
        %v1593 = vunpack.c.l.b16 %v1585
        %v1594 = vunpack.c.l.b16 %v1586
        %v1595 = vpack.c.b16 %v1592, %v1591
        %v1596 = vpack.c.b16 %v1594, %v1593
        %v1600 = vsel %vm1347, %v1581, 0
        %1602 = vmatprep.subr.bf16.mxu0 0
        %1603 = vmatpush1.bf16.msra.mxu0 %v1595
        %1604 = vmatprep.subr.bf16.mxu0 0
        %1605 = vmatpush1.bf16.msra.mxu0 %v1596
        %1606 = vmatprep.subr.bf16.mxu0 0
        %1607 = vmatpush1.bf16.msra.mxu0 0
        %1608 = vmatprep.subr.bf16.mxu0 0
        %1609 = vmatpush1.bf16.msra.mxu0 0
        %1610 = vmatprep.subr.bf16.mxu0 0
        %1611 = vmatpush1.bf16.msra.mxu0 0
        %1612 = vmatprep.subr.bf16.mxu0 0
        %1613 = vmatpush1.bf16.msra.mxu0 0
        %1614 = vmatprep.subr.bf16.mxu0 0
        %1615 = vmatpush1.bf16.msra.mxu0 0
        %1616 = vmatprep.subr.bf16.mxu0 0
        %1617 = vmatpush1.bf16.msra.mxu0 0
        %1618 = vmatprep.subr.bf16.mxu0 0
        %1619 = vmatpush1.bf16.msra.mxu0 0
        %1620 = vmatprep.subr.bf16.mxu0 0
        %1621 = vmatpush1.bf16.msra.mxu0 0
        %1622 = vmatprep.subr.bf16.mxu0 0
        %1623 = vmatpush1.bf16.msra.mxu0 0
        %1624 = vmatprep.subr.bf16.mxu0 0
        %1625 = vmatpush1.bf16.msra.mxu0 0
        %1626 = vmatprep.subr.bf16.mxu0 0
        %1627 = vmatpush1.bf16.msra.mxu0 0
        %1628 = vmatprep.subr.bf16.mxu0 0
        %1629 = vmatpush1.bf16.msra.mxu0 0
        %1630 = vmatprep.subr.bf16.mxu0 0
        %1631 = vmatpush1.bf16.msra.mxu0 0
        %1632 = vmatprep.subr.bf16.mxu0 0
        %1633 = vmatpush1.bf16.msra.mxu0 0
        %1634 = vmatprep.mubr.bf16.mxu0 0
        %1635 = vmatmul.mubr.bf16.gmra.mrb[0].mxu0 %v1600
        %v1636 = vpop.f32.mrb[0].mxu0
        %v1637 = vadd.f32 0.0, %v1636
        %v1638 = vpop.f32.mrb[0].mxu0
        %v1639 = vpop.f32.mrb[0].mxu0
        %v1640 = vpop.f32.mrb[0].mxu0
        %1641 = vdwg.mxu0
        %v1642 = vadd.f32 %v1574, %v1637
        %v1643 = vpack.c.bf16 %v1580, %v1580
        %s1644 = scalar_lea.vmem [#allocation7], 80
        %v1645 = vld [vmem:[%s1644] sm:$0xf]
        %v1646 = vld [vmem:[%s1644 + $0x4] sm:$0xf]
        %v1647 = vld [vmem:[%s1644 + $0x8] sm:$0xf]
        %v1648 = vld [vmem:[%s1644 + $0xc] sm:$0xf]
        %v1653 = vunpack.c.l.b16 %v1645
        %v1654 = vunpack.c.l.b16 %v1646
        %v1655 = vunpack.c.l.b16 %v1647
        %v1656 = vunpack.c.l.b16 %v1648
        %v1657 = vpack.c.b16 %v1654, %v1653
        %v1658 = vpack.c.b16 %v1656, %v1655
        %v1662 = vsel %vm1347, %v1643, 0
        %1664 = vmatprep.subr.bf16.mxu0 0
        %1665 = vmatpush1.bf16.msra.mxu0 %v1657
        %1666 = vmatprep.subr.bf16.mxu0 0
        %1667 = vmatpush1.bf16.msra.mxu0 %v1658
        %1668 = vmatprep.subr.bf16.mxu0 0
        %1669 = vmatpush1.bf16.msra.mxu0 0
        %1670 = vmatprep.subr.bf16.mxu0 0
        %1671 = vmatpush1.bf16.msra.mxu0 0
        %1672 = vmatprep.subr.bf16.mxu0 0
        %1673 = vmatpush1.bf16.msra.mxu0 0
        %1674 = vmatprep.subr.bf16.mxu0 0
        %1675 = vmatpush1.bf16.msra.mxu0 0
        %1676 = vmatprep.subr.bf16.mxu0 0
        %1677 = vmatpush1.bf16.msra.mxu0 0
        %1678 = vmatprep.subr.bf16.mxu0 0
        %1679 = vmatpush1.bf16.msra.mxu0 0
        %1680 = vmatprep.subr.bf16.mxu0 0
        %1681 = vmatpush1.bf16.msra.mxu0 0
        %1682 = vmatprep.subr.bf16.mxu0 0
        %1683 = vmatpush1.bf16.msra.mxu0 0
        %1684 = vmatprep.subr.bf16.mxu0 0
        %1685 = vmatpush1.bf16.msra.mxu0 0
        %1686 = vmatprep.subr.bf16.mxu0 0
        %1687 = vmatpush1.bf16.msra.mxu0 0
        %1688 = vmatprep.subr.bf16.mxu0 0
        %1689 = vmatpush1.bf16.msra.mxu0 0
        %1690 = vmatprep.subr.bf16.mxu0 0
        %1691 = vmatpush1.bf16.msra.mxu0 0
        %1692 = vmatprep.subr.bf16.mxu0 0
        %1693 = vmatpush1.bf16.msra.mxu0 0
        %1694 = vmatprep.subr.bf16.mxu0 0
        %1695 = vmatpush1.bf16.msra.mxu0 0
        %1696 = vmatprep.mubr.bf16.mxu0 0
        %1697 = vmatmul.mubr.bf16.gmra.mrb[0].mxu0 %v1662
        %v1698 = vpop.f32.mrb[0].mxu0
        %v1699 = vadd.f32 0.0, %v1698
        %v1700 = vpop.f32.mrb[0].mxu0
        %v1701 = vpop.f32.mrb[0].mxu0
        %v1702 = vpop.f32.mrb[0].mxu0
        %1703 = vdwg.mxu0
        %v1704 = vadd.f32 %v1642, %v1699
        %v1705 = vmul.f32 %v1577, %v1219
        %v1706 = vmul.f32 %v1580, %v1323
        %v1707 = vsub.f32 %v1705, %v1706
        %v1708 = vmul.f32 %v1580, %v1219
        %v1709 = vmul.f32 %v1577, %v1323
        %v1710 = vadd.f32 %v1708, %v1709
        %v1711 = vpack.c.bf16 %v1707, %v1707
        %s1712 = scalar_lea.vmem [#allocation7], 96
        %v1713 = vld [vmem:[%s1712] sm:$0xf]
        %v1714 = vld [vmem:[%s1712 + $0x4] sm:$0xf]
        %v1715 = vld [vmem:[%s1712 + $0x8] sm:$0xf]
        %v1716 = vld [vmem:[%s1712 + $0xc] sm:$0xf]
        %v1721 = vunpack.c.l.b16 %v1713
        %v1722 = vunpack.c.l.b16 %v1714
        %v1723 = vunpack.c.l.b16 %v1715
        %v1724 = vunpack.c.l.b16 %v1716
        %v1725 = vpack.c.b16 %v1722, %v1721
        %v1726 = vpack.c.b16 %v1724, %v1723
        %v1730 = vsel %vm1347, %v1711, 0
        %1732 = vmatprep.subr.bf16.mxu0 0
        %1733 = vmatpush1.bf16.msra.mxu0 %v1725
        %1734 = vmatprep.subr.bf16.mxu0 0
        %1735 = vmatpush1.bf16.msra.mxu0 %v1726
        %1736 = vmatprep.subr.bf16.mxu0 0
        %1737 = vmatpush1.bf16.msra.mxu0 0
        %1738 = vmatprep.subr.bf16.mxu0 0
        %1739 = vmatpush1.bf16.msra.mxu0 0
        %1740 = vmatprep.subr.bf16.mxu0 0
        %1741 = vmatpush1.bf16.msra.mxu0 0
        %1742 = vmatprep.subr.bf16.mxu0 0
        %1743 = vmatpush1.bf16.msra.mxu0 0
        %1744 = vmatprep.subr.bf16.mxu0 0
        %1745 = vmatpush1.bf16.msra.mxu0 0
        %1746 = vmatprep.subr.bf16.mxu0 0
        %1747 = vmatpush1.bf16.msra.mxu0 0
        %1748 = vmatprep.subr.bf16.mxu0 0
        %1749 = vmatpush1.bf16.msra.mxu0 0
        %1750 = vmatprep.subr.bf16.mxu0 0
        %1751 = vmatpush1.bf16.msra.mxu0 0
        %1752 = vmatprep.subr.bf16.mxu0 0
        %1753 = vmatpush1.bf16.msra.mxu0 0
        %1754 = vmatprep.subr.bf16.mxu0 0
        %1755 = vmatpush1.bf16.msra.mxu0 0
        %1756 = vmatprep.subr.bf16.mxu0 0
        %1757 = vmatpush1.bf16.msra.mxu0 0
        %1758 = vmatprep.subr.bf16.mxu0 0
        %1759 = vmatpush1.bf16.msra.mxu0 0
        %1760 = vmatprep.subr.bf16.mxu0 0
        %1761 = vmatpush1.bf16.msra.mxu0 0
        %1762 = vmatprep.subr.bf16.mxu0 0
        %1763 = vmatpush1.bf16.msra.mxu0 0
        %1764 = vmatprep.mubr.bf16.mxu0 0
        %1765 = vmatmul.mubr.bf16.gmra.mrb[0].mxu0 %v1730
        %v1766 = vpop.f32.mrb[0].mxu0
        %v1767 = vadd.f32 0.0, %v1766
        %v1768 = vpop.f32.mrb[0].mxu0
        %v1769 = vpop.f32.mrb[0].mxu0
        %v1770 = vpop.f32.mrb[0].mxu0
        %1771 = vdwg.mxu0
        %v1772 = vadd.f32 %v1704, %v1767
        %v1773 = vpack.c.bf16 %v1710, %v1710
        %s1774 = scalar_lea.vmem [#allocation7], 112
        %v1775 = vld [vmem:[%s1774] sm:$0xf]
        %v1776 = vld [vmem:[%s1774 + $0x4] sm:$0xf]
        %v1777 = vld [vmem:[%s1774 + $0x8] sm:$0xf]
        %v1778 = vld [vmem:[%s1774 + $0xc] sm:$0xf]
        %v1783 = vunpack.c.l.b16 %v1775
        %v1784 = vunpack.c.l.b16 %v1776
        %v1785 = vunpack.c.l.b16 %v1777
        %v1786 = vunpack.c.l.b16 %v1778
        %v1787 = vpack.c.b16 %v1784, %v1783
        %v1788 = vpack.c.b16 %v1786, %v1785
        %v1792 = vsel %vm1347, %v1773, 0
        %1794 = vmatprep.subr.bf16.mxu0 0
        %1795 = vmatpush1.bf16.msra.mxu0 %v1787
        %1796 = vmatprep.subr.bf16.mxu0 0
        %1797 = vmatpush1.bf16.msra.mxu0 %v1788
        %1798 = vmatprep.subr.bf16.mxu0 0
        %1799 = vmatpush1.bf16.msra.mxu0 0
        %1800 = vmatprep.subr.bf16.mxu0 0
        %1801 = vmatpush1.bf16.msra.mxu0 0
        %1802 = vmatprep.subr.bf16.mxu0 0
        %1803 = vmatpush1.bf16.msra.mxu0 0
        %1804 = vmatprep.subr.bf16.mxu0 0
        %1805 = vmatpush1.bf16.msra.mxu0 0
        %1806 = vmatprep.subr.bf16.mxu0 0
        %1807 = vmatpush1.bf16.msra.mxu0 0
        %1808 = vmatprep.subr.bf16.mxu0 0
        %1809 = vmatpush1.bf16.msra.mxu0 0
        %1810 = vmatprep.subr.bf16.mxu0 0
        %1811 = vmatpush1.bf16.msra.mxu0 0
        %1812 = vmatprep.subr.bf16.mxu0 0
        %1813 = vmatpush1.bf16.msra.mxu0 0
        %1814 = vmatprep.subr.bf16.mxu0 0
        %1815 = vmatpush1.bf16.msra.mxu0 0
        %1816 = vmatprep.subr.bf16.mxu0 0
        %1817 = vmatpush1.bf16.msra.mxu0 0
        %1818 = vmatprep.subr.bf16.mxu0 0
        %1819 = vmatpush1.bf16.msra.mxu0 0
        %1820 = vmatprep.subr.bf16.mxu0 0
        %1821 = vmatpush1.bf16.msra.mxu0 0
        %1822 = vmatprep.subr.bf16.mxu0 0
        %1823 = vmatpush1.bf16.msra.mxu0 0
        %1824 = vmatprep.subr.bf16.mxu0 0
        %1825 = vmatpush1.bf16.msra.mxu0 0
        %1826 = vmatprep.mubr.bf16.mxu0 0
        %1827 = vmatmul.mubr.bf16.gmra.mrb[0].mxu0 %v1792
        %v1828 = vpop.f32.mrb[0].mxu0
        %v1829 = vadd.f32 0.0, %v1828
        %v1830 = vpop.f32.mrb[0].mxu0
        %v1831 = vpop.f32.mrb[0].mxu0
        %v1832 = vpop.f32.mrb[0].mxu0
        %1833 = vdwg.mxu0
        %v1834 = vadd.f32 %v1772, %v1829
        %v1835 = vmul.f32 %v1707, %v1219
        %v1836 = vmul.f32 %v1710, %v1323
        %v1837 = vsub.f32 %v1835, %v1836
        %v1838 = vmul.f32 %v1710, %v1219
        %v1839 = vmul.f32 %v1707, %v1323
        %v1840 = vadd.f32 %v1838, %v1839
        %v1841 = vpack.c.bf16 %v1837, %v1837
        %s1842 = scalar_lea.vmem [#allocation7], 128
        %v1843 = vld [vmem:[%s1842] sm:$0xf]
        %v1844 = vld [vmem:[%s1842 + $0x4] sm:$0xf]
        %v1845 = vld [vmem:[%s1842 + $0x8] sm:$0xf]
        %v1846 = vld [vmem:[%s1842 + $0xc] sm:$0xf]
        %v1851 = vunpack.c.l.b16 %v1843
        %v1852 = vunpack.c.l.b16 %v1844
        %v1853 = vunpack.c.l.b16 %v1845
        %v1854 = vunpack.c.l.b16 %v1846
        %v1855 = vpack.c.b16 %v1852, %v1851
        %v1856 = vpack.c.b16 %v1854, %v1853
        %v1860 = vsel %vm1347, %v1841, 0
        %1862 = vmatprep.subr.bf16.mxu0 0
        %1863 = vmatpush1.bf16.msra.mxu0 %v1855
        %1864 = vmatprep.subr.bf16.mxu0 0
        %1865 = vmatpush1.bf16.msra.mxu0 %v1856
        %1866 = vmatprep.subr.bf16.mxu0 0
        %1867 = vmatpush1.bf16.msra.mxu0 0
        %1868 = vmatprep.subr.bf16.mxu0 0
        %1869 = vmatpush1.bf16.msra.mxu0 0
        %1870 = vmatprep.subr.bf16.mxu0 0
        %1871 = vmatpush1.bf16.msra.mxu0 0
        %1872 = vmatprep.subr.bf16.mxu0 0
        %1873 = vmatpush1.bf16.msra.mxu0 0
        %1874 = vmatprep.subr.bf16.mxu0 0
        %1875 = vmatpush1.bf16.msra.mxu0 0
        %1876 = vmatprep.subr.bf16.mxu0 0
        %1877 = vmatpush1.bf16.msra.mxu0 0
        %1878 = vmatprep.subr.bf16.mxu0 0
        %1879 = vmatpush1.bf16.msra.mxu0 0
        %1880 = vmatprep.subr.bf16.mxu0 0
        %1881 = vmatpush1.bf16.msra.mxu0 0
        %1882 = vmatprep.subr.bf16.mxu0 0
        %1883 = vmatpush1.bf16.msra.mxu0 0
        %1884 = vmatprep.subr.bf16.mxu0 0
        %1885 = vmatpush1.bf16.msra.mxu0 0
        %1886 = vmatprep.subr.bf16.mxu0 0
        %1887 = vmatpush1.bf16.msra.mxu0 0
        %1888 = vmatprep.subr.bf16.mxu0 0
        %1889 = vmatpush1.bf16.msra.mxu0 0
        %1890 = vmatprep.subr.bf16.mxu0 0
        %1891 = vmatpush1.bf16.msra.mxu0 0
        %1892 = vmatprep.subr.bf16.mxu0 0
        %1893 = vmatpush1.bf16.msra.mxu0 0
        %1894 = vmatprep.mubr.bf16.mxu0 0
        %1895 = vmatmul.mubr.bf16.gmra.mrb[0].mxu0 %v1860
        %v1896 = vpop.f32.mrb[0].mxu0
        %v1897 = vadd.f32 0.0, %v1896
        %v1898 = vpop.f32.mrb[0].mxu0
        %v1899 = vpop.f32.mrb[0].mxu0
        %v1900 = vpop.f32.mrb[0].mxu0
        %1901 = vdwg.mxu0
        %v1902 = vadd.f32 %v1834, %v1897
        %v1903 = vpack.c.bf16 %v1840, %v1840
        %s1904 = scalar_lea.vmem [#allocation7], 144
        %v1905 = vld [vmem:[%s1904] sm:$0xf]
        %v1906 = vld [vmem:[%s1904 + $0x4] sm:$0xf]
        %v1907 = vld [vmem:[%s1904 + $0x8] sm:$0xf]
        %v1908 = vld [vmem:[%s1904 + $0xc] sm:$0xf]
        %v1913 = vunpack.c.l.b16 %v1905
        %v1914 = vunpack.c.l.b16 %v1906
        %v1915 = vunpack.c.l.b16 %v1907
        %v1916 = vunpack.c.l.b16 %v1908
        %v1917 = vpack.c.b16 %v1914, %v1913
        %v1918 = vpack.c.b16 %v1916, %v1915
        %v1922 = vsel %vm1347, %v1903, 0
        %1924 = vmatprep.subr.bf16.mxu0 0
        %1925 = vmatpush1.bf16.msra.mxu0 %v1917
        %1926 = vmatprep.subr.bf16.mxu0 0
        %1927 = vmatpush1.bf16.msra.mxu0 %v1918
        %1928 = vmatprep.subr.bf16.mxu0 0
        %1929 = vmatpush1.bf16.msra.mxu0 0
        %1930 = vmatprep.subr.bf16.mxu0 0
        %1931 = vmatpush1.bf16.msra.mxu0 0
        %1932 = vmatprep.subr.bf16.mxu0 0
        %1933 = vmatpush1.bf16.msra.mxu0 0
        %1934 = vmatprep.subr.bf16.mxu0 0
        %1935 = vmatpush1.bf16.msra.mxu0 0
        %1936 = vmatprep.subr.bf16.mxu0 0
        %1937 = vmatpush1.bf16.msra.mxu0 0
        %1938 = vmatprep.subr.bf16.mxu0 0
        %1939 = vmatpush1.bf16.msra.mxu0 0
        %1940 = vmatprep.subr.bf16.mxu0 0
        %1941 = vmatpush1.bf16.msra.mxu0 0
        %1942 = vmatprep.subr.bf16.mxu0 0
        %1943 = vmatpush1.bf16.msra.mxu0 0
        %1944 = vmatprep.subr.bf16.mxu0 0
        %1945 = vmatpush1.bf16.msra.mxu0 0
        %1946 = vmatprep.subr.bf16.mxu0 0
        %1947 = vmatpush1.bf16.msra.mxu0 0
        %1948 = vmatprep.subr.bf16.mxu0 0
        %1949 = vmatpush1.bf16.msra.mxu0 0
        %1950 = vmatprep.subr.bf16.mxu0 0
        %1951 = vmatpush1.bf16.msra.mxu0 0
        %1952 = vmatprep.subr.bf16.mxu0 0
        %1953 = vmatpush1.bf16.msra.mxu0 0
        %1954 = vmatprep.subr.bf16.mxu0 0
        %1955 = vmatpush1.bf16.msra.mxu0 0
        %1956 = vmatprep.mubr.bf16.mxu0 0
        %1957 = vmatmul.mubr.bf16.gmra.mrb[0].mxu0 %v1922
        %v1958 = vpop.f32.mrb[0].mxu0
        %v1959 = vadd.f32 0.0, %v1958
        %v1960 = vpop.f32.mrb[0].mxu0
        %v1961 = vpop.f32.mrb[0].mxu0
        %v1962 = vpop.f32.mrb[0].mxu0
        %1963 = vdwg.mxu0
        %v1964 = vadd.f32 %v1902, %v1959
        %v1965 = vld [vmem:[%s4] sm:$0x1]
        %v1967 = vlaneseq
        %v1968 = vshrl.u32 %v1967, 7
        %v1969 = vsub.s32 0, %v1968
        %v1970 = vrot.slane %v1965, %v1969
        %v1972 = vadd.f32 %v1964, %v1970
        %v1973 = vtanh.pop %v1972
        %v1974 = vand.u32 2147483647, %v1973
        %vm1975 = vcmp.le.f32.partialorder %v1974, 0.7853982
        %vm1976 = vcmp.lt.s32.totalorder %v1973, 0
        %v1977 = vand.u32 %v1973, 2139095040
        %v1978 = vshrl.u32 %v1977, 23
        %v1979 = vsub.s32 %v1978, 127
        %v1980 = vand.u32 2147483647, %v1973
        %v1981 = vand.u32 %v1980, 8388607
        %v1982 = vor.u32 %v1981, 8388608
        %v1983 = vsub.s32 0, %v1982
        %v1984 = vadd.s32 %v1979, 1
        %vm1985 = vcmp.gt.s32.totalorder %v1984, 0
        %v1986 = vsel %vm1985, %v1984, 0
        %v1987 = vshrl.u32 %v1986, 5
        %v1988 = vand.u32 %v1986, 31
        %v1989 = vsub.s32 32, %v1988
        %v1990 = vshrl.u32 683565275, %v1989
        %v1991 = vshll.u32 683565275, %v1988
        %v1992 = vshrl.u32 2475754826, %v1989
        %v1993 = vor.u32 %v1991, %v1992
        %v1994 = vshll.u32 2475754826, %v1988
        %v1995 = vshrl.u32 2131351028, %v1989
        %v1996 = vor.u32 %v1994, %v1995
        %v1997 = vshll.u32 2131351028, %v1988
        %v1998 = vshrl.u32 2102212464, %v1989
        %v1999 = vor.u32 %v1997, %v1998
        %v2000 = vshll.u32 2102212464, %v1988
        %v2001 = vshrl.u32 920167782, %v1989
        %v2002 = vor.u32 %v2000, %v2001
        %v2003 = vshll.u32 920167782, %v1988
        %v2004 = vshrl.u32 1326507024, %v1989
        %v2005 = vor.u32 %v2003, %v2004
        %vm2006 = vcmp.lt.s32.totalorder %v1987, 1
        %vm2007 = vcmp.lt.s32.totalorder %v1987, 2
        %vm2008 = vcmp.lt.s32.totalorder %v1987, 3
        %vm2009 = vcmp.lt.s32.totalorder %v1987, 4
        %v2010 = vsel %vm2006, %v1990, %v1993
        %v2011 = vsel %vm2009, %v1999, 2102212464
        %v2012 = vsel %vm2008, %v1996, %v2011
        %v2013 = vsel %vm2007, %v2010, %v2012
        %v2014 = vsel %vm2006, %v1993, %v1996
        %v2015 = vsel %vm2009, %v2002, 920167782
        %v2016 = vsel %vm2008, %v1999, %v2015
        %v2017 = vsel %vm2007, %v2014, %v2016
        %v2018 = vsel %vm2006, %v1996, %v1999
        %v2019 = vsel %vm2009, %v2005, 1326507024
        %v2020 = vsel %vm2008, %v2002, %v2019
        %v2021 = vsel %vm2007, %v2018, %v2020
        %v2022 = vshll.u32 %v1982, 8
        %v2023 = vmul.u32.u64.compose %v2022, %v2021
        %v2024 = vextract.low.u32 %v2023
        %v2025 = vextract.high.u32 %v2023
        %v2026 = vmul.u32.u64.compose %v2022, %v2017
        %v2027 = vextract.low.u32 %v2026
        %v2028 = vextract.high.u32 %v2026
        %v2029 = vmul.u32 %v2022, %v2013
        %v2030 = vadd.s32 %v2025, %v2027
        %vm2031 = vc.u32 %v2025, %v2027
        %v2032 = vadd.s32 %v2028, 1
        %v2033 = vsel %vm2031, %v2032, %v2028
        %v2034 = vadd.s32 %v2029, %v2033
        %v2035 = vadd.s32 %v2034, 536870912
        %v2036 = vshrl.u32 %v2035, 30
        %v2037 = vshll.u32 %v2036, 30
        %v2038 = vsub.s32 %v2034, %v2037
        %vm2039 = vcmp.lt.s32.totalorder %v2038, 0
        %v2040 = vsub.s32 0, %v2038
        %v2041 = vsel %vm2039, %v2040, %v2038
        %v2042 = vclz %v2041
        %v2043 = vsub.s32 %v2042, 2
        %vm2044 = vcmp.gt.s32.totalorder 0, %v2043
        %v2045 = vsel %vm2044, 0, %v2043
        %v2046 = vsub.s32 32, %v2045
        %v2047 = vshll.u32 %v2038, %v2045
        %v2048 = vshrl.u32 %v2030, %v2046
        %v2049 = vor.u32 %v2047, %v2048
        %v2050 = vsub.s32 4294967266, %v2045
        %v2051 = vadd.s32 %v2050, 127
        %v2052 = vshll.u32 %v2051, 23
        %v2053 = vor.u32 4788187, %v2052
        %v2054 = vand.u32 2147483647, %v2053
        %v2056 = vcvt.s32.f32 %v2049
        %v2057 = vmul.f32 %v2056, %v2054
        %v2058 = vxor.u32 %v2057, 2147483648
        %v2059 = vsel %vm1976, %v2058, %v2057
        %v2060 = vsub.s32 4, %v2036
        %v2061 = vsel %vm1976, %v2060, %v2036
        %v2062 = vsel %vm1975, %v1973, %v2059
        %v2063 = vsel %vm1975, 0, %v2061
        %v2064 = vcosq.f32.pop %v2062
        %v2065 = vsinq.f32.pop %v2062
        %vm2066 = vweird.f32 %v1973
        %v2067 = vand.u32 %v2063, 3
        %vm2068 = vcmp.lt.s32.totalorder %v2067, 2
        %vm2069 = vcmp.eq.s32.totalorder %v2067, 0
        %v2070 = vxor.u32 %v2065, 2147483648
        %v2071 = vsel %vm2069, %v2064, %v2070
        %vm2072 = vcmp.eq.s32.totalorder %v2067, 2
        %v2073 = vxor.u32 %v2064, 2147483648
        %v2074 = vsel %vm2072, %v2073, %v2065
        %v2075 = vsel %vm2068, %v2071, %v2074
        %v2076 = vsel %vm2066, nan, %v2075
        %v2077 = vand.u32 2147483647, %v1973
        %vm2078 = vcmp.le.f32.partialorder %v2077, 0.7853982
        %vm2079 = vcmp.lt.s32.totalorder %v1973, 0
        %v2080 = vand.u32 %v1973, 2139095040
        %v2081 = vshrl.u32 %v2080, 23
        %v2082 = vsub.s32 %v2081, 127
        %v2083 = vand.u32 2147483647, %v1973
        %v2084 = vand.u32 %v2083, 8388607
        %v2085 = vor.u32 %v2084, 8388608
        %v2086 = vsub.s32 0, %v2085
        %v2087 = vadd.s32 %v2082, 1
        %vm2088 = vcmp.gt.s32.totalorder %v2087, 0
        %v2089 = vsel %vm2088, %v2087, 0
        %v2090 = vshrl.u32 %v2089, 5
        %v2091 = vand.u32 %v2089, 31
        %v2092 = vsub.s32 32, %v2091
        %v2093 = vshrl.u32 683565275, %v2092
        %v2094 = vshll.u32 683565275, %v2091
        %v2095 = vshrl.u32 2475754826, %v2092
        %v2096 = vor.u32 %v2094, %v2095
        %v2097 = vshll.u32 2475754826, %v2091
        %v2098 = vshrl.u32 2131351028, %v2092
        %v2099 = vor.u32 %v2097, %v2098
        %v2100 = vshll.u32 2131351028, %v2091
        %v2101 = vshrl.u32 2102212464, %v2092
        %v2102 = vor.u32 %v2100, %v2101
        %v2103 = vshll.u32 2102212464, %v2091
        %v2104 = vshrl.u32 920167782, %v2092
        %v2105 = vor.u32 %v2103, %v2104
        %v2106 = vshll.u32 920167782, %v2091
        %v2107 = vshrl.u32 1326507024, %v2092
        %v2108 = vor.u32 %v2106, %v2107
        %vm2109 = vcmp.lt.s32.totalorder %v2090, 1
        %vm2110 = vcmp.lt.s32.totalorder %v2090, 2
        %vm2111 = vcmp.lt.s32.totalorder %v2090, 3
        %vm2112 = vcmp.lt.s32.totalorder %v2090, 4
        %v2113 = vsel %vm2109, %v2093, %v2096
        %v2114 = vsel %vm2112, %v2102, 2102212464
        %v2115 = vsel %vm2111, %v2099, %v2114
        %v2116 = vsel %vm2110, %v2113, %v2115
        %v2117 = vsel %vm2109, %v2096, %v2099
        %v2118 = vsel %vm2112, %v2105, 920167782
        %v2119 = vsel %vm2111, %v2102, %v2118
        %v2120 = vsel %vm2110, %v2117, %v2119
        %v2121 = vsel %vm2109, %v2099, %v2102
        %v2122 = vsel %vm2112, %v2108, 1326507024
        %v2123 = vsel %vm2111, %v2105, %v2122
        %v2124 = vsel %vm2110, %v2121, %v2123
        %v2125 = vshll.u32 %v2085, 8
        %v2126 = vmul.u32.u64.compose %v2125, %v2124
        %v2127 = vextract.low.u32 %v2126
        %v2128 = vextract.high.u32 %v2126
        %v2129 = vmul.u32.u64.compose %v2125, %v2120
        %v2130 = vextract.low.u32 %v2129
        %v2131 = vextract.high.u32 %v2129
        %v2132 = vmul.u32 %v2125, %v2116
        %v2133 = vadd.s32 %v2128, %v2130
        %vm2134 = vc.u32 %v2128, %v2130
        %v2135 = vadd.s32 %v2131, 1
        %v2136 = vsel %vm2134, %v2135, %v2131
        %v2137 = vadd.s32 %v2132, %v2136
        %v2138 = vadd.s32 %v2137, 536870912
        %v2139 = vshrl.u32 %v2138, 30
        %v2140 = vshll.u32 %v2139, 30
        %v2141 = vsub.s32 %v2137, %v2140
        %vm2142 = vcmp.lt.s32.totalorder %v2141, 0
        %v2143 = vsub.s32 0, %v2141
        %v2144 = vsel %vm2142, %v2143, %v2141
        %v2145 = vclz %v2144
        %v2146 = vsub.s32 %v2145, 2
        %vm2147 = vcmp.gt.s32.totalorder 0, %v2146
        %v2148 = vsel %vm2147, 0, %v2146
        %v2149 = vsub.s32 32, %v2148
        %v2150 = vshll.u32 %v2141, %v2148
        %v2151 = vshrl.u32 %v2133, %v2149
        %v2152 = vor.u32 %v2150, %v2151
        %v2153 = vsub.s32 4294967266, %v2148
        %v2154 = vadd.s32 %v2153, 127
        %v2155 = vshll.u32 %v2154, 23
        %v2156 = vor.u32 4788187, %v2155
        %v2157 = vand.u32 2147483647, %v2156
        %v2159 = vcvt.s32.f32 %v2152
        %v2160 = vmul.f32 %v2159, %v2157
        %v2161 = vxor.u32 %v2160, 2147483648
        %v2162 = vsel %vm2079, %v2161, %v2160
        %v2163 = vsub.s32 4, %v2139
        %v2164 = vsel %vm2079, %v2163, %v2139
        %v2165 = vsel %vm2078, %v1973, %v2162
        %v2166 = vsel %vm2078, 0, %v2164
        %v2167 = vcosq.f32.pop %v2165
        %v2168 = vsinq.f32.pop %v2165
        %vm2169 = vweird.f32 %v1973
        %v2170 = vadd.s32 %v2166, 3
        %v2171 = vand.u32 %v2170, 3
        %vm2172 = vcmp.lt.s32.totalorder %v2171, 2
        %vm2173 = vcmp.eq.s32.totalorder %v2171, 0
        %v2174 = vxor.u32 %v2168, 2147483648
        %v2175 = vsel %vm2173, %v2167, %v2174
        %vm2176 = vcmp.eq.s32.totalorder %v2171, 2
        %v2177 = vxor.u32 %v2167, 2147483648
        %v2178 = vsel %vm2176, %v2177, %v2168
        %v2179 = vsel %vm2172, %v2175, %v2178
        %v2180 = vsel %vm2169, nan, %v2179
        %v2181 = vpack.c.bf16 %v2076, %v2076
        %v2182 = vld [vmem:[#allocation8] sm:$0xf]
        %v2183 = vld [vmem:[#allocation8 + $0x4] sm:$0xf]
        %v2184 = vld [vmem:[#allocation8 + $0x8] sm:$0xf]
        %v2185 = vld [vmem:[#allocation8 + $0xc] sm:$0xf]
        %v2186 = vpack.c.bf16 %v2180, %v2180
        %s2187 = scalar_lea.vmem [#allocation8], 16
        %v2188 = vld [vmem:[%s2187] sm:$0xf]
        %v2189 = vld [vmem:[%s2187 + $0x4] sm:$0xf]
        %v2190 = vld [vmem:[%s2187 + $0x8] sm:$0xf]
        %v2191 = vld [vmem:[%s2187 + $0xc] sm:$0xf]
        %v2196 = vunpack.c.l.b16 %v2188
        %v2197 = vunpack.c.l.b16 %v2189
        %v2198 = vunpack.c.l.b16 %v2190
        %v2199 = vunpack.c.l.b16 %v2191
        %v2200 = vpack.c.b16 %v2197, %v2196
        %v2201 = vpack.c.b16 %v2199, %v2198
        %v2205 = vsel %vm1347, %v2186, 0
        %2207 = vmatprep.subr.bf16.mxu0 0
        %2208 = vmatpush1.bf16.msra.mxu0 %v2200
        %2209 = vmatprep.subr.bf16.mxu0 0
        %2210 = vmatpush1.bf16.msra.mxu0 %v2201
        %2211 = vmatprep.subr.bf16.mxu0 0
        %2212 = vmatpush1.bf16.msra.mxu0 0
        %2213 = vmatprep.subr.bf16.mxu0 0
        %2214 = vmatpush1.bf16.msra.mxu0 0
        %2215 = vmatprep.subr.bf16.mxu0 0
        %2216 = vmatpush1.bf16.msra.mxu0 0
        %2217 = vmatprep.subr.bf16.mxu0 0
        %2218 = vmatpush1.bf16.msra.mxu0 0
        %2219 = vmatprep.subr.bf16.mxu0 0
        %2220 = vmatpush1.bf16.msra.mxu0 0
        %2221 = vmatprep.subr.bf16.mxu0 0
        %2222 = vmatpush1.bf16.msra.mxu0 0
        %2223 = vmatprep.subr.bf16.mxu0 0
        %2224 = vmatpush1.bf16.msra.mxu0 0
        %2225 = vmatprep.subr.bf16.mxu0 0
        %2226 = vmatpush1.bf16.msra.mxu0 0
        %2227 = vmatprep.subr.bf16.mxu0 0
        %2228 = vmatpush1.bf16.msra.mxu0 0
        %2229 = vmatprep.subr.bf16.mxu0 0
        %2230 = vmatpush1.bf16.msra.mxu0 0
        %2231 = vmatprep.subr.bf16.mxu0 0
        %2232 = vmatpush1.bf16.msra.mxu0 0
        %2233 = vmatprep.subr.bf16.mxu0 0
        %2234 = vmatpush1.bf16.msra.mxu0 0
        %2235 = vmatprep.subr.bf16.mxu0 0
        %2236 = vmatpush1.bf16.msra.mxu0 0
        %2237 = vmatprep.subr.bf16.mxu0 0
        %2238 = vmatpush1.bf16.msra.mxu0 0
        %2239 = vmatprep.mubr.bf16.mxu0 0
        %2240 = vmatmul.mubr.bf16.gmra.mrb[0].mxu0 %v2205
        %v2241 = vpop.f32.mrb[0].mxu0
        %v2242 = vadd.f32 0.0, %v2241
        %v2243 = vpop.f32.mrb[0].mxu0
        %v2244 = vpop.f32.mrb[0].mxu0
        %v2245 = vpop.f32.mrb[0].mxu0
        %2246 = vdwg.mxu0
        %v2251 = vunpack.c.l.b16 %v2182
        %v2252 = vunpack.c.l.b16 %v2183
        %v2253 = vunpack.c.l.b16 %v2184
        %v2254 = vunpack.c.l.b16 %v2185
        %v2255 = vpack.c.b16 %v2252, %v2251
        %v2256 = vpack.c.b16 %v2254, %v2253
        %v2260 = vsel %vm1347, %v2181, 0
        %2262 = vmatprep.subr.bf16.mxu0 0
        %2263 = vmatpush1.bf16.msra.mxu0 %v2255
        %2264 = vmatprep.subr.bf16.mxu0 0
        %2265 = vmatpush1.bf16.msra.mxu0 %v2256
        %2266 = vmatprep.subr.bf16.mxu0 0
        %2267 = vmatpush1.bf16.msra.mxu0 0
        %2268 = vmatprep.subr.bf16.mxu0 0
        %2269 = vmatpush1.bf16.msra.mxu0 0
        %2270 = vmatprep.subr.bf16.mxu0 0
        %2271 = vmatpush1.bf16.msra.mxu0 0
        %2272 = vmatprep.subr.bf16.mxu0 0
        %2273 = vmatpush1.bf16.msra.mxu0 0
        %2274 = vmatprep.subr.bf16.mxu0 0
        %2275 = vmatpush1.bf16.msra.mxu0 0
        %2276 = vmatprep.subr.bf16.mxu0 0
        %2277 = vmatpush1.bf16.msra.mxu0 0
        %2278 = vmatprep.subr.bf16.mxu0 0
        %2279 = vmatpush1.bf16.msra.mxu0 0
        %2280 = vmatprep.subr.bf16.mxu0 0
        %2281 = vmatpush1.bf16.msra.mxu0 0
        %2282 = vmatprep.subr.bf16.mxu0 0
        %2283 = vmatpush1.bf16.msra.mxu0 0
        %2284 = vmatprep.subr.bf16.mxu0 0
        %2285 = vmatpush1.bf16.msra.mxu0 0
        %2286 = vmatprep.subr.bf16.mxu0 0
        %2287 = vmatpush1.bf16.msra.mxu0 0
        %2288 = vmatprep.subr.bf16.mxu0 0
        %2289 = vmatpush1.bf16.msra.mxu0 0
        %2290 = vmatprep.subr.bf16.mxu0 0
        %2291 = vmatpush1.bf16.msra.mxu0 0
        %2292 = vmatprep.subr.bf16.mxu0 0
        %2293 = vmatpush1.bf16.msra.mxu0 0
        %2294 = vmatprep.mubr.bf16.mxu0 0
        %2295 = vmatmul.mubr.bf16.gmra.mrb[0].mxu0 %v2260
        %v2296 = vpop.f32.mrb[0].mxu0
        %v2297 = vadd.f32 %v2242, %v2296
        %v2298 = vpop.f32.mrb[0].mxu0
        %v2299 = vpop.f32.mrb[0].mxu0
        %v2300 = vpop.f32.mrb[0].mxu0
        %2301 = vdwg.mxu0
        %v2302 = vmul.f32 %v2076, %v2076
        %v2303 = vmul.f32 %v2180, %v2180
        %v2304 = vsub.f32 %v2302, %v2303
        %v2305 = vmul.f32 %v2180, %v2076
        %v2306 = vadd.f32 %v2305, %v2305
        %v2307 = vpack.c.bf16 %v2304, %v2304
        %s2308 = scalar_lea.vmem [#allocation8], 32
        %v2309 = vld [vmem:[%s2308] sm:$0xf]
        %v2310 = vld [vmem:[%s2308 + $0x4] sm:$0xf]
        %v2311 = vld [vmem:[%s2308 + $0x8] sm:$0xf]
        %v2312 = vld [vmem:[%s2308 + $0xc] sm:$0xf]
        %v2317 = vunpack.c.l.b16 %v2309
        %v2318 = vunpack.c.l.b16 %v2310
        %v2319 = vunpack.c.l.b16 %v2311
        %v2320 = vunpack.c.l.b16 %v2312
        %v2321 = vpack.c.b16 %v2318, %v2317
        %v2322 = vpack.c.b16 %v2320, %v2319
        %v2326 = vsel %vm1347, %v2307, 0
        %2328 = vmatprep.subr.bf16.mxu0 0
        %2329 = vmatpush1.bf16.msra.mxu0 %v2321
        %2330 = vmatprep.subr.bf16.mxu0 0
        %2331 = vmatpush1.bf16.msra.mxu0 %v2322
        %2332 = vmatprep.subr.bf16.mxu0 0
        %2333 = vmatpush1.bf16.msra.mxu0 0
        %2334 = vmatprep.subr.bf16.mxu0 0
        %2335 = vmatpush1.bf16.msra.mxu0 0
        %2336 = vmatprep.subr.bf16.mxu0 0
        %2337 = vmatpush1.bf16.msra.mxu0 0
        %2338 = vmatprep.subr.bf16.mxu0 0
        %2339 = vmatpush1.bf16.msra.mxu0 0
        %2340 = vmatprep.subr.bf16.mxu0 0
        %2341 = vmatpush1.bf16.msra.mxu0 0
        %2342 = vmatprep.subr.bf16.mxu0 0
        %2343 = vmatpush1.bf16.msra.mxu0 0
        %2344 = vmatprep.subr.bf16.mxu0 0
        %2345 = vmatpush1.bf16.msra.mxu0 0
        %2346 = vmatprep.subr.bf16.mxu0 0
        %2347 = vmatpush1.bf16.msra.mxu0 0
        %2348 = vmatprep.subr.bf16.mxu0 0
        %2349 = vmatpush1.bf16.msra.mxu0 0
        %2350 = vmatprep.subr.bf16.mxu0 0
        %2351 = vmatpush1.bf16.msra.mxu0 0
        %2352 = vmatprep.subr.bf16.mxu0 0
        %2353 = vmatpush1.bf16.msra.mxu0 0
        %2354 = vmatprep.subr.bf16.mxu0 0
        %2355 = vmatpush1.bf16.msra.mxu0 0
        %2356 = vmatprep.subr.bf16.mxu0 0
        %2357 = vmatpush1.bf16.msra.mxu0 0
        %2358 = vmatprep.subr.bf16.mxu0 0
        %2359 = vmatpush1.bf16.msra.mxu0 0
        %2360 = vmatprep.mubr.bf16.mxu0 0
        %2361 = vmatmul.mubr.bf16.gmra.mrb[0].mxu0 %v2326
        %v2362 = vpop.f32.mrb[0].mxu0
        %v2363 = vadd.f32 0.0, %v2362
        %v2364 = vpop.f32.mrb[0].mxu0
        %v2365 = vpop.f32.mrb[0].mxu0
        %v2366 = vpop.f32.mrb[0].mxu0
        %2367 = vdwg.mxu0
        %v2368 = vadd.f32 %v2297, %v2363
        %v2369 = vpack.c.bf16 %v2306, %v2306
        %s2370 = scalar_lea.vmem [#allocation8], 48
        %v2371 = vld [vmem:[%s2370] sm:$0xf]
        %v2372 = vld [vmem:[%s2370 + $0x4] sm:$0xf]
        %v2373 = vld [vmem:[%s2370 + $0x8] sm:$0xf]
        %v2374 = vld [vmem:[%s2370 + $0xc] sm:$0xf]
        %v2379 = vunpack.c.l.b16 %v2371
        %v2380 = vunpack.c.l.b16 %v2372
        %v2381 = vunpack.c.l.b16 %v2373
        %v2382 = vunpack.c.l.b16 %v2374
        %v2383 = vpack.c.b16 %v2380, %v2379
        %v2384 = vpack.c.b16 %v2382, %v2381
        %v2388 = vsel %vm1347, %v2369, 0
        %2390 = vmatprep.subr.bf16.mxu0 0
        %2391 = vmatpush1.bf16.msra.mxu0 %v2383
        %2392 = vmatprep.subr.bf16.mxu0 0
        %2393 = vmatpush1.bf16.msra.mxu0 %v2384
        %2394 = vmatprep.subr.bf16.mxu0 0
        %2395 = vmatpush1.bf16.msra.mxu0 0
        %2396 = vmatprep.subr.bf16.mxu0 0
        %2397 = vmatpush1.bf16.msra.mxu0 0
        %2398 = vmatprep.subr.bf16.mxu0 0
        %2399 = vmatpush1.bf16.msra.mxu0 0
        %2400 = vmatprep.subr.bf16.mxu0 0
        %2401 = vmatpush1.bf16.msra.mxu0 0
        %2402 = vmatprep.subr.bf16.mxu0 0
        %2403 = vmatpush1.bf16.msra.mxu0 0
        %2404 = vmatprep.subr.bf16.mxu0 0
        %2405 = vmatpush1.bf16.msra.mxu0 0
        %2406 = vmatprep.subr.bf16.mxu0 0
        %2407 = vmatpush1.bf16.msra.mxu0 0
        %2408 = vmatprep.subr.bf16.mxu0 0
        %2409 = vmatpush1.bf16.msra.mxu0 0
        %2410 = vmatprep.subr.bf16.mxu0 0
        %2411 = vmatpush1.bf16.msra.mxu0 0
        %2412 = vmatprep.subr.bf16.mxu0 0
        %2413 = vmatpush1.bf16.msra.mxu0 0
        %2414 = vmatprep.subr.bf16.mxu0 0
        %2415 = vmatpush1.bf16.msra.mxu0 0
        %2416 = vmatprep.subr.bf16.mxu0 0
        %2417 = vmatpush1.bf16.msra.mxu0 0
        %2418 = vmatprep.subr.bf16.mxu0 0
        %2419 = vmatpush1.bf16.msra.mxu0 0
        %2420 = vmatprep.subr.bf16.mxu0 0
        %2421 = vmatpush1.bf16.msra.mxu0 0
        %2422 = vmatprep.mubr.bf16.mxu0 0
        %2423 = vmatmul.mubr.bf16.gmra.mrb[0].mxu0 %v2388
        %v2424 = vpop.f32.mrb[0].mxu0
        %v2425 = vadd.f32 0.0, %v2424
        %v2426 = vpop.f32.mrb[0].mxu0
        %v2427 = vpop.f32.mrb[0].mxu0
        %v2428 = vpop.f32.mrb[0].mxu0
        %2429 = vdwg.mxu0
        %v2430 = vadd.f32 %v2368, %v2425
        %v2431 = vmul.f32 %v2304, %v2076
        %v2432 = vmul.f32 %v2306, %v2180
        %v2433 = vsub.f32 %v2431, %v2432
        %v2434 = vmul.f32 %v2306, %v2076
        %v2435 = vmul.f32 %v2304, %v2180
        %v2436 = vadd.f32 %v2434, %v2435
        %v2437 = vpack.c.bf16 %v2433, %v2433
        %s2438 = scalar_lea.vmem [#allocation8], 64
        %v2439 = vld [vmem:[%s2438] sm:$0xf]
        %v2440 = vld [vmem:[%s2438 + $0x4] sm:$0xf]
        %v2441 = vld [vmem:[%s2438 + $0x8] sm:$0xf]
        %v2442 = vld [vmem:[%s2438 + $0xc] sm:$0xf]
        %v2447 = vunpack.c.l.b16 %v2439
        %v2448 = vunpack.c.l.b16 %v2440
        %v2449 = vunpack.c.l.b16 %v2441
        %v2450 = vunpack.c.l.b16 %v2442
        %v2451 = vpack.c.b16 %v2448, %v2447
        %v2452 = vpack.c.b16 %v2450, %v2449
        %v2456 = vsel %vm1347, %v2437, 0
        %2458 = vmatprep.subr.bf16.mxu0 0
        %2459 = vmatpush1.bf16.msra.mxu0 %v2451
        %2460 = vmatprep.subr.bf16.mxu0 0
        %2461 = vmatpush1.bf16.msra.mxu0 %v2452
        %2462 = vmatprep.subr.bf16.mxu0 0
        %2463 = vmatpush1.bf16.msra.mxu0 0
        %2464 = vmatprep.subr.bf16.mxu0 0
        %2465 = vmatpush1.bf16.msra.mxu0 0
        %2466 = vmatprep.subr.bf16.mxu0 0
        %2467 = vmatpush1.bf16.msra.mxu0 0
        %2468 = vmatprep.subr.bf16.mxu0 0
        %2469 = vmatpush1.bf16.msra.mxu0 0
        %2470 = vmatprep.subr.bf16.mxu0 0
        %2471 = vmatpush1.bf16.msra.mxu0 0
        %2472 = vmatprep.subr.bf16.mxu0 0
        %2473 = vmatpush1.bf16.msra.mxu0 0
        %2474 = vmatprep.subr.bf16.mxu0 0
        %2475 = vmatpush1.bf16.msra.mxu0 0
        %2476 = vmatprep.subr.bf16.mxu0 0
        %2477 = vmatpush1.bf16.msra.mxu0 0
        %2478 = vmatprep.subr.bf16.mxu0 0
        %2479 = vmatpush1.bf16.msra.mxu0 0
        %2480 = vmatprep.subr.bf16.mxu0 0
        %2481 = vmatpush1.bf16.msra.mxu0 0
        %2482 = vmatprep.subr.bf16.mxu0 0
        %2483 = vmatpush1.bf16.msra.mxu0 0
        %2484 = vmatprep.subr.bf16.mxu0 0
        %2485 = vmatpush1.bf16.msra.mxu0 0
        %2486 = vmatprep.subr.bf16.mxu0 0
        %2487 = vmatpush1.bf16.msra.mxu0 0
        %2488 = vmatprep.subr.bf16.mxu0 0
        %2489 = vmatpush1.bf16.msra.mxu0 0
        %2490 = vmatprep.mubr.bf16.mxu0 0
        %2491 = vmatmul.mubr.bf16.gmra.mrb[0].mxu0 %v2456
        %v2492 = vpop.f32.mrb[0].mxu0
        %v2493 = vadd.f32 0.0, %v2492
        %v2494 = vpop.f32.mrb[0].mxu0
        %v2495 = vpop.f32.mrb[0].mxu0
        %v2496 = vpop.f32.mrb[0].mxu0
        %2497 = vdwg.mxu0
        %v2498 = vadd.f32 %v2430, %v2493
        %v2499 = vpack.c.bf16 %v2436, %v2436
        %s2500 = scalar_lea.vmem [#allocation8], 80
        %v2501 = vld [vmem:[%s2500] sm:$0xf]
        %v2502 = vld [vmem:[%s2500 + $0x4] sm:$0xf]
        %v2503 = vld [vmem:[%s2500 + $0x8] sm:$0xf]
        %v2504 = vld [vmem:[%s2500 + $0xc] sm:$0xf]
        %v2509 = vunpack.c.l.b16 %v2501
        %v2510 = vunpack.c.l.b16 %v2502
        %v2511 = vunpack.c.l.b16 %v2503
        %v2512 = vunpack.c.l.b16 %v2504
        %v2513 = vpack.c.b16 %v2510, %v2509
        %v2514 = vpack.c.b16 %v2512, %v2511
        %v2518 = vsel %vm1347, %v2499, 0
        %2520 = vmatprep.subr.bf16.mxu0 0
        %2521 = vmatpush1.bf16.msra.mxu0 %v2513
        %2522 = vmatprep.subr.bf16.mxu0 0
        %2523 = vmatpush1.bf16.msra.mxu0 %v2514
        %2524 = vmatprep.subr.bf16.mxu0 0
        %2525 = vmatpush1.bf16.msra.mxu0 0
        %2526 = vmatprep.subr.bf16.mxu0 0
        %2527 = vmatpush1.bf16.msra.mxu0 0
        %2528 = vmatprep.subr.bf16.mxu0 0
        %2529 = vmatpush1.bf16.msra.mxu0 0
        %2530 = vmatprep.subr.bf16.mxu0 0
        %2531 = vmatpush1.bf16.msra.mxu0 0
        %2532 = vmatprep.subr.bf16.mxu0 0
        %2533 = vmatpush1.bf16.msra.mxu0 0
        %2534 = vmatprep.subr.bf16.mxu0 0
        %2535 = vmatpush1.bf16.msra.mxu0 0
        %2536 = vmatprep.subr.bf16.mxu0 0
        %2537 = vmatpush1.bf16.msra.mxu0 0
        %2538 = vmatprep.subr.bf16.mxu0 0
        %2539 = vmatpush1.bf16.msra.mxu0 0
        %2540 = vmatprep.subr.bf16.mxu0 0
        %2541 = vmatpush1.bf16.msra.mxu0 0
        %2542 = vmatprep.subr.bf16.mxu0 0
        %2543 = vmatpush1.bf16.msra.mxu0 0
        %2544 = vmatprep.subr.bf16.mxu0 0
        %2545 = vmatpush1.bf16.msra.mxu0 0
        %2546 = vmatprep.subr.bf16.mxu0 0
        %2547 = vmatpush1.bf16.msra.mxu0 0
        %2548 = vmatprep.subr.bf16.mxu0 0
        %2549 = vmatpush1.bf16.msra.mxu0 0
        %2550 = vmatprep.subr.bf16.mxu0 0
        %2551 = vmatpush1.bf16.msra.mxu0 0
        %2552 = vmatprep.mubr.bf16.mxu0 0
        %2553 = vmatmul.mubr.bf16.gmra.mrb[0].mxu0 %v2518
        %v2554 = vpop.f32.mrb[0].mxu0
        %v2555 = vadd.f32 0.0, %v2554
        %v2556 = vpop.f32.mrb[0].mxu0
        %v2557 = vpop.f32.mrb[0].mxu0
        %v2558 = vpop.f32.mrb[0].mxu0
        %2559 = vdwg.mxu0
        %v2560 = vadd.f32 %v2498, %v2555
        %v2561 = vmul.f32 %v2433, %v2076
        %v2562 = vmul.f32 %v2436, %v2180
        %v2563 = vsub.f32 %v2561, %v2562
        %v2564 = vmul.f32 %v2436, %v2076
        %v2565 = vmul.f32 %v2433, %v2180
        %v2566 = vadd.f32 %v2564, %v2565
        %v2567 = vpack.c.bf16 %v2563, %v2563
        %s2568 = scalar_lea.vmem [#allocation8], 96
        %v2569 = vld [vmem:[%s2568] sm:$0xf]
        %v2570 = vld [vmem:[%s2568 + $0x4] sm:$0xf]
        %v2571 = vld [vmem:[%s2568 + $0x8] sm:$0xf]
        %v2572 = vld [vmem:[%s2568 + $0xc] sm:$0xf]
        %v2577 = vunpack.c.l.b16 %v2569
        %v2578 = vunpack.c.l.b16 %v2570
        %v2579 = vunpack.c.l.b16 %v2571
        %v2580 = vunpack.c.l.b16 %v2572
        %v2581 = vpack.c.b16 %v2578, %v2577
        %v2582 = vpack.c.b16 %v2580, %v2579
        %v2586 = vsel %vm1347, %v2567, 0
        %2588 = vmatprep.subr.bf16.mxu0 0
        %2589 = vmatpush1.bf16.msra.mxu0 %v2581
        %2590 = vmatprep.subr.bf16.mxu0 0
        %2591 = vmatpush1.bf16.msra.mxu0 %v2582
        %2592 = vmatprep.subr.bf16.mxu0 0
        %2593 = vmatpush1.bf16.msra.mxu0 0
        %2594 = vmatprep.subr.bf16.mxu0 0
        %2595 = vmatpush1.bf16.msra.mxu0 0
        %2596 = vmatprep.subr.bf16.mxu0 0
        %2597 = vmatpush1.bf16.msra.mxu0 0
        %2598 = vmatprep.subr.bf16.mxu0 0
        %2599 = vmatpush1.bf16.msra.mxu0 0
        %2600 = vmatprep.subr.bf16.mxu0 0
        %2601 = vmatpush1.bf16.msra.mxu0 0
        %2602 = vmatprep.subr.bf16.mxu0 0
        %2603 = vmatpush1.bf16.msra.mxu0 0
        %2604 = vmatprep.subr.bf16.mxu0 0
        %2605 = vmatpush1.bf16.msra.mxu0 0
        %2606 = vmatprep.subr.bf16.mxu0 0
        %2607 = vmatpush1.bf16.msra.mxu0 0
        %2608 = vmatprep.subr.bf16.mxu0 0
        %2609 = vmatpush1.bf16.msra.mxu0 0
        %2610 = vmatprep.subr.bf16.mxu0 0
        %2611 = vmatpush1.bf16.msra.mxu0 0
        %2612 = vmatprep.subr.bf16.mxu0 0
        %2613 = vmatpush1.bf16.msra.mxu0 0
        %2614 = vmatprep.subr.bf16.mxu0 0
        %2615 = vmatpush1.bf16.msra.mxu0 0
        %2616 = vmatprep.subr.bf16.mxu0 0
        %2617 = vmatpush1.bf16.msra.mxu0 0
        %2618 = vmatprep.subr.bf16.mxu0 0
        %2619 = vmatpush1.bf16.msra.mxu0 0
        %2620 = vmatprep.mubr.bf16.mxu0 0
        %2621 = vmatmul.mubr.bf16.gmra.mrb[0].mxu0 %v2586
        %v2622 = vpop.f32.mrb[0].mxu0
        %v2623 = vadd.f32 0.0, %v2622
        %v2624 = vpop.f32.mrb[0].mxu0
        %v2625 = vpop.f32.mrb[0].mxu0
        %v2626 = vpop.f32.mrb[0].mxu0
        %2627 = vdwg.mxu0
        %v2628 = vadd.f32 %v2560, %v2623
        %v2629 = vpack.c.bf16 %v2566, %v2566
        %s2630 = scalar_lea.vmem [#allocation8], 112
        %v2631 = vld [vmem:[%s2630] sm:$0xf]
        %v2632 = vld [vmem:[%s2630 + $0x4] sm:$0xf]
        %v2633 = vld [vmem:[%s2630 + $0x8] sm:$0xf]
        %v2634 = vld [vmem:[%s2630 + $0xc] sm:$0xf]
        %v2639 = vunpack.c.l.b16 %v2631
        %v2640 = vunpack.c.l.b16 %v2632
        %v2641 = vunpack.c.l.b16 %v2633
        %v2642 = vunpack.c.l.b16 %v2634
        %v2643 = vpack.c.b16 %v2640, %v2639
        %v2644 = vpack.c.b16 %v2642, %v2641
        %v2648 = vsel %vm1347, %v2629, 0
        %2650 = vmatprep.subr.bf16.mxu0 0
        %2651 = vmatpush1.bf16.msra.mxu0 %v2643
        %2652 = vmatprep.subr.bf16.mxu0 0
        %2653 = vmatpush1.bf16.msra.mxu0 %v2644
        %2654 = vmatprep.subr.bf16.mxu0 0
        %2655 = vmatpush1.bf16.msra.mxu0 0
        %2656 = vmatprep.subr.bf16.mxu0 0
        %2657 = vmatpush1.bf16.msra.mxu0 0
        %2658 = vmatprep.subr.bf16.mxu0 0
        %2659 = vmatpush1.bf16.msra.mxu0 0
        %2660 = vmatprep.subr.bf16.mxu0 0
        %2661 = vmatpush1.bf16.msra.mxu0 0
        %2662 = vmatprep.subr.bf16.mxu0 0
        %2663 = vmatpush1.bf16.msra.mxu0 0
        %2664 = vmatprep.subr.bf16.mxu0 0
        %2665 = vmatpush1.bf16.msra.mxu0 0
        %2666 = vmatprep.subr.bf16.mxu0 0
        %2667 = vmatpush1.bf16.msra.mxu0 0
        %2668 = vmatprep.subr.bf16.mxu0 0
        %2669 = vmatpush1.bf16.msra.mxu0 0
        %2670 = vmatprep.subr.bf16.mxu0 0
        %2671 = vmatpush1.bf16.msra.mxu0 0
        %2672 = vmatprep.subr.bf16.mxu0 0
        %2673 = vmatpush1.bf16.msra.mxu0 0
        %2674 = vmatprep.subr.bf16.mxu0 0
        %2675 = vmatpush1.bf16.msra.mxu0 0
        %2676 = vmatprep.subr.bf16.mxu0 0
        %2677 = vmatpush1.bf16.msra.mxu0 0
        %2678 = vmatprep.subr.bf16.mxu0 0
        %2679 = vmatpush1.bf16.msra.mxu0 0
        %2680 = vmatprep.subr.bf16.mxu0 0
        %2681 = vmatpush1.bf16.msra.mxu0 0
        %2682 = vmatprep.mubr.bf16.mxu0 0
        %2683 = vmatmul.mubr.bf16.gmra.mrb[0].mxu0 %v2648
        %v2684 = vpop.f32.mrb[0].mxu0
        %v2685 = vadd.f32 0.0, %v2684
        %v2686 = vpop.f32.mrb[0].mxu0
        %v2687 = vpop.f32.mrb[0].mxu0
        %v2688 = vpop.f32.mrb[0].mxu0
        %2689 = vdwg.mxu0
        %v2690 = vadd.f32 %v2628, %v2685
        %v2691 = vmul.f32 %v2563, %v2076
        %v2692 = vmul.f32 %v2566, %v2180
        %v2693 = vsub.f32 %v2691, %v2692
        %v2694 = vmul.f32 %v2566, %v2076
        %v2695 = vmul.f32 %v2563, %v2180
        %v2696 = vadd.f32 %v2694, %v2695
        %v2697 = vpack.c.bf16 %v2693, %v2693
        %s2698 = scalar_lea.vmem [#allocation8], 128
        %v2699 = vld [vmem:[%s2698] sm:$0xf]
        %v2700 = vld [vmem:[%s2698 + $0x4] sm:$0xf]
        %v2701 = vld [vmem:[%s2698 + $0x8] sm:$0xf]
        %v2702 = vld [vmem:[%s2698 + $0xc] sm:$0xf]
        %v2707 = vunpack.c.l.b16 %v2699
        %v2708 = vunpack.c.l.b16 %v2700
        %v2709 = vunpack.c.l.b16 %v2701
        %v2710 = vunpack.c.l.b16 %v2702
        %v2711 = vpack.c.b16 %v2708, %v2707
        %v2712 = vpack.c.b16 %v2710, %v2709
        %v2716 = vsel %vm1347, %v2697, 0
        %2718 = vmatprep.subr.bf16.mxu0 0
        %2719 = vmatpush1.bf16.msra.mxu0 %v2711
        %2720 = vmatprep.subr.bf16.mxu0 0
        %2721 = vmatpush1.bf16.msra.mxu0 %v2712
        %2722 = vmatprep.subr.bf16.mxu0 0
        %2723 = vmatpush1.bf16.msra.mxu0 0
        %2724 = vmatprep.subr.bf16.mxu0 0
        %2725 = vmatpush1.bf16.msra.mxu0 0
        %2726 = vmatprep.subr.bf16.mxu0 0
        %2727 = vmatpush1.bf16.msra.mxu0 0
        %2728 = vmatprep.subr.bf16.mxu0 0
        %2729 = vmatpush1.bf16.msra.mxu0 0
        %2730 = vmatprep.subr.bf16.mxu0 0
        %2731 = vmatpush1.bf16.msra.mxu0 0
        %2732 = vmatprep.subr.bf16.mxu0 0
        %2733 = vmatpush1.bf16.msra.mxu0 0
        %2734 = vmatprep.subr.bf16.mxu0 0
        %2735 = vmatpush1.bf16.msra.mxu0 0
        %2736 = vmatprep.subr.bf16.mxu0 0
        %2737 = vmatpush1.bf16.msra.mxu0 0
        %2738 = vmatprep.subr.bf16.mxu0 0
        %2739 = vmatpush1.bf16.msra.mxu0 0
        %2740 = vmatprep.subr.bf16.mxu0 0
        %2741 = vmatpush1.bf16.msra.mxu0 0
        %2742 = vmatprep.subr.bf16.mxu0 0
        %2743 = vmatpush1.bf16.msra.mxu0 0
        %2744 = vmatprep.subr.bf16.mxu0 0
        %2745 = vmatpush1.bf16.msra.mxu0 0
        %2746 = vmatprep.subr.bf16.mxu0 0
        %2747 = vmatpush1.bf16.msra.mxu0 0
        %2748 = vmatprep.subr.bf16.mxu0 0
        %2749 = vmatpush1.bf16.msra.mxu0 0
        %2750 = vmatprep.mubr.bf16.mxu0 0
        %2751 = vmatmul.mubr.bf16.gmra.mrb[0].mxu0 %v2716
        %v2752 = vpop.f32.mrb[0].mxu0
        %v2753 = vadd.f32 0.0, %v2752
        %v2754 = vpop.f32.mrb[0].mxu0
        %v2755 = vpop.f32.mrb[0].mxu0
        %v2756 = vpop.f32.mrb[0].mxu0
        %2757 = vdwg.mxu0
        %v2758 = vadd.f32 %v2690, %v2753
        %v2759 = vpack.c.bf16 %v2696, %v2696
        %s2760 = scalar_lea.vmem [#allocation8], 144
        %v2761 = vld [vmem:[%s2760] sm:$0xf]
        %v2762 = vld [vmem:[%s2760 + $0x4] sm:$0xf]
        %v2763 = vld [vmem:[%s2760 + $0x8] sm:$0xf]
        %v2764 = vld [vmem:[%s2760 + $0xc] sm:$0xf]
        %v2769 = vunpack.c.l.b16 %v2761
        %v2770 = vunpack.c.l.b16 %v2762
        %v2771 = vunpack.c.l.b16 %v2763
        %v2772 = vunpack.c.l.b16 %v2764
        %v2773 = vpack.c.b16 %v2770, %v2769
        %v2774 = vpack.c.b16 %v2772, %v2771
        %v2778 = vsel %vm1347, %v2759, 0
        %2780 = vmatprep.subr.bf16.mxu0 0
        %2781 = vmatpush1.bf16.msra.mxu0 %v2773
        %2782 = vmatprep.subr.bf16.mxu0 0
        %2783 = vmatpush1.bf16.msra.mxu0 %v2774
        %2784 = vmatprep.subr.bf16.mxu0 0
        %2785 = vmatpush1.bf16.msra.mxu0 0
        %2786 = vmatprep.subr.bf16.mxu0 0
        %2787 = vmatpush1.bf16.msra.mxu0 0
        %2788 = vmatprep.subr.bf16.mxu0 0
        %2789 = vmatpush1.bf16.msra.mxu0 0
        %2790 = vmatprep.subr.bf16.mxu0 0
        %2791 = vmatpush1.bf16.msra.mxu0 0
        %2792 = vmatprep.subr.bf16.mxu0 0
        %2793 = vmatpush1.bf16.msra.mxu0 0
        %2794 = vmatprep.subr.bf16.mxu0 0
        %2795 = vmatpush1.bf16.msra.mxu0 0
        %2796 = vmatprep.subr.bf16.mxu0 0
        %2797 = vmatpush1.bf16.msra.mxu0 0
        %2798 = vmatprep.subr.bf16.mxu0 0
        %2799 = vmatpush1.bf16.msra.mxu0 0
        %2800 = vmatprep.subr.bf16.mxu0 0
        %2801 = vmatpush1.bf16.msra.mxu0 0
        %2802 = vmatprep.subr.bf16.mxu0 0
        %2803 = vmatpush1.bf16.msra.mxu0 0
        %2804 = vmatprep.subr.bf16.mxu0 0
        %2805 = vmatpush1.bf16.msra.mxu0 0
        %2806 = vmatprep.subr.bf16.mxu0 0
        %2807 = vmatpush1.bf16.msra.mxu0 0
        %2808 = vmatprep.subr.bf16.mxu0 0
        %2809 = vmatpush1.bf16.msra.mxu0 0
        %2810 = vmatprep.subr.bf16.mxu0 0
        %2811 = vmatpush1.bf16.msra.mxu0 0
        %2812 = vmatprep.mubr.bf16.mxu0 0
        %2813 = vmatmul.mubr.bf16.gmra.mrb[0].mxu0 %v2778
        %v2814 = vpop.f32.mrb[0].mxu0
        %v2815 = vadd.f32 0.0, %v2814
        %v2816 = vpop.f32.mrb[0].mxu0
        %v2817 = vpop.f32.mrb[0].mxu0
        %v2818 = vpop.f32.mrb[0].mxu0
        %2819 = vdwg.mxu0
        %v2820 = vadd.f32 %v2758, %v2815
        %v2821 = vld [vmem:[%s6] sm:$0x1]
        %v2823 = vlaneseq
        %v2824 = vshrl.u32 %v2823, 7
        %v2825 = vsub.s32 0, %v2824
        %v2826 = vrot.slane %v2821, %v2825
        %v2828 = vadd.f32 %v2820, %v2826
        %2829 = vst [vmem:[%s337] sm:$0xff] %v2828
        %s2830 = sand.u32 %s186, 1
        %s2831 = scalar_lea.sflag [#allocation4], %s2830
        %s2832 = sand.u32 %s186, 1
        %s2833 = smul.addr %s2832, 8
        %s2834 = scalar_lea.vmem [#allocation10], %s2833
        // Predicated region
        $region65: #{tpu_custom_call.1} parent=47 // pred_check
          %p2835 = pneg %p196
        $region66: #{tpu_custom_call.1} parent=47 // pred_check_branch
          %2837 = sbr.rel (%p2835) target = $region68
        $region67: #{tpu_custom_call.1} parent=47 // pred_region
          %s2839 = ssub.s32 128, 128
          %2840 = vsyncadd %s2831, %s2839
          %s2841 = smul.addr %s26, 128
          %s2842 = scalar_lea.hbm %s7, %s2841
          %s2844 = sshll.u32 %s2834, 4
          %s2845 = int_to_ptr.vmem [resolvable:$true] %s2844
          %2847 = dma.vmem_to_hbm [thread:$0]  %s2845, 128, %s2842, %s2831
        $region68: #{tpu_custom_call.1} parent=47 // pred_fallthru
          _
      $region48: #{tpu_custom_call.1} parent=5 // pred_fallthru
        _
      %p2848 = scmp.le.s32.totalorder 2, %s21
      // Predicated region
      $region69: #{tpu_custom_call.1} parent=5 // pred_check
        %p2849 = pneg %p2848
      $region70: #{tpu_custom_call.1} parent=5 // pred_check_branch
        %2851 = sbr.rel (%p2849) target = $region72
      $region71: #{tpu_custom_call.1} parent=5 // pred_region
        %s2852 = ssub.s32 %s21, 2
        // Predicated region
        $region73: #{tpu_custom_call.1} parent=71 // pred_check
          %p2853 = pneg %p202
        $region74: #{tpu_custom_call.1} parent=71 // pred_check_branch
          %2855 = sbr.rel (%p2853) target = $region76
        $region75: #{tpu_custom_call.1} parent=71 // pred_region
          %s2856 = sand.u32 %s187, 1
          %s2857 = scalar_lea.sflag [#allocation4], %s2856
          %s2858 = sand.u32 %s187, 1
          %s2859 = smul.addr %s2858, 8
          %s2860 = scalar_lea.vmem [#allocation10], %s2859
          %2861 = dma.done %s2857, 128
        $region76: #{tpu_custom_call.1} parent=71 // pred_fallthru
          _
      $region72: #{tpu_custom_call.1} parent=5 // pred_fallthru
        _
    $region6: #{tpu_custom_call.1} parent=1 // loop_footer
      %s25 = sadd.s32 1, %s21
    $region7: #{tpu_custom_call.1} parent=1 // loop_footer_branch
      %20 = sbr.rel target = $region3
    $region8: #{tpu_custom_call.1} parent=1 // loop_exit
      _
    %2862 = vsyncpa [#allocation3], 1
    %s2863 = scalar_lea.sflag [#allocation3], 1
    %2864 = vsyncpa %s2863, 1
    %2865 = vsyncpa [#allocation6], 1
    %2866 = vsyncpa [#allocation9], 1
    %2867 = vsyncpa [#allocation4], 1
    %s2868 = scalar_lea.sflag [#allocation4], 1
    %2869 = vsyncpa %s2868, 1

</llo_original>
